<compile_context>
chip_gen: v6e
topology: v6e:2x2x1
jax: 0.10.0
libtpu: 0.0.40
codegen_flags: <defaults>
</compile_context>

<pallas_src>
import functools

import jax
import jax.numpy as jnp
from jax.experimental import pallas as pl
from jax.experimental.pallas import tpu as pltpu


def _round_up(x, m):
    return (x + m - 1) // m * m


# --------------------------------------------------------------------------
# Fused kernel: one invocation, all layers unrolled, all weights VMEM-resident.
# Token slab layout: row (s * nb_pad + t) = image s, token t  (t=0 is CLS,
# t in [num_tokens, nb_pad) are zero pad rows that never touch real rows).
# Attention mixes over the image-batch axis (reference feeds (B, N+1, D) into a
# batch_first=False encoder => seq axis is B), independently per token index.
# --------------------------------------------------------------------------
def _vit_fused_kernel(sb, nb_pad, num_layers, ffn_chunk,
                      patches_ref, patch_w_ref, tok_base_ref,
                      seg_ref, seg_t_ref,
                      wq_ref, wk_ref, wv_ref, wo_ref,
                      w1_ref, b1_ref, w2_ref,
                      vecs_ref, head_w_ref, head_b_ref,
                      logits_ref):
    D = tok_base_ref.shape[-1]
    F = w1_ref.shape[-1]

    # ---- patch embedding + CLS token + positional add ----------------------
    # patches rows are zero at CLS/pad positions; tok_base carries cls+pos/pos.
    x = (jnp.dot(patches_ref[...], patch_w_ref[...],
                 preferred_element_type=jnp.float32)
         + tok_base_ref[...])                              # (M, D) f32

    seg = seg_ref[...]                                     # (D, H) head indicator
    seg_t = seg_t_ref[...]                                 # (H, D)

    def layer_norm(yv, g, b):
        mu = jnp.mean(yv, axis=-1, keepdims=True)
        var = jnp.mean((yv - mu) ** 2, axis=-1, keepdims=True)
        return (yv - mu) * jax.lax.rsqrt(var + 1e-5) * g + b

    for l in range(num_layers):
        # packed per-layer vectors: 0=bq(scaled) 1=bk 2=bv 3=bo 4=b2
        #                           5=ln1_g 6=ln1_b 7=ln2_g 8=ln2_b
        xb = x.astype(jnp.bfloat16)
        q = (jnp.dot(xb, wq_ref[l], preferred_element_type=jnp.float32)
             + vecs_ref[l, 0:1, :])                        # 1/sqrt(hd) folded in
        k = (jnp.dot(xb, wk_ref[l], preferred_element_type=jnp.float32)
             + vecs_ref[l, 1:2, :])
        v = (jnp.dot(xb, wv_ref[l], preferred_element_type=jnp.float32)
             + vecs_ref[l, 2:3, :])

        # ---- multi-head attention over the sb image positions -------------
        # Row r = (s, t) pairs with K/V of image (s + j) mod sb, same token t,
        # obtained by a sublane-aligned roll of j*nb_pad rows (XLU, no copies).
        # Softmax over j covers the full image set per row, so this equals the
        # reference attention regardless of the per-row ordering.
        scores, v_rolled = [], []
        for j in range(sb):
            if j == 0:
                kj, vj = k, v
            else:
                kj = pltpu.roll(k, shift=j * nb_pad, axis=0)
                vj = pltpu.roll(v, shift=j * nb_pad, axis=0)
            v_rolled.append(vj)
            # scores_j[r, h] = sum_{d in head h} q[r, d] * kj[r, d]
            scores.append(jnp.dot(q * kj, seg,
                                  preferred_element_type=jnp.float32))  # (M, H)
        m = scores[0]
        for s in scores[1:]:
            m = jnp.maximum(m, s)
        exps = [jnp.exp(s - m) for s in scores]
        denom = exps[0]
        for e in exps[1:]:
            denom = denom + e
        inv = 1.0 / denom                                  # exact (tiny (M, H))

        ctx = None
        for j in range(sb):
            p_full = jnp.dot(exps[j] * inv, seg_t,
                             preferred_element_type=jnp.float32)        # (M, D)
            term = p_full * v_rolled[j]
            ctx = term if ctx is None else ctx + term

        attn = (jnp.dot(ctx.astype(jnp.bfloat16), wo_ref[l],
                        preferred_element_type=jnp.float32)
                + vecs_ref[l, 3:4, :])

        # ---- post-norm encoder layer (torch default), ReLU FFN -------------
        y = layer_norm(x + attn, vecs_ref[l, 5:6, :], vecs_ref[l, 6:7, :])

        # FFN hidden dim chunked so the (M, F) intermediate never materializes.
        yb = y.astype(jnp.bfloat16)
        ff = None
        for c in range(F // ffn_chunk):
            lo = c * ffn_chunk
            h = (jnp.dot(yb, w1_ref[l, :, lo:lo + ffn_chunk],
                         preferred_element_type=jnp.float32)
                 + b1_ref[l, :, lo:lo + ffn_chunk])
            h = jnp.maximum(h, 0.0)
            part = jnp.dot(h.astype(jnp.bfloat16),
                           w2_ref[l, lo:lo + ffn_chunk, :],
                           preferred_element_type=jnp.float32)
            ff = part if ff is None else ff + part
        ff = ff + vecs_ref[l, 4:5, :]
        x = layer_norm(y + ff, vecs_ref[l, 7:8, :], vecs_ref[l, 8:9, :])

    # ---- classification head on ALL rows (same MXU cost as sb rows); -------
    # the sb CLS rows / real class columns are selected outside the kernel.
    # head_w is zero-padded to 128 lanes -> lane-dense unmasked output stores.
    logits_ref[...] = (jnp.dot(x.astype(jnp.bfloat16), head_w_ref[...],
                               preferred_element_type=jnp.float32)
                       + head_b_ref[...])


def vit_forward_fused(patches_padded, params, *, sb, nb_pad):
    M = patches_padded.shape[0]
    L = params["wq"].shape[0]
    F = params["w1"].shape[-1]
    nc_pad = params["head_w"].shape[1]
    ffn_chunk = 512 if F % 512 == 0 else F

    kernel = functools.partial(_vit_fused_kernel, sb, nb_pad, L, ffn_chunk)

    # No grid / BlockSpecs: every input is loaded whole into VMEM once
    # (total < 1 MiB at this config), the kernel body runs a single time.
    return pl.pallas_call(
        kernel,
        out_shape=jax.ShapeDtypeStruct((M, nc_pad), jnp.float32),
    )(patches_padded, params["patch_w"], params["tok_base"],
      params["seg"], params["seg_t"],
      params["wq"], params["wk"], params["wv"], params["wo"],
      params["w1"], params["b1"], params["w2"],
      params["vecs"], params["head_w"], params["head_b"])


# --------------------------------------------------------------------------
# Parameter construction (deterministic, synthetic, pre-packed for the kernel).
# --------------------------------------------------------------------------
def init_params(key, *, batch, channels, patch_size, embed_dim, max_num_token,
                num_classes, num_layers, num_heads, num_tokens, nb_pad,
                dim_ff=2048):
    std = 0.02
    cpp = channels * patch_size * patch_size
    D = embed_dim
    hd = D // num_heads
    scale = 1.0 / float(hd) ** 0.5
    nc_pad = _round_up(num_classes, 128)

    keys = jax.random.split(key, 5)
    params = {}

    # conv kernel (D, C, p, p) flattened to (C*p*p, D) so conv2d == matmul
    conv_kernel = jax.random.normal(
        keys[0], (D, channels, patch_size, patch_size), jnp.float32) * std
    params["patch_w"] = conv_kernel.reshape(D, cpp).T.astype(jnp.bfloat16)

    # per-image class token (reference uses randn(B, 1, D)) + positional table
    cls_token = jax.random.normal(keys[1], (batch, 1, D), jnp.float32) * std
    pos_table = jax.random.normal(keys[2], (max_num_token, D), jnp.float32) * std
    pos = pos_table[:num_tokens]
    base = jnp.zeros((batch, nb_pad, D), jnp.float32)
    base = base.at[:, 0, :].set(cls_token[:, 0, :] + pos[0])
    base = base.at[:, 1:num_tokens, :].set(pos[1:][None, :, :])
    params["tok_base"] = base.reshape(batch * nb_pad, D)          # f32

    # head-segment indicator matrices (heads partition D contiguously)
    seg = (jnp.arange(D)[:, None] // hd
           == jnp.arange(num_heads)[None, :]).astype(jnp.float32)  # (D, H)
    params["seg"] = seg
    params["seg_t"] = seg.T

    head_w = jax.random.normal(keys[3], (D, num_classes), jnp.float32) * std
    head_w = jnp.pad(head_w, ((0, 0), (0, nc_pad - num_classes)))
    params["head_w"] = head_w.astype(jnp.bfloat16)                # (D, 128)
    params["head_b"] = jnp.zeros((1, nc_pad), jnp.float32)

    lkeys = jax.random.split(keys[4], num_layers)
    wq, wk, wv, wo, w1, w2, b1, vecs = [], [], [], [], [], [], [], []
    for l in range(num_layers):
        lk = jax.random.split(lkeys[l], 4)
        w_in = jax.random.normal(lk[0], (D, 3 * D), jnp.float32) * std
        b_in = jnp.zeros((3 * D,), jnp.float32)
        # fold 1/sqrt(head_dim) into BOTH the q weight and the q bias
        wq.append(w_in[:, :D] * scale)
        wk.append(w_in[:, D:2 * D])
        wv.append(w_in[:, 2 * D:])
        wo.append(jax.random.normal(lk[1], (D, D), jnp.float32) * std)
        w1.append(jax.random.normal(lk[2], (D, dim_ff), jnp.float32) * std)
        w2.append(jax.random.normal(lk[3], (dim_ff, D), jnp.float32) * std)
        b1.append(jnp.zeros((1, dim_ff), jnp.float32))

        # packed small per-layer vectors, rows:
        # 0=bq(scaled) 1=bk 2=bv 3=bo 4=b2 5=ln1_g 6=ln1_b 7=ln2_g 8=ln2_b
        vblk = jnp.zeros((16, D), jnp.float32)
        vblk = vblk.at[0].set(b_in[:D] * scale)
        vblk = vblk.at[1].set(b_in[D:2 * D])
        vblk = vblk.at[2].set(b_in[2 * D:])
        vblk = vblk.at[5].set(jnp.ones((D,), jnp.float32))
        vblk = vblk.at[7].set(jnp.ones((D,), jnp.float32))
        vecs.append(vblk)

    params["wq"] = jnp.stack(wq).astype(jnp.bfloat16)             # (L, D, D)
    params["wk"] = jnp.stack(wk).astype(jnp.bfloat16)
    params["wv"] = jnp.stack(wv).astype(jnp.bfloat16)
    params["wo"] = jnp.stack(wo).astype(jnp.bfloat16)
    params["w1"] = jnp.stack(w1).astype(jnp.bfloat16)             # (L, D, F)
    params["w2"] = jnp.stack(w2).astype(jnp.bfloat16)             # (L, F, D)
    params["b1"] = jnp.stack(b1)                                  # (L, 1, F) f32
    params["vecs"] = jnp.stack(vecs)                              # (L, 16, D) f32
    return params


# --------------------------------------------------------------------------
# Full forward: layout glue (jit-fused XLA) + one fused Pallas kernel.
# --------------------------------------------------------------------------
@functools.partial(jax.jit,
                   static_argnames=("patch_size", "nb_pad", "num_classes"))
def vit_forward(image, params, *, patch_size, nb_pad, num_classes):
    B, C, H, W = image.shape
    p = patch_size
    nh, nw = H // p, W // p
    N = nh * nw
    cpp = C * p * p

    # strided-conv patchification: flatten each patch in (C, ph, pw) order
    patches = image.reshape(B, C, nh, p, nw, p)
    patches = patches.transpose(0, 2, 4, 1, 3, 5).reshape(B, N, cpp)

    # place patch n of image s at token row (n + 1) of its padded block;
    # CLS (row 0) and pad rows stay zero for the in-kernel patch matmul.
    pp = jnp.zeros((B, nb_pad, cpp), jnp.float32)
    pp = pp.at[:, 1:N + 1, :].set(patches)
    patches_padded = pp.reshape(B * nb_pad, cpp).astype(jnp.bfloat16)

    logits_full = vit_forward_fused(patches_padded, params, sb=B, nb_pad=nb_pad)
    # select the CLS row of each image block and the real class columns
    return logits_full.reshape(B, nb_pad, -1)[:, 0, :num_classes]


if __name__ == "__main__":
    # Small config consistent with the module:
    #   image_size=(4,16,16), patch_size=4 -> 16 patches (+1 CLS = 17 tokens)
    B, C, H, W = 2, 4, 16, 16
    PATCH = 4
    EMBED = 32
    MAX_TOK = 32
    NUM_CLASSES = 10
    NUM_LAYERS = 2
    NUM_HEADS = 8

    N = (H // PATCH) * (W // PATCH)
    NUM_TOKENS = N + 1
    NB_PAD = _round_up(NUM_TOKENS, 8)     # token axis padded to sublane-aligned 24

    key = jax.random.PRNGKey(0)
    k_img, k_par = jax.random.split(key)
    image = jax.random.normal(k_img, (B, C, H, W), dtype=jnp.float32)

    params = init_params(k_par, batch=B, channels=C, patch_size=PATCH,
                         embed_dim=EMBED, max_num_token=MAX_TOK,
                         num_classes=NUM_CLASSES, num_layers=NUM_LAYERS,
                         num_heads=NUM_HEADS, num_tokens=NUM_TOKENS,
                         nb_pad=NB_PAD)

    logits = vit_forward(image, params, patch_size=PATCH, nb_pad=NB_PAD,
                         num_classes=NUM_CLASSES)
    logits = jax.block_until_ready(logits)

    assert logits.shape == (B, NUM_CLASSES)
    assert bool(jnp.all(jnp.isfinite(logits)))
    print("KERNEL_OK")
</pallas_src>

<mosaic_0001>
module attributes {stable_mosaic.version = 11 : i64} {
  func.func @_vit_fused_kernel(%arg0: memref<48x64xbf16, #tpu.memory_space<vmem>>, %arg1: memref<64x32xbf16, #tpu.memory_space<vmem>>, %arg2: memref<48x32xf32, #tpu.memory_space<vmem>>, %arg3: memref<32x8xf32, #tpu.memory_space<vmem>>, %arg4: memref<8x32xf32, #tpu.memory_space<vmem>>, %arg5: memref<2x32x32xbf16, #tpu.memory_space<vmem>>, %arg6: memref<2x32x32xbf16, #tpu.memory_space<vmem>>, %arg7: memref<2x32x32xbf16, #tpu.memory_space<vmem>>, %arg8: memref<2x32x32xbf16, #tpu.memory_space<vmem>>, %arg9: memref<2x32x2048xbf16, #tpu.memory_space<vmem>>, %arg10: memref<2x1x2048xf32, #tpu.memory_space<vmem>>, %arg11: memref<2x2048x32xbf16, #tpu.memory_space<vmem>>, %arg12: memref<2x16x32xf32, #tpu.memory_space<vmem>>, %arg13: memref<32x128xbf16, #tpu.memory_space<vmem>>, %arg14: memref<1x128xf32, #tpu.memory_space<vmem>>, %arg15: memref<48x128xf32, #tpu.memory_space<vmem>>) attributes {dimension_semantics = [], scalar_prefetch = 0 : i64, scratch_operands = 0 : i64, tpu.core_type = #tpu.core_type<tc>} {
    %c0 = arith.constant 0 : index
    %c0_0 = arith.constant 0 : index
    %0 = vector.load %arg0[%c0, %c0_0] : memref<48x64xbf16, #tpu.memory_space<vmem>>, vector<48x64xbf16>
    %c0_1 = arith.constant 0 : index
    %c0_2 = arith.constant 0 : index
    %1 = vector.load %arg1[%c0_1, %c0_2] : memref<64x32xbf16, #tpu.memory_space<vmem>>, vector<64x32xbf16>
    %cst = arith.constant dense<0.000000e+00> : vector<48x32xf32>
    %2 = tpu.matmul %0, %1, %cst {dimension_numbers = #tpu.dot_dimension_numbers<[1], [0], [0], [1], [0, 0, 1, 1], [], []>} : vector<48x64xbf16>, vector<64x32xbf16>, vector<48x32xf32> -> vector<48x32xf32>
    %c0_3 = arith.constant 0 : index
    %c0_4 = arith.constant 0 : index
    %3 = vector.load %arg2[%c0_3, %c0_4] : memref<48x32xf32, #tpu.memory_space<vmem>>, vector<48x32xf32>
    %4 = arith.addf %2, %3 : vector<48x32xf32>
    %c0_5 = arith.constant 0 : index
    %c0_6 = arith.constant 0 : index
    %5 = vector.load %arg3[%c0_5, %c0_6] : memref<32x8xf32, #tpu.memory_space<vmem>>, vector<32x8xf32>
    %c0_7 = arith.constant 0 : index
    %c0_8 = arith.constant 0 : index
    %6 = vector.load %arg4[%c0_7, %c0_8] : memref<8x32xf32, #tpu.memory_space<vmem>>, vector<8x32xf32>
    %7 = arith.truncf %4 : vector<48x32xf32> to vector<48x32xbf16>
    %c0_9 = arith.constant 0 : index
    %c0_10 = arith.constant 0 : index
    %c0_11 = arith.constant 0 : index
    %8 = vector.load %arg5[%c0_9, %c0_10, %c0_11] : memref<2x32x32xbf16, #tpu.memory_space<vmem>>, vector<1x32x32xbf16>
    %9 = vector.shape_cast %8 : vector<1x32x32xbf16> to vector<32x32xbf16>
    %cst_12 = arith.constant dense<0.000000e+00> : vector<48x32xf32>
    %10 = tpu.matmul %7, %9, %cst_12 {dimension_numbers = #tpu.dot_dimension_numbers<[1], [0], [0], [1], [0, 0, 1, 1], [], []>} : vector<48x32xbf16>, vector<32x32xbf16>, vector<48x32xf32> -> vector<48x32xf32>
    %c0_13 = arith.constant 0 : index
    %c0_14 = arith.constant 0 : index
    %c0_15 = arith.constant 0 : index
    %11 = vector.load %arg12[%c0_13, %c0_14, %c0_15] : memref<2x16x32xf32, #tpu.memory_space<vmem>>, vector<1x1x32xf32>
    %12 = vector.shape_cast %11 : vector<1x1x32xf32> to vector<1x32xf32>
    %13 = vector.broadcast %12 : vector<1x32xf32> to vector<48x32xf32>
    %14 = arith.addf %10, %13 : vector<48x32xf32>
    %c0_16 = arith.constant 0 : index
    %c0_17 = arith.constant 0 : index
    %c0_18 = arith.constant 0 : index
    %15 = vector.load %arg6[%c0_16, %c0_17, %c0_18] : memref<2x32x32xbf16, #tpu.memory_space<vmem>>, vector<1x32x32xbf16>
    %16 = vector.shape_cast %15 : vector<1x32x32xbf16> to vector<32x32xbf16>
    %cst_19 = arith.constant dense<0.000000e+00> : vector<48x32xf32>
    %17 = tpu.matmul %7, %16, %cst_19 {dimension_numbers = #tpu.dot_dimension_numbers<[1], [0], [0], [1], [0, 0, 1, 1], [], []>} : vector<48x32xbf16>, vector<32x32xbf16>, vector<48x32xf32> -> vector<48x32xf32>
    %c0_20 = arith.constant 0 : index
    %c1 = arith.constant 1 : index
    %c0_21 = arith.constant 0 : index
    %18 = vector.load %arg12[%c0_20, %c1, %c0_21] : memref<2x16x32xf32, #tpu.memory_space<vmem>>, vector<1x1x32xf32>
    %19 = vector.shape_cast %18 : vector<1x1x32xf32> to vector<1x32xf32>
    %20 = vector.broadcast %19 : vector<1x32xf32> to vector<48x32xf32>
    %21 = arith.addf %17, %20 : vector<48x32xf32>
    %c0_22 = arith.constant 0 : index
    %c0_23 = arith.constant 0 : index
    %c0_24 = arith.constant 0 : index
    %22 = vector.load %arg7[%c0_22, %c0_23, %c0_24] : memref<2x32x32xbf16, #tpu.memory_space<vmem>>, vector<1x32x32xbf16>
    %23 = vector.shape_cast %22 : vector<1x32x32xbf16> to vector<32x32xbf16>
    %cst_25 = arith.constant dense<0.000000e+00> : vector<48x32xf32>
    %24 = tpu.matmul %7, %23, %cst_25 {dimension_numbers = #tpu.dot_dimension_numbers<[1], [0], [0], [1], [0, 0, 1, 1], [], []>} : vector<48x32xbf16>, vector<32x32xbf16>, vector<48x32xf32> -> vector<48x32xf32>
    %c0_26 = arith.constant 0 : index
    %c2 = arith.constant 2 : index
    %c0_27 = arith.constant 0 : index
    %25 = vector.load %arg12[%c0_26, %c2, %c0_27] : memref<2x16x32xf32, #tpu.memory_space<vmem>>, vector<1x1x32xf32>
    %26 = vector.shape_cast %25 : vector<1x1x32xf32> to vector<1x32xf32>
    %27 = vector.broadcast %26 : vector<1x32xf32> to vector<48x32xf32>
    %28 = arith.addf %24, %27 : vector<48x32xf32>
    %29 = arith.mulf %14, %21 : vector<48x32xf32>
    %cst_28 = arith.constant dense<0.000000e+00> : vector<48x8xf32>
    %30 = tpu.matmul %29, %5, %cst_28 {dimension_numbers = #tpu.dot_dimension_numbers<[1], [0], [0], [1], [0, 0, 1, 1], [], []>} : vector<48x32xf32>, vector<32x8xf32>, vector<48x8xf32> -> vector<48x8xf32>
    %c24_i32 = arith.constant 24 : i32
    %31 = tpu.dynamic_rotate %21 by %c24_i32 dim 0 : vector<48x32xf32>, i32 -> vector<48x32xf32>
    %c24_i32_29 = arith.constant 24 : i32
    %32 = tpu.dynamic_rotate %28 by %c24_i32_29 dim 0 : vector<48x32xf32>, i32 -> vector<48x32xf32>
    %33 = arith.mulf %14, %31 : vector<48x32xf32>
    %cst_30 = arith.constant dense<0.000000e+00> : vector<48x8xf32>
    %34 = tpu.matmul %33, %5, %cst_30 {dimension_numbers = #tpu.dot_dimension_numbers<[1], [0], [0], [1], [0, 0, 1, 1], [], []>} : vector<48x32xf32>, vector<32x8xf32>, vector<48x8xf32> -> vector<48x8xf32>
    %35 = arith.maximumf %30, %34 : vector<48x8xf32>
    %36 = arith.subf %30, %35 : vector<48x8xf32>
    %37 = math.exp %36 : vector<48x8xf32>
    %38 = arith.subf %34, %35 : vector<48x8xf32>
    %39 = math.exp %38 : vector<48x8xf32>
    %40 = arith.addf %37, %39 : vector<48x8xf32>
    %cst_31 = arith.constant 1.000000e+00 : f32
    %41 = vector.broadcast %cst_31 : f32 to vector<48x8xf32>
    %42 = arith.divf %41, %40 : vector<48x8xf32>
    %43 = arith.mulf %37, %42 : vector<48x8xf32>
    %cst_32 = arith.constant dense<0.000000e+00> : vector<48x32xf32>
    %44 = tpu.matmul %43, %6, %cst_32 {dimension_numbers = #tpu.dot_dimension_numbers<[1], [0], [0], [1], [0, 0, 1, 1], [], []>} : vector<48x8xf32>, vector<8x32xf32>, vector<48x32xf32> -> vector<48x32xf32>
    %45 = arith.mulf %44, %28 : vector<48x32xf32>
    %46 = arith.mulf %39, %42 : vector<48x8xf32>
    %cst_33 = arith.constant dense<0.000000e+00> : vector<48x32xf32>
    %47 = tpu.matmul %46, %6, %cst_33 {dimension_numbers = #tpu.dot_dimension_numbers<[1], [0], [0], [1], [0, 0, 1, 1], [], []>} : vector<48x8xf32>, vector<8x32xf32>, vector<48x32xf32> -> vector<48x32xf32>
    %48 = arith.mulf %47, %32 : vector<48x32xf32>
    %49 = arith.addf %45, %48 : vector<48x32xf32>
    %50 = arith.truncf %49 : vector<48x32xf32> to vector<48x32xbf16>
    %c0_34 = arith.constant 0 : index
    %c0_35 = arith.constant 0 : index
    %c0_36 = arith.constant 0 : index
    %51 = vector.load %arg8[%c0_34, %c0_35, %c0_36] : memref<2x32x32xbf16, #tpu.memory_space<vmem>>, vector<1x32x32xbf16>
    %52 = vector.shape_cast %51 : vector<1x32x32xbf16> to vector<32x32xbf16>
    %cst_37 = arith.constant dense<0.000000e+00> : vector<48x32xf32>
    %53 = tpu.matmul %50, %52, %cst_37 {dimension_numbers = #tpu.dot_dimension_numbers<[1], [0], [0], [1], [0, 0, 1, 1], [], []>} : vector<48x32xbf16>, vector<32x32xbf16>, vector<48x32xf32> -> vector<48x32xf32>
    %c0_38 = arith.constant 0 : index
    %c3 = arith.constant 3 : index
    %c0_39 = arith.constant 0 : index
    %54 = vector.load %arg12[%c0_38, %c3, %c0_39] : memref<2x16x32xf32, #tpu.memory_space<vmem>>, vector<1x1x32xf32>
    %55 = vector.shape_cast %54 : vector<1x1x32xf32> to vector<1x32xf32>
    %56 = vector.broadcast %55 : vector<1x32xf32> to vector<48x32xf32>
    %57 = arith.addf %53, %56 : vector<48x32xf32>
    %58 = arith.addf %4, %57 : vector<48x32xf32>
    %c0_40 = arith.constant 0 : index
    %c5 = arith.constant 5 : index
    %c0_41 = arith.constant 0 : index
    %59 = vector.load %arg12[%c0_40, %c5, %c0_41] : memref<2x16x32xf32, #tpu.memory_space<vmem>>, vector<1x1x32xf32>
    %60 = vector.shape_cast %59 : vector<1x1x32xf32> to vector<1x32xf32>
    %c0_42 = arith.constant 0 : index
    %c6 = arith.constant 6 : index
    %c0_43 = arith.constant 0 : index
    %61 = vector.load %arg12[%c0_42, %c6, %c0_43] : memref<2x16x32xf32, #tpu.memory_space<vmem>>, vector<1x1x32xf32>
    %62 = vector.shape_cast %61 : vector<1x1x32xf32> to vector<1x32xf32>
    %cst_44 = arith.constant dense<0.000000e+00> : vector<48xf32>
    %63 = vector.multi_reduction <add>, %58, %cst_44 [1] : vector<48x32xf32> to vector<48xf32>
    %64 = vector.shape_cast %63 : vector<48xf32> to vector<48x1xf32>
    %cst_45 = arith.constant 3.200000e+01 : f32
    %65 = vector.broadcast %cst_45 : f32 to vector<48x1xf32>
    %66 = arith.divf %64, %65 : vector<48x1xf32>
    %67 = vector.broadcast %66 : vector<48x1xf32> to vector<48x32xf32>
    %68 = arith.subf %58, %67 : vector<48x32xf32>
    %69 = arith.mulf %68, %68 : vector<48x32xf32>
    %cst_46 = arith.constant dense<0.000000e+00> : vector<48xf32>
    %70 = vector.multi_reduction <add>, %69, %cst_46 [1] : vector<48x32xf32> to vector<48xf32>
    %71 = vector.shape_cast %70 : vector<48xf32> to vector<48x1xf32>
    %cst_47 = arith.constant 3.200000e+01 : f32
    %72 = vector.broadcast %cst_47 : f32 to vector<48x1xf32>
    %73 = arith.divf %71, %72 : vector<48x1xf32>
    %74 = vector.broadcast %66 : vector<48x1xf32> to vector<48x32xf32>
    %75 = arith.subf %58, %74 : vector<48x32xf32>
    %cst_48 = arith.constant 9.99999974E-6 : f32
    %76 = vector.broadcast %cst_48 : f32 to vector<48x1xf32>
    %77 = arith.addf %73, %76 : vector<48x1xf32>
    %78 = math.rsqrt %77 : vector<48x1xf32>
    %79 = vector.broadcast %78 : vector<48x1xf32> to vector<48x32xf32>
    %80 = arith.mulf %75, %79 : vector<48x32xf32>
    %81 = vector.broadcast %60 : vector<1x32xf32> to vector<48x32xf32>
    %82 = arith.mulf %80, %81 : vector<48x32xf32>
    %83 = vector.broadcast %62 : vector<1x32xf32> to vector<48x32xf32>
    %84 = arith.addf %82, %83 : vector<48x32xf32>
    %85 = arith.truncf %84 : vector<48x32xf32> to vector<48x32xbf16>
    %c0_49 = arith.constant 0 : index
    %c0_50 = arith.constant 0 : index
    %c0_51 = arith.constant 0 : index
    %86 = vector.load %arg9[%c0_49, %c0_50, %c0_51] : memref<2x32x2048xbf16, #tpu.memory_space<vmem>>, vector<1x32x512xbf16>
    %87 = vector.shape_cast %86 : vector<1x32x512xbf16> to vector<32x512xbf16>
    %cst_52 = arith.constant dense<0.000000e+00> : vector<48x512xf32>
    %88 = tpu.matmul %85, %87, %cst_52 {dimension_numbers = #tpu.dot_dimension_numbers<[1], [0], [0], [1], [0, 0, 1, 1], [], []>} : vector<48x32xbf16>, vector<32x512xbf16>, vector<48x512xf32> -> vector<48x512xf32>
    %c0_53 = arith.constant 0 : index
    %c0_54 = arith.constant 0 : index
    %c0_55 = arith.constant 0 : index
    %89 = vector.load %arg10[%c0_53, %c0_54, %c0_55] : memref<2x1x2048xf32, #tpu.memory_space<vmem>>, vector<1x1x512xf32>
    %90 = vector.shape_cast %89 : vector<1x1x512xf32> to vector<1x512xf32>
    %91 = vector.broadcast %90 : vector<1x512xf32> to vector<48x512xf32>
    %92 = arith.addf %88, %91 : vector<48x512xf32>
    %cst_56 = arith.constant 0.000000e+00 : f32
    %93 = vector.broadcast %cst_56 : f32 to vector<48x512xf32>
    %94 = arith.maximumf %92, %93 : vector<48x512xf32>
    %95 = arith.truncf %94 : vector<48x512xf32> to vector<48x512xbf16>
    %c0_57 = arith.constant 0 : index
    %c0_58 = arith.constant 0 : index
    %c0_59 = arith.constant 0 : index
    %96 = vector.load %arg11[%c0_57, %c0_58, %c0_59] : memref<2x2048x32xbf16, #tpu.memory_space<vmem>>, vector<1x512x32xbf16>
    %97 = vector.shape_cast %96 : vector<1x512x32xbf16> to vector<512x32xbf16>
    %cst_60 = arith.constant dense<0.000000e+00> : vector<48x32xf32>
    %98 = tpu.matmul %95, %97, %cst_60 {dimension_numbers = #tpu.dot_dimension_numbers<[1], [0], [0], [1], [0, 0, 1, 1], [], []>} : vector<48x512xbf16>, vector<512x32xbf16>, vector<48x32xf32> -> vector<48x32xf32>
    %c0_61 = arith.constant 0 : index
    %c0_62 = arith.constant 0 : index
    %c512 = arith.constant 512 : index
    %99 = vector.load %arg9[%c0_61, %c0_62, %c512] : memref<2x32x2048xbf16, #tpu.memory_space<vmem>>, vector<1x32x512xbf16>
    %100 = vector.shape_cast %99 : vector<1x32x512xbf16> to vector<32x512xbf16>
    %cst_63 = arith.constant dense<0.000000e+00> : vector<48x512xf32>
    %101 = tpu.matmul %85, %100, %cst_63 {dimension_numbers = #tpu.dot_dimension_numbers<[1], [0], [0], [1], [0, 0, 1, 1], [], []>} : vector<48x32xbf16>, vector<32x512xbf16>, vector<48x512xf32> -> vector<48x512xf32>
    %c0_64 = arith.constant 0 : index
    %c0_65 = arith.constant 0 : index
    %c512_66 = arith.constant 512 : index
    %102 = vector.load %arg10[%c0_64, %c0_65, %c512_66] : memref<2x1x2048xf32, #tpu.memory_space<vmem>>, vector<1x1x512xf32>
    %103 = vector.shape_cast %102 : vector<1x1x512xf32> to vector<1x512xf32>
    %104 = vector.broadcast %103 : vector<1x512xf32> to vector<48x512xf32>
    %105 = arith.addf %101, %104 : vector<48x512xf32>
    %cst_67 = arith.constant 0.000000e+00 : f32
    %106 = vector.broadcast %cst_67 : f32 to vector<48x512xf32>
    %107 = arith.maximumf %105, %106 : vector<48x512xf32>
    %108 = arith.truncf %107 : vector<48x512xf32> to vector<48x512xbf16>
    %c0_68 = arith.constant 0 : index
    %c512_69 = arith.constant 512 : index
    %c0_70 = arith.constant 0 : index
    %109 = vector.load %arg11[%c0_68, %c512_69, %c0_70] : memref<2x2048x32xbf16, #tpu.memory_space<vmem>>, vector<1x512x32xbf16>
    %110 = vector.shape_cast %109 : vector<1x512x32xbf16> to vector<512x32xbf16>
    %cst_71 = arith.constant dense<0.000000e+00> : vector<48x32xf32>
    %111 = tpu.matmul %108, %110, %cst_71 {dimension_numbers = #tpu.dot_dimension_numbers<[1], [0], [0], [1], [0, 0, 1, 1], [], []>} : vector<48x512xbf16>, vector<512x32xbf16>, vector<48x32xf32> -> vector<48x32xf32>
    %112 = arith.addf %98, %111 : vector<48x32xf32>
    %c0_72 = arith.constant 0 : index
    %c0_73 = arith.constant 0 : index
    %c1024 = arith.constant 1024 : index
    %113 = vector.load %arg9[%c0_72, %c0_73, %c1024] : memref<2x32x2048xbf16, #tpu.memory_space<vmem>>, vector<1x32x512xbf16>
    %114 = vector.shape_cast %113 : vector<1x32x512xbf16> to vector<32x512xbf16>
    %cst_74 = arith.constant dense<0.000000e+00> : vector<48x512xf32>
    %115 = tpu.matmul %85, %114, %cst_74 {dimension_numbers = #tpu.dot_dimension_numbers<[1], [0], [0], [1], [0, 0, 1, 1], [], []>} : vector<48x32xbf16>, vector<32x512xbf16>, vector<48x512xf32> -> vector<48x512xf32>
    %c0_75 = arith.constant 0 : index
    %c0_76 = arith.constant 0 : index
    %c1024_77 = arith.constant 1024 : index
    %116 = vector.load %arg10[%c0_75, %c0_76, %c1024_77] : memref<2x1x2048xf32, #tpu.memory_space<vmem>>, vector<1x1x512xf32>
    %117 = vector.shape_cast %116 : vector<1x1x512xf32> to vector<1x512xf32>
    %118 = vector.broadcast %117 : vector<1x512xf32> to vector<48x512xf32>
    %119 = arith.addf %115, %118 : vector<48x512xf32>
    %cst_78 = arith.constant 0.000000e+00 : f32
    %120 = vector.broadcast %cst_78 : f32 to vector<48x512xf32>
    %121 = arith.maximumf %119, %120 : vector<48x512xf32>
    %122 = arith.truncf %121 : vector<48x512xf32> to vector<48x512xbf16>
    %c0_79 = arith.constant 0 : index
    %c1024_80 = arith.constant 1024 : index
    %c0_81 = arith.constant 0 : index
    %123 = vector.load %arg11[%c0_79, %c1024_80, %c0_81] : memref<2x2048x32xbf16, #tpu.memory_space<vmem>>, vector<1x512x32xbf16>
    %124 = vector.shape_cast %123 : vector<1x512x32xbf16> to vector<512x32xbf16>
    %cst_82 = arith.constant dense<0.000000e+00> : vector<48x32xf32>
    %125 = tpu.matmul %122, %124, %cst_82 {dimension_numbers = #tpu.dot_dimension_numbers<[1], [0], [0], [1], [0, 0, 1, 1], [], []>} : vector<48x512xbf16>, vector<512x32xbf16>, vector<48x32xf32> -> vector<48x32xf32>
    %126 = arith.addf %112, %125 : vector<48x32xf32>
    %c0_83 = arith.constant 0 : index
    %c0_84 = arith.constant 0 : index
    %c1536 = arith.constant 1536 : index
    %127 = vector.load %arg9[%c0_83, %c0_84, %c1536] : memref<2x32x2048xbf16, #tpu.memory_space<vmem>>, vector<1x32x512xbf16>
    %128 = vector.shape_cast %127 : vector<1x32x512xbf16> to vector<32x512xbf16>
    %cst_85 = arith.constant dense<0.000000e+00> : vector<48x512xf32>
    %129 = tpu.matmul %85, %128, %cst_85 {dimension_numbers = #tpu.dot_dimension_numbers<[1], [0], [0], [1], [0, 0, 1, 1], [], []>} : vector<48x32xbf16>, vector<32x512xbf16>, vector<48x512xf32> -> vector<48x512xf32>
    %c0_86 = arith.constant 0 : index
    %c0_87 = arith.constant 0 : index
    %c1536_88 = arith.constant 1536 : index
    %130 = vector.load %arg10[%c0_86, %c0_87, %c1536_88] : memref<2x1x2048xf32, #tpu.memory_space<vmem>>, vector<1x1x512xf32>
    %131 = vector.shape_cast %130 : vector<1x1x512xf32> to vector<1x512xf32>
    %132 = vector.broadcast %131 : vector<1x512xf32> to vector<48x512xf32>
    %133 = arith.addf %129, %132 : vector<48x512xf32>
    %cst_89 = arith.constant 0.000000e+00 : f32
    %134 = vector.broadcast %cst_89 : f32 to vector<48x512xf32>
    %135 = arith.maximumf %133, %134 : vector<48x512xf32>
    %136 = arith.truncf %135 : vector<48x512xf32> to vector<48x512xbf16>
    %c0_90 = arith.constant 0 : index
    %c1536_91 = arith.constant 1536 : index
    %c0_92 = arith.constant 0 : index
    %137 = vector.load %arg11[%c0_90, %c1536_91, %c0_92] : memref<2x2048x32xbf16, #tpu.memory_space<vmem>>, vector<1x512x32xbf16>
    %138 = vector.shape_cast %137 : vector<1x512x32xbf16> to vector<512x32xbf16>
    %cst_93 = arith.constant dense<0.000000e+00> : vector<48x32xf32>
    %139 = tpu.matmul %136, %138, %cst_93 {dimension_numbers = #tpu.dot_dimension_numbers<[1], [0], [0], [1], [0, 0, 1, 1], [], []>} : vector<48x512xbf16>, vector<512x32xbf16>, vector<48x32xf32> -> vector<48x32xf32>
    %140 = arith.addf %126, %139 : vector<48x32xf32>
    %c0_94 = arith.constant 0 : index
    %c4 = arith.constant 4 : index
    %c0_95 = arith.constant 0 : index
    %141 = vector.load %arg12[%c0_94, %c4, %c0_95] : memref<2x16x32xf32, #tpu.memory_space<vmem>>, vector<1x1x32xf32>
    %142 = vector.shape_cast %141 : vector<1x1x32xf32> to vector<1x32xf32>
    %143 = vector.broadcast %142 : vector<1x32xf32> to vector<48x32xf32>
    %144 = arith.addf %140, %143 : vector<48x32xf32>
    %145 = arith.addf %84, %144 : vector<48x32xf32>
    %c0_96 = arith.constant 0 : index
    %c7 = arith.constant 7 : index
    %c0_97 = arith.constant 0 : index
    %146 = vector.load %arg12[%c0_96, %c7, %c0_97] : memref<2x16x32xf32, #tpu.memory_space<vmem>>, vector<1x1x32xf32>
    %147 = vector.shape_cast %146 : vector<1x1x32xf32> to vector<1x32xf32>
    %c0_98 = arith.constant 0 : index
    %c8 = arith.constant 8 : index
    %c0_99 = arith.constant 0 : index
    %148 = vector.load %arg12[%c0_98, %c8, %c0_99] : memref<2x16x32xf32, #tpu.memory_space<vmem>>, vector<1x1x32xf32>
    %149 = vector.shape_cast %148 : vector<1x1x32xf32> to vector<1x32xf32>
    %cst_100 = arith.constant dense<0.000000e+00> : vector<48xf32>
    %150 = vector.multi_reduction <add>, %145, %cst_100 [1] : vector<48x32xf32> to vector<48xf32>
    %151 = vector.shape_cast %150 : vector<48xf32> to vector<48x1xf32>
    %cst_101 = arith.constant 3.200000e+01 : f32
    %152 = vector.broadcast %cst_101 : f32 to vector<48x1xf32>
    %153 = arith.divf %151, %152 : vector<48x1xf32>
    %154 = vector.broadcast %153 : vector<48x1xf32> to vector<48x32xf32>
    %155 = arith.subf %145, %154 : vector<48x32xf32>
    %156 = arith.mulf %155, %155 : vector<48x32xf32>
    %cst_102 = arith.constant dense<0.000000e+00> : vector<48xf32>
    %157 = vector.multi_reduction <add>, %156, %cst_102 [1] : vector<48x32xf32> to vector<48xf32>
    %158 = vector.shape_cast %157 : vector<48xf32> to vector<48x1xf32>
    %cst_103 = arith.constant 3.200000e+01 : f32
    %159 = vector.broadcast %cst_103 : f32 to vector<48x1xf32>
    %160 = arith.divf %158, %159 : vector<48x1xf32>
    %161 = vector.broadcast %153 : vector<48x1xf32> to vector<48x32xf32>
    %162 = arith.subf %145, %161 : vector<48x32xf32>
    %cst_104 = arith.constant 9.99999974E-6 : f32
    %163 = vector.broadcast %cst_104 : f32 to vector<48x1xf32>
    %164 = arith.addf %160, %163 : vector<48x1xf32>
    %165 = math.rsqrt %164 : vector<48x1xf32>
    %166 = vector.broadcast %165 : vector<48x1xf32> to vector<48x32xf32>
    %167 = arith.mulf %162, %166 : vector<48x32xf32>
    %168 = vector.broadcast %147 : vector<1x32xf32> to vector<48x32xf32>
    %169 = arith.mulf %167, %168 : vector<48x32xf32>
    %170 = vector.broadcast %149 : vector<1x32xf32> to vector<48x32xf32>
    %171 = arith.addf %169, %170 : vector<48x32xf32>
    %172 = arith.truncf %171 : vector<48x32xf32> to vector<48x32xbf16>
    %c1_105 = arith.constant 1 : index
    %c0_106 = arith.constant 0 : index
    %c0_107 = arith.constant 0 : index
    %173 = vector.load %arg5[%c1_105, %c0_106, %c0_107] : memref<2x32x32xbf16, #tpu.memory_space<vmem>>, vector<1x32x32xbf16>
    %174 = vector.shape_cast %173 : vector<1x32x32xbf16> to vector<32x32xbf16>
    %cst_108 = arith.constant dense<0.000000e+00> : vector<48x32xf32>
    %175 = tpu.matmul %172, %174, %cst_108 {dimension_numbers = #tpu.dot_dimension_numbers<[1], [0], [0], [1], [0, 0, 1, 1], [], []>} : vector<48x32xbf16>, vector<32x32xbf16>, vector<48x32xf32> -> vector<48x32xf32>
    %c1_109 = arith.constant 1 : index
    %c0_110 = arith.constant 0 : index
    %c0_111 = arith.constant 0 : index
    %176 = vector.load %arg12[%c1_109, %c0_110, %c0_111] : memref<2x16x32xf32, #tpu.memory_space<vmem>>, vector<1x1x32xf32>
    %177 = vector.shape_cast %176 : vector<1x1x32xf32> to vector<1x32xf32>
    %178 = vector.broadcast %177 : vector<1x32xf32> to vector<48x32xf32>
    %179 = arith.addf %175, %178 : vector<48x32xf32>
    %c1_112 = arith.constant 1 : index
    %c0_113 = arith.constant 0 : index
    %c0_114 = arith.constant 0 : index
    %180 = vector.load %arg6[%c1_112, %c0_113, %c0_114] : memref<2x32x32xbf16, #tpu.memory_space<vmem>>, vector<1x32x32xbf16>
    %181 = vector.shape_cast %180 : vector<1x32x32xbf16> to vector<32x32xbf16>
    %cst_115 = arith.constant dense<0.000000e+00> : vector<48x32xf32>
    %182 = tpu.matmul %172, %181, %cst_115 {dimension_numbers = #tpu.dot_dimension_numbers<[1], [0], [0], [1], [0, 0, 1, 1], [], []>} : vector<48x32xbf16>, vector<32x32xbf16>, vector<48x32xf32> -> vector<48x32xf32>
    %c1_116 = arith.constant 1 : index
    %c1_117 = arith.constant 1 : index
    %c0_118 = arith.constant 0 : index
    %183 = vector.load %arg12[%c1_116, %c1_117, %c0_118] : memref<2x16x32xf32, #tpu.memory_space<vmem>>, vector<1x1x32xf32>
    %184 = vector.shape_cast %183 : vector<1x1x32xf32> to vector<1x32xf32>
    %185 = vector.broadcast %184 : vector<1x32xf32> to vector<48x32xf32>
    %186 = arith.addf %182, %185 : vector<48x32xf32>
    %c1_119 = arith.constant 1 : index
    %c0_120 = arith.constant 0 : index
    %c0_121 = arith.constant 0 : index
    %187 = vector.load %arg7[%c1_119, %c0_120, %c0_121] : memref<2x32x32xbf16, #tpu.memory_space<vmem>>, vector<1x32x32xbf16>
    %188 = vector.shape_cast %187 : vector<1x32x32xbf16> to vector<32x32xbf16>
    %cst_122 = arith.constant dense<0.000000e+00> : vector<48x32xf32>
    %189 = tpu.matmul %172, %188, %cst_122 {dimension_numbers = #tpu.dot_dimension_numbers<[1], [0], [0], [1], [0, 0, 1, 1], [], []>} : vector<48x32xbf16>, vector<32x32xbf16>, vector<48x32xf32> -> vector<48x32xf32>
    %c1_123 = arith.constant 1 : index
    %c2_124 = arith.constant 2 : index
    %c0_125 = arith.constant 0 : index
    %190 = vector.load %arg12[%c1_123, %c2_124, %c0_125] : memref<2x16x32xf32, #tpu.memory_space<vmem>>, vector<1x1x32xf32>
    %191 = vector.shape_cast %190 : vector<1x1x32xf32> to vector<1x32xf32>
    %192 = vector.broadcast %191 : vector<1x32xf32> to vector<48x32xf32>
    %193 = arith.addf %189, %192 : vector<48x32xf32>
    %194 = arith.mulf %179, %186 : vector<48x32xf32>
    %cst_126 = arith.constant dense<0.000000e+00> : vector<48x8xf32>
    %195 = tpu.matmul %194, %5, %cst_126 {dimension_numbers = #tpu.dot_dimension_numbers<[1], [0], [0], [1], [0, 0, 1, 1], [], []>} : vector<48x32xf32>, vector<32x8xf32>, vector<48x8xf32> -> vector<48x8xf32>
    %c24_i32_127 = arith.constant 24 : i32
    %196 = tpu.dynamic_rotate %186 by %c24_i32_127 dim 0 : vector<48x32xf32>, i32 -> vector<48x32xf32>
    %c24_i32_128 = arith.constant 24 : i32
    %197 = tpu.dynamic_rotate %193 by %c24_i32_128 dim 0 : vector<48x32xf32>, i32 -> vector<48x32xf32>
    %198 = arith.mulf %179, %196 : vector<48x32xf32>
    %cst_129 = arith.constant dense<0.000000e+00> : vector<48x8xf32>
    %199 = tpu.matmul %198, %5, %cst_129 {dimension_numbers = #tpu.dot_dimension_numbers<[1], [0], [0], [1], [0, 0, 1, 1], [], []>} : vector<48x32xf32>, vector<32x8xf32>, vector<48x8xf32> -> vector<48x8xf32>
    %200 = arith.maximumf %195, %199 : vector<48x8xf32>
    %201 = arith.subf %195, %200 : vector<48x8xf32>
    %202 = math.exp %201 : vector<48x8xf32>
    %203 = arith.subf %199, %200 : vector<48x8xf32>
    %204 = math.exp %203 : vector<48x8xf32>
    %205 = arith.addf %202, %204 : vector<48x8xf32>
    %cst_130 = arith.constant 1.000000e+00 : f32
    %206 = vector.broadcast %cst_130 : f32 to vector<48x8xf32>
    %207 = arith.divf %206, %205 : vector<48x8xf32>
    %208 = arith.mulf %202, %207 : vector<48x8xf32>
    %cst_131 = arith.constant dense<0.000000e+00> : vector<48x32xf32>
    %209 = tpu.matmul %208, %6, %cst_131 {dimension_numbers = #tpu.dot_dimension_numbers<[1], [0], [0], [1], [0, 0, 1, 1], [], []>} : vector<48x8xf32>, vector<8x32xf32>, vector<48x32xf32> -> vector<48x32xf32>
    %210 = arith.mulf %209, %193 : vector<48x32xf32>
    %211 = arith.mulf %204, %207 : vector<48x8xf32>
    %cst_132 = arith.constant dense<0.000000e+00> : vector<48x32xf32>
    %212 = tpu.matmul %211, %6, %cst_132 {dimension_numbers = #tpu.dot_dimension_numbers<[1], [0], [0], [1], [0, 0, 1, 1], [], []>} : vector<48x8xf32>, vector<8x32xf32>, vector<48x32xf32> -> vector<48x32xf32>
    %213 = arith.mulf %212, %197 : vector<48x32xf32>
    %214 = arith.addf %210, %213 : vector<48x32xf32>
    %215 = arith.truncf %214 : vector<48x32xf32> to vector<48x32xbf16>
    %c1_133 = arith.constant 1 : index
    %c0_134 = arith.constant 0 : index
    %c0_135 = arith.constant 0 : index
    %216 = vector.load %arg8[%c1_133, %c0_134, %c0_135] : memref<2x32x32xbf16, #tpu.memory_space<vmem>>, vector<1x32x32xbf16>
    %217 = vector.shape_cast %216 : vector<1x32x32xbf16> to vector<32x32xbf16>
    %cst_136 = arith.constant dense<0.000000e+00> : vector<48x32xf32>
    %218 = tpu.matmul %215, %217, %cst_136 {dimension_numbers = #tpu.dot_dimension_numbers<[1], [0], [0], [1], [0, 0, 1, 1], [], []>} : vector<48x32xbf16>, vector<32x32xbf16>, vector<48x32xf32> -> vector<48x32xf32>
    %c1_137 = arith.constant 1 : index
    %c3_138 = arith.constant 3 : index
    %c0_139 = arith.constant 0 : index
    %219 = vector.load %arg12[%c1_137, %c3_138, %c0_139] : memref<2x16x32xf32, #tpu.memory_space<vmem>>, vector<1x1x32xf32>
    %220 = vector.shape_cast %219 : vector<1x1x32xf32> to vector<1x32xf32>
    %221 = vector.broadcast %220 : vector<1x32xf32> to vector<48x32xf32>
    %222 = arith.addf %218, %221 : vector<48x32xf32>
    %223 = arith.addf %171, %222 : vector<48x32xf32>
    %c1_140 = arith.constant 1 : index
    %c5_141 = arith.constant 5 : index
    %c0_142 = arith.constant 0 : index
    %224 = vector.load %arg12[%c1_140, %c5_141, %c0_142] : memref<2x16x32xf32, #tpu.memory_space<vmem>>, vector<1x1x32xf32>
    %225 = vector.shape_cast %224 : vector<1x1x32xf32> to vector<1x32xf32>
    %c1_143 = arith.constant 1 : index
    %c6_144 = arith.constant 6 : index
    %c0_145 = arith.constant 0 : index
    %226 = vector.load %arg12[%c1_143, %c6_144, %c0_145] : memref<2x16x32xf32, #tpu.memory_space<vmem>>, vector<1x1x32xf32>
    %227 = vector.shape_cast %226 : vector<1x1x32xf32> to vector<1x32xf32>
    %cst_146 = arith.constant dense<0.000000e+00> : vector<48xf32>
    %228 = vector.multi_reduction <add>, %223, %cst_146 [1] : vector<48x32xf32> to vector<48xf32>
    %229 = vector.shape_cast %228 : vector<48xf32> to vector<48x1xf32>
    %cst_147 = arith.constant 3.200000e+01 : f32
    %230 = vector.broadcast %cst_147 : f32 to vector<48x1xf32>
    %231 = arith.divf %229, %230 : vector<48x1xf32>
    %232 = vector.broadcast %231 : vector<48x1xf32> to vector<48x32xf32>
    %233 = arith.subf %223, %232 : vector<48x32xf32>
    %234 = arith.mulf %233, %233 : vector<48x32xf32>
    %cst_148 = arith.constant dense<0.000000e+00> : vector<48xf32>
    %235 = vector.multi_reduction <add>, %234, %cst_148 [1] : vector<48x32xf32> to vector<48xf32>
    %236 = vector.shape_cast %235 : vector<48xf32> to vector<48x1xf32>
    %cst_149 = arith.constant 3.200000e+01 : f32
    %237 = vector.broadcast %cst_149 : f32 to vector<48x1xf32>
    %238 = arith.divf %236, %237 : vector<48x1xf32>
    %239 = vector.broadcast %231 : vector<48x1xf32> to vector<48x32xf32>
    %240 = arith.subf %223, %239 : vector<48x32xf32>
    %cst_150 = arith.constant 9.99999974E-6 : f32
    %241 = vector.broadcast %cst_150 : f32 to vector<48x1xf32>
    %242 = arith.addf %238, %241 : vector<48x1xf32>
    %243 = math.rsqrt %242 : vector<48x1xf32>
    %244 = vector.broadcast %243 : vector<48x1xf32> to vector<48x32xf32>
    %245 = arith.mulf %240, %244 : vector<48x32xf32>
    %246 = vector.broadcast %225 : vector<1x32xf32> to vector<48x32xf32>
    %247 = arith.mulf %245, %246 : vector<48x32xf32>
    %248 = vector.broadcast %227 : vector<1x32xf32> to vector<48x32xf32>
    %249 = arith.addf %247, %248 : vector<48x32xf32>
    %250 = arith.truncf %249 : vector<48x32xf32> to vector<48x32xbf16>
    %c1_151 = arith.constant 1 : index
    %c0_152 = arith.constant 0 : index
    %c0_153 = arith.constant 0 : index
    %251 = vector.load %arg9[%c1_151, %c0_152, %c0_153] : memref<2x32x2048xbf16, #tpu.memory_space<vmem>>, vector<1x32x512xbf16>
    %252 = vector.shape_cast %251 : vector<1x32x512xbf16> to vector<32x512xbf16>
    %cst_154 = arith.constant dense<0.000000e+00> : vector<48x512xf32>
    %253 = tpu.matmul %250, %252, %cst_154 {dimension_numbers = #tpu.dot_dimension_numbers<[1], [0], [0], [1], [0, 0, 1, 1], [], []>} : vector<48x32xbf16>, vector<32x512xbf16>, vector<48x512xf32> -> vector<48x512xf32>
    %c1_155 = arith.constant 1 : index
    %c0_156 = arith.constant 0 : index
    %c0_157 = arith.constant 0 : index
    %254 = vector.load %arg10[%c1_155, %c0_156, %c0_157] : memref<2x1x2048xf32, #tpu.memory_space<vmem>>, vector<1x1x512xf32>
    %255 = vector.shape_cast %254 : vector<1x1x512xf32> to vector<1x512xf32>
    %256 = vector.broadcast %255 : vector<1x512xf32> to vector<48x512xf32>
    %257 = arith.addf %253, %256 : vector<48x512xf32>
    %cst_158 = arith.constant 0.000000e+00 : f32
    %258 = vector.broadcast %cst_158 : f32 to vector<48x512xf32>
    %259 = arith.maximumf %257, %258 : vector<48x512xf32>
    %260 = arith.truncf %259 : vector<48x512xf32> to vector<48x512xbf16>
    %c1_159 = arith.constant 1 : index
    %c0_160 = arith.constant 0 : index
    %c0_161 = arith.constant 0 : index
    %261 = vector.load %arg11[%c1_159, %c0_160, %c0_161] : memref<2x2048x32xbf16, #tpu.memory_space<vmem>>, vector<1x512x32xbf16>
    %262 = vector.shape_cast %261 : vector<1x512x32xbf16> to vector<512x32xbf16>
    %cst_162 = arith.constant dense<0.000000e+00> : vector<48x32xf32>
    %263 = tpu.matmul %260, %262, %cst_162 {dimension_numbers = #tpu.dot_dimension_numbers<[1], [0], [0], [1], [0, 0, 1, 1], [], []>} : vector<48x512xbf16>, vector<512x32xbf16>, vector<48x32xf32> -> vector<48x32xf32>
    %c1_163 = arith.constant 1 : index
    %c0_164 = arith.constant 0 : index
    %c512_165 = arith.constant 512 : index
    %264 = vector.load %arg9[%c1_163, %c0_164, %c512_165] : memref<2x32x2048xbf16, #tpu.memory_space<vmem>>, vector<1x32x512xbf16>
    %265 = vector.shape_cast %264 : vector<1x32x512xbf16> to vector<32x512xbf16>
    %cst_166 = arith.constant dense<0.000000e+00> : vector<48x512xf32>
    %266 = tpu.matmul %250, %265, %cst_166 {dimension_numbers = #tpu.dot_dimension_numbers<[1], [0], [0], [1], [0, 0, 1, 1], [], []>} : vector<48x32xbf16>, vector<32x512xbf16>, vector<48x512xf32> -> vector<48x512xf32>
    %c1_167 = arith.constant 1 : index
    %c0_168 = arith.constant 0 : index
    %c512_169 = arith.constant 512 : index
    %267 = vector.load %arg10[%c1_167, %c0_168, %c512_169] : memref<2x1x2048xf32, #tpu.memory_space<vmem>>, vector<1x1x512xf32>
    %268 = vector.shape_cast %267 : vector<1x1x512xf32> to vector<1x512xf32>
    %269 = vector.broadcast %268 : vector<1x512xf32> to vector<48x512xf32>
    %270 = arith.addf %266, %269 : vector<48x512xf32>
    %cst_170 = arith.constant 0.000000e+00 : f32
    %271 = vector.broadcast %cst_170 : f32 to vector<48x512xf32>
    %272 = arith.maximumf %270, %271 : vector<48x512xf32>
    %273 = arith.truncf %272 : vector<48x512xf32> to vector<48x512xbf16>
    %c1_171 = arith.constant 1 : index
    %c512_172 = arith.constant 512 : index
    %c0_173 = arith.constant 0 : index
    %274 = vector.load %arg11[%c1_171, %c512_172, %c0_173] : memref<2x2048x32xbf16, #tpu.memory_space<vmem>>, vector<1x512x32xbf16>
    %275 = vector.shape_cast %274 : vector<1x512x32xbf16> to vector<512x32xbf16>
    %cst_174 = arith.constant dense<0.000000e+00> : vector<48x32xf32>
    %276 = tpu.matmul %273, %275, %cst_174 {dimension_numbers = #tpu.dot_dimension_numbers<[1], [0], [0], [1], [0, 0, 1, 1], [], []>} : vector<48x512xbf16>, vector<512x32xbf16>, vector<48x32xf32> -> vector<48x32xf32>
    %277 = arith.addf %263, %276 : vector<48x32xf32>
    %c1_175 = arith.constant 1 : index
    %c0_176 = arith.constant 0 : index
    %c1024_177 = arith.constant 1024 : index
    %278 = vector.load %arg9[%c1_175, %c0_176, %c1024_177] : memref<2x32x2048xbf16, #tpu.memory_space<vmem>>, vector<1x32x512xbf16>
    %279 = vector.shape_cast %278 : vector<1x32x512xbf16> to vector<32x512xbf16>
    %cst_178 = arith.constant dense<0.000000e+00> : vector<48x512xf32>
    %280 = tpu.matmul %250, %279, %cst_178 {dimension_numbers = #tpu.dot_dimension_numbers<[1], [0], [0], [1], [0, 0, 1, 1], [], []>} : vector<48x32xbf16>, vector<32x512xbf16>, vector<48x512xf32> -> vector<48x512xf32>
    %c1_179 = arith.constant 1 : index
    %c0_180 = arith.constant 0 : index
    %c1024_181 = arith.constant 1024 : index
    %281 = vector.load %arg10[%c1_179, %c0_180, %c1024_181] : memref<2x1x2048xf32, #tpu.memory_space<vmem>>, vector<1x1x512xf32>
    %282 = vector.shape_cast %281 : vector<1x1x512xf32> to vector<1x512xf32>
    %283 = vector.broadcast %282 : vector<1x512xf32> to vector<48x512xf32>
    %284 = arith.addf %280, %283 : vector<48x512xf32>
    %cst_182 = arith.constant 0.000000e+00 : f32
    %285 = vector.broadcast %cst_182 : f32 to vector<48x512xf32>
    %286 = arith.maximumf %284, %285 : vector<48x512xf32>
    %287 = arith.truncf %286 : vector<48x512xf32> to vector<48x512xbf16>
    %c1_183 = arith.constant 1 : index
    %c1024_184 = arith.constant 1024 : index
    %c0_185 = arith.constant 0 : index
    %288 = vector.load %arg11[%c1_183, %c1024_184, %c0_185] : memref<2x2048x32xbf16, #tpu.memory_space<vmem>>, vector<1x512x32xbf16>
    %289 = vector.shape_cast %288 : vector<1x512x32xbf16> to vector<512x32xbf16>
    %cst_186 = arith.constant dense<0.000000e+00> : vector<48x32xf32>
    %290 = tpu.matmul %287, %289, %cst_186 {dimension_numbers = #tpu.dot_dimension_numbers<[1], [0], [0], [1], [0, 0, 1, 1], [], []>} : vector<48x512xbf16>, vector<512x32xbf16>, vector<48x32xf32> -> vector<48x32xf32>
    %291 = arith.addf %277, %290 : vector<48x32xf32>
    %c1_187 = arith.constant 1 : index
    %c0_188 = arith.constant 0 : index
    %c1536_189 = arith.constant 1536 : index
    %292 = vector.load %arg9[%c1_187, %c0_188, %c1536_189] : memref<2x32x2048xbf16, #tpu.memory_space<vmem>>, vector<1x32x512xbf16>
    %293 = vector.shape_cast %292 : vector<1x32x512xbf16> to vector<32x512xbf16>
    %cst_190 = arith.constant dense<0.000000e+00> : vector<48x512xf32>
    %294 = tpu.matmul %250, %293, %cst_190 {dimension_numbers = #tpu.dot_dimension_numbers<[1], [0], [0], [1], [0, 0, 1, 1], [], []>} : vector<48x32xbf16>, vector<32x512xbf16>, vector<48x512xf32> -> vector<48x512xf32>
    %c1_191 = arith.constant 1 : index
    %c0_192 = arith.constant 0 : index
    %c1536_193 = arith.constant 1536 : index
    %295 = vector.load %arg10[%c1_191, %c0_192, %c1536_193] : memref<2x1x2048xf32, #tpu.memory_space<vmem>>, vector<1x1x512xf32>
    %296 = vector.shape_cast %295 : vector<1x1x512xf32> to vector<1x512xf32>
    %297 = vector.broadcast %296 : vector<1x512xf32> to vector<48x512xf32>
    %298 = arith.addf %294, %297 : vector<48x512xf32>
    %cst_194 = arith.constant 0.000000e+00 : f32
    %299 = vector.broadcast %cst_194 : f32 to vector<48x512xf32>
    %300 = arith.maximumf %298, %299 : vector<48x512xf32>
    %301 = arith.truncf %300 : vector<48x512xf32> to vector<48x512xbf16>
    %c1_195 = arith.constant 1 : index
    %c1536_196 = arith.constant 1536 : index
    %c0_197 = arith.constant 0 : index
    %302 = vector.load %arg11[%c1_195, %c1536_196, %c0_197] : memref<2x2048x32xbf16, #tpu.memory_space<vmem>>, vector<1x512x32xbf16>
    %303 = vector.shape_cast %302 : vector<1x512x32xbf16> to vector<512x32xbf16>
    %cst_198 = arith.constant dense<0.000000e+00> : vector<48x32xf32>
    %304 = tpu.matmul %301, %303, %cst_198 {dimension_numbers = #tpu.dot_dimension_numbers<[1], [0], [0], [1], [0, 0, 1, 1], [], []>} : vector<48x512xbf16>, vector<512x32xbf16>, vector<48x32xf32> -> vector<48x32xf32>
    %305 = arith.addf %291, %304 : vector<48x32xf32>
    %c1_199 = arith.constant 1 : index
    %c4_200 = arith.constant 4 : index
    %c0_201 = arith.constant 0 : index
    %306 = vector.load %arg12[%c1_199, %c4_200, %c0_201] : memref<2x16x32xf32, #tpu.memory_space<vmem>>, vector<1x1x32xf32>
    %307 = vector.shape_cast %306 : vector<1x1x32xf32> to vector<1x32xf32>
    %308 = vector.broadcast %307 : vector<1x32xf32> to vector<48x32xf32>
    %309 = arith.addf %305, %308 : vector<48x32xf32>
    %310 = arith.addf %249, %309 : vector<48x32xf32>
    %c1_202 = arith.constant 1 : index
    %c7_203 = arith.constant 7 : index
    %c0_204 = arith.constant 0 : index
    %311 = vector.load %arg12[%c1_202, %c7_203, %c0_204] : memref<2x16x32xf32, #tpu.memory_space<vmem>>, vector<1x1x32xf32>
    %312 = vector.shape_cast %311 : vector<1x1x32xf32> to vector<1x32xf32>
    %c1_205 = arith.constant 1 : index
    %c8_206 = arith.constant 8 : index
    %c0_207 = arith.constant 0 : index
    %313 = vector.load %arg12[%c1_205, %c8_206, %c0_207] : memref<2x16x32xf32, #tpu.memory_space<vmem>>, vector<1x1x32xf32>
    %314 = vector.shape_cast %313 : vector<1x1x32xf32> to vector<1x32xf32>
    %cst_208 = arith.constant dense<0.000000e+00> : vector<48xf32>
    %315 = vector.multi_reduction <add>, %310, %cst_208 [1] : vector<48x32xf32> to vector<48xf32>
    %316 = vector.shape_cast %315 : vector<48xf32> to vector<48x1xf32>
    %cst_209 = arith.constant 3.200000e+01 : f32
    %317 = vector.broadcast %cst_209 : f32 to vector<48x1xf32>
    %318 = arith.divf %316, %317 : vector<48x1xf32>
    %319 = vector.broadcast %318 : vector<48x1xf32> to vector<48x32xf32>
    %320 = arith.subf %310, %319 : vector<48x32xf32>
    %321 = arith.mulf %320, %320 : vector<48x32xf32>
    %cst_210 = arith.constant dense<0.000000e+00> : vector<48xf32>
    %322 = vector.multi_reduction <add>, %321, %cst_210 [1] : vector<48x32xf32> to vector<48xf32>
    %323 = vector.shape_cast %322 : vector<48xf32> to vector<48x1xf32>
    %cst_211 = arith.constant 3.200000e+01 : f32
    %324 = vector.broadcast %cst_211 : f32 to vector<48x1xf32>
    %325 = arith.divf %323, %324 : vector<48x1xf32>
    %326 = vector.broadcast %318 : vector<48x1xf32> to vector<48x32xf32>
    %327 = arith.subf %310, %326 : vector<48x32xf32>
    %cst_212 = arith.constant 9.99999974E-6 : f32
    %328 = vector.broadcast %cst_212 : f32 to vector<48x1xf32>
    %329 = arith.addf %325, %328 : vector<48x1xf32>
    %330 = math.rsqrt %329 : vector<48x1xf32>
    %331 = vector.broadcast %330 : vector<48x1xf32> to vector<48x32xf32>
    %332 = arith.mulf %327, %331 : vector<48x32xf32>
    %333 = vector.broadcast %312 : vector<1x32xf32> to vector<48x32xf32>
    %334 = arith.mulf %332, %333 : vector<48x32xf32>
    %335 = vector.broadcast %314 : vector<1x32xf32> to vector<48x32xf32>
    %336 = arith.addf %334, %335 : vector<48x32xf32>
    %337 = arith.truncf %336 : vector<48x32xf32> to vector<48x32xbf16>
    %c0_213 = arith.constant 0 : index
    %c0_214 = arith.constant 0 : index
    %338 = vector.load %arg13[%c0_213, %c0_214] : memref<32x128xbf16, #tpu.memory_space<vmem>>, vector<32x128xbf16>
    %cst_215 = arith.constant dense<0.000000e+00> : vector<48x128xf32>
    %339 = tpu.matmul %337, %338, %cst_215 {dimension_numbers = #tpu.dot_dimension_numbers<[1], [0], [0], [1], [0, 0, 1, 1], [], []>} : vector<48x32xbf16>, vector<32x128xbf16>, vector<48x128xf32> -> vector<48x128xf32>
    %c0_216 = arith.constant 0 : index
    %c0_217 = arith.constant 0 : index
    %340 = vector.load %arg14[%c0_216, %c0_217] : memref<1x128xf32, #tpu.memory_space<vmem>>, vector<1x128xf32>
    %341 = vector.broadcast %340 : vector<1x128xf32> to vector<48x128xf32>
    %342 = arith.addf %339, %341 : vector<48x128xf32>
    %c0_218 = arith.constant 0 : index
    %c0_219 = arith.constant 0 : index
    %343 = vector.load %arg15[%c0_218, %c0_219] : memref<48x128xf32, #tpu.memory_space<vmem>>, vector<48x128xf32>
    tpu.vector_store %arg15[%c0_218, %c0_219], %342 {strides = array<i32>} : memref<48x128xf32, #tpu.memory_space<vmem>>, vector<48x128xf32>,
    return
  }
}

</mosaic_0001>

<llo_original>
// kernel: vit_forward.1
$region0: #{vit_forward.1}
  #allocation0 [shape = 'u32[]', space=smem, size = 0x4, offset = 0x4, fixed_abs, tag = 'smem constant byte address 0x4 - core index']
  #allocation1 [shape = 'u32[144,128]{1,0:T(1,128)}', space=vmem, size = 0x12000, scoped, tag = 'internal scratch']
  %s0 = inlined_call_operand.vmem [shape: bf16[48,64], index: 0, kind: input, shape index: {}]
  %s1 = inlined_call_operand.vmem [shape: bf16[64,32], index: 1, kind: input, shape index: {}]
  %s2 = inlined_call_operand.vmem [shape: f32[48,32], index: 2, kind: input, shape index: {}]
  %s3 = inlined_call_operand.vmem [shape: f32[32,8], index: 3, kind: input, shape index: {}]
  %s4 = inlined_call_operand.vmem [shape: f32[8,32], index: 4, kind: input, shape index: {}]
  %s5 = inlined_call_operand.vmem [shape: bf16[2,32,32], index: 5, kind: input, shape index: {}]
  %s6 = inlined_call_operand.vmem [shape: bf16[2,32,32], index: 6, kind: input, shape index: {}]
  %s7 = inlined_call_operand.vmem [shape: bf16[2,32,32], index: 7, kind: input, shape index: {}]
  %s8 = inlined_call_operand.vmem [shape: bf16[2,32,32], index: 8, kind: input, shape index: {}]
  %s9 = inlined_call_operand.vmem [shape: bf16[2,32,2048], index: 9, kind: input, shape index: {}]
  %s10 = inlined_call_operand.vmem [shape: f32[2,1,2048], index: 10, kind: input, shape index: {}]
  %s11 = inlined_call_operand.vmem [shape: bf16[2,2048,32], index: 11, kind: input, shape index: {}]
  %s12 = inlined_call_operand.vmem [shape: f32[2,16,32], index: 12, kind: input, shape index: {}]
  %s13 = inlined_call_operand.vmem [shape: bf16[32,128], index: 13, kind: input, shape index: {}]
  %s14 = inlined_call_operand.vmem [shape: f32[1,128], index: 14, kind: input, shape index: {}]
  %s15 = inlined_call_operand.vmem [shape: f32[48,128], index: 15, kind: output, shape index: {}]
  %s16 = sld [smem:[#allocation0]]
  $region70: #{vit_forward.1} parent=0
    _
  %s18 = ssub.s32 1, %s16
  %s19 = scalar_select 0, %s18, %s16
  // Predicated region
  $region2: #{vit_forward.1} parent=0 // pred_check
    _
  $region3: #{vit_forward.1} parent=0 // pred_check_branch
    %21 = sbr.rel (0) target = $region5
  $region4: #{vit_forward.1} parent=0 // pred_region
    _
  $region5: #{vit_forward.1} parent=0 // pred_fallthru
    _
  // Predicated region
  $region6: #{vit_forward.1} parent=0 // pred_check
    _
  $region7: #{vit_forward.1} parent=0 // pred_check_branch
    %23 = sbr.rel (0) target = $region9
  $region8: #{vit_forward.1} parent=0 // pred_region
    _
  $region9: #{vit_forward.1} parent=0 // pred_fallthru
    _
  // Predicated region
  $region10: #{vit_forward.1} parent=0 // pred_check
    _
  $region11: #{vit_forward.1} parent=0 // pred_check_branch
    %25 = sbr.rel (0) target = $region13
  $region12: #{vit_forward.1} parent=0 // pred_region
    _
  $region13: #{vit_forward.1} parent=0 // pred_fallthru
    _
  // Predicated region
  $region14: #{vit_forward.1} parent=0 // pred_check
    _
  $region15: #{vit_forward.1} parent=0 // pred_check_branch
    %27 = sbr.rel (0) target = $region17
  $region16: #{vit_forward.1} parent=0 // pred_region
    _
  $region17: #{vit_forward.1} parent=0 // pred_fallthru
    _
  // Predicated region
  $region18: #{vit_forward.1} parent=0 // pred_check
    _
  $region19: #{vit_forward.1} parent=0 // pred_check_branch
    %29 = sbr.rel (0) target = $region21
  $region20: #{vit_forward.1} parent=0 // pred_region
    _
  $region21: #{vit_forward.1} parent=0 // pred_fallthru
    _
  // Predicated region
  $region22: #{vit_forward.1} parent=0 // pred_check
    _
  $region23: #{vit_forward.1} parent=0 // pred_check_branch
    %31 = sbr.rel (0) target = $region25
  $region24: #{vit_forward.1} parent=0 // pred_region
    _
  $region25: #{vit_forward.1} parent=0 // pred_fallthru
    _
  // Predicated region
  $region26: #{vit_forward.1} parent=0 // pred_check
    _
  $region27: #{vit_forward.1} parent=0 // pred_check_branch
    %33 = sbr.rel (0) target = $region29
  $region28: #{vit_forward.1} parent=0 // pred_region
    _
  $region29: #{vit_forward.1} parent=0 // pred_fallthru
    _
  // Predicated region
  $region30: #{vit_forward.1} parent=0 // pred_check
    _
  $region31: #{vit_forward.1} parent=0 // pred_check_branch
    %35 = sbr.rel (0) target = $region33
  $region32: #{vit_forward.1} parent=0 // pred_region
    _
  $region33: #{vit_forward.1} parent=0 // pred_fallthru
    _
  // Predicated region
  $region34: #{vit_forward.1} parent=0 // pred_check
    _
  $region35: #{vit_forward.1} parent=0 // pred_check_branch
    %37 = sbr.rel (0) target = $region37
  $region36: #{vit_forward.1} parent=0 // pred_region
    _
  $region37: #{vit_forward.1} parent=0 // pred_fallthru
    _
  // Predicated region
  $region38: #{vit_forward.1} parent=0 // pred_check
    _
  $region39: #{vit_forward.1} parent=0 // pred_check_branch
    %39 = sbr.rel (0) target = $region41
  $region40: #{vit_forward.1} parent=0 // pred_region
    _
  $region41: #{vit_forward.1} parent=0 // pred_fallthru
    _
  // Predicated region
  $region42: #{vit_forward.1} parent=0 // pred_check
    _
  $region43: #{vit_forward.1} parent=0 // pred_check_branch
    %41 = sbr.rel (0) target = $region45
  $region44: #{vit_forward.1} parent=0 // pred_region
    _
  $region45: #{vit_forward.1} parent=0 // pred_fallthru
    _
  // Predicated region
  $region46: #{vit_forward.1} parent=0 // pred_check
    _
  $region47: #{vit_forward.1} parent=0 // pred_check_branch
    %43 = sbr.rel (0) target = $region49
  $region48: #{vit_forward.1} parent=0 // pred_region
    _
  $region49: #{vit_forward.1} parent=0 // pred_fallthru
    _
  // Predicated region
  $region50: #{vit_forward.1} parent=0 // pred_check
    _
  $region51: #{vit_forward.1} parent=0 // pred_check_branch
    %45 = sbr.rel (0) target = $region53
  $region52: #{vit_forward.1} parent=0 // pred_region
    _
  $region53: #{vit_forward.1} parent=0 // pred_fallthru
    _
  // Predicated region
  $region54: #{vit_forward.1} parent=0 // pred_check
    _
  $region55: #{vit_forward.1} parent=0 // pred_check_branch
    %47 = sbr.rel (0) target = $region57
  $region56: #{vit_forward.1} parent=0 // pred_region
    _
  $region57: #{vit_forward.1} parent=0 // pred_fallthru
    _
  // Predicated region
  $region58: #{vit_forward.1} parent=0 // pred_check
    _
  $region59: #{vit_forward.1} parent=0 // pred_check_branch
    %49 = sbr.rel (0) target = $region61
  $region60: #{vit_forward.1} parent=0 // pred_region
    _
  $region61: #{vit_forward.1} parent=0 // pred_fallthru
    _
  %v51 = vld [vmem:[%s0] sm:$0xf]
  %v52 = vld [vmem:[%s0 + $0x4] sm:$0xf]
  %v53 = vld [vmem:[%s0 + $0x8] sm:$0xf]
  %v54 = vld [vmem:[%s0 + $0xc] sm:$0xf]
  %v55 = vld [vmem:[%s0 + $0x10] sm:$0xf]
  %v56 = vld [vmem:[%s0 + $0x14] sm:$0xf]
  %v57 = vld [vmem:[%s1] sm:$0xf]
  %v58 = vld [vmem:[%s1 + $0x4] sm:$0xf]
  %v59 = vld [vmem:[%s1 + $0x8] sm:$0xf]
  %v60 = vld [vmem:[%s1 + $0xc] sm:$0xf]
  %v61 = vld [vmem:[%s1 + $0x10] sm:$0xf]
  %v62 = vld [vmem:[%s1 + $0x14] sm:$0xf]
  %v63 = vld [vmem:[%s1 + $0x18] sm:$0xf]
  %v64 = vld [vmem:[%s1 + $0x1c] sm:$0xf]
  %v65 = vld [vmem:[%s2] sm:$0xff]
  %v66 = vld [vmem:[%s2 + $0x8] sm:$0xff]
  %v67 = vld [vmem:[%s2 + $0x10] sm:$0xff]
  %v68 = vld [vmem:[%s2 + $0x18] sm:$0xff]
  %v69 = vld [vmem:[%s2 + $0x20] sm:$0xff]
  %v70 = vld [vmem:[%s2 + $0x28] sm:$0xff]
  %v77 = vunpack.c.l.b16 %v51
  %v78 = vunpack.c.l.b16 %v52
  %v79 = vunpack.c.l.b16 %v53
  %v80 = vunpack.c.l.b16 %v54
  %v81 = vunpack.c.l.b16 %v55
  %v82 = vunpack.c.l.b16 %v56
  %v83 = vpack.c.b16 %v78, %v77
  %v84 = vpack.c.b16 %v80, %v79
  %v85 = vpack.c.b16 %v82, %v81
  %v94 = vunpack.c.l.b16 %v57
  %v95 = vunpack.c.l.b16 %v58
  %v96 = vunpack.c.l.b16 %v59
  %v97 = vunpack.c.l.b16 %v60
  %v98 = vunpack.c.l.b16 %v61
  %v99 = vunpack.c.l.b16 %v62
  %v100 = vunpack.c.l.b16 %v63
  %v101 = vunpack.c.l.b16 %v64
  %v102 = vpack.c.b16 %v95, %v94
  %v103 = vpack.c.b16 %v97, %v96
  %v104 = vpack.c.b16 %v99, %v98
  %v105 = vpack.c.b16 %v101, %v100
  %vm110 = vcmask 523264
  %v112 = vsel %vm110, %v83, 0
  %v115 = vsel %vm110, %v84, 0
  %v118 = vsel %vm110, %v85, 0
  %120 = vmatprep.subr.bf16.mxu0 0
  %121 = vmatpush1.bf16.msra.mxu0 0
  %122 = vmatprep.subr.bf16.mxu0 0
  %123 = vmatpush1.bf16.msra.mxu0 0
  %124 = vmatprep.subr.bf16.mxu0 0
  %125 = vmatpush1.bf16.msra.mxu0 0
  %126 = vmatprep.subr.bf16.mxu0 0
  %127 = vmatpush1.bf16.msra.mxu0 0
  %128 = vmatprep.subr.bf16.mxu0 0
  %129 = vmatpush1.bf16.msra.mxu0 %v105
  %130 = vmatprep.subr.bf16.mxu0 0
  %131 = vmatpush1.bf16.msra.mxu0 %v104
  %132 = vmatprep.subr.bf16.mxu0 0
  %133 = vmatpush1.bf16.msra.mxu0 %v103
  %134 = vmatprep.subr.bf16.mxu0 0
  %135 = vmatpush1.bf16.msra.mxu0 %v102
  %136 = vmatprep.subr.bf16.mxu0 0
  %137 = vmatpush2.bf16.msra.mxu0 0
  %138 = vmatprep.subr.bf16.mxu0 0
  %139 = vmatpush2.bf16.msra.mxu0 0
  %140 = vmatprep.subr.bf16.mxu0 0
  %141 = vmatpush2.bf16.msra.mxu0 0
  %142 = vmatprep.subr.bf16.mxu0 0
  %143 = vmatpush2.bf16.msra.mxu0 0
  %144 = vmatprep.subr.bf16.mxu0 0
  %145 = vmatpush2.bf16.msra.mxu0 0
  %146 = vmatprep.subr.bf16.mxu0 0
  %147 = vmatpush2.bf16.msra.mxu0 0
  %148 = vmatprep.subr.bf16.mxu0 0
  %149 = vmatpush2.bf16.msra.mxu0 0
  %150 = vmatprep.subr.bf16.mxu0 0
  %151 = vmatpush2.bf16.msra.mxu0 0
  %152 = vmatprep.mubr.bf16.mxu0 0
  %153 = vmatmul.mubr.bf16.gmra.mxu0 %v112
  %v154 = vpop.f32.mrf.mxu0
  %v155 = vadd.f32 %v65, %v154
  %v156 = vpop.f32.mrf.mxu0
  %v157 = vpop.f32.mrf.mxu0
  %v158 = vadd.f32 %v66, %v157
  %v159 = vpop.f32.mrf.mxu0
  %160 = vmatprep.mubr.bf16.mxu0 0
  %161 = vmatmul.mubr.bf16.gmra.mxu0 %v115
  %v162 = vpop.f32.mrf.mxu0
  %v163 = vadd.f32 %v67, %v162
  %v164 = vpop.f32.mrf.mxu0
  %v165 = vpop.f32.mrf.mxu0
  %v166 = vadd.f32 %v68, %v165
  %v167 = vpop.f32.mrf.mxu0
  %168 = vmatprep.mubr.bf16.mxu0 0
  %169 = vmatmul.mubr.bf16.gmra.mxu0 %v118
  %v170 = vpop.f32.mrf.mxu0
  %v171 = vadd.f32 %v69, %v170
  %v172 = vpop.f32.mrf.mxu0
  %v173 = vpop.f32.mrf.mxu0
  %v174 = vadd.f32 %v70, %v173
  %v175 = vpop.f32.mrf.mxu0
  %176 = vdwg.mxu0
  %v177 = vld [vmem:[%s3] sm:$0xff]
  %v178 = vld [vmem:[%s3 + $0x8] sm:$0xff]
  %v179 = vld [vmem:[%s3 + $0x10] sm:$0xff]
  %v180 = vld [vmem:[%s3 + $0x18] sm:$0xff]
  %v181 = vld [vmem:[%s4] sm:$0xff]
  %v182 = vpack.c.bf16 %v158, %v155
  %v183 = vpack.c.bf16 %v166, %v163
  %v184 = vpack.c.bf16 %v174, %v171
  %v185 = vld [vmem:[%s5] sm:$0xf]
  %v186 = vld [vmem:[%s5 + $0x4] sm:$0xf]
  %v187 = vld [vmem:[%s5 + $0x8] sm:$0xf]
  %v188 = vld [vmem:[%s5 + $0xc] sm:$0xf]
  %v189 = vld [vmem:[%s12] sm:$0x1]
  %v190 = vlaneseq
  %v191 = vshrl.u32 %v190, 7
  %v192 = vsub.s32 0, %v191
  %v193 = vrot.slane %v189, %v192
  %v198 = vunpack.c.l.b16 %v185
  %v199 = vunpack.c.l.b16 %v186
  %v200 = vunpack.c.l.b16 %v187
  %v201 = vunpack.c.l.b16 %v188
  %v202 = vpack.c.b16 %v199, %v198
  %v203 = vpack.c.b16 %v201, %v200
  %vm206 = vcmask 261120
  %v208 = vsel %vm206, %v182, 0
  %v211 = vsel %vm206, %v183, 0
  %v214 = vsel %vm206, %v184, 0
  %216 = vmatprep.subr.bf16.mxu0 0
  %217 = vmatpush1.bf16.msra.mxu0 0
  %218 = vmatprep.subr.bf16.mxu0 0
  %219 = vmatpush1.bf16.msra.mxu0 0
  %220 = vmatprep.subr.bf16.mxu0 0
  %221 = vmatpush1.bf16.msra.mxu0 0
  %222 = vmatprep.subr.bf16.mxu0 0
  %223 = vmatpush1.bf16.msra.mxu0 0
  %224 = vmatprep.subr.bf16.mxu0 0
  %225 = vmatpush1.bf16.msra.mxu0 0
  %226 = vmatprep.subr.bf16.mxu0 0
  %227 = vmatpush1.bf16.msra.mxu0 0
  %228 = vmatprep.subr.bf16.mxu0 0
  %229 = vmatpush1.bf16.msra.mxu0 %v203
  %230 = vmatprep.subr.bf16.mxu0 0
  %231 = vmatpush1.bf16.msra.mxu0 %v202
  %232 = vmatprep.subr.bf16.mxu0 0
  %233 = vmatpush2.bf16.msra.mxu0 0
  %234 = vmatprep.subr.bf16.mxu0 0
  %235 = vmatpush2.bf16.msra.mxu0 0
  %236 = vmatprep.subr.bf16.mxu0 0
  %237 = vmatpush2.bf16.msra.mxu0 0
  %238 = vmatprep.subr.bf16.mxu0 0
  %239 = vmatpush2.bf16.msra.mxu0 0
  %240 = vmatprep.subr.bf16.mxu0 0
  %241 = vmatpush2.bf16.msra.mxu0 0
  %242 = vmatprep.subr.bf16.mxu0 0
  %243 = vmatpush2.bf16.msra.mxu0 0
  %244 = vmatprep.subr.bf16.mxu0 0
  %245 = vmatpush2.bf16.msra.mxu0 0
  %246 = vmatprep.subr.bf16.mxu0 0
  %247 = vmatpush2.bf16.msra.mxu0 0
  %248 = vmatprep.mubr.bf16.mxu0 0
  %249 = vmatmul.mubr.bf16.gmra.mxu0 %v208
  %v250 = vpop.f32.mrf.mxu0
  %v251 = vadd.f32 %v193, %v250
  %v252 = vpop.f32.mrf.mxu0
  %v253 = vpop.f32.mrf.mxu0
  %v254 = vadd.f32 %v193, %v253
  %v255 = vpop.f32.mrf.mxu0
  %256 = vmatprep.mubr.bf16.mxu0 0
  %257 = vmatmul.mubr.bf16.gmra.mxu0 %v211
  %v258 = vpop.f32.mrf.mxu0
  %v259 = vadd.f32 %v193, %v258
  %v260 = vpop.f32.mrf.mxu0
  %v261 = vpop.f32.mrf.mxu0
  %v262 = vadd.f32 %v193, %v261
  %v263 = vpop.f32.mrf.mxu0
  %264 = vmatprep.mubr.bf16.mxu0 0
  %265 = vmatmul.mubr.bf16.gmra.mxu0 %v214
  %v266 = vpop.f32.mrf.mxu0
  %v267 = vadd.f32 %v193, %v266
  %v268 = vpop.f32.mrf.mxu0
  %v269 = vpop.f32.mrf.mxu0
  %v270 = vadd.f32 %v193, %v269
  %v271 = vpop.f32.mrf.mxu0
  %272 = vdwg.mxu0
  %v273 = vld [vmem:[%s6] sm:$0xf]
  %v274 = vld [vmem:[%s6 + $0x4] sm:$0xf]
  %v275 = vld [vmem:[%s6 + $0x8] sm:$0xf]
  %v276 = vld [vmem:[%s6 + $0xc] sm:$0xf]
  %v277 = vld [vmem:[%s12 + $0x1] sm:$0x1]
  %v278 = vlaneseq
  %v279 = vshrl.u32 %v278, 7
  %v280 = vsub.s32 0, %v279
  %v281 = vrot.slane %v277, %v280
  %v286 = vunpack.c.l.b16 %v273
  %v287 = vunpack.c.l.b16 %v274
  %v288 = vunpack.c.l.b16 %v275
  %v289 = vunpack.c.l.b16 %v276
  %v290 = vpack.c.b16 %v287, %v286
  %v291 = vpack.c.b16 %v289, %v288
  %294 = vmatprep.subr.bf16.mxu0 0
  %295 = vmatpush1.bf16.msra.mxu0 0
  %296 = vmatprep.subr.bf16.mxu0 0
  %297 = vmatpush1.bf16.msra.mxu0 0
  %298 = vmatprep.subr.bf16.mxu0 0
  %299 = vmatpush1.bf16.msra.mxu0 0
  %300 = vmatprep.subr.bf16.mxu0 0
  %301 = vmatpush1.bf16.msra.mxu0 0
  %302 = vmatprep.subr.bf16.mxu0 0
  %303 = vmatpush1.bf16.msra.mxu0 0
  %304 = vmatprep.subr.bf16.mxu0 0
  %305 = vmatpush1.bf16.msra.mxu0 0
  %306 = vmatprep.subr.bf16.mxu0 0
  %307 = vmatpush1.bf16.msra.mxu0 %v291
  %308 = vmatprep.subr.bf16.mxu0 0
  %309 = vmatpush1.bf16.msra.mxu0 %v290
  %310 = vmatprep.subr.bf16.mxu0 0
  %311 = vmatpush2.bf16.msra.mxu0 0
  %312 = vmatprep.subr.bf16.mxu0 0
  %313 = vmatpush2.bf16.msra.mxu0 0
  %314 = vmatprep.subr.bf16.mxu0 0
  %315 = vmatpush2.bf16.msra.mxu0 0
  %316 = vmatprep.subr.bf16.mxu0 0
  %317 = vmatpush2.bf16.msra.mxu0 0
  %318 = vmatprep.subr.bf16.mxu0 0
  %319 = vmatpush2.bf16.msra.mxu0 0
  %320 = vmatprep.subr.bf16.mxu0 0
  %321 = vmatpush2.bf16.msra.mxu0 0
  %322 = vmatprep.subr.bf16.mxu0 0
  %323 = vmatpush2.bf16.msra.mxu0 0
  %324 = vmatprep.subr.bf16.mxu0 0
  %325 = vmatpush2.bf16.msra.mxu0 0
  %326 = vmatprep.mubr.bf16.mxu0 0
  %327 = vmatmul.mubr.bf16.gmra.mxu0 %v208
  %v328 = vpop.f32.mrf.mxu0
  %v329 = vadd.f32 %v281, %v328
  %v330 = vpop.f32.mrf.mxu0
  %v331 = vpop.f32.mrf.mxu0
  %v332 = vadd.f32 %v281, %v331
  %v333 = vpop.f32.mrf.mxu0
  %334 = vmatprep.mubr.bf16.mxu0 0
  %335 = vmatmul.mubr.bf16.gmra.mxu0 %v211
  %v336 = vpop.f32.mrf.mxu0
  %v337 = vadd.f32 %v281, %v336
  %v338 = vpop.f32.mrf.mxu0
  %v339 = vpop.f32.mrf.mxu0
  %v340 = vadd.f32 %v281, %v339
  %v341 = vpop.f32.mrf.mxu0
  %342 = vmatprep.mubr.bf16.mxu0 0
  %343 = vmatmul.mubr.bf16.gmra.mxu0 %v214
  %v344 = vpop.f32.mrf.mxu0
  %v345 = vadd.f32 %v281, %v344
  %v346 = vpop.f32.mrf.mxu0
  %v347 = vpop.f32.mrf.mxu0
  %v348 = vadd.f32 %v281, %v347
  %v349 = vpop.f32.mrf.mxu0
  %350 = vdwg.mxu0
  %v351 = vld [vmem:[%s7] sm:$0xf]
  %v352 = vld [vmem:[%s7 + $0x4] sm:$0xf]
  %v353 = vld [vmem:[%s7 + $0x8] sm:$0xf]
  %v354 = vld [vmem:[%s7 + $0xc] sm:$0xf]
  %v355 = vld [vmem:[%s12 + $0x2] sm:$0x1]
  %v356 = vlaneseq
  %v357 = vshrl.u32 %v356, 7
  %v358 = vsub.s32 0, %v357
  %v359 = vrot.slane %v355, %v358
  %v364 = vunpack.c.l.b16 %v351
  %v365 = vunpack.c.l.b16 %v352
  %v366 = vunpack.c.l.b16 %v353
  %v367 = vunpack.c.l.b16 %v354
  %v368 = vpack.c.b16 %v365, %v364
  %v369 = vpack.c.b16 %v367, %v366
  %372 = vmatprep.subr.bf16.mxu0 0
  %373 = vmatpush1.bf16.msra.mxu0 0
  %374 = vmatprep.subr.bf16.mxu0 0
  %375 = vmatpush1.bf16.msra.mxu0 0
  %376 = vmatprep.subr.bf16.mxu0 0
  %377 = vmatpush1.bf16.msra.mxu0 0
  %378 = vmatprep.subr.bf16.mxu0 0
  %379 = vmatpush1.bf16.msra.mxu0 0
  %380 = vmatprep.subr.bf16.mxu0 0
  %381 = vmatpush1.bf16.msra.mxu0 0
  %382 = vmatprep.subr.bf16.mxu0 0
  %383 = vmatpush1.bf16.msra.mxu0 0
  %384 = vmatprep.subr.bf16.mxu0 0
  %385 = vmatpush1.bf16.msra.mxu0 %v369
  %386 = vmatprep.subr.bf16.mxu0 0
  %387 = vmatpush1.bf16.msra.mxu0 %v368
  %388 = vmatprep.subr.bf16.mxu0 0
  %389 = vmatpush2.bf16.msra.mxu0 0
  %390 = vmatprep.subr.bf16.mxu0 0
  %391 = vmatpush2.bf16.msra.mxu0 0
  %392 = vmatprep.subr.bf16.mxu0 0
  %393 = vmatpush2.bf16.msra.mxu0 0
  %394 = vmatprep.subr.bf16.mxu0 0
  %395 = vmatpush2.bf16.msra.mxu0 0
  %396 = vmatprep.subr.bf16.mxu0 0
  %397 = vmatpush2.bf16.msra.mxu0 0
  %398 = vmatprep.subr.bf16.mxu0 0
  %399 = vmatpush2.bf16.msra.mxu0 0
  %400 = vmatprep.subr.bf16.mxu0 0
  %401 = vmatpush2.bf16.msra.mxu0 0
  %402 = vmatprep.subr.bf16.mxu0 0
  %403 = vmatpush2.bf16.msra.mxu0 0
  %404 = vmatprep.mubr.bf16.mxu0 0
  %405 = vmatmul.mubr.bf16.gmra.mxu0 %v208
  %v406 = vpop.f32.mrf.mxu0
  %v407 = vadd.f32 %v359, %v406
  %v408 = vpop.f32.mrf.mxu0
  %v409 = vpop.f32.mrf.mxu0
  %v410 = vadd.f32 %v359, %v409
  %v411 = vpop.f32.mrf.mxu0
  %412 = vmatprep.mubr.bf16.mxu0 0
  %413 = vmatmul.mubr.bf16.gmra.mxu0 %v211
  %v414 = vpop.f32.mrf.mxu0
  %v415 = vadd.f32 %v359, %v414
  %v416 = vpop.f32.mrf.mxu0
  %v417 = vpop.f32.mrf.mxu0
  %v418 = vadd.f32 %v359, %v417
  %v419 = vpop.f32.mrf.mxu0
  %420 = vmatprep.mubr.bf16.mxu0 0
  %421 = vmatmul.mubr.bf16.gmra.mxu0 %v214
  %v422 = vpop.f32.mrf.mxu0
  %v423 = vadd.f32 %v359, %v422
  %v424 = vpop.f32.mrf.mxu0
  %v425 = vpop.f32.mrf.mxu0
  %v426 = vadd.f32 %v359, %v425
  %v427 = vpop.f32.mrf.mxu0
  %428 = vdwg.mxu0
  %v429 = vmul.f32 %v251, %v329
  %v430 = vmul.f32 %v254, %v332
  %v431 = vmul.f32 %v259, %v337
  %v432 = vmul.f32 %v262, %v340
  %v433 = vmul.f32 %v267, %v345
  %v434 = vmul.f32 %v270, %v348
  %v436 = vsel %vm206, %v429, 0
  %v439 = vsel %vm206, %v430, 0
  %v442 = vsel %vm206, %v431, 0
  %v445 = vsel %vm206, %v432, 0
  %v448 = vsel %vm206, %v433, 0
  %v451 = vsel %vm206, %v434, 0
  %453 = vmatprep.subr.mxu0 0.0
  %454 = vmatpush1.msra.mxu0 0.0
  %455 = vmatprep.subr.mxu0 0.0
  %456 = vmatpush1.msra.mxu0 0.0
  %457 = vmatprep.subr.mxu0 0.0
  %458 = vmatpush1.msra.mxu0 0.0
  %459 = vmatprep.subr.mxu0 0.0
  %460 = vmatpush1.msra.mxu0 0.0
  %461 = vmatprep.subr.mxu0 0.0
  %462 = vmatpush1.msra.mxu0 0.0
  %463 = vmatprep.subr.mxu0 0.0
  %464 = vmatpush1.msra.mxu0 0.0
  %465 = vmatprep.subr.mxu0 0.0
  %466 = vmatpush1.msra.mxu0 0.0
  %467 = vmatprep.subr.mxu0 0.0
  %468 = vmatpush1.msra.mxu0 0.0
  %469 = vmatprep.subr.mxu0 0.0
  %470 = vmatpush1.msra.mxu0 0.0
  %471 = vmatprep.subr.mxu0 0.0
  %472 = vmatpush1.msra.mxu0 0.0
  %473 = vmatprep.subr.mxu0 0.0
  %474 = vmatpush1.msra.mxu0 0.0
  %475 = vmatprep.subr.mxu0 0.0
  %476 = vmatpush1.msra.mxu0 0.0
  %477 = vmatprep.subr.mxu0 0.0
  %478 = vmatpush1.msra.mxu0 %v180
  %479 = vmatprep.subr.mxu0 0.0
  %480 = vmatpush1.msra.mxu0 %v179
  %481 = vmatprep.subr.mxu0 0.0
  %482 = vmatpush1.msra.mxu0 %v178
  %483 = vmatprep.subr.mxu0 0.0
  %484 = vmatpush1.msra.mxu0 %v177
  %485 = vmatprep.subr.mxu0 0.0
  %486 = vmatpush2.msra.mxu0 0.0
  %487 = vmatprep.subr.mxu0 0.0
  %488 = vmatpush2.msra.mxu0 0.0
  %489 = vmatprep.subr.mxu0 0.0
  %490 = vmatpush2.msra.mxu0 0.0
  %491 = vmatprep.subr.mxu0 0.0
  %492 = vmatpush2.msra.mxu0 0.0
  %493 = vmatprep.subr.mxu0 0.0
  %494 = vmatpush2.msra.mxu0 0.0
  %495 = vmatprep.subr.mxu0 0.0
  %496 = vmatpush2.msra.mxu0 0.0
  %497 = vmatprep.subr.mxu0 0.0
  %498 = vmatpush2.msra.mxu0 0.0
  %499 = vmatprep.subr.mxu0 0.0
  %500 = vmatpush2.msra.mxu0 0.0
  %501 = vmatprep.subr.mxu0 0.0
  %502 = vmatpush2.msra.mxu0 0.0
  %503 = vmatprep.subr.mxu0 0.0
  %504 = vmatpush2.msra.mxu0 0.0
  %505 = vmatprep.subr.mxu0 0.0
  %506 = vmatpush2.msra.mxu0 0.0
  %507 = vmatprep.subr.mxu0 0.0
  %508 = vmatpush2.msra.mxu0 0.0
  %509 = vmatprep.subr.mxu0 0.0
  %510 = vmatpush2.msra.mxu0 0.0
  %511 = vmatprep.subr.mxu0 0.0
  %512 = vmatpush2.msra.mxu0 0.0
  %513 = vmatprep.subr.mxu0 0.0
  %514 = vmatpush2.msra.mxu0 0.0
  %515 = vmatprep.subr.mxu0 0.0
  %516 = vmatpush2.msra.mxu0 0.0
  %517 = vmatprep.mubr.f32.mxu0 0.0
  %518 = vmatmul.mubr.f32.gmra.mxu0 %v436
  %v519 = vpop.f32.mrf.mxu0
  %v520 = vadd.f32 0.0, %v519
  %v521 = vpop.f32.mrf.mxu0
  %522 = vmatprep.mubr.f32.mxu0 0.0
  %523 = vmatmul.mubr.f32.gmra.mxu0 %v439
  %v524 = vpop.f32.mrf.mxu0
  %v525 = vadd.f32 0.0, %v524
  %v526 = vpop.f32.mrf.mxu0
  %527 = vmatprep.mubr.f32.mxu0 0.0
  %528 = vmatmul.mubr.f32.gmra.mxu0 %v442
  %v529 = vpop.f32.mrf.mxu0
  %v530 = vadd.f32 0.0, %v529
  %v531 = vpop.f32.mrf.mxu0
  %532 = vmatprep.mubr.f32.mxu0 0.0
  %533 = vmatmul.mubr.f32.gmra.mxu0 %v445
  %v534 = vpop.f32.mrf.mxu0
  %v535 = vadd.f32 0.0, %v534
  %v536 = vpop.f32.mrf.mxu0
  %537 = vmatprep.mubr.f32.mxu0 0.0
  %538 = vmatmul.mubr.f32.gmra.mxu0 %v448
  %v539 = vpop.f32.mrf.mxu0
  %v540 = vadd.f32 0.0, %v539
  %v541 = vpop.f32.mrf.mxu0
  %542 = vmatprep.mubr.f32.mxu0 0.0
  %543 = vmatmul.mubr.f32.gmra.mxu0 %v451
  %v544 = vpop.f32.mrf.mxu0
  %v545 = vadd.f32 0.0, %v544
  %v546 = vpop.f32.mrf.mxu0
  %547 = vdwg.mxu0
  %v548 = vmul.f32 %v251, %v340
  %v549 = vmul.f32 %v254, %v345
  %v550 = vmul.f32 %v259, %v348
  %v551 = vmul.f32 %v262, %v329
  %v552 = vmul.f32 %v267, %v332
  %v553 = vmul.f32 %v270, %v337
  %v555 = vsel %vm206, %v548, 0
  %v558 = vsel %vm206, %v549, 0
  %v561 = vsel %vm206, %v550, 0
  %v564 = vsel %vm206, %v551, 0
  %v567 = vsel %vm206, %v552, 0
  %v570 = vsel %vm206, %v553, 0
  %572 = vmatprep.subr.mxu0 0.0
  %573 = vmatpush1.msra.mxu0 0.0
  %574 = vmatprep.subr.mxu0 0.0
  %575 = vmatpush1.msra.mxu0 0.0
  %576 = vmatprep.subr.mxu0 0.0
  %577 = vmatpush1.msra.mxu0 0.0
  %578 = vmatprep.subr.mxu0 0.0
  %579 = vmatpush1.msra.mxu0 0.0
  %580 = vmatprep.subr.mxu0 0.0
  %581 = vmatpush1.msra.mxu0 0.0
  %582 = vmatprep.subr.mxu0 0.0
  %583 = vmatpush1.msra.mxu0 0.0
  %584 = vmatprep.subr.mxu0 0.0
  %585 = vmatpush1.msra.mxu0 0.0
  %586 = vmatprep.subr.mxu0 0.0
  %587 = vmatpush1.msra.mxu0 0.0
  %588 = vmatprep.subr.mxu0 0.0
  %589 = vmatpush1.msra.mxu0 0.0
  %590 = vmatprep.subr.mxu0 0.0
  %591 = vmatpush1.msra.mxu0 0.0
  %592 = vmatprep.subr.mxu0 0.0
  %593 = vmatpush1.msra.mxu0 0.0
  %594 = vmatprep.subr.mxu0 0.0
  %595 = vmatpush1.msra.mxu0 0.0
  %596 = vmatprep.subr.mxu0 0.0
  %597 = vmatpush1.msra.mxu0 %v180
  %598 = vmatprep.subr.mxu0 0.0
  %599 = vmatpush1.msra.mxu0 %v179
  %600 = vmatprep.subr.mxu0 0.0
  %601 = vmatpush1.msra.mxu0 %v178
  %602 = vmatprep.subr.mxu0 0.0
  %603 = vmatpush1.msra.mxu0 %v177
  %604 = vmatprep.subr.mxu0 0.0
  %605 = vmatpush2.msra.mxu0 0.0
  %606 = vmatprep.subr.mxu0 0.0
  %607 = vmatpush2.msra.mxu0 0.0
  %608 = vmatprep.subr.mxu0 0.0
  %609 = vmatpush2.msra.mxu0 0.0
  %610 = vmatprep.subr.mxu0 0.0
  %611 = vmatpush2.msra.mxu0 0.0
  %612 = vmatprep.subr.mxu0 0.0
  %613 = vmatpush2.msra.mxu0 0.0
  %614 = vmatprep.subr.mxu0 0.0
  %615 = vmatpush2.msra.mxu0 0.0
  %616 = vmatprep.subr.mxu0 0.0
  %617 = vmatpush2.msra.mxu0 0.0
  %618 = vmatprep.subr.mxu0 0.0
  %619 = vmatpush2.msra.mxu0 0.0
  %620 = vmatprep.subr.mxu0 0.0
  %621 = vmatpush2.msra.mxu0 0.0
  %622 = vmatprep.subr.mxu0 0.0
  %623 = vmatpush2.msra.mxu0 0.0
  %624 = vmatprep.subr.mxu0 0.0
  %625 = vmatpush2.msra.mxu0 0.0
  %626 = vmatprep.subr.mxu0 0.0
  %627 = vmatpush2.msra.mxu0 0.0
  %628 = vmatprep.subr.mxu0 0.0
  %629 = vmatpush2.msra.mxu0 0.0
  %630 = vmatprep.subr.mxu0 0.0
  %631 = vmatpush2.msra.mxu0 0.0
  %632 = vmatprep.subr.mxu0 0.0
  %633 = vmatpush2.msra.mxu0 0.0
  %634 = vmatprep.subr.mxu0 0.0
  %635 = vmatpush2.msra.mxu0 0.0
  %636 = vmatprep.mubr.f32.mxu0 0.0
  %637 = vmatmul.mubr.f32.gmra.mxu0 %v555
  %v638 = vpop.f32.mrf.mxu0
  %v639 = vadd.f32 0.0, %v638
  %v640 = vpop.f32.mrf.mxu0
  %641 = vmatprep.mubr.f32.mxu0 0.0
  %642 = vmatmul.mubr.f32.gmra.mxu0 %v558
  %v643 = vpop.f32.mrf.mxu0
  %v644 = vadd.f32 0.0, %v643
  %v645 = vpop.f32.mrf.mxu0
  %646 = vmatprep.mubr.f32.mxu0 0.0
  %647 = vmatmul.mubr.f32.gmra.mxu0 %v561
  %v648 = vpop.f32.mrf.mxu0
  %v649 = vadd.f32 0.0, %v648
  %v650 = vpop.f32.mrf.mxu0
  %651 = vmatprep.mubr.f32.mxu0 0.0
  %652 = vmatmul.mubr.f32.gmra.mxu0 %v564
  %v653 = vpop.f32.mrf.mxu0
  %v654 = vadd.f32 0.0, %v653
  %v655 = vpop.f32.mrf.mxu0
  %656 = vmatprep.mubr.f32.mxu0 0.0
  %657 = vmatmul.mubr.f32.gmra.mxu0 %v567
  %v658 = vpop.f32.mrf.mxu0
  %v659 = vadd.f32 0.0, %v658
  %v660 = vpop.f32.mrf.mxu0
  %661 = vmatprep.mubr.f32.mxu0 0.0
  %662 = vmatmul.mubr.f32.gmra.mxu0 %v570
  %v663 = vpop.f32.mrf.mxu0
  %v664 = vadd.f32 0.0, %v663
  %v665 = vpop.f32.mrf.mxu0
  %666 = vdwg.mxu0
  %v667 = vmax.f32 %v520, %v639
  %v668 = vmax.f32 %v525, %v644
  %v669 = vmax.f32 %v530, %v649
  %v670 = vmax.f32 %v535, %v654
  %v671 = vmax.f32 %v540, %v659
  %v672 = vmax.f32 %v545, %v664
  %v673 = vsub.f32 %v520, %v667
  %v674 = vsub.f32 %v525, %v668
  %v675 = vsub.f32 %v530, %v669
  %v676 = vsub.f32 %v535, %v670
  %v677 = vsub.f32 %v540, %v671
  %v678 = vsub.f32 %v545, %v672
  %v679 = vmul.f32 %v673, 1.442695
  %v680 = vpow.pop %v679
  %v681 = vmul.f32 %v674, 1.442695
  %v682 = vpow.pop %v681
  %v683 = vmul.f32 %v675, 1.442695
  %v684 = vpow.pop %v683
  %v685 = vmul.f32 %v676, 1.442695
  %v686 = vpow.pop %v685
  %v687 = vmul.f32 %v677, 1.442695
  %v688 = vpow.pop %v687
  %v689 = vmul.f32 %v678, 1.442695
  %v690 = vpow.pop %v689
  %v691 = vsub.f32 %v639, %v667
  %v692 = vsub.f32 %v644, %v668
  %v693 = vsub.f32 %v649, %v669
  %v694 = vsub.f32 %v654, %v670
  %v695 = vsub.f32 %v659, %v671
  %v696 = vsub.f32 %v664, %v672
  %v697 = vmul.f32 %v691, 1.442695
  %v698 = vpow.pop %v697
  %v699 = vmul.f32 %v692, 1.442695
  %v700 = vpow.pop %v699
  %v701 = vmul.f32 %v693, 1.442695
  %v702 = vpow.pop %v701
  %v703 = vmul.f32 %v694, 1.442695
  %v704 = vpow.pop %v703
  %v705 = vmul.f32 %v695, 1.442695
  %v706 = vpow.pop %v705
  %v707 = vmul.f32 %v696, 1.442695
  %v708 = vpow.pop %v707
  %v709 = vadd.f32 %v680, %v698
  %v710 = vadd.f32 %v682, %v700
  %v711 = vadd.f32 %v684, %v702
  %v712 = vadd.f32 %v686, %v704
  %v713 = vadd.f32 %v688, %v706
  %v714 = vadd.f32 %v690, %v708
  %v715 = vrcp.pop %v709
  %v716 = vmul.f32 1.0, %v715
  %v717 = vrcp.pop %v710
  %v718 = vmul.f32 1.0, %v717
  %v719 = vrcp.pop %v711
  %v720 = vmul.f32 1.0, %v719
  %v721 = vrcp.pop %v712
  %v722 = vmul.f32 1.0, %v721
  %v723 = vrcp.pop %v713
  %v724 = vmul.f32 1.0, %v723
  %v725 = vrcp.pop %v714
  %v726 = vmul.f32 1.0, %v725
  %v727 = vmul.f32 %v680, %v716
  %v728 = vmul.f32 %v682, %v718
  %v729 = vmul.f32 %v684, %v720
  %v730 = vmul.f32 %v686, %v722
  %v731 = vmul.f32 %v688, %v724
  %v732 = vmul.f32 %v690, %v726
  %vm733 = vcmask 64512
  %v735 = vsel %vm733, %v727, 0
  %v738 = vsel %vm733, %v728, 0
  %v741 = vsel %vm733, %v729, 0
  %v744 = vsel %vm733, %v730, 0
  %v747 = vsel %vm733, %v731, 0
  %v750 = vsel %vm733, %v732, 0
  %752 = vmatprep.subr.mxu0 0.0
  %753 = vmatpush1.msra.mxu0 0.0
  %754 = vmatprep.subr.mxu0 0.0
  %755 = vmatpush1.msra.mxu0 0.0
  %756 = vmatprep.subr.mxu0 0.0
  %757 = vmatpush1.msra.mxu0 0.0
  %758 = vmatprep.subr.mxu0 0.0
  %759 = vmatpush1.msra.mxu0 0.0
  %760 = vmatprep.subr.mxu0 0.0
  %761 = vmatpush1.msra.mxu0 0.0
  %762 = vmatprep.subr.mxu0 0.0
  %763 = vmatpush1.msra.mxu0 0.0
  %764 = vmatprep.subr.mxu0 0.0
  %765 = vmatpush1.msra.mxu0 0.0
  %766 = vmatprep.subr.mxu0 0.0
  %767 = vmatpush1.msra.mxu0 0.0
  %768 = vmatprep.subr.mxu0 0.0
  %769 = vmatpush1.msra.mxu0 0.0
  %770 = vmatprep.subr.mxu0 0.0
  %771 = vmatpush1.msra.mxu0 0.0
  %772 = vmatprep.subr.mxu0 0.0
  %773 = vmatpush1.msra.mxu0 0.0
  %774 = vmatprep.subr.mxu0 0.0
  %775 = vmatpush1.msra.mxu0 0.0
  %776 = vmatprep.subr.mxu0 0.0
  %777 = vmatpush1.msra.mxu0 0.0
  %778 = vmatprep.subr.mxu0 0.0
  %779 = vmatpush1.msra.mxu0 0.0
  %780 = vmatprep.subr.mxu0 0.0
  %781 = vmatpush1.msra.mxu0 0.0
  %782 = vmatprep.subr.mxu0 0.0
  %783 = vmatpush1.msra.mxu0 %v181
  %784 = vmatprep.subr.mxu0 0.0
  %785 = vmatpush2.msra.mxu0 0.0
  %786 = vmatprep.subr.mxu0 0.0
  %787 = vmatpush2.msra.mxu0 0.0
  %788 = vmatprep.subr.mxu0 0.0
  %789 = vmatpush2.msra.mxu0 0.0
  %790 = vmatprep.subr.mxu0 0.0
  %791 = vmatpush2.msra.mxu0 0.0
  %792 = vmatprep.subr.mxu0 0.0
  %793 = vmatpush2.msra.mxu0 0.0
  %794 = vmatprep.subr.mxu0 0.0
  %795 = vmatpush2.msra.mxu0 0.0
  %796 = vmatprep.subr.mxu0 0.0
  %797 = vmatpush2.msra.mxu0 0.0
  %798 = vmatprep.subr.mxu0 0.0
  %799 = vmatpush2.msra.mxu0 0.0
  %800 = vmatprep.subr.mxu0 0.0
  %801 = vmatpush2.msra.mxu0 0.0
  %802 = vmatprep.subr.mxu0 0.0
  %803 = vmatpush2.msra.mxu0 0.0
  %804 = vmatprep.subr.mxu0 0.0
  %805 = vmatpush2.msra.mxu0 0.0
  %806 = vmatprep.subr.mxu0 0.0
  %807 = vmatpush2.msra.mxu0 0.0
  %808 = vmatprep.subr.mxu0 0.0
  %809 = vmatpush2.msra.mxu0 0.0
  %810 = vmatprep.subr.mxu0 0.0
  %811 = vmatpush2.msra.mxu0 0.0
  %812 = vmatprep.subr.mxu0 0.0
  %813 = vmatpush2.msra.mxu0 0.0
  %814 = vmatprep.subr.mxu0 0.0
  %815 = vmatpush2.msra.mxu0 0.0
  %816 = vmatprep.mubr.f32.mxu0 0.0
  %817 = vmatmul.mubr.f32.gmra.mxu0 %v735
  %v818 = vpop.f32.mrf.mxu0
  %v819 = vadd.f32 0.0, %v818
  %v820 = vpop.f32.mrf.mxu0
  %821 = vmatprep.mubr.f32.mxu0 0.0
  %822 = vmatmul.mubr.f32.gmra.mxu0 %v738
  %v823 = vpop.f32.mrf.mxu0
  %v824 = vadd.f32 0.0, %v823
  %v825 = vpop.f32.mrf.mxu0
  %826 = vmatprep.mubr.f32.mxu0 0.0
  %827 = vmatmul.mubr.f32.gmra.mxu0 %v741
  %v828 = vpop.f32.mrf.mxu0
  %v829 = vadd.f32 0.0, %v828
  %v830 = vpop.f32.mrf.mxu0
  %831 = vmatprep.mubr.f32.mxu0 0.0
  %832 = vmatmul.mubr.f32.gmra.mxu0 %v744
  %v833 = vpop.f32.mrf.mxu0
  %v834 = vadd.f32 0.0, %v833
  %v835 = vpop.f32.mrf.mxu0
  %836 = vmatprep.mubr.f32.mxu0 0.0
  %837 = vmatmul.mubr.f32.gmra.mxu0 %v747
  %v838 = vpop.f32.mrf.mxu0
  %v839 = vadd.f32 0.0, %v838
  %v840 = vpop.f32.mrf.mxu0
  %841 = vmatprep.mubr.f32.mxu0 0.0
  %842 = vmatmul.mubr.f32.gmra.mxu0 %v750
  %v843 = vpop.f32.mrf.mxu0
  %v844 = vadd.f32 0.0, %v843
  %v845 = vpop.f32.mrf.mxu0
  %846 = vdwg.mxu0
  %v847 = vmul.f32 %v819, %v407
  %v848 = vmul.f32 %v824, %v410
  %v849 = vmul.f32 %v829, %v415
  %v850 = vmul.f32 %v834, %v418
  %v851 = vmul.f32 %v839, %v423
  %v852 = vmul.f32 %v844, %v426
  %v853 = vmul.f32 %v698, %v716
  %v854 = vmul.f32 %v700, %v718
  %v855 = vmul.f32 %v702, %v720
  %v856 = vmul.f32 %v704, %v722
  %v857 = vmul.f32 %v706, %v724
  %v858 = vmul.f32 %v708, %v726
  %v860 = vsel %vm733, %v853, 0
  %v863 = vsel %vm733, %v854, 0
  %v866 = vsel %vm733, %v855, 0
  %v869 = vsel %vm733, %v856, 0
  %v872 = vsel %vm733, %v857, 0
  %v875 = vsel %vm733, %v858, 0
  %877 = vmatprep.subr.mxu0 0.0
  %878 = vmatpush1.msra.mxu0 0.0
  %879 = vmatprep.subr.mxu0 0.0
  %880 = vmatpush1.msra.mxu0 0.0
  %881 = vmatprep.subr.mxu0 0.0
  %882 = vmatpush1.msra.mxu0 0.0
  %883 = vmatprep.subr.mxu0 0.0
  %884 = vmatpush1.msra.mxu0 0.0
  %885 = vmatprep.subr.mxu0 0.0
  %886 = vmatpush1.msra.mxu0 0.0
  %887 = vmatprep.subr.mxu0 0.0
  %888 = vmatpush1.msra.mxu0 0.0
  %889 = vmatprep.subr.mxu0 0.0
  %890 = vmatpush1.msra.mxu0 0.0
  %891 = vmatprep.subr.mxu0 0.0
  %892 = vmatpush1.msra.mxu0 0.0
  %893 = vmatprep.subr.mxu0 0.0
  %894 = vmatpush1.msra.mxu0 0.0
  %895 = vmatprep.subr.mxu0 0.0
  %896 = vmatpush1.msra.mxu0 0.0
  %897 = vmatprep.subr.mxu0 0.0
  %898 = vmatpush1.msra.mxu0 0.0
  %899 = vmatprep.subr.mxu0 0.0
  %900 = vmatpush1.msra.mxu0 0.0
  %901 = vmatprep.subr.mxu0 0.0
  %902 = vmatpush1.msra.mxu0 0.0
  %903 = vmatprep.subr.mxu0 0.0
  %904 = vmatpush1.msra.mxu0 0.0
  %905 = vmatprep.subr.mxu0 0.0
  %906 = vmatpush1.msra.mxu0 0.0
  %907 = vmatprep.subr.mxu0 0.0
  %908 = vmatpush1.msra.mxu0 %v181
  %909 = vmatprep.subr.mxu0 0.0
  %910 = vmatpush2.msra.mxu0 0.0
  %911 = vmatprep.subr.mxu0 0.0
  %912 = vmatpush2.msra.mxu0 0.0
  %913 = vmatprep.subr.mxu0 0.0
  %914 = vmatpush2.msra.mxu0 0.0
  %915 = vmatprep.subr.mxu0 0.0
  %916 = vmatpush2.msra.mxu0 0.0
  %917 = vmatprep.subr.mxu0 0.0
  %918 = vmatpush2.msra.mxu0 0.0
  %919 = vmatprep.subr.mxu0 0.0
  %920 = vmatpush2.msra.mxu0 0.0
  %921 = vmatprep.subr.mxu0 0.0
  %922 = vmatpush2.msra.mxu0 0.0
  %923 = vmatprep.subr.mxu0 0.0
  %924 = vmatpush2.msra.mxu0 0.0
  %925 = vmatprep.subr.mxu0 0.0
  %926 = vmatpush2.msra.mxu0 0.0
  %927 = vmatprep.subr.mxu0 0.0
  %928 = vmatpush2.msra.mxu0 0.0
  %929 = vmatprep.subr.mxu0 0.0
  %930 = vmatpush2.msra.mxu0 0.0
  %931 = vmatprep.subr.mxu0 0.0
  %932 = vmatpush2.msra.mxu0 0.0
  %933 = vmatprep.subr.mxu0 0.0
  %934 = vmatpush2.msra.mxu0 0.0
  %935 = vmatprep.subr.mxu0 0.0
  %936 = vmatpush2.msra.mxu0 0.0
  %937 = vmatprep.subr.mxu0 0.0
  %938 = vmatpush2.msra.mxu0 0.0
  %939 = vmatprep.subr.mxu0 0.0
  %940 = vmatpush2.msra.mxu0 0.0
  %941 = vmatprep.mubr.f32.mxu0 0.0
  %942 = vmatmul.mubr.f32.gmra.mxu0 %v860
  %v943 = vpop.f32.mrf.mxu0
  %v944 = vadd.f32 0.0, %v943
  %v945 = vpop.f32.mrf.mxu0
  %946 = vmatprep.mubr.f32.mxu0 0.0
  %947 = vmatmul.mubr.f32.gmra.mxu0 %v863
  %v948 = vpop.f32.mrf.mxu0
  %v949 = vadd.f32 0.0, %v948
  %v950 = vpop.f32.mrf.mxu0
  %951 = vmatprep.mubr.f32.mxu0 0.0
  %952 = vmatmul.mubr.f32.gmra.mxu0 %v866
  %v953 = vpop.f32.mrf.mxu0
  %v954 = vadd.f32 0.0, %v953
  %v955 = vpop.f32.mrf.mxu0
  %956 = vmatprep.mubr.f32.mxu0 0.0
  %957 = vmatmul.mubr.f32.gmra.mxu0 %v869
  %v958 = vpop.f32.mrf.mxu0
  %v959 = vadd.f32 0.0, %v958
  %v960 = vpop.f32.mrf.mxu0
  %961 = vmatprep.mubr.f32.mxu0 0.0
  %962 = vmatmul.mubr.f32.gmra.mxu0 %v872
  %v963 = vpop.f32.mrf.mxu0
  %v964 = vadd.f32 0.0, %v963
  %v965 = vpop.f32.mrf.mxu0
  %966 = vmatprep.mubr.f32.mxu0 0.0
  %967 = vmatmul.mubr.f32.gmra.mxu0 %v875
  %v968 = vpop.f32.mrf.mxu0
  %v969 = vadd.f32 0.0, %v968
  %v970 = vpop.f32.mrf.mxu0
  %971 = vdwg.mxu0
  %v972 = vmul.f32 %v944, %v418
  %v973 = vmul.f32 %v949, %v423
  %v974 = vmul.f32 %v954, %v426
  %v975 = vmul.f32 %v959, %v407
  %v976 = vmul.f32 %v964, %v410
  %v977 = vmul.f32 %v969, %v415
  %v978 = vadd.f32 %v847, %v972
  %v979 = vadd.f32 %v848, %v973
  %v980 = vadd.f32 %v849, %v974
  %v981 = vadd.f32 %v850, %v975
  %v982 = vadd.f32 %v851, %v976
  %v983 = vadd.f32 %v852, %v977
  %v984 = vpack.c.bf16 %v979, %v978
  %v985 = vpack.c.bf16 %v981, %v980
  %v986 = vpack.c.bf16 %v983, %v982
  %v987 = vld [vmem:[%s8] sm:$0xf]
  %v988 = vld [vmem:[%s8 + $0x4] sm:$0xf]
  %v989 = vld [vmem:[%s8 + $0x8] sm:$0xf]
  %v990 = vld [vmem:[%s8 + $0xc] sm:$0xf]
  %v991 = vld [vmem:[%s12 + $0x3] sm:$0x1]
  %v992 = vlaneseq
  %v993 = vshrl.u32 %v992, 7
  %v994 = vsub.s32 0, %v993
  %v995 = vrot.slane %v991, %v994
  %v1000 = vunpack.c.l.b16 %v987
  %v1001 = vunpack.c.l.b16 %v988
  %v1002 = vunpack.c.l.b16 %v989
  %v1003 = vunpack.c.l.b16 %v990
  %v1004 = vpack.c.b16 %v1001, %v1000
  %v1005 = vpack.c.b16 %v1003, %v1002
  %v1009 = vsel %vm206, %v984, 0
  %v1012 = vsel %vm206, %v985, 0
  %v1015 = vsel %vm206, %v986, 0
  %1017 = vmatprep.subr.bf16.mxu0 0
  %1018 = vmatpush1.bf16.msra.mxu0 0
  %1019 = vmatprep.subr.bf16.mxu0 0
  %1020 = vmatpush1.bf16.msra.mxu0 0
  %1021 = vmatprep.subr.bf16.mxu0 0
  %1022 = vmatpush1.bf16.msra.mxu0 0
  %1023 = vmatprep.subr.bf16.mxu0 0
  %1024 = vmatpush1.bf16.msra.mxu0 0
  %1025 = vmatprep.subr.bf16.mxu0 0
  %1026 = vmatpush1.bf16.msra.mxu0 0
  %1027 = vmatprep.subr.bf16.mxu0 0
  %1028 = vmatpush1.bf16.msra.mxu0 0
  %1029 = vmatprep.subr.bf16.mxu0 0
  %1030 = vmatpush1.bf16.msra.mxu0 %v1005
  %1031 = vmatprep.subr.bf16.mxu0 0
  %1032 = vmatpush1.bf16.msra.mxu0 %v1004
  %1033 = vmatprep.subr.bf16.mxu0 0
  %1034 = vmatpush2.bf16.msra.mxu0 0
  %1035 = vmatprep.subr.bf16.mxu0 0
  %1036 = vmatpush2.bf16.msra.mxu0 0
  %1037 = vmatprep.subr.bf16.mxu0 0
  %1038 = vmatpush2.bf16.msra.mxu0 0
  %1039 = vmatprep.subr.bf16.mxu0 0
  %1040 = vmatpush2.bf16.msra.mxu0 0
  %1041 = vmatprep.subr.bf16.mxu0 0
  %1042 = vmatpush2.bf16.msra.mxu0 0
  %1043 = vmatprep.subr.bf16.mxu0 0
  %1044 = vmatpush2.bf16.msra.mxu0 0
  %1045 = vmatprep.subr.bf16.mxu0 0
  %1046 = vmatpush2.bf16.msra.mxu0 0
  %1047 = vmatprep.subr.bf16.mxu0 0
  %1048 = vmatpush2.bf16.msra.mxu0 0
  %1049 = vmatprep.mubr.bf16.mxu0 0
  %1050 = vmatmul.mubr.bf16.gmra.mxu0 %v1009
  %v1051 = vpop.f32.mrf.mxu0
  %v1052 = vadd.f32 %v995, %v1051
  %v1053 = vpop.f32.mrf.mxu0
  %v1054 = vpop.f32.mrf.mxu0
  %v1055 = vadd.f32 %v995, %v1054
  %v1056 = vpop.f32.mrf.mxu0
  %1057 = vmatprep.mubr.bf16.mxu0 0
  %1058 = vmatmul.mubr.bf16.gmra.mxu0 %v1012
  %v1059 = vpop.f32.mrf.mxu0
  %v1060 = vadd.f32 %v995, %v1059
  %v1061 = vpop.f32.mrf.mxu0
  %v1062 = vpop.f32.mrf.mxu0
  %v1063 = vadd.f32 %v995, %v1062
  %v1064 = vpop.f32.mrf.mxu0
  %1065 = vmatprep.mubr.bf16.mxu0 0
  %1066 = vmatmul.mubr.bf16.gmra.mxu0 %v1015
  %v1067 = vpop.f32.mrf.mxu0
  %v1068 = vadd.f32 %v995, %v1067
  %v1069 = vpop.f32.mrf.mxu0
  %v1070 = vpop.f32.mrf.mxu0
  %v1071 = vadd.f32 %v995, %v1070
  %v1072 = vpop.f32.mrf.mxu0
  %1073 = vdwg.mxu0
  %v1074 = vadd.f32 %v155, %v1052
  %v1075 = vadd.f32 %v158, %v1055
  %v1076 = vadd.f32 %v163, %v1060
  %v1077 = vadd.f32 %v166, %v1063
  %v1078 = vadd.f32 %v171, %v1068
  %v1079 = vadd.f32 %v174, %v1071
  %v1080 = vld [vmem:[%s12 + $0x5] sm:$0x1]
  %v1081 = vld [vmem:[%s12 + $0x6] sm:$0x1]
  %v1082 = vsel %vm206, %v1074, 0.0
  %1083 = vadd.xlane.f32.xlu0 %v1082
  %v1084 = vpop.xlane.xlu0 %1083
  %v1085 = vsel %vm206, %v1075, 0.0
  %1086 = vadd.xlane.f32.xlu0 %v1085
  %v1087 = vpop.xlane.xlu0 %1086
  %v1088 = vsel %vm206, %v1076, 0.0
  %1089 = vadd.xlane.f32.xlu0 %v1088
  %v1090 = vpop.xlane.xlu0 %1089
  %v1091 = vsel %vm206, %v1077, 0.0
  %1092 = vadd.xlane.f32.xlu0 %v1091
  %v1093 = vpop.xlane.xlu0 %1092
  %v1094 = vsel %vm206, %v1078, 0.0
  %1095 = vadd.xlane.f32.xlu0 %v1094
  %v1096 = vpop.xlane.xlu0 %1095
  %v1097 = vsel %vm206, %v1079, 0.0
  %1098 = vadd.xlane.f32.xlu0 %v1097
  %v1099 = vpop.xlane.xlu0 %1098
  %v1100 = vrcp.pop 32.0
  %v1101 = vmul.f32 %v1084, %v1100
  %v1102 = vmul.f32 %v1087, %v1100
  %v1103 = vmul.f32 %v1090, %v1100
  %v1104 = vmul.f32 %v1093, %v1100
  %v1105 = vmul.f32 %v1096, %v1100
  %v1106 = vmul.f32 %v1099, %v1100
  %v1107 = vsub.f32 %v1074, %v1101
  %v1108 = vsub.f32 %v1075, %v1102
  %v1109 = vsub.f32 %v1076, %v1103
  %v1110 = vsub.f32 %v1077, %v1104
  %v1111 = vsub.f32 %v1078, %v1105
  %v1112 = vsub.f32 %v1079, %v1106
  %v1113 = vmul.f32 %v1107, %v1107
  %v1114 = vmul.f32 %v1108, %v1108
  %v1115 = vmul.f32 %v1109, %v1109
  %v1116 = vmul.f32 %v1110, %v1110
  %v1117 = vmul.f32 %v1111, %v1111
  %v1118 = vmul.f32 %v1112, %v1112
  %v1119 = vsel %vm206, %v1113, 0.0
  %1120 = vadd.xlane.f32.xlu0 %v1119
  %v1121 = vpop.xlane.xlu0 %1120
  %v1122 = vsel %vm206, %v1114, 0.0
  %1123 = vadd.xlane.f32.xlu0 %v1122
  %v1124 = vpop.xlane.xlu0 %1123
  %v1125 = vsel %vm206, %v1115, 0.0
  %1126 = vadd.xlane.f32.xlu0 %v1125
  %v1127 = vpop.xlane.xlu0 %1126
  %v1128 = vsel %vm206, %v1116, 0.0
  %1129 = vadd.xlane.f32.xlu0 %v1128
  %v1130 = vpop.xlane.xlu0 %1129
  %v1131 = vsel %vm206, %v1117, 0.0
  %1132 = vadd.xlane.f32.xlu0 %v1131
  %v1133 = vpop.xlane.xlu0 %1132
  %v1134 = vsel %vm206, %v1118, 0.0
  %1135 = vadd.xlane.f32.xlu0 %v1134
  %v1136 = vpop.xlane.xlu0 %1135
  %v1137 = vmul.f32 %v1121, %v1100
  %v1138 = vmul.f32 %v1124, %v1100
  %v1139 = vmul.f32 %v1127, %v1100
  %v1140 = vmul.f32 %v1130, %v1100
  %v1141 = vmul.f32 %v1133, %v1100
  %v1142 = vmul.f32 %v1136, %v1100
  %v1143 = vadd.f32 %v1137, 1e-05
  %v1144 = vadd.f32 %v1138, 1e-05
  %v1145 = vadd.f32 %v1139, 1e-05
  %v1146 = vadd.f32 %v1140, 1e-05
  %v1147 = vadd.f32 %v1141, 1e-05
  %v1148 = vadd.f32 %v1142, 1e-05
  %v1149 = vrsqrt.pop %v1143
  %v1150 = vrsqrt.pop %v1144
  %v1151 = vrsqrt.pop %v1145
  %v1152 = vrsqrt.pop %v1146
  %v1153 = vrsqrt.pop %v1147
  %v1154 = vrsqrt.pop %v1148
  %v1155 = vmul.f32 %v1107, %v1149
  %v1156 = vmul.f32 %v1108, %v1150
  %v1157 = vmul.f32 %v1109, %v1151
  %v1158 = vmul.f32 %v1110, %v1152
  %v1159 = vmul.f32 %v1111, %v1153
  %v1160 = vmul.f32 %v1112, %v1154
  %v1161 = vlaneseq
  %v1162 = vshrl.u32 %v1161, 7
  %v1163 = vsub.s32 0, %v1162
  %v1164 = vrot.slane %v1080, %v1163
  %v1165 = vmul.f32 %v1155, %v1164
  %v1166 = vmul.f32 %v1156, %v1164
  %v1167 = vmul.f32 %v1157, %v1164
  %v1168 = vmul.f32 %v1158, %v1164
  %v1169 = vmul.f32 %v1159, %v1164
  %v1170 = vmul.f32 %v1160, %v1164
  %v1171 = vlaneseq
  %v1172 = vshrl.u32 %v1171, 7
  %v1173 = vsub.s32 0, %v1172
  %v1174 = vrot.slane %v1081, %v1173
  %v1175 = vadd.f32 %v1165, %v1174
  %v1176 = vadd.f32 %v1166, %v1174
  %v1177 = vadd.f32 %v1167, %v1174
  %v1178 = vadd.f32 %v1168, %v1174
  %v1179 = vadd.f32 %v1169, %v1174
  %v1180 = vadd.f32 %v1170, %v1174
  %v1181 = vpack.c.bf16 %v1176, %v1175
  %v1182 = vpack.c.bf16 %v1178, %v1177
  %v1183 = vpack.c.bf16 %v1180, %v1179
  %v1184 = vld [vmem:[%s9] sm:$0xff]
  %v1185 = vld [vmem:[%s9 + $0x8] sm:$0xff]
  %v1186 = vld [vmem:[%s9 + $0x40] sm:$0xff]
  %v1187 = vld [vmem:[%s9 + $0x48] sm:$0xff]
  %v1188 = vld [vmem:[%s9 + $0x80] sm:$0xff]
  %v1189 = vld [vmem:[%s9 + $0x88] sm:$0xff]
  %v1190 = vld [vmem:[%s9 + $0xc0] sm:$0xff]
  %v1191 = vld [vmem:[%s9 + $0xc8] sm:$0xff]
  %v1192 = vld [vmem:[%s10] sm:$0xf]
  %v1194 = vlaneseq
  %v1195 = vshrl.u32 %v1194, 7
  %v1196 = vsub.s32 0, %v1195
  %v1197 = vrot.slane %v1192, %v1196
  %v1198 = vlaneseq
  %v1199 = vshrl.u32 %v1198, 7
  %v1200 = vsub.s32 1, %v1199
  %v1201 = vrot.slane %v1192, %v1200
  %v1202 = vlaneseq
  %v1203 = vshrl.u32 %v1202, 7
  %v1204 = vsub.s32 2, %v1203
  %v1205 = vrot.slane %v1192, %v1204
  %v1206 = vlaneseq
  %v1207 = vshrl.u32 %v1206, 7
  %v1208 = vsub.s32 3, %v1207
  %v1209 = vrot.slane %v1192, %v1208
  %v1222 = vunpack.c.l.b16 %v1184
  %v1223 = vunpack.c.h.b16 %v1184
  %v1224 = vunpack.c.l.b16 %v1185
  %v1225 = vunpack.c.h.b16 %v1185
  %v1226 = vunpack.c.l.b16 %v1186
  %v1227 = vunpack.c.h.b16 %v1186
  %v1228 = vunpack.c.l.b16 %v1187
  %v1229 = vunpack.c.h.b16 %v1187
  %v1230 = vunpack.c.l.b16 %v1188
  %v1231 = vunpack.c.h.b16 %v1188
  %v1232 = vunpack.c.l.b16 %v1189
  %v1233 = vunpack.c.h.b16 %v1189
  %v1234 = vunpack.c.l.b16 %v1190
  %v1235 = vunpack.c.h.b16 %v1190
  %v1236 = vunpack.c.l.b16 %v1191
  %v1237 = vunpack.c.h.b16 %v1191
  %v1238 = vpack.c.b16 %v1226, %v1222
  %v1239 = vpack.c.b16 %v1227, %v1223
  %v1240 = vpack.c.b16 %v1228, %v1224
  %v1241 = vpack.c.b16 %v1229, %v1225
  %v1242 = vpack.c.b16 %v1234, %v1230
  %v1243 = vpack.c.b16 %v1235, %v1231
  %v1244 = vpack.c.b16 %v1236, %v1232
  %v1245 = vpack.c.b16 %v1237, %v1233
  %v1255 = vsel %vm206, %v1181, 0
  %v1258 = vsel %vm206, %v1182, 0
  %v1261 = vsel %vm206, %v1183, 0
  %1263 = vmatprep.subr.bf16.mxu0 0
  %1264 = vmatpush1.bf16.msra.mxu0 0
  %1265 = vmatprep.subr.bf16.mxu0 0
  %1266 = vmatpush1.bf16.msra.mxu0 0
  %1267 = vmatprep.subr.bf16.mxu0 0
  %1268 = vmatpush1.bf16.msra.mxu0 0
  %1269 = vmatprep.subr.bf16.mxu0 0
  %1270 = vmatpush1.bf16.msra.mxu0 0
  %1271 = vmatprep.subr.bf16.mxu0 0
  %1272 = vmatpush1.bf16.msra.mxu0 0
  %1273 = vmatprep.subr.bf16.mxu0 0
  %1274 = vmatpush1.bf16.msra.mxu0 0
  %1275 = vmatprep.subr.bf16.mxu0 %v1243
  %1276 = vmatpush1.bf16.msra.mxu0 %v1242
  %1277 = vmatprep.subr.bf16.mxu0 %v1239
  %1278 = vmatpush1.bf16.msra.mxu0 %v1238
  %1279 = vmatprep.subr.bf16.mxu0 0
  %1280 = vmatpush2.bf16.msra.mxu0 0
  %1281 = vmatprep.subr.bf16.mxu0 0
  %1282 = vmatpush2.bf16.msra.mxu0 0
  %1283 = vmatprep.subr.bf16.mxu0 0
  %1284 = vmatpush2.bf16.msra.mxu0 0
  %1285 = vmatprep.subr.bf16.mxu0 0
  %1286 = vmatpush2.bf16.msra.mxu0 0
  %1287 = vmatprep.subr.bf16.mxu0 0
  %1288 = vmatpush2.bf16.msra.mxu0 0
  %1289 = vmatprep.subr.bf16.mxu0 0
  %1290 = vmatpush2.bf16.msra.mxu0 0
  %1291 = vmatprep.subr.bf16.mxu0 0
  %1292 = vmatpush2.bf16.msra.mxu0 0
  %1293 = vmatprep.subr.bf16.mxu0 0
  %1294 = vmatpush2.bf16.msra.mxu0 0
  %1295 = vmatprep.mubr.bf16.mxu0 0
  %1296 = vmatmul.mubr.bf16.gmra.mxu0 %v1255
  %v1297 = vpop.f32.mrf.mxu0
  %v1298 = vadd.f32 %v1197, %v1297
  %v1299 = vpop.f32.mrf.mxu0
  %v1300 = vadd.f32 %v1201, %v1299
  %v1301 = vpop.f32.mrf.mxu0
  %v1302 = vadd.f32 %v1197, %v1301
  %v1303 = vpop.f32.mrf.mxu0
  %v1304 = vadd.f32 %v1201, %v1303
  %1305 = vmatprep.mubr.bf16.mxu0 0
  %1306 = vmatmul.mubr.bf16.gmra.mxu0 %v1258
  %v1307 = vpop.f32.mrf.mxu0
  %v1308 = vadd.f32 %v1197, %v1307
  %v1309 = vpop.f32.mrf.mxu0
  %v1310 = vadd.f32 %v1201, %v1309
  %v1311 = vpop.f32.mrf.mxu0
  %v1312 = vadd.f32 %v1197, %v1311
  %v1313 = vpop.f32.mrf.mxu0
  %v1314 = vadd.f32 %v1201, %v1313
  %1315 = vmatprep.mubr.bf16.mxu0 0
  %1316 = vmatmul.mubr.bf16.gmra.mxu0 %v1261
  %v1317 = vpop.f32.mrf.mxu0
  %v1318 = vadd.f32 %v1197, %v1317
  %v1319 = vpop.f32.mrf.mxu0
  %v1320 = vadd.f32 %v1201, %v1319
  %v1321 = vpop.f32.mrf.mxu0
  %v1322 = vadd.f32 %v1197, %v1321
  %v1323 = vpop.f32.mrf.mxu0
  %v1324 = vadd.f32 %v1201, %v1323
  %1325 = vdwg.mxu0
  %1326 = vmatprep.subr.bf16.mxu0 0
  %1327 = vmatpush1.bf16.msra.mxu0 0
  %1328 = vmatprep.subr.bf16.mxu0 0
  %1329 = vmatpush1.bf16.msra.mxu0 0
  %1330 = vmatprep.subr.bf16.mxu0 0
  %1331 = vmatpush1.bf16.msra.mxu0 0
  %1332 = vmatprep.subr.bf16.mxu0 0
  %1333 = vmatpush1.bf16.msra.mxu0 0
  %1334 = vmatprep.subr.bf16.mxu0 0
  %1335 = vmatpush1.bf16.msra.mxu0 0
  %1336 = vmatprep.subr.bf16.mxu0 0
  %1337 = vmatpush1.bf16.msra.mxu0 0
  %1338 = vmatprep.subr.bf16.mxu0 %v1245
  %1339 = vmatpush1.bf16.msra.mxu0 %v1244
  %1340 = vmatprep.subr.bf16.mxu0 %v1241
  %1341 = vmatpush1.bf16.msra.mxu0 %v1240
  %1342 = vmatprep.subr.bf16.mxu0 0
  %1343 = vmatpush2.bf16.msra.mxu0 0
  %1344 = vmatprep.subr.bf16.mxu0 0
  %1345 = vmatpush2.bf16.msra.mxu0 0
  %1346 = vmatprep.subr.bf16.mxu0 0
  %1347 = vmatpush2.bf16.msra.mxu0 0
  %1348 = vmatprep.subr.bf16.mxu0 0
  %1349 = vmatpush2.bf16.msra.mxu0 0
  %1350 = vmatprep.subr.bf16.mxu0 0
  %1351 = vmatpush2.bf16.msra.mxu0 0
  %1352 = vmatprep.subr.bf16.mxu0 0
  %1353 = vmatpush2.bf16.msra.mxu0 0
  %1354 = vmatprep.subr.bf16.mxu0 0
  %1355 = vmatpush2.bf16.msra.mxu0 0
  %1356 = vmatprep.subr.bf16.mxu0 0
  %1357 = vmatpush2.bf16.msra.mxu0 0
  %1358 = vmatprep.mubr.bf16.mxu0 0
  %1359 = vmatmul.mubr.bf16.gmra.mxu0 %v1255
  %v1360 = vpop.f32.mrf.mxu0
  %v1361 = vadd.f32 %v1205, %v1360
  %v1362 = vpop.f32.mrf.mxu0
  %v1363 = vadd.f32 %v1209, %v1362
  %v1364 = vpop.f32.mrf.mxu0
  %v1365 = vadd.f32 %v1205, %v1364
  %v1366 = vpop.f32.mrf.mxu0
  %v1367 = vadd.f32 %v1209, %v1366
  %1368 = vmatprep.mubr.bf16.mxu0 0
  %1369 = vmatmul.mubr.bf16.gmra.mxu0 %v1258
  %v1370 = vpop.f32.mrf.mxu0
  %v1371 = vadd.f32 %v1205, %v1370
  %v1372 = vpop.f32.mrf.mxu0
  %v1373 = vadd.f32 %v1209, %v1372
  %v1374 = vpop.f32.mrf.mxu0
  %v1375 = vadd.f32 %v1205, %v1374
  %v1376 = vpop.f32.mrf.mxu0
  %v1377 = vadd.f32 %v1209, %v1376
  %1378 = vmatprep.mubr.bf16.mxu0 0
  %1379 = vmatmul.mubr.bf16.gmra.mxu0 %v1261
  %v1380 = vpop.f32.mrf.mxu0
  %v1381 = vadd.f32 %v1205, %v1380
  %v1382 = vpop.f32.mrf.mxu0
  %v1383 = vadd.f32 %v1209, %v1382
  %v1384 = vpop.f32.mrf.mxu0
  %v1385 = vadd.f32 %v1205, %v1384
  %v1386 = vpop.f32.mrf.mxu0
  %v1387 = vadd.f32 %v1209, %v1386
  %1388 = vdwg.mxu0
  %v1389 = vmax.f32 %v1298, 0.0
  %v1390 = vmax.f32 %v1300, 0.0
  %v1391 = vmax.f32 %v1361, 0.0
  %v1392 = vmax.f32 %v1363, 0.0
  %v1393 = vmax.f32 %v1302, 0.0
  %v1394 = vmax.f32 %v1304, 0.0
  %v1395 = vmax.f32 %v1365, 0.0
  %v1396 = vmax.f32 %v1367, 0.0
  %v1397 = vmax.f32 %v1308, 0.0
  %v1398 = vmax.f32 %v1310, 0.0
  %v1399 = vmax.f32 %v1371, 0.0
  %v1400 = vmax.f32 %v1373, 0.0
  %v1401 = vmax.f32 %v1312, 0.0
  %v1402 = vmax.f32 %v1314, 0.0
  %v1403 = vmax.f32 %v1375, 0.0
  %v1404 = vmax.f32 %v1377, 0.0
  %v1405 = vmax.f32 %v1318, 0.0
  %v1406 = vmax.f32 %v1320, 0.0
  %v1407 = vmax.f32 %v1381, 0.0
  %v1408 = vmax.f32 %v1383, 0.0
  %v1409 = vmax.f32 %v1322, 0.0
  %v1410 = vmax.f32 %v1324, 0.0
  %v1411 = vmax.f32 %v1385, 0.0
  %v1412 = vmax.f32 %v1387, 0.0
  %v1413 = vpack.c.bf16 %v1393, %v1389
  %v1414 = vpack.c.bf16 %v1394, %v1390
  %v1415 = vpack.c.bf16 %v1395, %v1391
  %v1416 = vpack.c.bf16 %v1396, %v1392
  %v1417 = vpack.c.bf16 %v1401, %v1397
  %v1418 = vpack.c.bf16 %v1402, %v1398
  %v1419 = vpack.c.bf16 %v1403, %v1399
  %v1420 = vpack.c.bf16 %v1404, %v1400
  %v1421 = vpack.c.bf16 %v1409, %v1405
  %v1422 = vpack.c.bf16 %v1410, %v1406
  %v1423 = vpack.c.bf16 %v1411, %v1407
  %v1424 = vpack.c.bf16 %v1412, %v1408
  %v1425 = vld [vmem:[%s11] sm:$0xf]
  %v1426 = vld [vmem:[%s11 + $0x4] sm:$0xf]
  %v1427 = vld [vmem:[%s11 + $0x8] sm:$0xf]
  %v1428 = vld [vmem:[%s11 + $0xc] sm:$0xf]
  %v1429 = vld [vmem:[%s11 + $0x10] sm:$0xf]
  %v1430 = vld [vmem:[%s11 + $0x14] sm:$0xf]
  %v1431 = vld [vmem:[%s11 + $0x18] sm:$0xf]
  %v1432 = vld [vmem:[%s11 + $0x1c] sm:$0xf]
  %v1433 = vld [vmem:[%s11 + $0x20] sm:$0xf]
  %v1434 = vld [vmem:[%s11 + $0x24] sm:$0xf]
  %v1435 = vld [vmem:[%s11 + $0x28] sm:$0xf]
  %v1436 = vld [vmem:[%s11 + $0x2c] sm:$0xf]
  %v1437 = vld [vmem:[%s11 + $0x30] sm:$0xf]
  %v1438 = vld [vmem:[%s11 + $0x34] sm:$0xf]
  %v1439 = vld [vmem:[%s11 + $0x38] sm:$0xf]
  %v1440 = vld [vmem:[%s11 + $0x3c] sm:$0xf]
  %v1441 = vld [vmem:[%s11 + $0x40] sm:$0xf]
  %v1442 = vld [vmem:[%s11 + $0x44] sm:$0xf]
  %v1443 = vld [vmem:[%s11 + $0x48] sm:$0xf]
  %v1444 = vld [vmem:[%s11 + $0x4c] sm:$0xf]
  %v1445 = vld [vmem:[%s11 + $0x50] sm:$0xf]
  %v1446 = vld [vmem:[%s11 + $0x54] sm:$0xf]
  %v1447 = vld [vmem:[%s11 + $0x58] sm:$0xf]
  %v1448 = vld [vmem:[%s11 + $0x5c] sm:$0xf]
  %v1449 = vld [vmem:[%s11 + $0x60] sm:$0xf]
  %v1450 = vld [vmem:[%s11 + $0x64] sm:$0xf]
  %v1451 = vld [vmem:[%s11 + $0x68] sm:$0xf]
  %v1452 = vld [vmem:[%s11 + $0x6c] sm:$0xf]
  %v1453 = vld [vmem:[%s11 + $0x70] sm:$0xf]
  %v1454 = vld [vmem:[%s11 + $0x74] sm:$0xf]
  %v1455 = vld [vmem:[%s11 + $0x78] sm:$0xf]
  %v1456 = vld [vmem:[%s11 + $0x7c] sm:$0xf]
  %v1457 = vld [vmem:[%s11 + $0x80] sm:$0xf]
  %v1458 = vld [vmem:[%s11 + $0x84] sm:$0xf]
  %v1459 = vld [vmem:[%s11 + $0x88] sm:$0xf]
  %v1460 = vld [vmem:[%s11 + $0x8c] sm:$0xf]
  %v1461 = vld [vmem:[%s11 + $0x90] sm:$0xf]
  %v1462 = vld [vmem:[%s11 + $0x94] sm:$0xf]
  %v1463 = vld [vmem:[%s11 + $0x98] sm:$0xf]
  %v1464 = vld [vmem:[%s11 + $0x9c] sm:$0xf]
  %v1465 = vld [vmem:[%s11 + $0xa0] sm:$0xf]
  %v1466 = vld [vmem:[%s11 + $0xa4] sm:$0xf]
  %v1467 = vld [vmem:[%s11 + $0xa8] sm:$0xf]
  %v1468 = vld [vmem:[%s11 + $0xac] sm:$0xf]
  %v1469 = vld [vmem:[%s11 + $0xb0] sm:$0xf]
  %v1470 = vld [vmem:[%s11 + $0xb4] sm:$0xf]
  %v1471 = vld [vmem:[%s11 + $0xb8] sm:$0xf]
  %v1472 = vld [vmem:[%s11 + $0xbc] sm:$0xf]
  %v1473 = vld [vmem:[%s11 + $0xc0] sm:$0xf]
  %v1474 = vld [vmem:[%s11 + $0xc4] sm:$0xf]
  %v1475 = vld [vmem:[%s11 + $0xc8] sm:$0xf]
  %v1476 = vld [vmem:[%s11 + $0xcc] sm:$0xf]
  %v1477 = vld [vmem:[%s11 + $0xd0] sm:$0xf]
  %v1478 = vld [vmem:[%s11 + $0xd4] sm:$0xf]
  %v1479 = vld [vmem:[%s11 + $0xd8] sm:$0xf]
  %v1480 = vld [vmem:[%s11 + $0xdc] sm:$0xf]
  %v1481 = vld [vmem:[%s11 + $0xe0] sm:$0xf]
  %v1482 = vld [vmem:[%s11 + $0xe4] sm:$0xf]
  %v1483 = vld [vmem:[%s11 + $0xe8] sm:$0xf]
  %v1484 = vld [vmem:[%s11 + $0xec] sm:$0xf]
  %v1485 = vld [vmem:[%s11 + $0xf0] sm:$0xf]
  %v1486 = vld [vmem:[%s11 + $0xf4] sm:$0xf]
  %v1487 = vld [vmem:[%s11 + $0xf8] sm:$0xf]
  %v1488 = vld [vmem:[%s11 + $0xfc] sm:$0xf]
  %v1489 = vld [vmem:[%s9 + $0x10] sm:$0xff]
  %v1490 = vld [vmem:[%s9 + $0x18] sm:$0xff]
  %v1491 = vld [vmem:[%s9 + $0x50] sm:$0xff]
  %v1492 = vld [vmem:[%s9 + $0x58] sm:$0xff]
  %v1493 = vld [vmem:[%s9 + $0x90] sm:$0xff]
  %v1494 = vld [vmem:[%s9 + $0x98] sm:$0xff]
  %v1495 = vld [vmem:[%s9 + $0xd0] sm:$0xff]
  %v1496 = vld [vmem:[%s9 + $0xd8] sm:$0xff]
  %v1497 = vld [vmem:[%s10 + $0x4] sm:$0xf]
  %v1499 = vlaneseq
  %v1500 = vshrl.u32 %v1499, 7
  %v1501 = vsub.s32 0, %v1500
  %v1502 = vrot.slane %v1497, %v1501
  %v1503 = vlaneseq
  %v1504 = vshrl.u32 %v1503, 7
  %v1505 = vsub.s32 1, %v1504
  %v1506 = vrot.slane %v1497, %v1505
  %v1507 = vlaneseq
  %v1508 = vshrl.u32 %v1507, 7
  %v1509 = vsub.s32 2, %v1508
  %v1510 = vrot.slane %v1497, %v1509
  %v1511 = vlaneseq
  %v1512 = vshrl.u32 %v1511, 7
  %v1513 = vsub.s32 3, %v1512
  %v1514 = vrot.slane %v1497, %v1513
  %v1527 = vunpack.c.l.b16 %v1489
  %v1528 = vunpack.c.h.b16 %v1489
  %v1529 = vunpack.c.l.b16 %v1490
  %v1530 = vunpack.c.h.b16 %v1490
  %v1531 = vunpack.c.l.b16 %v1491
  %v1532 = vunpack.c.h.b16 %v1491
  %v1533 = vunpack.c.l.b16 %v1492
  %v1534 = vunpack.c.h.b16 %v1492
  %v1535 = vunpack.c.l.b16 %v1493
  %v1536 = vunpack.c.h.b16 %v1493
  %v1537 = vunpack.c.l.b16 %v1494
  %v1538 = vunpack.c.h.b16 %v1494
  %v1539 = vunpack.c.l.b16 %v1495
  %v1540 = vunpack.c.h.b16 %v1495
  %v1541 = vunpack.c.l.b16 %v1496
  %v1542 = vunpack.c.h.b16 %v1496
  %v1543 = vpack.c.b16 %v1531, %v1527
  %v1544 = vpack.c.b16 %v1532, %v1528
  %v1545 = vpack.c.b16 %v1533, %v1529
  %v1546 = vpack.c.b16 %v1534, %v1530
  %v1547 = vpack.c.b16 %v1539, %v1535
  %v1548 = vpack.c.b16 %v1540, %v1536
  %v1549 = vpack.c.b16 %v1541, %v1537
  %v1550 = vpack.c.b16 %v1542, %v1538
  %1559 = vmatprep.subr.bf16.mxu0 0
  %1560 = vmatpush1.bf16.msra.mxu0 0
  %1561 = vmatprep.subr.bf16.mxu0 0
  %1562 = vmatpush1.bf16.msra.mxu0 0
  %1563 = vmatprep.subr.bf16.mxu0 0
  %1564 = vmatpush1.bf16.msra.mxu0 0
  %1565 = vmatprep.subr.bf16.mxu0 0
  %1566 = vmatpush1.bf16.msra.mxu0 0
  %1567 = vmatprep.subr.bf16.mxu0 0
  %1568 = vmatpush1.bf16.msra.mxu0 0
  %1569 = vmatprep.subr.bf16.mxu0 0
  %1570 = vmatpush1.bf16.msra.mxu0 0
  %1571 = vmatprep.subr.bf16.mxu0 %v1548
  %1572 = vmatpush1.bf16.msra.mxu0 %v1547
  %1573 = vmatprep.subr.bf16.mxu0 %v1544
  %1574 = vmatpush1.bf16.msra.mxu0 %v1543
  %1575 = vmatprep.subr.bf16.mxu0 0
  %1576 = vmatpush2.bf16.msra.mxu0 0
  %1577 = vmatprep.subr.bf16.mxu0 0
  %1578 = vmatpush2.bf16.msra.mxu0 0
  %1579 = vmatprep.subr.bf16.mxu0 0
  %1580 = vmatpush2.bf16.msra.mxu0 0
  %1581 = vmatprep.subr.bf16.mxu0 0
  %1582 = vmatpush2.bf16.msra.mxu0 0
  %1583 = vmatprep.subr.bf16.mxu0 0
  %1584 = vmatpush2.bf16.msra.mxu0 0
  %1585 = vmatprep.subr.bf16.mxu0 0
  %1586 = vmatpush2.bf16.msra.mxu0 0
  %1587 = vmatprep.subr.bf16.mxu0 0
  %1588 = vmatpush2.bf16.msra.mxu0 0
  %1589 = vmatprep.subr.bf16.mxu0 0
  %1590 = vmatpush2.bf16.msra.mxu0 0
  %1591 = vmatprep.mubr.bf16.mxu0 0
  %1592 = vmatmul.mubr.bf16.gmra.mxu0 %v1255
  %v1593 = vpop.f32.mrf.mxu0
  %v1594 = vadd.f32 %v1502, %v1593
  %v1595 = vpop.f32.mrf.mxu0
  %v1596 = vadd.f32 %v1506, %v1595
  %v1597 = vpop.f32.mrf.mxu0
  %v1598 = vadd.f32 %v1502, %v1597
  %v1599 = vpop.f32.mrf.mxu0
  %v1600 = vadd.f32 %v1506, %v1599
  %1601 = vmatprep.mubr.bf16.mxu0 0
  %1602 = vmatmul.mubr.bf16.gmra.mxu0 %v1258
  %v1603 = vpop.f32.mrf.mxu0
  %v1604 = vadd.f32 %v1502, %v1603
  %v1605 = vpop.f32.mrf.mxu0
  %v1606 = vadd.f32 %v1506, %v1605
  %v1607 = vpop.f32.mrf.mxu0
  %v1608 = vadd.f32 %v1502, %v1607
  %v1609 = vpop.f32.mrf.mxu0
  %v1610 = vadd.f32 %v1506, %v1609
  %1611 = vmatprep.mubr.bf16.mxu0 0
  %1612 = vmatmul.mubr.bf16.gmra.mxu0 %v1261
  %v1613 = vpop.f32.mrf.mxu0
  %v1614 = vadd.f32 %v1502, %v1613
  %v1615 = vpop.f32.mrf.mxu0
  %v1616 = vadd.f32 %v1506, %v1615
  %v1617 = vpop.f32.mrf.mxu0
  %v1618 = vadd.f32 %v1502, %v1617
  %v1619 = vpop.f32.mrf.mxu0
  %v1620 = vadd.f32 %v1506, %v1619
  %1621 = vdwg.mxu0
  %1622 = vmatprep.subr.bf16.mxu0 0
  %1623 = vmatpush1.bf16.msra.mxu0 0
  %1624 = vmatprep.subr.bf16.mxu0 0
  %1625 = vmatpush1.bf16.msra.mxu0 0
  %1626 = vmatprep.subr.bf16.mxu0 0
  %1627 = vmatpush1.bf16.msra.mxu0 0
  %1628 = vmatprep.subr.bf16.mxu0 0
  %1629 = vmatpush1.bf16.msra.mxu0 0
  %1630 = vmatprep.subr.bf16.mxu0 0
  %1631 = vmatpush1.bf16.msra.mxu0 0
  %1632 = vmatprep.subr.bf16.mxu0 0
  %1633 = vmatpush1.bf16.msra.mxu0 0
  %1634 = vmatprep.subr.bf16.mxu0 %v1550
  %1635 = vmatpush1.bf16.msra.mxu0 %v1549
  %1636 = vmatprep.subr.bf16.mxu0 %v1546
  %1637 = vmatpush1.bf16.msra.mxu0 %v1545
  %1638 = vmatprep.subr.bf16.mxu0 0
  %1639 = vmatpush2.bf16.msra.mxu0 0
  %1640 = vmatprep.subr.bf16.mxu0 0
  %1641 = vmatpush2.bf16.msra.mxu0 0
  %1642 = vmatprep.subr.bf16.mxu0 0
  %1643 = vmatpush2.bf16.msra.mxu0 0
  %1644 = vmatprep.subr.bf16.mxu0 0
  %1645 = vmatpush2.bf16.msra.mxu0 0
  %1646 = vmatprep.subr.bf16.mxu0 0
  %1647 = vmatpush2.bf16.msra.mxu0 0
  %1648 = vmatprep.subr.bf16.mxu0 0
  %1649 = vmatpush2.bf16.msra.mxu0 0
  %1650 = vmatprep.subr.bf16.mxu0 0
  %1651 = vmatpush2.bf16.msra.mxu0 0
  %1652 = vmatprep.subr.bf16.mxu0 0
  %1653 = vmatpush2.bf16.msra.mxu0 0
  %1654 = vmatprep.mubr.bf16.mxu0 0
  %1655 = vmatmul.mubr.bf16.gmra.mxu0 %v1255
  %v1656 = vpop.f32.mrf.mxu0
  %v1657 = vadd.f32 %v1510, %v1656
  %v1658 = vpop.f32.mrf.mxu0
  %v1659 = vadd.f32 %v1514, %v1658
  %v1660 = vpop.f32.mrf.mxu0
  %v1661 = vadd.f32 %v1510, %v1660
  %v1662 = vpop.f32.mrf.mxu0
  %v1663 = vadd.f32 %v1514, %v1662
  %1664 = vmatprep.mubr.bf16.mxu0 0
  %1665 = vmatmul.mubr.bf16.gmra.mxu0 %v1258
  %v1666 = vpop.f32.mrf.mxu0
  %v1667 = vadd.f32 %v1510, %v1666
  %v1668 = vpop.f32.mrf.mxu0
  %v1669 = vadd.f32 %v1514, %v1668
  %v1670 = vpop.f32.mrf.mxu0
  %v1671 = vadd.f32 %v1510, %v1670
  %v1672 = vpop.f32.mrf.mxu0
  %v1673 = vadd.f32 %v1514, %v1672
  %1674 = vmatprep.mubr.bf16.mxu0 0
  %1675 = vmatmul.mubr.bf16.gmra.mxu0 %v1261
  %v1676 = vpop.f32.mrf.mxu0
  %v1677 = vadd.f32 %v1510, %v1676
  %v1678 = vpop.f32.mrf.mxu0
  %v1679 = vadd.f32 %v1514, %v1678
  %v1680 = vpop.f32.mrf.mxu0
  %v1681 = vadd.f32 %v1510, %v1680
  %v1682 = vpop.f32.mrf.mxu0
  %v1683 = vadd.f32 %v1514, %v1682
  %1684 = vdwg.mxu0
  %v1685 = vmax.f32 %v1594, 0.0
  %v1686 = vmax.f32 %v1596, 0.0
  %v1687 = vmax.f32 %v1657, 0.0
  %v1688 = vmax.f32 %v1659, 0.0
  %v1689 = vmax.f32 %v1598, 0.0
  %v1690 = vmax.f32 %v1600, 0.0
  %v1691 = vmax.f32 %v1661, 0.0
  %v1692 = vmax.f32 %v1663, 0.0
  %v1693 = vmax.f32 %v1604, 0.0
  %v1694 = vmax.f32 %v1606, 0.0
  %v1695 = vmax.f32 %v1667, 0.0
  %v1696 = vmax.f32 %v1669, 0.0
  %v1697 = vmax.f32 %v1608, 0.0
  %v1698 = vmax.f32 %v1610, 0.0
  %v1699 = vmax.f32 %v1671, 0.0
  %v1700 = vmax.f32 %v1673, 0.0
  %v1701 = vmax.f32 %v1614, 0.0
  %v1702 = vmax.f32 %v1616, 0.0
  %v1703 = vmax.f32 %v1677, 0.0
  %v1704 = vmax.f32 %v1679, 0.0
  %v1705 = vmax.f32 %v1618, 0.0
  %v1706 = vmax.f32 %v1620, 0.0
  %v1707 = vmax.f32 %v1681, 0.0
  %v1708 = vmax.f32 %v1683, 0.0
  %v1709 = vpack.c.bf16 %v1689, %v1685
  %v1710 = vpack.c.bf16 %v1690, %v1686
  %v1711 = vpack.c.bf16 %v1691, %v1687
  %v1712 = vpack.c.bf16 %v1692, %v1688
  %v1713 = vpack.c.bf16 %v1697, %v1693
  %v1714 = vpack.c.bf16 %v1698, %v1694
  %v1715 = vpack.c.bf16 %v1699, %v1695
  %v1716 = vpack.c.bf16 %v1700, %v1696
  %v1717 = vpack.c.bf16 %v1705, %v1701
  %v1718 = vpack.c.bf16 %v1706, %v1702
  %v1719 = vpack.c.bf16 %v1707, %v1703
  %v1720 = vpack.c.bf16 %v1708, %v1704
  %v1721 = vld [vmem:[%s11 + $0x100] sm:$0xf]
  %v1722 = vld [vmem:[%s11 + $0x104] sm:$0xf]
  %v1723 = vld [vmem:[%s11 + $0x108] sm:$0xf]
  %v1724 = vld [vmem:[%s11 + $0x10c] sm:$0xf]
  %v1725 = vld [vmem:[%s11 + $0x110] sm:$0xf]
  %v1726 = vld [vmem:[%s11 + $0x114] sm:$0xf]
  %v1727 = vld [vmem:[%s11 + $0x118] sm:$0xf]
  %v1728 = vld [vmem:[%s11 + $0x11c] sm:$0xf]
  %v1729 = vld [vmem:[%s11 + $0x120] sm:$0xf]
  %v1730 = vld [vmem:[%s11 + $0x124] sm:$0xf]
  %v1731 = vld [vmem:[%s11 + $0x128] sm:$0xf]
  %v1732 = vld [vmem:[%s11 + $0x12c] sm:$0xf]
  %v1733 = vld [vmem:[%s11 + $0x130] sm:$0xf]
  %v1734 = vld [vmem:[%s11 + $0x134] sm:$0xf]
  %v1735 = vld [vmem:[%s11 + $0x138] sm:$0xf]
  %v1736 = vld [vmem:[%s11 + $0x13c] sm:$0xf]
  %v1737 = vld [vmem:[%s11 + $0x140] sm:$0xf]
  %v1738 = vld [vmem:[%s11 + $0x144] sm:$0xf]
  %v1739 = vld [vmem:[%s11 + $0x148] sm:$0xf]
  %v1740 = vld [vmem:[%s11 + $0x14c] sm:$0xf]
  %v1741 = vld [vmem:[%s11 + $0x150] sm:$0xf]
  %v1742 = vld [vmem:[%s11 + $0x154] sm:$0xf]
  %v1743 = vld [vmem:[%s11 + $0x158] sm:$0xf]
  %v1744 = vld [vmem:[%s11 + $0x15c] sm:$0xf]
  %v1745 = vld [vmem:[%s11 + $0x160] sm:$0xf]
  %v1746 = vld [vmem:[%s11 + $0x164] sm:$0xf]
  %v1747 = vld [vmem:[%s11 + $0x168] sm:$0xf]
  %v1748 = vld [vmem:[%s11 + $0x16c] sm:$0xf]
  %v1749 = vld [vmem:[%s11 + $0x170] sm:$0xf]
  %v1750 = vld [vmem:[%s11 + $0x174] sm:$0xf]
  %v1751 = vld [vmem:[%s11 + $0x178] sm:$0xf]
  %v1752 = vld [vmem:[%s11 + $0x17c] sm:$0xf]
  %v1753 = vld [vmem:[%s11 + $0x180] sm:$0xf]
  %v1754 = vld [vmem:[%s11 + $0x184] sm:$0xf]
  %v1755 = vld [vmem:[%s11 + $0x188] sm:$0xf]
  %v1756 = vld [vmem:[%s11 + $0x18c] sm:$0xf]
  %v1757 = vld [vmem:[%s11 + $0x190] sm:$0xf]
  %v1758 = vld [vmem:[%s11 + $0x194] sm:$0xf]
  %v1759 = vld [vmem:[%s11 + $0x198] sm:$0xf]
  %v1760 = vld [vmem:[%s11 + $0x19c] sm:$0xf]
  %v1761 = vld [vmem:[%s11 + $0x1a0] sm:$0xf]
  %v1762 = vld [vmem:[%s11 + $0x1a4] sm:$0xf]
  %v1763 = vld [vmem:[%s11 + $0x1a8] sm:$0xf]
  %v1764 = vld [vmem:[%s11 + $0x1ac] sm:$0xf]
  %v1765 = vld [vmem:[%s11 + $0x1b0] sm:$0xf]
  %v1766 = vld [vmem:[%s11 + $0x1b4] sm:$0xf]
  %v1767 = vld [vmem:[%s11 + $0x1b8] sm:$0xf]
  %v1768 = vld [vmem:[%s11 + $0x1bc] sm:$0xf]
  %v1769 = vld [vmem:[%s11 + $0x1c0] sm:$0xf]
  %v1770 = vld [vmem:[%s11 + $0x1c4] sm:$0xf]
  %v1771 = vld [vmem:[%s11 + $0x1c8] sm:$0xf]
  %v1772 = vld [vmem:[%s11 + $0x1cc] sm:$0xf]
  %v1773 = vld [vmem:[%s11 + $0x1d0] sm:$0xf]
  %v1774 = vld [vmem:[%s11 + $0x1d4] sm:$0xf]
  %v1775 = vld [vmem:[%s11 + $0x1d8] sm:$0xf]
  %v1776 = vld [vmem:[%s11 + $0x1dc] sm:$0xf]
  %v1777 = vld [vmem:[%s11 + $0x1e0] sm:$0xf]
  %v1778 = vld [vmem:[%s11 + $0x1e4] sm:$0xf]
  %v1779 = vld [vmem:[%s11 + $0x1e8] sm:$0xf]
  %v1780 = vld [vmem:[%s11 + $0x1ec] sm:$0xf]
  %v1781 = vld [vmem:[%s11 + $0x1f0] sm:$0xf]
  %v1782 = vld [vmem:[%s11 + $0x1f4] sm:$0xf]
  %v1783 = vld [vmem:[%s11 + $0x1f8] sm:$0xf]
  %v1784 = vld [vmem:[%s11 + $0x1fc] sm:$0xf]
  %v1849 = vunpack.c.l.b16 %v1721
  %v1850 = vunpack.c.l.b16 %v1722
  %v1851 = vunpack.c.l.b16 %v1723
  %v1852 = vunpack.c.l.b16 %v1724
  %v1853 = vunpack.c.l.b16 %v1725
  %v1854 = vunpack.c.l.b16 %v1726
  %v1855 = vunpack.c.l.b16 %v1727
  %v1856 = vunpack.c.l.b16 %v1728
  %v1857 = vunpack.c.l.b16 %v1729
  %v1858 = vunpack.c.l.b16 %v1730
  %v1859 = vunpack.c.l.b16 %v1731
  %v1860 = vunpack.c.l.b16 %v1732
  %v1861 = vunpack.c.l.b16 %v1733
  %v1862 = vunpack.c.l.b16 %v1734
  %v1863 = vunpack.c.l.b16 %v1735
  %v1864 = vunpack.c.l.b16 %v1736
  %v1865 = vunpack.c.l.b16 %v1737
  %v1866 = vunpack.c.l.b16 %v1738
  %v1867 = vunpack.c.l.b16 %v1739
  %v1868 = vunpack.c.l.b16 %v1740
  %v1869 = vunpack.c.l.b16 %v1741
  %v1870 = vunpack.c.l.b16 %v1742
  %v1871 = vunpack.c.l.b16 %v1743
  %v1872 = vunpack.c.l.b16 %v1744
  %v1873 = vunpack.c.l.b16 %v1745
  %v1874 = vunpack.c.l.b16 %v1746
  %v1875 = vunpack.c.l.b16 %v1747
  %v1876 = vunpack.c.l.b16 %v1748
  %v1877 = vunpack.c.l.b16 %v1749
  %v1878 = vunpack.c.l.b16 %v1750
  %v1879 = vunpack.c.l.b16 %v1751
  %v1880 = vunpack.c.l.b16 %v1752
  %v1881 = vunpack.c.l.b16 %v1753
  %v1882 = vunpack.c.l.b16 %v1754
  %v1883 = vunpack.c.l.b16 %v1755
  %v1884 = vunpack.c.l.b16 %v1756
  %v1885 = vunpack.c.l.b16 %v1757
  %v1886 = vunpack.c.l.b16 %v1758
  %v1887 = vunpack.c.l.b16 %v1759
  %v1888 = vunpack.c.l.b16 %v1760
  %v1889 = vunpack.c.l.b16 %v1761
  %v1890 = vunpack.c.l.b16 %v1762
  %v1891 = vunpack.c.l.b16 %v1763
  %v1892 = vunpack.c.l.b16 %v1764
  %v1893 = vunpack.c.l.b16 %v1765
  %v1894 = vunpack.c.l.b16 %v1766
  %v1895 = vunpack.c.l.b16 %v1767
  %v1896 = vunpack.c.l.b16 %v1768
  %v1897 = vunpack.c.l.b16 %v1769
  %v1898 = vunpack.c.l.b16 %v1770
  %v1899 = vunpack.c.l.b16 %v1771
  %v1900 = vunpack.c.l.b16 %v1772
  %v1901 = vunpack.c.l.b16 %v1773
  %v1902 = vunpack.c.l.b16 %v1774
  %v1903 = vunpack.c.l.b16 %v1775
  %v1904 = vunpack.c.l.b16 %v1776
  %v1905 = vunpack.c.l.b16 %v1777
  %v1906 = vunpack.c.l.b16 %v1778
  %v1907 = vunpack.c.l.b16 %v1779
  %v1908 = vunpack.c.l.b16 %v1780
  %v1909 = vunpack.c.l.b16 %v1781
  %v1910 = vunpack.c.l.b16 %v1782
  %v1911 = vunpack.c.l.b16 %v1783
  %v1912 = vunpack.c.l.b16 %v1784
  %v1913 = vpack.c.b16 %v1850, %v1849
  %v1914 = vpack.c.b16 %v1852, %v1851
  %v1915 = vpack.c.b16 %v1854, %v1853
  %v1916 = vpack.c.b16 %v1856, %v1855
  %v1917 = vpack.c.b16 %v1858, %v1857
  %v1918 = vpack.c.b16 %v1860, %v1859
  %v1919 = vpack.c.b16 %v1862, %v1861
  %v1920 = vpack.c.b16 %v1864, %v1863
  %v1921 = vpack.c.b16 %v1866, %v1865
  %v1922 = vpack.c.b16 %v1868, %v1867
  %v1923 = vpack.c.b16 %v1870, %v1869
  %v1924 = vpack.c.b16 %v1872, %v1871
  %v1925 = vpack.c.b16 %v1874, %v1873
  %v1926 = vpack.c.b16 %v1876, %v1875
  %v1927 = vpack.c.b16 %v1878, %v1877
  %v1928 = vpack.c.b16 %v1880, %v1879
  %v1929 = vpack.c.b16 %v1882, %v1881
  %v1930 = vpack.c.b16 %v1884, %v1883
  %v1931 = vpack.c.b16 %v1886, %v1885
  %v1932 = vpack.c.b16 %v1888, %v1887
  %v1933 = vpack.c.b16 %v1890, %v1889
  %v1934 = vpack.c.b16 %v1892, %v1891
  %v1935 = vpack.c.b16 %v1894, %v1893
  %v1936 = vpack.c.b16 %v1896, %v1895
  %v1937 = vpack.c.b16 %v1898, %v1897
  %v1938 = vpack.c.b16 %v1900, %v1899
  %v1939 = vpack.c.b16 %v1902, %v1901
  %v1940 = vpack.c.b16 %v1904, %v1903
  %v1941 = vpack.c.b16 %v1906, %v1905
  %v1942 = vpack.c.b16 %v1908, %v1907
  %v1943 = vpack.c.b16 %v1910, %v1909
  %v1944 = vpack.c.b16 %v1912, %v1911
  %1977 = vmatprep.subr.bf16.mxu0 0
  %1978 = vmatpush1.bf16.msra.mxu0 %v1920
  %1979 = vmatprep.subr.bf16.mxu0 0
  %1980 = vmatpush1.bf16.msra.mxu0 %v1919
  %1981 = vmatprep.subr.bf16.mxu0 0
  %1982 = vmatpush1.bf16.msra.mxu0 %v1918
  %1983 = vmatprep.subr.bf16.mxu0 0
  %1984 = vmatpush1.bf16.msra.mxu0 %v1917
  %1985 = vmatprep.subr.bf16.mxu0 0
  %1986 = vmatpush1.bf16.msra.mxu0 %v1916
  %1987 = vmatprep.subr.bf16.mxu0 0
  %1988 = vmatpush1.bf16.msra.mxu0 %v1915
  %1989 = vmatprep.subr.bf16.mxu0 0
  %1990 = vmatpush1.bf16.msra.mxu0 %v1914
  %1991 = vmatprep.subr.bf16.mxu0 0
  %1992 = vmatpush1.bf16.msra.mxu0 %v1913
  %1993 = vmatprep.subr.bf16.mxu0 0
  %1994 = vmatpush2.bf16.msra.mxu0 %v1928
  %1995 = vmatprep.subr.bf16.mxu0 0
  %1996 = vmatpush2.bf16.msra.mxu0 %v1927
  %1997 = vmatprep.subr.bf16.mxu0 0
  %1998 = vmatpush2.bf16.msra.mxu0 %v1926
  %1999 = vmatprep.subr.bf16.mxu0 0
  %2000 = vmatpush2.bf16.msra.mxu0 %v1925
  %2001 = vmatprep.subr.bf16.mxu0 0
  %2002 = vmatpush2.bf16.msra.mxu0 %v1924
  %2003 = vmatprep.subr.bf16.mxu0 0
  %2004 = vmatpush2.bf16.msra.mxu0 %v1923
  %2005 = vmatprep.subr.bf16.mxu0 0
  %2006 = vmatpush2.bf16.msra.mxu0 %v1922
  %2007 = vmatprep.subr.bf16.mxu0 0
  %2008 = vmatpush2.bf16.msra.mxu0 %v1921
  %2009 = vmatprep.mubr.bf16.mxu0 %v1710
  %2010 = vmatmul.mubr.bf16.gmra.mxu0 %v1709
  %v2011 = vpop.f32.mrf.mxu0
  %v2012 = vadd.f32 0.0, %v2011
  %v2013 = vpop.f32.mrf.mxu0
  %v2014 = vpop.f32.mrf.mxu0
  %v2015 = vadd.f32 0.0, %v2014
  %v2016 = vpop.f32.mrf.mxu0
  %2017 = vmatprep.mubr.bf16.mxu0 %v1714
  %2018 = vmatmul.mubr.bf16.gmra.mxu0 %v1713
  %v2019 = vpop.f32.mrf.mxu0
  %v2020 = vadd.f32 0.0, %v2019
  %v2021 = vpop.f32.mrf.mxu0
  %v2022 = vpop.f32.mrf.mxu0
  %v2023 = vadd.f32 0.0, %v2022
  %v2024 = vpop.f32.mrf.mxu0
  %2025 = vmatprep.mubr.bf16.mxu0 %v1718
  %2026 = vmatmul.mubr.bf16.gmra.mxu0 %v1717
  %v2027 = vpop.f32.mrf.mxu0
  %v2028 = vadd.f32 0.0, %v2027
  %v2029 = vpop.f32.mrf.mxu0
  %v2030 = vpop.f32.mrf.mxu0
  %v2031 = vadd.f32 0.0, %v2030
  %v2032 = vpop.f32.mrf.mxu0
  %2033 = vdwg.mxu0
  %2034 = vmatprep.subr.bf16.mxu0 0
  %2035 = vmatpush1.bf16.msra.mxu0 %v1936
  %2036 = vmatprep.subr.bf16.mxu0 0
  %2037 = vmatpush1.bf16.msra.mxu0 %v1935
  %2038 = vmatprep.subr.bf16.mxu0 0
  %2039 = vmatpush1.bf16.msra.mxu0 %v1934
  %2040 = vmatprep.subr.bf16.mxu0 0
  %2041 = vmatpush1.bf16.msra.mxu0 %v1933
  %2042 = vmatprep.subr.bf16.mxu0 0
  %2043 = vmatpush1.bf16.msra.mxu0 %v1932
  %2044 = vmatprep.subr.bf16.mxu0 0
  %2045 = vmatpush1.bf16.msra.mxu0 %v1931
  %2046 = vmatprep.subr.bf16.mxu0 0
  %2047 = vmatpush1.bf16.msra.mxu0 %v1930
  %2048 = vmatprep.subr.bf16.mxu0 0
  %2049 = vmatpush1.bf16.msra.mxu0 %v1929
  %2050 = vmatprep.subr.bf16.mxu0 0
  %2051 = vmatpush2.bf16.msra.mxu0 %v1944
  %2052 = vmatprep.subr.bf16.mxu0 0
  %2053 = vmatpush2.bf16.msra.mxu0 %v1943
  %2054 = vmatprep.subr.bf16.mxu0 0
  %2055 = vmatpush2.bf16.msra.mxu0 %v1942
  %2056 = vmatprep.subr.bf16.mxu0 0
  %2057 = vmatpush2.bf16.msra.mxu0 %v1941
  %2058 = vmatprep.subr.bf16.mxu0 0
  %2059 = vmatpush2.bf16.msra.mxu0 %v1940
  %2060 = vmatprep.subr.bf16.mxu0 0
  %2061 = vmatpush2.bf16.msra.mxu0 %v1939
  %2062 = vmatprep.subr.bf16.mxu0 0
  %2063 = vmatpush2.bf16.msra.mxu0 %v1938
  %2064 = vmatprep.subr.bf16.mxu0 0
  %2065 = vmatpush2.bf16.msra.mxu0 %v1937
  %2066 = vmatprep.mubr.bf16.mxu0 %v1712
  %2067 = vmatmul.mubr.bf16.gmra.mxu0 %v1711
  %v2068 = vpop.f32.mrf.mxu0
  %v2069 = vadd.f32 %v2012, %v2068
  %v2070 = vpop.f32.mrf.mxu0
  %v2071 = vpop.f32.mrf.mxu0
  %v2072 = vadd.f32 %v2015, %v2071
  %v2073 = vpop.f32.mrf.mxu0
  %2074 = vmatprep.mubr.bf16.mxu0 %v1716
  %2075 = vmatmul.mubr.bf16.gmra.mxu0 %v1715
  %v2076 = vpop.f32.mrf.mxu0
  %v2077 = vadd.f32 %v2020, %v2076
  %v2078 = vpop.f32.mrf.mxu0
  %v2079 = vpop.f32.mrf.mxu0
  %v2080 = vadd.f32 %v2023, %v2079
  %v2081 = vpop.f32.mrf.mxu0
  %2082 = vmatprep.mubr.bf16.mxu0 %v1720
  %2083 = vmatmul.mubr.bf16.gmra.mxu0 %v1719
  %v2084 = vpop.f32.mrf.mxu0
  %v2085 = vadd.f32 %v2028, %v2084
  %v2086 = vpop.f32.mrf.mxu0
  %v2087 = vpop.f32.mrf.mxu0
  %v2088 = vadd.f32 %v2031, %v2087
  %v2089 = vpop.f32.mrf.mxu0
  %2090 = vdwg.mxu0
  %v2155 = vunpack.c.l.b16 %v1425
  %v2156 = vunpack.c.l.b16 %v1426
  %v2157 = vunpack.c.l.b16 %v1427
  %v2158 = vunpack.c.l.b16 %v1428
  %v2159 = vunpack.c.l.b16 %v1429
  %v2160 = vunpack.c.l.b16 %v1430
  %v2161 = vunpack.c.l.b16 %v1431
  %v2162 = vunpack.c.l.b16 %v1432
  %v2163 = vunpack.c.l.b16 %v1433
  %v2164 = vunpack.c.l.b16 %v1434
  %v2165 = vunpack.c.l.b16 %v1435
  %v2166 = vunpack.c.l.b16 %v1436
  %v2167 = vunpack.c.l.b16 %v1437
  %v2168 = vunpack.c.l.b16 %v1438
  %v2169 = vunpack.c.l.b16 %v1439
  %v2170 = vunpack.c.l.b16 %v1440
  %v2171 = vunpack.c.l.b16 %v1441
  %v2172 = vunpack.c.l.b16 %v1442
  %v2173 = vunpack.c.l.b16 %v1443
  %v2174 = vunpack.c.l.b16 %v1444
  %v2175 = vunpack.c.l.b16 %v1445
  %v2176 = vunpack.c.l.b16 %v1446
  %v2177 = vunpack.c.l.b16 %v1447
  %v2178 = vunpack.c.l.b16 %v1448
  %v2179 = vunpack.c.l.b16 %v1449
  %v2180 = vunpack.c.l.b16 %v1450
  %v2181 = vunpack.c.l.b16 %v1451
  %v2182 = vunpack.c.l.b16 %v1452
  %v2183 = vunpack.c.l.b16 %v1453
  %v2184 = vunpack.c.l.b16 %v1454
  %v2185 = vunpack.c.l.b16 %v1455
  %v2186 = vunpack.c.l.b16 %v1456
  %v2187 = vunpack.c.l.b16 %v1457
  %v2188 = vunpack.c.l.b16 %v1458
  %v2189 = vunpack.c.l.b16 %v1459
  %v2190 = vunpack.c.l.b16 %v1460
  %v2191 = vunpack.c.l.b16 %v1461
  %v2192 = vunpack.c.l.b16 %v1462
  %v2193 = vunpack.c.l.b16 %v1463
  %v2194 = vunpack.c.l.b16 %v1464
  %v2195 = vunpack.c.l.b16 %v1465
  %v2196 = vunpack.c.l.b16 %v1466
  %v2197 = vunpack.c.l.b16 %v1467
  %v2198 = vunpack.c.l.b16 %v1468
  %v2199 = vunpack.c.l.b16 %v1469
  %v2200 = vunpack.c.l.b16 %v1470
  %v2201 = vunpack.c.l.b16 %v1471
  %v2202 = vunpack.c.l.b16 %v1472
  %v2203 = vunpack.c.l.b16 %v1473
  %v2204 = vunpack.c.l.b16 %v1474
  %v2205 = vunpack.c.l.b16 %v1475
  %v2206 = vunpack.c.l.b16 %v1476
  %v2207 = vunpack.c.l.b16 %v1477
  %v2208 = vunpack.c.l.b16 %v1478
  %v2209 = vunpack.c.l.b16 %v1479
  %v2210 = vunpack.c.l.b16 %v1480
  %v2211 = vunpack.c.l.b16 %v1481
  %v2212 = vunpack.c.l.b16 %v1482
  %v2213 = vunpack.c.l.b16 %v1483
  %v2214 = vunpack.c.l.b16 %v1484
  %v2215 = vunpack.c.l.b16 %v1485
  %v2216 = vunpack.c.l.b16 %v1486
  %v2217 = vunpack.c.l.b16 %v1487
  %v2218 = vunpack.c.l.b16 %v1488
  %v2219 = vpack.c.b16 %v2156, %v2155
  %v2220 = vpack.c.b16 %v2158, %v2157
  %v2221 = vpack.c.b16 %v2160, %v2159
  %v2222 = vpack.c.b16 %v2162, %v2161
  %v2223 = vpack.c.b16 %v2164, %v2163
  %v2224 = vpack.c.b16 %v2166, %v2165
  %v2225 = vpack.c.b16 %v2168, %v2167
  %v2226 = vpack.c.b16 %v2170, %v2169
  %v2227 = vpack.c.b16 %v2172, %v2171
  %v2228 = vpack.c.b16 %v2174, %v2173
  %v2229 = vpack.c.b16 %v2176, %v2175
  %v2230 = vpack.c.b16 %v2178, %v2177
  %v2231 = vpack.c.b16 %v2180, %v2179
  %v2232 = vpack.c.b16 %v2182, %v2181
  %v2233 = vpack.c.b16 %v2184, %v2183
  %v2234 = vpack.c.b16 %v2186, %v2185
  %v2235 = vpack.c.b16 %v2188, %v2187
  %v2236 = vpack.c.b16 %v2190, %v2189
  %v2237 = vpack.c.b16 %v2192, %v2191
  %v2238 = vpack.c.b16 %v2194, %v2193
  %v2239 = vpack.c.b16 %v2196, %v2195
  %v2240 = vpack.c.b16 %v2198, %v2197
  %v2241 = vpack.c.b16 %v2200, %v2199
  %v2242 = vpack.c.b16 %v2202, %v2201
  %v2243 = vpack.c.b16 %v2204, %v2203
  %v2244 = vpack.c.b16 %v2206, %v2205
  %v2245 = vpack.c.b16 %v2208, %v2207
  %v2246 = vpack.c.b16 %v2210, %v2209
  %v2247 = vpack.c.b16 %v2212, %v2211
  %v2248 = vpack.c.b16 %v2214, %v2213
  %v2249 = vpack.c.b16 %v2216, %v2215
  %v2250 = vpack.c.b16 %v2218, %v2217
  %2283 = vmatprep.subr.bf16.mxu0 0
  %2284 = vmatpush1.bf16.msra.mxu0 %v2226
  %2285 = vmatprep.subr.bf16.mxu0 0
  %2286 = vmatpush1.bf16.msra.mxu0 %v2225
  %2287 = vmatprep.subr.bf16.mxu0 0
  %2288 = vmatpush1.bf16.msra.mxu0 %v2224
  %2289 = vmatprep.subr.bf16.mxu0 0
  %2290 = vmatpush1.bf16.msra.mxu0 %v2223
  %2291 = vmatprep.subr.bf16.mxu0 0
  %2292 = vmatpush1.bf16.msra.mxu0 %v2222
  %2293 = vmatprep.subr.bf16.mxu0 0
  %2294 = vmatpush1.bf16.msra.mxu0 %v2221
  %2295 = vmatprep.subr.bf16.mxu0 0
  %2296 = vmatpush1.bf16.msra.mxu0 %v2220
  %2297 = vmatprep.subr.bf16.mxu0 0
  %2298 = vmatpush1.bf16.msra.mxu0 %v2219
  %2299 = vmatprep.subr.bf16.mxu0 0
  %2300 = vmatpush2.bf16.msra.mxu0 %v2234
  %2301 = vmatprep.subr.bf16.mxu0 0
  %2302 = vmatpush2.bf16.msra.mxu0 %v2233
  %2303 = vmatprep.subr.bf16.mxu0 0
  %2304 = vmatpush2.bf16.msra.mxu0 %v2232
  %2305 = vmatprep.subr.bf16.mxu0 0
  %2306 = vmatpush2.bf16.msra.mxu0 %v2231
  %2307 = vmatprep.subr.bf16.mxu0 0
  %2308 = vmatpush2.bf16.msra.mxu0 %v2230
  %2309 = vmatprep.subr.bf16.mxu0 0
  %2310 = vmatpush2.bf16.msra.mxu0 %v2229
  %2311 = vmatprep.subr.bf16.mxu0 0
  %2312 = vmatpush2.bf16.msra.mxu0 %v2228
  %2313 = vmatprep.subr.bf16.mxu0 0
  %2314 = vmatpush2.bf16.msra.mxu0 %v2227
  %2315 = vmatprep.mubr.bf16.mxu0 %v1414
  %2316 = vmatmul.mubr.bf16.gmra.mxu0 %v1413
  %v2317 = vpop.f32.mrf.mxu0
  %v2318 = vadd.f32 %v2069, %v2317
  %v2319 = vpop.f32.mrf.mxu0
  %v2320 = vpop.f32.mrf.mxu0
  %v2321 = vadd.f32 %v2072, %v2320
  %v2322 = vpop.f32.mrf.mxu0
  %2323 = vmatprep.mubr.bf16.mxu0 %v1418
  %2324 = vmatmul.mubr.bf16.gmra.mxu0 %v1417
  %v2325 = vpop.f32.mrf.mxu0
  %v2326 = vadd.f32 %v2077, %v2325
  %v2327 = vpop.f32.mrf.mxu0
  %v2328 = vpop.f32.mrf.mxu0
  %v2329 = vadd.f32 %v2080, %v2328
  %v2330 = vpop.f32.mrf.mxu0
  %2331 = vmatprep.mubr.bf16.mxu0 %v1422
  %2332 = vmatmul.mubr.bf16.gmra.mxu0 %v1421
  %v2333 = vpop.f32.mrf.mxu0
  %v2334 = vadd.f32 %v2085, %v2333
  %v2335 = vpop.f32.mrf.mxu0
  %v2336 = vpop.f32.mrf.mxu0
  %v2337 = vadd.f32 %v2088, %v2336
  %v2338 = vpop.f32.mrf.mxu0
  %2339 = vdwg.mxu0
  %2340 = vmatprep.subr.bf16.mxu0 0
  %2341 = vmatpush1.bf16.msra.mxu0 %v2242
  %2342 = vmatprep.subr.bf16.mxu0 0
  %2343 = vmatpush1.bf16.msra.mxu0 %v2241
  %2344 = vmatprep.subr.bf16.mxu0 0
  %2345 = vmatpush1.bf16.msra.mxu0 %v2240
  %2346 = vmatprep.subr.bf16.mxu0 0
  %2347 = vmatpush1.bf16.msra.mxu0 %v2239
  %2348 = vmatprep.subr.bf16.mxu0 0
  %2349 = vmatpush1.bf16.msra.mxu0 %v2238
  %2350 = vmatprep.subr.bf16.mxu0 0
  %2351 = vmatpush1.bf16.msra.mxu0 %v2237
  %2352 = vmatprep.subr.bf16.mxu0 0
  %2353 = vmatpush1.bf16.msra.mxu0 %v2236
  %2354 = vmatprep.subr.bf16.mxu0 0
  %2355 = vmatpush1.bf16.msra.mxu0 %v2235
  %2356 = vmatprep.subr.bf16.mxu0 0
  %2357 = vmatpush2.bf16.msra.mxu0 %v2250
  %2358 = vmatprep.subr.bf16.mxu0 0
  %2359 = vmatpush2.bf16.msra.mxu0 %v2249
  %2360 = vmatprep.subr.bf16.mxu0 0
  %2361 = vmatpush2.bf16.msra.mxu0 %v2248
  %2362 = vmatprep.subr.bf16.mxu0 0
  %2363 = vmatpush2.bf16.msra.mxu0 %v2247
  %2364 = vmatprep.subr.bf16.mxu0 0
  %2365 = vmatpush2.bf16.msra.mxu0 %v2246
  %2366 = vmatprep.subr.bf16.mxu0 0
  %2367 = vmatpush2.bf16.msra.mxu0 %v2245
  %2368 = vmatprep.subr.bf16.mxu0 0
  %2369 = vmatpush2.bf16.msra.mxu0 %v2244
  %2370 = vmatprep.subr.bf16.mxu0 0
  %2371 = vmatpush2.bf16.msra.mxu0 %v2243
  %2372 = vmatprep.mubr.bf16.mxu0 %v1416
  %2373 = vmatmul.mubr.bf16.gmra.mxu0 %v1415
  %v2374 = vpop.f32.mrf.mxu0
  %v2375 = vadd.f32 %v2318, %v2374
  %v2376 = vpop.f32.mrf.mxu0
  %v2377 = vpop.f32.mrf.mxu0
  %v2378 = vadd.f32 %v2321, %v2377
  %v2379 = vpop.f32.mrf.mxu0
  %2380 = vmatprep.mubr.bf16.mxu0 %v1420
  %2381 = vmatmul.mubr.bf16.gmra.mxu0 %v1419
  %v2382 = vpop.f32.mrf.mxu0
  %v2383 = vadd.f32 %v2326, %v2382
  %v2384 = vpop.f32.mrf.mxu0
  %v2385 = vpop.f32.mrf.mxu0
  %v2386 = vadd.f32 %v2329, %v2385
  %v2387 = vpop.f32.mrf.mxu0
  %2388 = vmatprep.mubr.bf16.mxu0 %v1424
  %2389 = vmatmul.mubr.bf16.gmra.mxu0 %v1423
  %v2390 = vpop.f32.mrf.mxu0
  %v2391 = vadd.f32 %v2334, %v2390
  %v2392 = vpop.f32.mrf.mxu0
  %v2393 = vpop.f32.mrf.mxu0
  %v2394 = vadd.f32 %v2337, %v2393
  %v2395 = vpop.f32.mrf.mxu0
  %2396 = vdwg.mxu0
  %v2397 = vld [vmem:[%s9 + $0x20] sm:$0xff]
  %v2398 = vld [vmem:[%s9 + $0x28] sm:$0xff]
  %v2399 = vld [vmem:[%s9 + $0x60] sm:$0xff]
  %v2400 = vld [vmem:[%s9 + $0x68] sm:$0xff]
  %v2401 = vld [vmem:[%s9 + $0xa0] sm:$0xff]
  %v2402 = vld [vmem:[%s9 + $0xa8] sm:$0xff]
  %v2403 = vld [vmem:[%s9 + $0xe0] sm:$0xff]
  %v2404 = vld [vmem:[%s9 + $0xe8] sm:$0xff]
  %v2405 = vld [vmem:[%s10 + $0x8] sm:$0xf]
  %v2407 = vlaneseq
  %v2408 = vshrl.u32 %v2407, 7
  %v2409 = vsub.s32 0, %v2408
  %v2410 = vrot.slane %v2405, %v2409
  %v2411 = vlaneseq
  %v2412 = vshrl.u32 %v2411, 7
  %v2413 = vsub.s32 1, %v2412
  %v2414 = vrot.slane %v2405, %v2413
  %v2415 = vlaneseq
  %v2416 = vshrl.u32 %v2415, 7
  %v2417 = vsub.s32 2, %v2416
  %v2418 = vrot.slane %v2405, %v2417
  %v2419 = vlaneseq
  %v2420 = vshrl.u32 %v2419, 7
  %v2421 = vsub.s32 3, %v2420
  %v2422 = vrot.slane %v2405, %v2421
  %v2435 = vunpack.c.l.b16 %v2397
  %v2436 = vunpack.c.h.b16 %v2397
  %v2437 = vunpack.c.l.b16 %v2398
  %v2438 = vunpack.c.h.b16 %v2398
  %v2439 = vunpack.c.l.b16 %v2399
  %v2440 = vunpack.c.h.b16 %v2399
  %v2441 = vunpack.c.l.b16 %v2400
  %v2442 = vunpack.c.h.b16 %v2400
  %v2443 = vunpack.c.l.b16 %v2401
  %v2444 = vunpack.c.h.b16 %v2401
  %v2445 = vunpack.c.l.b16 %v2402
  %v2446 = vunpack.c.h.b16 %v2402
  %v2447 = vunpack.c.l.b16 %v2403
  %v2448 = vunpack.c.h.b16 %v2403
  %v2449 = vunpack.c.l.b16 %v2404
  %v2450 = vunpack.c.h.b16 %v2404
  %v2451 = vpack.c.b16 %v2439, %v2435
  %v2452 = vpack.c.b16 %v2440, %v2436
  %v2453 = vpack.c.b16 %v2441, %v2437
  %v2454 = vpack.c.b16 %v2442, %v2438
  %v2455 = vpack.c.b16 %v2447, %v2443
  %v2456 = vpack.c.b16 %v2448, %v2444
  %v2457 = vpack.c.b16 %v2449, %v2445
  %v2458 = vpack.c.b16 %v2450, %v2446
  %2467 = vmatprep.subr.bf16.mxu0 0
  %2468 = vmatpush1.bf16.msra.mxu0 0
  %2469 = vmatprep.subr.bf16.mxu0 0
  %2470 = vmatpush1.bf16.msra.mxu0 0
  %2471 = vmatprep.subr.bf16.mxu0 0
  %2472 = vmatpush1.bf16.msra.mxu0 0
  %2473 = vmatprep.subr.bf16.mxu0 0
  %2474 = vmatpush1.bf16.msra.mxu0 0
  %2475 = vmatprep.subr.bf16.mxu0 0
  %2476 = vmatpush1.bf16.msra.mxu0 0
  %2477 = vmatprep.subr.bf16.mxu0 0
  %2478 = vmatpush1.bf16.msra.mxu0 0
  %2479 = vmatprep.subr.bf16.mxu0 %v2456
  %2480 = vmatpush1.bf16.msra.mxu0 %v2455
  %2481 = vmatprep.subr.bf16.mxu0 %v2452
  %2482 = vmatpush1.bf16.msra.mxu0 %v2451
  %2483 = vmatprep.subr.bf16.mxu0 0
  %2484 = vmatpush2.bf16.msra.mxu0 0
  %2485 = vmatprep.subr.bf16.mxu0 0
  %2486 = vmatpush2.bf16.msra.mxu0 0
  %2487 = vmatprep.subr.bf16.mxu0 0
  %2488 = vmatpush2.bf16.msra.mxu0 0
  %2489 = vmatprep.subr.bf16.mxu0 0
  %2490 = vmatpush2.bf16.msra.mxu0 0
  %2491 = vmatprep.subr.bf16.mxu0 0
  %2492 = vmatpush2.bf16.msra.mxu0 0
  %2493 = vmatprep.subr.bf16.mxu0 0
  %2494 = vmatpush2.bf16.msra.mxu0 0
  %2495 = vmatprep.subr.bf16.mxu0 0
  %2496 = vmatpush2.bf16.msra.mxu0 0
  %2497 = vmatprep.subr.bf16.mxu0 0
  %2498 = vmatpush2.bf16.msra.mxu0 0
  %2499 = vmatprep.mubr.bf16.mxu0 0
  %2500 = vmatmul.mubr.bf16.gmra.mxu0 %v1255
  %v2501 = vpop.f32.mrf.mxu0
  %v2502 = vadd.f32 %v2410, %v2501
  %v2503 = vpop.f32.mrf.mxu0
  %v2504 = vadd.f32 %v2414, %v2503
  %v2505 = vpop.f32.mrf.mxu0
  %v2506 = vadd.f32 %v2410, %v2505
  %v2507 = vpop.f32.mrf.mxu0
  %v2508 = vadd.f32 %v2414, %v2507
  %2509 = vmatprep.mubr.bf16.mxu0 0
  %2510 = vmatmul.mubr.bf16.gmra.mxu0 %v1258
  %v2511 = vpop.f32.mrf.mxu0
  %v2512 = vadd.f32 %v2410, %v2511
  %v2513 = vpop.f32.mrf.mxu0
  %v2514 = vadd.f32 %v2414, %v2513
  %v2515 = vpop.f32.mrf.mxu0
  %v2516 = vadd.f32 %v2410, %v2515
  %v2517 = vpop.f32.mrf.mxu0
  %v2518 = vadd.f32 %v2414, %v2517
  %2519 = vmatprep.mubr.bf16.mxu0 0
  %2520 = vmatmul.mubr.bf16.gmra.mxu0 %v1261
  %v2521 = vpop.f32.mrf.mxu0
  %v2522 = vadd.f32 %v2410, %v2521
  %v2523 = vpop.f32.mrf.mxu0
  %v2524 = vadd.f32 %v2414, %v2523
  %v2525 = vpop.f32.mrf.mxu0
  %v2526 = vadd.f32 %v2410, %v2525
  %v2527 = vpop.f32.mrf.mxu0
  %v2528 = vadd.f32 %v2414, %v2527
  %2529 = vdwg.mxu0
  %2530 = vmatprep.subr.bf16.mxu0 0
  %2531 = vmatpush1.bf16.msra.mxu0 0
  %2532 = vmatprep.subr.bf16.mxu0 0
  %2533 = vmatpush1.bf16.msra.mxu0 0
  %2534 = vmatprep.subr.bf16.mxu0 0
  %2535 = vmatpush1.bf16.msra.mxu0 0
  %2536 = vmatprep.subr.bf16.mxu0 0
  %2537 = vmatpush1.bf16.msra.mxu0 0
  %2538 = vmatprep.subr.bf16.mxu0 0
  %2539 = vmatpush1.bf16.msra.mxu0 0
  %2540 = vmatprep.subr.bf16.mxu0 0
  %2541 = vmatpush1.bf16.msra.mxu0 0
  %2542 = vmatprep.subr.bf16.mxu0 %v2458
  %2543 = vmatpush1.bf16.msra.mxu0 %v2457
  %2544 = vmatprep.subr.bf16.mxu0 %v2454
  %2545 = vmatpush1.bf16.msra.mxu0 %v2453
  %2546 = vmatprep.subr.bf16.mxu0 0
  %2547 = vmatpush2.bf16.msra.mxu0 0
  %2548 = vmatprep.subr.bf16.mxu0 0
  %2549 = vmatpush2.bf16.msra.mxu0 0
  %2550 = vmatprep.subr.bf16.mxu0 0
  %2551 = vmatpush2.bf16.msra.mxu0 0
  %2552 = vmatprep.subr.bf16.mxu0 0
  %2553 = vmatpush2.bf16.msra.mxu0 0
  %2554 = vmatprep.subr.bf16.mxu0 0
  %2555 = vmatpush2.bf16.msra.mxu0 0
  %2556 = vmatprep.subr.bf16.mxu0 0
  %2557 = vmatpush2.bf16.msra.mxu0 0
  %2558 = vmatprep.subr.bf16.mxu0 0
  %2559 = vmatpush2.bf16.msra.mxu0 0
  %2560 = vmatprep.subr.bf16.mxu0 0
  %2561 = vmatpush2.bf16.msra.mxu0 0
  %2562 = vmatprep.mubr.bf16.mxu0 0
  %2563 = vmatmul.mubr.bf16.gmra.mxu0 %v1255
  %v2564 = vpop.f32.mrf.mxu0
  %v2565 = vadd.f32 %v2418, %v2564
  %v2566 = vpop.f32.mrf.mxu0
  %v2567 = vadd.f32 %v2422, %v2566
  %v2568 = vpop.f32.mrf.mxu0
  %v2569 = vadd.f32 %v2418, %v2568
  %v2570 = vpop.f32.mrf.mxu0
  %v2571 = vadd.f32 %v2422, %v2570
  %2572 = vmatprep.mubr.bf16.mxu0 0
  %2573 = vmatmul.mubr.bf16.gmra.mxu0 %v1258
  %v2574 = vpop.f32.mrf.mxu0
  %v2575 = vadd.f32 %v2418, %v2574
  %v2576 = vpop.f32.mrf.mxu0
  %v2577 = vadd.f32 %v2422, %v2576
  %v2578 = vpop.f32.mrf.mxu0
  %v2579 = vadd.f32 %v2418, %v2578
  %v2580 = vpop.f32.mrf.mxu0
  %v2581 = vadd.f32 %v2422, %v2580
  %2582 = vmatprep.mubr.bf16.mxu0 0
  %2583 = vmatmul.mubr.bf16.gmra.mxu0 %v1261
  %v2584 = vpop.f32.mrf.mxu0
  %v2585 = vadd.f32 %v2418, %v2584
  %v2586 = vpop.f32.mrf.mxu0
  %v2587 = vadd.f32 %v2422, %v2586
  %v2588 = vpop.f32.mrf.mxu0
  %v2589 = vadd.f32 %v2418, %v2588
  %v2590 = vpop.f32.mrf.mxu0
  %v2591 = vadd.f32 %v2422, %v2590
  %2592 = vdwg.mxu0
  %v2593 = vmax.f32 %v2502, 0.0
  %v2594 = vmax.f32 %v2504, 0.0
  %v2595 = vmax.f32 %v2565, 0.0
  %v2596 = vmax.f32 %v2567, 0.0
  %v2597 = vmax.f32 %v2506, 0.0
  %v2598 = vmax.f32 %v2508, 0.0
  %v2599 = vmax.f32 %v2569, 0.0
  %v2600 = vmax.f32 %v2571, 0.0
  %v2601 = vmax.f32 %v2512, 0.0
  %v2602 = vmax.f32 %v2514, 0.0
  %v2603 = vmax.f32 %v2575, 0.0
  %v2604 = vmax.f32 %v2577, 0.0
  %v2605 = vmax.f32 %v2516, 0.0
  %v2606 = vmax.f32 %v2518, 0.0
  %v2607 = vmax.f32 %v2579, 0.0
  %v2608 = vmax.f32 %v2581, 0.0
  %v2609 = vmax.f32 %v2522, 0.0
  %v2610 = vmax.f32 %v2524, 0.0
  %v2611 = vmax.f32 %v2585, 0.0
  %v2612 = vmax.f32 %v2587, 0.0
  %v2613 = vmax.f32 %v2526, 0.0
  %v2614 = vmax.f32 %v2528, 0.0
  %v2615 = vmax.f32 %v2589, 0.0
  %v2616 = vmax.f32 %v2591, 0.0
  %v2617 = vpack.c.bf16 %v2597, %v2593
  %v2618 = vpack.c.bf16 %v2598, %v2594
  %v2619 = vpack.c.bf16 %v2599, %v2595
  %v2620 = vpack.c.bf16 %v2600, %v2596
  %v2621 = vpack.c.bf16 %v2605, %v2601
  %v2622 = vpack.c.bf16 %v2606, %v2602
  %v2623 = vpack.c.bf16 %v2607, %v2603
  %v2624 = vpack.c.bf16 %v2608, %v2604
  %v2625 = vpack.c.bf16 %v2613, %v2609
  %v2626 = vpack.c.bf16 %v2614, %v2610
  %v2627 = vpack.c.bf16 %v2615, %v2611
  %v2628 = vpack.c.bf16 %v2616, %v2612
  %v2629 = vld [vmem:[%s11 + $0x200] sm:$0xf]
  %v2630 = vld [vmem:[%s11 + $0x204] sm:$0xf]
  %v2631 = vld [vmem:[%s11 + $0x208] sm:$0xf]
  %v2632 = vld [vmem:[%s11 + $0x20c] sm:$0xf]
  %v2633 = vld [vmem:[%s11 + $0x210] sm:$0xf]
  %v2634 = vld [vmem:[%s11 + $0x214] sm:$0xf]
  %v2635 = vld [vmem:[%s11 + $0x218] sm:$0xf]
  %v2636 = vld [vmem:[%s11 + $0x21c] sm:$0xf]
  %v2637 = vld [vmem:[%s11 + $0x220] sm:$0xf]
  %v2638 = vld [vmem:[%s11 + $0x224] sm:$0xf]
  %v2639 = vld [vmem:[%s11 + $0x228] sm:$0xf]
  %v2640 = vld [vmem:[%s11 + $0x22c] sm:$0xf]
  %v2641 = vld [vmem:[%s11 + $0x230] sm:$0xf]
  %v2642 = vld [vmem:[%s11 + $0x234] sm:$0xf]
  %v2643 = vld [vmem:[%s11 + $0x238] sm:$0xf]
  %v2644 = vld [vmem:[%s11 + $0x23c] sm:$0xf]
  %v2645 = vld [vmem:[%s11 + $0x240] sm:$0xf]
  %v2646 = vld [vmem:[%s11 + $0x244] sm:$0xf]
  %v2647 = vld [vmem:[%s11 + $0x248] sm:$0xf]
  %v2648 = vld [vmem:[%s11 + $0x24c] sm:$0xf]
  %v2649 = vld [vmem:[%s11 + $0x250] sm:$0xf]
  %v2650 = vld [vmem:[%s11 + $0x254] sm:$0xf]
  %v2651 = vld [vmem:[%s11 + $0x258] sm:$0xf]
  %v2652 = vld [vmem:[%s11 + $0x25c] sm:$0xf]
  %v2653 = vld [vmem:[%s11 + $0x260] sm:$0xf]
  %v2654 = vld [vmem:[%s11 + $0x264] sm:$0xf]
  %v2655 = vld [vmem:[%s11 + $0x268] sm:$0xf]
  %v2656 = vld [vmem:[%s11 + $0x26c] sm:$0xf]
  %v2657 = vld [vmem:[%s11 + $0x270] sm:$0xf]
  %v2658 = vld [vmem:[%s11 + $0x274] sm:$0xf]
  %v2659 = vld [vmem:[%s11 + $0x278] sm:$0xf]
  %v2660 = vld [vmem:[%s11 + $0x27c] sm:$0xf]
  %v2661 = vld [vmem:[%s11 + $0x280] sm:$0xf]
  %v2662 = vld [vmem:[%s11 + $0x284] sm:$0xf]
  %v2663 = vld [vmem:[%s11 + $0x288] sm:$0xf]
  %v2664 = vld [vmem:[%s11 + $0x28c] sm:$0xf]
  %v2665 = vld [vmem:[%s11 + $0x290] sm:$0xf]
  %v2666 = vld [vmem:[%s11 + $0x294] sm:$0xf]
  %v2667 = vld [vmem:[%s11 + $0x298] sm:$0xf]
  %v2668 = vld [vmem:[%s11 + $0x29c] sm:$0xf]
  %v2669 = vld [vmem:[%s11 + $0x2a0] sm:$0xf]
  %v2670 = vld [vmem:[%s11 + $0x2a4] sm:$0xf]
  %v2671 = vld [vmem:[%s11 + $0x2a8] sm:$0xf]
  %v2672 = vld [vmem:[%s11 + $0x2ac] sm:$0xf]
  %v2673 = vld [vmem:[%s11 + $0x2b0] sm:$0xf]
  %v2674 = vld [vmem:[%s11 + $0x2b4] sm:$0xf]
  %v2675 = vld [vmem:[%s11 + $0x2b8] sm:$0xf]
  %v2676 = vld [vmem:[%s11 + $0x2bc] sm:$0xf]
  %v2677 = vld [vmem:[%s11 + $0x2c0] sm:$0xf]
  %v2678 = vld [vmem:[%s11 + $0x2c4] sm:$0xf]
  %v2679 = vld [vmem:[%s11 + $0x2c8] sm:$0xf]
  %v2680 = vld [vmem:[%s11 + $0x2cc] sm:$0xf]
  %v2681 = vld [vmem:[%s11 + $0x2d0] sm:$0xf]
  %v2682 = vld [vmem:[%s11 + $0x2d4] sm:$0xf]
  %v2683 = vld [vmem:[%s11 + $0x2d8] sm:$0xf]
  %v2684 = vld [vmem:[%s11 + $0x2dc] sm:$0xf]
  %v2685 = vld [vmem:[%s11 + $0x2e0] sm:$0xf]
  %v2686 = vld [vmem:[%s11 + $0x2e4] sm:$0xf]
  %v2687 = vld [vmem:[%s11 + $0x2e8] sm:$0xf]
  %v2688 = vld [vmem:[%s11 + $0x2ec] sm:$0xf]
  %v2689 = vld [vmem:[%s11 + $0x2f0] sm:$0xf]
  %v2690 = vld [vmem:[%s11 + $0x2f4] sm:$0xf]
  %v2691 = vld [vmem:[%s11 + $0x2f8] sm:$0xf]
  %v2692 = vld [vmem:[%s11 + $0x2fc] sm:$0xf]
  %v2757 = vunpack.c.l.b16 %v2629
  %v2758 = vunpack.c.l.b16 %v2630
  %v2759 = vunpack.c.l.b16 %v2631
  %v2760 = vunpack.c.l.b16 %v2632
  %v2761 = vunpack.c.l.b16 %v2633
  %v2762 = vunpack.c.l.b16 %v2634
  %v2763 = vunpack.c.l.b16 %v2635
  %v2764 = vunpack.c.l.b16 %v2636
  %v2765 = vunpack.c.l.b16 %v2637
  %v2766 = vunpack.c.l.b16 %v2638
  %v2767 = vunpack.c.l.b16 %v2639
  %v2768 = vunpack.c.l.b16 %v2640
  %v2769 = vunpack.c.l.b16 %v2641
  %v2770 = vunpack.c.l.b16 %v2642
  %v2771 = vunpack.c.l.b16 %v2643
  %v2772 = vunpack.c.l.b16 %v2644
  %v2773 = vunpack.c.l.b16 %v2645
  %v2774 = vunpack.c.l.b16 %v2646
  %v2775 = vunpack.c.l.b16 %v2647
  %v2776 = vunpack.c.l.b16 %v2648
  %v2777 = vunpack.c.l.b16 %v2649
  %v2778 = vunpack.c.l.b16 %v2650
  %v2779 = vunpack.c.l.b16 %v2651
  %v2780 = vunpack.c.l.b16 %v2652
  %v2781 = vunpack.c.l.b16 %v2653
  %v2782 = vunpack.c.l.b16 %v2654
  %v2783 = vunpack.c.l.b16 %v2655
  %v2784 = vunpack.c.l.b16 %v2656
  %v2785 = vunpack.c.l.b16 %v2657
  %v2786 = vunpack.c.l.b16 %v2658
  %v2787 = vunpack.c.l.b16 %v2659
  %v2788 = vunpack.c.l.b16 %v2660
  %v2789 = vunpack.c.l.b16 %v2661
  %v2790 = vunpack.c.l.b16 %v2662
  %v2791 = vunpack.c.l.b16 %v2663
  %v2792 = vunpack.c.l.b16 %v2664
  %v2793 = vunpack.c.l.b16 %v2665
  %v2794 = vunpack.c.l.b16 %v2666
  %v2795 = vunpack.c.l.b16 %v2667
  %v2796 = vunpack.c.l.b16 %v2668
  %v2797 = vunpack.c.l.b16 %v2669
  %v2798 = vunpack.c.l.b16 %v2670
  %v2799 = vunpack.c.l.b16 %v2671
  %v2800 = vunpack.c.l.b16 %v2672
  %v2801 = vunpack.c.l.b16 %v2673
  %v2802 = vunpack.c.l.b16 %v2674
  %v2803 = vunpack.c.l.b16 %v2675
  %v2804 = vunpack.c.l.b16 %v2676
  %v2805 = vunpack.c.l.b16 %v2677
  %v2806 = vunpack.c.l.b16 %v2678
  %v2807 = vunpack.c.l.b16 %v2679
  %v2808 = vunpack.c.l.b16 %v2680
  %v2809 = vunpack.c.l.b16 %v2681
  %v2810 = vunpack.c.l.b16 %v2682
  %v2811 = vunpack.c.l.b16 %v2683
  %v2812 = vunpack.c.l.b16 %v2684
  %v2813 = vunpack.c.l.b16 %v2685
  %v2814 = vunpack.c.l.b16 %v2686
  %v2815 = vunpack.c.l.b16 %v2687
  %v2816 = vunpack.c.l.b16 %v2688
  %v2817 = vunpack.c.l.b16 %v2689
  %v2818 = vunpack.c.l.b16 %v2690
  %v2819 = vunpack.c.l.b16 %v2691
  %v2820 = vunpack.c.l.b16 %v2692
  %v2821 = vpack.c.b16 %v2758, %v2757
  %v2822 = vpack.c.b16 %v2760, %v2759
  %v2823 = vpack.c.b16 %v2762, %v2761
  %v2824 = vpack.c.b16 %v2764, %v2763
  %v2825 = vpack.c.b16 %v2766, %v2765
  %v2826 = vpack.c.b16 %v2768, %v2767
  %v2827 = vpack.c.b16 %v2770, %v2769
  %v2828 = vpack.c.b16 %v2772, %v2771
  %v2829 = vpack.c.b16 %v2774, %v2773
  %v2830 = vpack.c.b16 %v2776, %v2775
  %v2831 = vpack.c.b16 %v2778, %v2777
  %v2832 = vpack.c.b16 %v2780, %v2779
  %v2833 = vpack.c.b16 %v2782, %v2781
  %v2834 = vpack.c.b16 %v2784, %v2783
  %v2835 = vpack.c.b16 %v2786, %v2785
  %v2836 = vpack.c.b16 %v2788, %v2787
  %v2837 = vpack.c.b16 %v2790, %v2789
  %v2838 = vpack.c.b16 %v2792, %v2791
  %v2839 = vpack.c.b16 %v2794, %v2793
  %v2840 = vpack.c.b16 %v2796, %v2795
  %v2841 = vpack.c.b16 %v2798, %v2797
  %v2842 = vpack.c.b16 %v2800, %v2799
  %v2843 = vpack.c.b16 %v2802, %v2801
  %v2844 = vpack.c.b16 %v2804, %v2803
  %v2845 = vpack.c.b16 %v2806, %v2805
  %v2846 = vpack.c.b16 %v2808, %v2807
  %v2847 = vpack.c.b16 %v2810, %v2809
  %v2848 = vpack.c.b16 %v2812, %v2811
  %v2849 = vpack.c.b16 %v2814, %v2813
  %v2850 = vpack.c.b16 %v2816, %v2815
  %v2851 = vpack.c.b16 %v2818, %v2817
  %v2852 = vpack.c.b16 %v2820, %v2819
  %2885 = vmatprep.subr.bf16.mxu0 0
  %2886 = vmatpush1.bf16.msra.mxu0 %v2828
  %2887 = vmatprep.subr.bf16.mxu0 0
  %2888 = vmatpush1.bf16.msra.mxu0 %v2827
  %2889 = vmatprep.subr.bf16.mxu0 0
  %2890 = vmatpush1.bf16.msra.mxu0 %v2826
  %2891 = vmatprep.subr.bf16.mxu0 0
  %2892 = vmatpush1.bf16.msra.mxu0 %v2825
  %2893 = vmatprep.subr.bf16.mxu0 0
  %2894 = vmatpush1.bf16.msra.mxu0 %v2824
  %2895 = vmatprep.subr.bf16.mxu0 0
  %2896 = vmatpush1.bf16.msra.mxu0 %v2823
  %2897 = vmatprep.subr.bf16.mxu0 0
  %2898 = vmatpush1.bf16.msra.mxu0 %v2822
  %2899 = vmatprep.subr.bf16.mxu0 0
  %2900 = vmatpush1.bf16.msra.mxu0 %v2821
  %2901 = vmatprep.subr.bf16.mxu0 0
  %2902 = vmatpush2.bf16.msra.mxu0 %v2836
  %2903 = vmatprep.subr.bf16.mxu0 0
  %2904 = vmatpush2.bf16.msra.mxu0 %v2835
  %2905 = vmatprep.subr.bf16.mxu0 0
  %2906 = vmatpush2.bf16.msra.mxu0 %v2834
  %2907 = vmatprep.subr.bf16.mxu0 0
  %2908 = vmatpush2.bf16.msra.mxu0 %v2833
  %2909 = vmatprep.subr.bf16.mxu0 0
  %2910 = vmatpush2.bf16.msra.mxu0 %v2832
  %2911 = vmatprep.subr.bf16.mxu0 0
  %2912 = vmatpush2.bf16.msra.mxu0 %v2831
  %2913 = vmatprep.subr.bf16.mxu0 0
  %2914 = vmatpush2.bf16.msra.mxu0 %v2830
  %2915 = vmatprep.subr.bf16.mxu0 0
  %2916 = vmatpush2.bf16.msra.mxu0 %v2829
  %2917 = vmatprep.mubr.bf16.mxu0 %v2618
  %2918 = vmatmul.mubr.bf16.gmra.mxu0 %v2617
  %v2919 = vpop.f32.mrf.mxu0
  %v2920 = vadd.f32 0.0, %v2919
  %v2921 = vpop.f32.mrf.mxu0
  %v2922 = vpop.f32.mrf.mxu0
  %v2923 = vadd.f32 0.0, %v2922
  %v2924 = vpop.f32.mrf.mxu0
  %2925 = vmatprep.mubr.bf16.mxu0 %v2622
  %2926 = vmatmul.mubr.bf16.gmra.mxu0 %v2621
  %v2927 = vpop.f32.mrf.mxu0
  %v2928 = vadd.f32 0.0, %v2927
  %v2929 = vpop.f32.mrf.mxu0
  %v2930 = vpop.f32.mrf.mxu0
  %v2931 = vadd.f32 0.0, %v2930
  %v2932 = vpop.f32.mrf.mxu0
  %2933 = vmatprep.mubr.bf16.mxu0 %v2626
  %2934 = vmatmul.mubr.bf16.gmra.mxu0 %v2625
  %v2935 = vpop.f32.mrf.mxu0
  %v2936 = vadd.f32 0.0, %v2935
  %v2937 = vpop.f32.mrf.mxu0
  %v2938 = vpop.f32.mrf.mxu0
  %v2939 = vadd.f32 0.0, %v2938
  %v2940 = vpop.f32.mrf.mxu0
  %2941 = vdwg.mxu0
  %2942 = vmatprep.subr.bf16.mxu0 0
  %2943 = vmatpush1.bf16.msra.mxu0 %v2844
  %2944 = vmatprep.subr.bf16.mxu0 0
  %2945 = vmatpush1.bf16.msra.mxu0 %v2843
  %2946 = vmatprep.subr.bf16.mxu0 0
  %2947 = vmatpush1.bf16.msra.mxu0 %v2842
  %2948 = vmatprep.subr.bf16.mxu0 0
  %2949 = vmatpush1.bf16.msra.mxu0 %v2841
  %2950 = vmatprep.subr.bf16.mxu0 0
  %2951 = vmatpush1.bf16.msra.mxu0 %v2840
  %2952 = vmatprep.subr.bf16.mxu0 0
  %2953 = vmatpush1.bf16.msra.mxu0 %v2839
  %2954 = vmatprep.subr.bf16.mxu0 0
  %2955 = vmatpush1.bf16.msra.mxu0 %v2838
  %2956 = vmatprep.subr.bf16.mxu0 0
  %2957 = vmatpush1.bf16.msra.mxu0 %v2837
  %2958 = vmatprep.subr.bf16.mxu0 0
  %2959 = vmatpush2.bf16.msra.mxu0 %v2852
  %2960 = vmatprep.subr.bf16.mxu0 0
  %2961 = vmatpush2.bf16.msra.mxu0 %v2851
  %2962 = vmatprep.subr.bf16.mxu0 0
  %2963 = vmatpush2.bf16.msra.mxu0 %v2850
  %2964 = vmatprep.subr.bf16.mxu0 0
  %2965 = vmatpush2.bf16.msra.mxu0 %v2849
  %2966 = vmatprep.subr.bf16.mxu0 0
  %2967 = vmatpush2.bf16.msra.mxu0 %v2848
  %2968 = vmatprep.subr.bf16.mxu0 0
  %2969 = vmatpush2.bf16.msra.mxu0 %v2847
  %2970 = vmatprep.subr.bf16.mxu0 0
  %2971 = vmatpush2.bf16.msra.mxu0 %v2846
  %2972 = vmatprep.subr.bf16.mxu0 0
  %2973 = vmatpush2.bf16.msra.mxu0 %v2845
  %2974 = vmatprep.mubr.bf16.mxu0 %v2620
  %2975 = vmatmul.mubr.bf16.gmra.mxu0 %v2619
  %v2976 = vpop.f32.mrf.mxu0
  %v2977 = vadd.f32 %v2920, %v2976
  %v2978 = vpop.f32.mrf.mxu0
  %v2979 = vpop.f32.mrf.mxu0
  %v2980 = vadd.f32 %v2923, %v2979
  %v2981 = vpop.f32.mrf.mxu0
  %2982 = vmatprep.mubr.bf16.mxu0 %v2624
  %2983 = vmatmul.mubr.bf16.gmra.mxu0 %v2623
  %v2984 = vpop.f32.mrf.mxu0
  %v2985 = vadd.f32 %v2928, %v2984
  %v2986 = vpop.f32.mrf.mxu0
  %v2987 = vpop.f32.mrf.mxu0
  %v2988 = vadd.f32 %v2931, %v2987
  %v2989 = vpop.f32.mrf.mxu0
  %2990 = vmatprep.mubr.bf16.mxu0 %v2628
  %2991 = vmatmul.mubr.bf16.gmra.mxu0 %v2627
  %v2992 = vpop.f32.mrf.mxu0
  %v2993 = vadd.f32 %v2936, %v2992
  %v2994 = vpop.f32.mrf.mxu0
  %v2995 = vpop.f32.mrf.mxu0
  %v2996 = vadd.f32 %v2939, %v2995
  %v2997 = vpop.f32.mrf.mxu0
  %2998 = vdwg.mxu0
  %v2999 = vadd.f32 %v2375, %v2977
  %v3000 = vadd.f32 %v2378, %v2980
  %v3001 = vadd.f32 %v2383, %v2985
  %v3002 = vadd.f32 %v2386, %v2988
  %v3003 = vadd.f32 %v2391, %v2993
  %v3004 = vadd.f32 %v2394, %v2996
  %v3005 = vld [vmem:[%s9 + $0x30] sm:$0xff]
  %v3006 = vld [vmem:[%s9 + $0x38] sm:$0xff]
  %v3007 = vld [vmem:[%s9 + $0x70] sm:$0xff]
  %v3008 = vld [vmem:[%s9 + $0x78] sm:$0xff]
  %v3009 = vld [vmem:[%s9 + $0xb0] sm:$0xff]
  %v3010 = vld [vmem:[%s9 + $0xb8] sm:$0xff]
  %v3011 = vld [vmem:[%s9 + $0xf0] sm:$0xff]
  %v3012 = vld [vmem:[%s9 + $0xf8] sm:$0xff]
  %v3013 = vld [vmem:[%s10 + $0xc] sm:$0xf]
  %v3015 = vlaneseq
  %v3016 = vshrl.u32 %v3015, 7
  %v3017 = vsub.s32 0, %v3016
  %v3018 = vrot.slane %v3013, %v3017
  %v3019 = vlaneseq
  %v3020 = vshrl.u32 %v3019, 7
  %v3021 = vsub.s32 1, %v3020
  %v3022 = vrot.slane %v3013, %v3021
  %v3023 = vlaneseq
  %v3024 = vshrl.u32 %v3023, 7
  %v3025 = vsub.s32 2, %v3024
  %v3026 = vrot.slane %v3013, %v3025
  %v3027 = vlaneseq
  %v3028 = vshrl.u32 %v3027, 7
  %v3029 = vsub.s32 3, %v3028
  %v3030 = vrot.slane %v3013, %v3029
  %v3043 = vunpack.c.l.b16 %v3005
  %v3044 = vunpack.c.h.b16 %v3005
  %v3045 = vunpack.c.l.b16 %v3006
  %v3046 = vunpack.c.h.b16 %v3006
  %v3047 = vunpack.c.l.b16 %v3007
  %v3048 = vunpack.c.h.b16 %v3007
  %v3049 = vunpack.c.l.b16 %v3008
  %v3050 = vunpack.c.h.b16 %v3008
  %v3051 = vunpack.c.l.b16 %v3009
  %v3052 = vunpack.c.h.b16 %v3009
  %v3053 = vunpack.c.l.b16 %v3010
  %v3054 = vunpack.c.h.b16 %v3010
  %v3055 = vunpack.c.l.b16 %v3011
  %v3056 = vunpack.c.h.b16 %v3011
  %v3057 = vunpack.c.l.b16 %v3012
  %v3058 = vunpack.c.h.b16 %v3012
  %v3059 = vpack.c.b16 %v3047, %v3043
  %v3060 = vpack.c.b16 %v3048, %v3044
  %v3061 = vpack.c.b16 %v3049, %v3045
  %v3062 = vpack.c.b16 %v3050, %v3046
  %v3063 = vpack.c.b16 %v3055, %v3051
  %v3064 = vpack.c.b16 %v3056, %v3052
  %v3065 = vpack.c.b16 %v3057, %v3053
  %v3066 = vpack.c.b16 %v3058, %v3054
  %3075 = vmatprep.subr.bf16.mxu0 0
  %3076 = vmatpush1.bf16.msra.mxu0 0
  %3077 = vmatprep.subr.bf16.mxu0 0
  %3078 = vmatpush1.bf16.msra.mxu0 0
  %3079 = vmatprep.subr.bf16.mxu0 0
  %3080 = vmatpush1.bf16.msra.mxu0 0
  %3081 = vmatprep.subr.bf16.mxu0 0
  %3082 = vmatpush1.bf16.msra.mxu0 0
  %3083 = vmatprep.subr.bf16.mxu0 0
  %3084 = vmatpush1.bf16.msra.mxu0 0
  %3085 = vmatprep.subr.bf16.mxu0 0
  %3086 = vmatpush1.bf16.msra.mxu0 0
  %3087 = vmatprep.subr.bf16.mxu0 %v3064
  %3088 = vmatpush1.bf16.msra.mxu0 %v3063
  %3089 = vmatprep.subr.bf16.mxu0 %v3060
  %3090 = vmatpush1.bf16.msra.mxu0 %v3059
  %3091 = vmatprep.subr.bf16.mxu0 0
  %3092 = vmatpush2.bf16.msra.mxu0 0
  %3093 = vmatprep.subr.bf16.mxu0 0
  %3094 = vmatpush2.bf16.msra.mxu0 0
  %3095 = vmatprep.subr.bf16.mxu0 0
  %3096 = vmatpush2.bf16.msra.mxu0 0
  %3097 = vmatprep.subr.bf16.mxu0 0
  %3098 = vmatpush2.bf16.msra.mxu0 0
  %3099 = vmatprep.subr.bf16.mxu0 0
  %3100 = vmatpush2.bf16.msra.mxu0 0
  %3101 = vmatprep.subr.bf16.mxu0 0
  %3102 = vmatpush2.bf16.msra.mxu0 0
  %3103 = vmatprep.subr.bf16.mxu0 0
  %3104 = vmatpush2.bf16.msra.mxu0 0
  %3105 = vmatprep.subr.bf16.mxu0 0
  %3106 = vmatpush2.bf16.msra.mxu0 0
  %3107 = vmatprep.mubr.bf16.mxu0 0
  %3108 = vmatmul.mubr.bf16.gmra.mxu0 %v1255
  %v3109 = vpop.f32.mrf.mxu0
  %v3110 = vadd.f32 %v3018, %v3109
  %v3111 = vpop.f32.mrf.mxu0
  %v3112 = vadd.f32 %v3022, %v3111
  %v3113 = vpop.f32.mrf.mxu0
  %v3114 = vadd.f32 %v3018, %v3113
  %v3115 = vpop.f32.mrf.mxu0
  %v3116 = vadd.f32 %v3022, %v3115
  %3117 = vmatprep.mubr.bf16.mxu0 0
  %3118 = vmatmul.mubr.bf16.gmra.mxu0 %v1258
  %v3119 = vpop.f32.mrf.mxu0
  %v3120 = vadd.f32 %v3018, %v3119
  %v3121 = vpop.f32.mrf.mxu0
  %v3122 = vadd.f32 %v3022, %v3121
  %v3123 = vpop.f32.mrf.mxu0
  %v3124 = vadd.f32 %v3018, %v3123
  %v3125 = vpop.f32.mrf.mxu0
  %v3126 = vadd.f32 %v3022, %v3125
  %3127 = vmatprep.mubr.bf16.mxu0 0
  %3128 = vmatmul.mubr.bf16.gmra.mxu0 %v1261
  %v3129 = vpop.f32.mrf.mxu0
  %v3130 = vadd.f32 %v3018, %v3129
  %v3131 = vpop.f32.mrf.mxu0
  %v3132 = vadd.f32 %v3022, %v3131
  %v3133 = vpop.f32.mrf.mxu0
  %v3134 = vadd.f32 %v3018, %v3133
  %v3135 = vpop.f32.mrf.mxu0
  %v3136 = vadd.f32 %v3022, %v3135
  %3137 = vdwg.mxu0
  %3138 = vmatprep.subr.bf16.mxu0 0
  %3139 = vmatpush1.bf16.msra.mxu0 0
  %3140 = vmatprep.subr.bf16.mxu0 0
  %3141 = vmatpush1.bf16.msra.mxu0 0
  %3142 = vmatprep.subr.bf16.mxu0 0
  %3143 = vmatpush1.bf16.msra.mxu0 0
  %3144 = vmatprep.subr.bf16.mxu0 0
  %3145 = vmatpush1.bf16.msra.mxu0 0
  %3146 = vmatprep.subr.bf16.mxu0 0
  %3147 = vmatpush1.bf16.msra.mxu0 0
  %3148 = vmatprep.subr.bf16.mxu0 0
  %3149 = vmatpush1.bf16.msra.mxu0 0
  %3150 = vmatprep.subr.bf16.mxu0 %v3066
  %3151 = vmatpush1.bf16.msra.mxu0 %v3065
  %3152 = vmatprep.subr.bf16.mxu0 %v3062
  %3153 = vmatpush1.bf16.msra.mxu0 %v3061
  %3154 = vmatprep.subr.bf16.mxu0 0
  %3155 = vmatpush2.bf16.msra.mxu0 0
  %3156 = vmatprep.subr.bf16.mxu0 0
  %3157 = vmatpush2.bf16.msra.mxu0 0
  %3158 = vmatprep.subr.bf16.mxu0 0
  %3159 = vmatpush2.bf16.msra.mxu0 0
  %3160 = vmatprep.subr.bf16.mxu0 0
  %3161 = vmatpush2.bf16.msra.mxu0 0
  %3162 = vmatprep.subr.bf16.mxu0 0
  %3163 = vmatpush2.bf16.msra.mxu0 0
  %3164 = vmatprep.subr.bf16.mxu0 0
  %3165 = vmatpush2.bf16.msra.mxu0 0
  %3166 = vmatprep.subr.bf16.mxu0 0
  %3167 = vmatpush2.bf16.msra.mxu0 0
  %3168 = vmatprep.subr.bf16.mxu0 0
  %3169 = vmatpush2.bf16.msra.mxu0 0
  %3170 = vmatprep.mubr.bf16.mxu0 0
  %3171 = vmatmul.mubr.bf16.gmra.mxu0 %v1255
  %v3172 = vpop.f32.mrf.mxu0
  %v3173 = vadd.f32 %v3026, %v3172
  %v3174 = vpop.f32.mrf.mxu0
  %v3175 = vadd.f32 %v3030, %v3174
  %v3176 = vpop.f32.mrf.mxu0
  %v3177 = vadd.f32 %v3026, %v3176
  %v3178 = vpop.f32.mrf.mxu0
  %v3179 = vadd.f32 %v3030, %v3178
  %3180 = vmatprep.mubr.bf16.mxu0 0
  %3181 = vmatmul.mubr.bf16.gmra.mxu0 %v1258
  %v3182 = vpop.f32.mrf.mxu0
  %v3183 = vadd.f32 %v3026, %v3182
  %v3184 = vpop.f32.mrf.mxu0
  %v3185 = vadd.f32 %v3030, %v3184
  %v3186 = vpop.f32.mrf.mxu0
  %v3187 = vadd.f32 %v3026, %v3186
  %v3188 = vpop.f32.mrf.mxu0
  %v3189 = vadd.f32 %v3030, %v3188
  %3190 = vmatprep.mubr.bf16.mxu0 0
  %3191 = vmatmul.mubr.bf16.gmra.mxu0 %v1261
  %v3192 = vpop.f32.mrf.mxu0
  %v3193 = vadd.f32 %v3026, %v3192
  %v3194 = vpop.f32.mrf.mxu0
  %v3195 = vadd.f32 %v3030, %v3194
  %v3196 = vpop.f32.mrf.mxu0
  %v3197 = vadd.f32 %v3026, %v3196
  %v3198 = vpop.f32.mrf.mxu0
  %v3199 = vadd.f32 %v3030, %v3198
  %3200 = vdwg.mxu0
  %v3201 = vmax.f32 %v3110, 0.0
  %v3202 = vmax.f32 %v3112, 0.0
  %v3203 = vmax.f32 %v3173, 0.0
  %v3204 = vmax.f32 %v3175, 0.0
  %v3205 = vmax.f32 %v3114, 0.0
  %v3206 = vmax.f32 %v3116, 0.0
  %v3207 = vmax.f32 %v3177, 0.0
  %v3208 = vmax.f32 %v3179, 0.0
  %v3209 = vmax.f32 %v3120, 0.0
  %v3210 = vmax.f32 %v3122, 0.0
  %v3211 = vmax.f32 %v3183, 0.0
  %v3212 = vmax.f32 %v3185, 0.0
  %v3213 = vmax.f32 %v3124, 0.0
  %v3214 = vmax.f32 %v3126, 0.0
  %v3215 = vmax.f32 %v3187, 0.0
  %v3216 = vmax.f32 %v3189, 0.0
  %v3217 = vmax.f32 %v3130, 0.0
  %v3218 = vmax.f32 %v3132, 0.0
  %v3219 = vmax.f32 %v3193, 0.0
  %v3220 = vmax.f32 %v3195, 0.0
  %v3221 = vmax.f32 %v3134, 0.0
  %v3222 = vmax.f32 %v3136, 0.0
  %v3223 = vmax.f32 %v3197, 0.0
  %v3224 = vmax.f32 %v3199, 0.0
  %v3225 = vpack.c.bf16 %v3205, %v3201
  %v3226 = vpack.c.bf16 %v3206, %v3202
  %v3227 = vpack.c.bf16 %v3207, %v3203
  %v3228 = vpack.c.bf16 %v3208, %v3204
  %v3229 = vpack.c.bf16 %v3213, %v3209
  %v3230 = vpack.c.bf16 %v3214, %v3210
  %v3231 = vpack.c.bf16 %v3215, %v3211
  %v3232 = vpack.c.bf16 %v3216, %v3212
  %v3233 = vpack.c.bf16 %v3221, %v3217
  %v3234 = vpack.c.bf16 %v3222, %v3218
  %v3235 = vpack.c.bf16 %v3223, %v3219
  %v3236 = vpack.c.bf16 %v3224, %v3220
  %v3237 = vld [vmem:[%s11 + $0x300] sm:$0xf]
  %v3238 = vld [vmem:[%s11 + $0x304] sm:$0xf]
  %v3239 = vld [vmem:[%s11 + $0x308] sm:$0xf]
  %v3240 = vld [vmem:[%s11 + $0x30c] sm:$0xf]
  %v3241 = vld [vmem:[%s11 + $0x310] sm:$0xf]
  %v3242 = vld [vmem:[%s11 + $0x314] sm:$0xf]
  %v3243 = vld [vmem:[%s11 + $0x318] sm:$0xf]
  %v3244 = vld [vmem:[%s11 + $0x31c] sm:$0xf]
  %v3245 = vld [vmem:[%s11 + $0x320] sm:$0xf]
  %v3246 = vld [vmem:[%s11 + $0x324] sm:$0xf]
  %v3247 = vld [vmem:[%s11 + $0x328] sm:$0xf]
  %v3248 = vld [vmem:[%s11 + $0x32c] sm:$0xf]
  %v3249 = vld [vmem:[%s11 + $0x330] sm:$0xf]
  %v3250 = vld [vmem:[%s11 + $0x334] sm:$0xf]
  %v3251 = vld [vmem:[%s11 + $0x338] sm:$0xf]
  %v3252 = vld [vmem:[%s11 + $0x33c] sm:$0xf]
  %v3253 = vld [vmem:[%s11 + $0x340] sm:$0xf]
  %v3254 = vld [vmem:[%s11 + $0x344] sm:$0xf]
  %v3255 = vld [vmem:[%s11 + $0x348] sm:$0xf]
  %v3256 = vld [vmem:[%s11 + $0x34c] sm:$0xf]
  %v3257 = vld [vmem:[%s11 + $0x350] sm:$0xf]
  %v3258 = vld [vmem:[%s11 + $0x354] sm:$0xf]
  %v3259 = vld [vmem:[%s11 + $0x358] sm:$0xf]
  %v3260 = vld [vmem:[%s11 + $0x35c] sm:$0xf]
  %v3261 = vld [vmem:[%s11 + $0x360] sm:$0xf]
  %v3262 = vld [vmem:[%s11 + $0x364] sm:$0xf]
  %v3263 = vld [vmem:[%s11 + $0x368] sm:$0xf]
  %v3264 = vld [vmem:[%s11 + $0x36c] sm:$0xf]
  %v3265 = vld [vmem:[%s11 + $0x370] sm:$0xf]
  %v3266 = vld [vmem:[%s11 + $0x374] sm:$0xf]
  %v3267 = vld [vmem:[%s11 + $0x378] sm:$0xf]
  %v3268 = vld [vmem:[%s11 + $0x37c] sm:$0xf]
  %v3269 = vld [vmem:[%s11 + $0x380] sm:$0xf]
  %v3270 = vld [vmem:[%s11 + $0x384] sm:$0xf]
  %v3271 = vld [vmem:[%s11 + $0x388] sm:$0xf]
  %v3272 = vld [vmem:[%s11 + $0x38c] sm:$0xf]
  %v3273 = vld [vmem:[%s11 + $0x390] sm:$0xf]
  %v3274 = vld [vmem:[%s11 + $0x394] sm:$0xf]
  %v3275 = vld [vmem:[%s11 + $0x398] sm:$0xf]
  %v3276 = vld [vmem:[%s11 + $0x39c] sm:$0xf]
  %v3277 = vld [vmem:[%s11 + $0x3a0] sm:$0xf]
  %v3278 = vld [vmem:[%s11 + $0x3a4] sm:$0xf]
  %v3279 = vld [vmem:[%s11 + $0x3a8] sm:$0xf]
  %v3280 = vld [vmem:[%s11 + $0x3ac] sm:$0xf]
  %v3281 = vld [vmem:[%s11 + $0x3b0] sm:$0xf]
  %v3282 = vld [vmem:[%s11 + $0x3b4] sm:$0xf]
  %v3283 = vld [vmem:[%s11 + $0x3b8] sm:$0xf]
  %v3284 = vld [vmem:[%s11 + $0x3bc] sm:$0xf]
  %v3285 = vld [vmem:[%s11 + $0x3c0] sm:$0xf]
  %v3286 = vld [vmem:[%s11 + $0x3c4] sm:$0xf]
  %v3287 = vld [vmem:[%s11 + $0x3c8] sm:$0xf]
  %v3288 = vld [vmem:[%s11 + $0x3cc] sm:$0xf]
  %v3289 = vld [vmem:[%s11 + $0x3d0] sm:$0xf]
  %v3290 = vld [vmem:[%s11 + $0x3d4] sm:$0xf]
  %v3291 = vld [vmem:[%s11 + $0x3d8] sm:$0xf]
  %v3292 = vld [vmem:[%s11 + $0x3dc] sm:$0xf]
  %v3293 = vld [vmem:[%s11 + $0x3e0] sm:$0xf]
  %v3294 = vld [vmem:[%s11 + $0x3e4] sm:$0xf]
  %v3295 = vld [vmem:[%s11 + $0x3e8] sm:$0xf]
  %v3296 = vld [vmem:[%s11 + $0x3ec] sm:$0xf]
  %v3297 = vld [vmem:[%s11 + $0x3f0] sm:$0xf]
  %v3298 = vld [vmem:[%s11 + $0x3f4] sm:$0xf]
  %v3299 = vld [vmem:[%s11 + $0x3f8] sm:$0xf]
  %v3300 = vld [vmem:[%s11 + $0x3fc] sm:$0xf]
  %v3365 = vunpack.c.l.b16 %v3237
  %v3366 = vunpack.c.l.b16 %v3238
  %v3367 = vunpack.c.l.b16 %v3239
  %v3368 = vunpack.c.l.b16 %v3240
  %v3369 = vunpack.c.l.b16 %v3241
  %v3370 = vunpack.c.l.b16 %v3242
  %v3371 = vunpack.c.l.b16 %v3243
  %v3372 = vunpack.c.l.b16 %v3244
  %v3373 = vunpack.c.l.b16 %v3245
  %v3374 = vunpack.c.l.b16 %v3246
  %v3375 = vunpack.c.l.b16 %v3247
  %v3376 = vunpack.c.l.b16 %v3248
  %v3377 = vunpack.c.l.b16 %v3249
  %v3378 = vunpack.c.l.b16 %v3250
  %v3379 = vunpack.c.l.b16 %v3251
  %v3380 = vunpack.c.l.b16 %v3252
  %v3381 = vunpack.c.l.b16 %v3253
  %v3382 = vunpack.c.l.b16 %v3254
  %v3383 = vunpack.c.l.b16 %v3255
  %v3384 = vunpack.c.l.b16 %v3256
  %v3385 = vunpack.c.l.b16 %v3257
  %v3386 = vunpack.c.l.b16 %v3258
  %v3387 = vunpack.c.l.b16 %v3259
  %v3388 = vunpack.c.l.b16 %v3260
  %v3389 = vunpack.c.l.b16 %v3261
  %v3390 = vunpack.c.l.b16 %v3262
  %v3391 = vunpack.c.l.b16 %v3263
  %v3392 = vunpack.c.l.b16 %v3264
  %v3393 = vunpack.c.l.b16 %v3265
  %v3394 = vunpack.c.l.b16 %v3266
  %v3395 = vunpack.c.l.b16 %v3267
  %v3396 = vunpack.c.l.b16 %v3268
  %v3397 = vunpack.c.l.b16 %v3269
  %v3398 = vunpack.c.l.b16 %v3270
  %v3399 = vunpack.c.l.b16 %v3271
  %v3400 = vunpack.c.l.b16 %v3272
  %v3401 = vunpack.c.l.b16 %v3273
  %v3402 = vunpack.c.l.b16 %v3274
  %v3403 = vunpack.c.l.b16 %v3275
  %v3404 = vunpack.c.l.b16 %v3276
  %v3405 = vunpack.c.l.b16 %v3277
  %v3406 = vunpack.c.l.b16 %v3278
  %v3407 = vunpack.c.l.b16 %v3279
  %v3408 = vunpack.c.l.b16 %v3280
  %v3409 = vunpack.c.l.b16 %v3281
  %v3410 = vunpack.c.l.b16 %v3282
  %v3411 = vunpack.c.l.b16 %v3283
  %v3412 = vunpack.c.l.b16 %v3284
  %v3413 = vunpack.c.l.b16 %v3285
  %v3414 = vunpack.c.l.b16 %v3286
  %v3415 = vunpack.c.l.b16 %v3287
  %v3416 = vunpack.c.l.b16 %v3288
  %v3417 = vunpack.c.l.b16 %v3289
  %v3418 = vunpack.c.l.b16 %v3290
  %v3419 = vunpack.c.l.b16 %v3291
  %v3420 = vunpack.c.l.b16 %v3292
  %v3421 = vunpack.c.l.b16 %v3293
  %v3422 = vunpack.c.l.b16 %v3294
  %v3423 = vunpack.c.l.b16 %v3295
  %v3424 = vunpack.c.l.b16 %v3296
  %v3425 = vunpack.c.l.b16 %v3297
  %v3426 = vunpack.c.l.b16 %v3298
  %v3427 = vunpack.c.l.b16 %v3299
  %v3428 = vunpack.c.l.b16 %v3300
  %v3429 = vpack.c.b16 %v3366, %v3365
  %v3430 = vpack.c.b16 %v3368, %v3367
  %v3431 = vpack.c.b16 %v3370, %v3369
  %v3432 = vpack.c.b16 %v3372, %v3371
  %v3433 = vpack.c.b16 %v3374, %v3373
  %v3434 = vpack.c.b16 %v3376, %v3375
  %v3435 = vpack.c.b16 %v3378, %v3377
  %v3436 = vpack.c.b16 %v3380, %v3379
  %v3437 = vpack.c.b16 %v3382, %v3381
  %v3438 = vpack.c.b16 %v3384, %v3383
  %v3439 = vpack.c.b16 %v3386, %v3385
  %v3440 = vpack.c.b16 %v3388, %v3387
  %v3441 = vpack.c.b16 %v3390, %v3389
  %v3442 = vpack.c.b16 %v3392, %v3391
  %v3443 = vpack.c.b16 %v3394, %v3393
  %v3444 = vpack.c.b16 %v3396, %v3395
  %v3445 = vpack.c.b16 %v3398, %v3397
  %v3446 = vpack.c.b16 %v3400, %v3399
  %v3447 = vpack.c.b16 %v3402, %v3401
  %v3448 = vpack.c.b16 %v3404, %v3403
  %v3449 = vpack.c.b16 %v3406, %v3405
  %v3450 = vpack.c.b16 %v3408, %v3407
  %v3451 = vpack.c.b16 %v3410, %v3409
  %v3452 = vpack.c.b16 %v3412, %v3411
  %v3453 = vpack.c.b16 %v3414, %v3413
  %v3454 = vpack.c.b16 %v3416, %v3415
  %v3455 = vpack.c.b16 %v3418, %v3417
  %v3456 = vpack.c.b16 %v3420, %v3419
  %v3457 = vpack.c.b16 %v3422, %v3421
  %v3458 = vpack.c.b16 %v3424, %v3423
  %v3459 = vpack.c.b16 %v3426, %v3425
  %v3460 = vpack.c.b16 %v3428, %v3427
  %3493 = vmatprep.subr.bf16.mxu0 0
  %3494 = vmatpush1.bf16.msra.mxu0 %v3436
  %3495 = vmatprep.subr.bf16.mxu0 0
  %3496 = vmatpush1.bf16.msra.mxu0 %v3435
  %3497 = vmatprep.subr.bf16.mxu0 0
  %3498 = vmatpush1.bf16.msra.mxu0 %v3434
  %3499 = vmatprep.subr.bf16.mxu0 0
  %3500 = vmatpush1.bf16.msra.mxu0 %v3433
  %3501 = vmatprep.subr.bf16.mxu0 0
  %3502 = vmatpush1.bf16.msra.mxu0 %v3432
  %3503 = vmatprep.subr.bf16.mxu0 0
  %3504 = vmatpush1.bf16.msra.mxu0 %v3431
  %3505 = vmatprep.subr.bf16.mxu0 0
  %3506 = vmatpush1.bf16.msra.mxu0 %v3430
  %3507 = vmatprep.subr.bf16.mxu0 0
  %3508 = vmatpush1.bf16.msra.mxu0 %v3429
  %3509 = vmatprep.subr.bf16.mxu0 0
  %3510 = vmatpush2.bf16.msra.mxu0 %v3444
  %3511 = vmatprep.subr.bf16.mxu0 0
  %3512 = vmatpush2.bf16.msra.mxu0 %v3443
  %3513 = vmatprep.subr.bf16.mxu0 0
  %3514 = vmatpush2.bf16.msra.mxu0 %v3442
  %3515 = vmatprep.subr.bf16.mxu0 0
  %3516 = vmatpush2.bf16.msra.mxu0 %v3441
  %3517 = vmatprep.subr.bf16.mxu0 0
  %3518 = vmatpush2.bf16.msra.mxu0 %v3440
  %3519 = vmatprep.subr.bf16.mxu0 0
  %3520 = vmatpush2.bf16.msra.mxu0 %v3439
  %3521 = vmatprep.subr.bf16.mxu0 0
  %3522 = vmatpush2.bf16.msra.mxu0 %v3438
  %3523 = vmatprep.subr.bf16.mxu0 0
  %3524 = vmatpush2.bf16.msra.mxu0 %v3437
  %3525 = vmatprep.mubr.bf16.mxu0 %v3226
  %3526 = vmatmul.mubr.bf16.gmra.mxu0 %v3225
  %v3527 = vpop.f32.mrf.mxu0
  %v3528 = vadd.f32 0.0, %v3527
  %v3529 = vpop.f32.mrf.mxu0
  %v3530 = vpop.f32.mrf.mxu0
  %v3531 = vadd.f32 0.0, %v3530
  %v3532 = vpop.f32.mrf.mxu0
  %3533 = vmatprep.mubr.bf16.mxu0 %v3230
  %3534 = vmatmul.mubr.bf16.gmra.mxu0 %v3229
  %v3535 = vpop.f32.mrf.mxu0
  %v3536 = vadd.f32 0.0, %v3535
  %v3537 = vpop.f32.mrf.mxu0
  %v3538 = vpop.f32.mrf.mxu0
  %v3539 = vadd.f32 0.0, %v3538
  %v3540 = vpop.f32.mrf.mxu0
  %3541 = vmatprep.mubr.bf16.mxu0 %v3234
  %3542 = vmatmul.mubr.bf16.gmra.mxu0 %v3233
  %v3543 = vpop.f32.mrf.mxu0
  %v3544 = vadd.f32 0.0, %v3543
  %v3545 = vpop.f32.mrf.mxu0
  %v3546 = vpop.f32.mrf.mxu0
  %v3547 = vadd.f32 0.0, %v3546
  %v3548 = vpop.f32.mrf.mxu0
  %3549 = vdwg.mxu0
  %3550 = vmatprep.subr.bf16.mxu0 0
  %3551 = vmatpush1.bf16.msra.mxu0 %v3452
  %3552 = vmatprep.subr.bf16.mxu0 0
  %3553 = vmatpush1.bf16.msra.mxu0 %v3451
  %3554 = vmatprep.subr.bf16.mxu0 0
  %3555 = vmatpush1.bf16.msra.mxu0 %v3450
  %3556 = vmatprep.subr.bf16.mxu0 0
  %3557 = vmatpush1.bf16.msra.mxu0 %v3449
  %3558 = vmatprep.subr.bf16.mxu0 0
  %3559 = vmatpush1.bf16.msra.mxu0 %v3448
  %3560 = vmatprep.subr.bf16.mxu0 0
  %3561 = vmatpush1.bf16.msra.mxu0 %v3447
  %3562 = vmatprep.subr.bf16.mxu0 0
  %3563 = vmatpush1.bf16.msra.mxu0 %v3446
  %3564 = vmatprep.subr.bf16.mxu0 0
  %3565 = vmatpush1.bf16.msra.mxu0 %v3445
  %3566 = vmatprep.subr.bf16.mxu0 0
  %3567 = vmatpush2.bf16.msra.mxu0 %v3460
  %3568 = vmatprep.subr.bf16.mxu0 0
  %3569 = vmatpush2.bf16.msra.mxu0 %v3459
  %3570 = vmatprep.subr.bf16.mxu0 0
  %3571 = vmatpush2.bf16.msra.mxu0 %v3458
  %3572 = vmatprep.subr.bf16.mxu0 0
  %3573 = vmatpush2.bf16.msra.mxu0 %v3457
  %3574 = vmatprep.subr.bf16.mxu0 0
  %3575 = vmatpush2.bf16.msra.mxu0 %v3456
  %3576 = vmatprep.subr.bf16.mxu0 0
  %3577 = vmatpush2.bf16.msra.mxu0 %v3455
  %3578 = vmatprep.subr.bf16.mxu0 0
  %3579 = vmatpush2.bf16.msra.mxu0 %v3454
  %3580 = vmatprep.subr.bf16.mxu0 0
  %3581 = vmatpush2.bf16.msra.mxu0 %v3453
  %3582 = vmatprep.mubr.bf16.mxu0 %v3228
  %3583 = vmatmul.mubr.bf16.gmra.mxu0 %v3227
  %v3584 = vpop.f32.mrf.mxu0
  %v3585 = vadd.f32 %v3528, %v3584
  %v3586 = vpop.f32.mrf.mxu0
  %v3587 = vpop.f32.mrf.mxu0
  %v3588 = vadd.f32 %v3531, %v3587
  %v3589 = vpop.f32.mrf.mxu0
  %3590 = vmatprep.mubr.bf16.mxu0 %v3232
  %3591 = vmatmul.mubr.bf16.gmra.mxu0 %v3231
  %v3592 = vpop.f32.mrf.mxu0
  %v3593 = vadd.f32 %v3536, %v3592
  %v3594 = vpop.f32.mrf.mxu0
  %v3595 = vpop.f32.mrf.mxu0
  %v3596 = vadd.f32 %v3539, %v3595
  %v3597 = vpop.f32.mrf.mxu0
  %3598 = vmatprep.mubr.bf16.mxu0 %v3236
  %3599 = vmatmul.mubr.bf16.gmra.mxu0 %v3235
  %v3600 = vpop.f32.mrf.mxu0
  %v3601 = vadd.f32 %v3544, %v3600
  %v3602 = vpop.f32.mrf.mxu0
  %v3603 = vpop.f32.mrf.mxu0
  %v3604 = vadd.f32 %v3547, %v3603
  %v3605 = vpop.f32.mrf.mxu0
  %3606 = vdwg.mxu0
  %v3607 = vadd.f32 %v2999, %v3585
  %v3608 = vadd.f32 %v3000, %v3588
  %v3609 = vadd.f32 %v3001, %v3593
  %v3610 = vadd.f32 %v3002, %v3596
  %v3611 = vadd.f32 %v3003, %v3601
  %v3612 = vadd.f32 %v3004, %v3604
  %v3613 = vld [vmem:[%s12 + $0x4] sm:$0x1]
  %v3614 = vlaneseq
  %v3615 = vshrl.u32 %v3614, 7
  %v3616 = vsub.s32 0, %v3615
  %v3617 = vrot.slane %v3613, %v3616
  %v3618 = vadd.f32 %v3607, %v3617
  %v3619 = vadd.f32 %v3608, %v3617
  %v3620 = vadd.f32 %v3609, %v3617
  %v3621 = vadd.f32 %v3610, %v3617
  %v3622 = vadd.f32 %v3611, %v3617
  %v3623 = vadd.f32 %v3612, %v3617
  %v3624 = vadd.f32 %v1175, %v3618
  %v3625 = vadd.f32 %v1176, %v3619
  %v3626 = vadd.f32 %v1177, %v3620
  %v3627 = vadd.f32 %v1178, %v3621
  %v3628 = vadd.f32 %v1179, %v3622
  %v3629 = vadd.f32 %v1180, %v3623
  %v3630 = vld [vmem:[%s12 + $0x7] sm:$0x1]
  %v3631 = vld [vmem:[%s12 + $0x8] sm:$0x1]
  %v3632 = vsel %vm206, %v3624, 0.0
  %3633 = vadd.xlane.f32.xlu0 %v3632
  %v3634 = vpop.xlane.xlu0 %3633
  %v3635 = vsel %vm206, %v3625, 0.0
  %3636 = vadd.xlane.f32.xlu0 %v3635
  %v3637 = vpop.xlane.xlu0 %3636
  %v3638 = vsel %vm206, %v3626, 0.0
  %3639 = vadd.xlane.f32.xlu0 %v3638
  %v3640 = vpop.xlane.xlu0 %3639
  %v3641 = vsel %vm206, %v3627, 0.0
  %3642 = vadd.xlane.f32.xlu0 %v3641
  %v3643 = vpop.xlane.xlu0 %3642
  %v3644 = vsel %vm206, %v3628, 0.0
  %3645 = vadd.xlane.f32.xlu0 %v3644
  %v3646 = vpop.xlane.xlu0 %3645
  %v3647 = vsel %vm206, %v3629, 0.0
  %3648 = vadd.xlane.f32.xlu0 %v3647
  %v3649 = vpop.xlane.xlu0 %3648
  %v3650 = vmul.f32 %v3634, %v1100
  %v3651 = vmul.f32 %v3637, %v1100
  %v3652 = vmul.f32 %v3640, %v1100
  %v3653 = vmul.f32 %v3643, %v1100
  %v3654 = vmul.f32 %v3646, %v1100
  %v3655 = vmul.f32 %v3649, %v1100
  %v3656 = vsub.f32 %v3624, %v3650
  %v3657 = vsub.f32 %v3625, %v3651
  %v3658 = vsub.f32 %v3626, %v3652
  %v3659 = vsub.f32 %v3627, %v3653
  %v3660 = vsub.f32 %v3628, %v3654
  %v3661 = vsub.f32 %v3629, %v3655
  %v3662 = vmul.f32 %v3656, %v3656
  %v3663 = vmul.f32 %v3657, %v3657
  %v3664 = vmul.f32 %v3658, %v3658
  %v3665 = vmul.f32 %v3659, %v3659
  %v3666 = vmul.f32 %v3660, %v3660
  %v3667 = vmul.f32 %v3661, %v3661
  %v3668 = vsel %vm206, %v3662, 0.0
  %3669 = vadd.xlane.f32.xlu0 %v3668
  %v3670 = vpop.xlane.xlu0 %3669
  %v3671 = vsel %vm206, %v3663, 0.0
  %3672 = vadd.xlane.f32.xlu0 %v3671
  %v3673 = vpop.xlane.xlu0 %3672
  %v3674 = vsel %vm206, %v3664, 0.0
  %3675 = vadd.xlane.f32.xlu0 %v3674
  %v3676 = vpop.xlane.xlu0 %3675
  %v3677 = vsel %vm206, %v3665, 0.0
  %3678 = vadd.xlane.f32.xlu0 %v3677
  %v3679 = vpop.xlane.xlu0 %3678
  %v3680 = vsel %vm206, %v3666, 0.0
  %3681 = vadd.xlane.f32.xlu0 %v3680
  %v3682 = vpop.xlane.xlu0 %3681
  %v3683 = vsel %vm206, %v3667, 0.0
  %3684 = vadd.xlane.f32.xlu0 %v3683
  %v3685 = vpop.xlane.xlu0 %3684
  %v3686 = vmul.f32 %v3670, %v1100
  %v3687 = vmul.f32 %v3673, %v1100
  %v3688 = vmul.f32 %v3676, %v1100
  %v3689 = vmul.f32 %v3679, %v1100
  %v3690 = vmul.f32 %v3682, %v1100
  %v3691 = vmul.f32 %v3685, %v1100
  %v3692 = vadd.f32 %v3686, 1e-05
  %v3693 = vadd.f32 %v3687, 1e-05
  %v3694 = vadd.f32 %v3688, 1e-05
  %v3695 = vadd.f32 %v3689, 1e-05
  %v3696 = vadd.f32 %v3690, 1e-05
  %v3697 = vadd.f32 %v3691, 1e-05
  %v3698 = vrsqrt.pop %v3692
  %v3699 = vrsqrt.pop %v3693
  %v3700 = vrsqrt.pop %v3694
  %v3701 = vrsqrt.pop %v3695
  %v3702 = vrsqrt.pop %v3696
  %v3703 = vrsqrt.pop %v3697
  %v3704 = vmul.f32 %v3656, %v3698
  %v3705 = vmul.f32 %v3657, %v3699
  %v3706 = vmul.f32 %v3658, %v3700
  %v3707 = vmul.f32 %v3659, %v3701
  %v3708 = vmul.f32 %v3660, %v3702
  %v3709 = vmul.f32 %v3661, %v3703
  %v3710 = vlaneseq
  %v3711 = vshrl.u32 %v3710, 7
  %v3712 = vsub.s32 0, %v3711
  %v3713 = vrot.slane %v3630, %v3712
  %v3714 = vmul.f32 %v3704, %v3713
  %v3715 = vmul.f32 %v3705, %v3713
  %v3716 = vmul.f32 %v3706, %v3713
  %v3717 = vmul.f32 %v3707, %v3713
  %v3718 = vmul.f32 %v3708, %v3713
  %v3719 = vmul.f32 %v3709, %v3713
  %v3720 = vlaneseq
  %v3721 = vshrl.u32 %v3720, 7
  %v3722 = vsub.s32 0, %v3721
  %v3723 = vrot.slane %v3631, %v3722
  %v3724 = vadd.f32 %v3714, %v3723
  %v3725 = vadd.f32 %v3715, %v3723
  %v3726 = vadd.f32 %v3716, %v3723
  %v3727 = vadd.f32 %v3717, %v3723
  %v3728 = vadd.f32 %v3718, %v3723
  %v3729 = vadd.f32 %v3719, %v3723
  %v3730 = vpack.c.bf16 %v3725, %v3724
  %v3731 = vpack.c.bf16 %v3727, %v3726
  %v3732 = vpack.c.bf16 %v3729, %v3728
  %s3733 = scalar_lea.vmem %s5, 16
  %v3734 = vld [vmem:[%s3733] sm:$0xf]
  %v3735 = vld [vmem:[%s3733 + $0x4] sm:$0xf]
  %v3736 = vld [vmem:[%s3733 + $0x8] sm:$0xf]
  %v3737 = vld [vmem:[%s3733 + $0xc] sm:$0xf]
  %s3738 = scalar_lea.vmem %s12, 16
  %v3739 = vld [vmem:[%s3738] sm:$0x1]
  %v3740 = vlaneseq
  %v3741 = vshrl.u32 %v3740, 7
  %v3742 = vsub.s32 0, %v3741
  %v3743 = vrot.slane %v3739, %v3742
  %v3748 = vunpack.c.l.b16 %v3734
  %v3749 = vunpack.c.l.b16 %v3735
  %v3750 = vunpack.c.l.b16 %v3736
  %v3751 = vunpack.c.l.b16 %v3737
  %v3752 = vpack.c.b16 %v3749, %v3748
  %v3753 = vpack.c.b16 %v3751, %v3750
  %v3757 = vsel %vm206, %v3730, 0
  %v3760 = vsel %vm206, %v3731, 0
  %v3763 = vsel %vm206, %v3732, 0
  %3765 = vmatprep.subr.bf16.mxu0 0
  %3766 = vmatpush1.bf16.msra.mxu0 0
  %3767 = vmatprep.subr.bf16.mxu0 0
  %3768 = vmatpush1.bf16.msra.mxu0 0
  %3769 = vmatprep.subr.bf16.mxu0 0
  %3770 = vmatpush1.bf16.msra.mxu0 0
  %3771 = vmatprep.subr.bf16.mxu0 0
  %3772 = vmatpush1.bf16.msra.mxu0 0
  %3773 = vmatprep.subr.bf16.mxu0 0
  %3774 = vmatpush1.bf16.msra.mxu0 0
  %3775 = vmatprep.subr.bf16.mxu0 0
  %3776 = vmatpush1.bf16.msra.mxu0 0
  %3777 = vmatprep.subr.bf16.mxu0 0
  %3778 = vmatpush1.bf16.msra.mxu0 %v3753
  %3779 = vmatprep.subr.bf16.mxu0 0
  %3780 = vmatpush1.bf16.msra.mxu0 %v3752
  %3781 = vmatprep.subr.bf16.mxu0 0
  %3782 = vmatpush2.bf16.msra.mxu0 0
  %3783 = vmatprep.subr.bf16.mxu0 0
  %3784 = vmatpush2.bf16.msra.mxu0 0
  %3785 = vmatprep.subr.bf16.mxu0 0
  %3786 = vmatpush2.bf16.msra.mxu0 0
  %3787 = vmatprep.subr.bf16.mxu0 0
  %3788 = vmatpush2.bf16.msra.mxu0 0
  %3789 = vmatprep.subr.bf16.mxu0 0
  %3790 = vmatpush2.bf16.msra.mxu0 0
  %3791 = vmatprep.subr.bf16.mxu0 0
  %3792 = vmatpush2.bf16.msra.mxu0 0
  %3793 = vmatprep.subr.bf16.mxu0 0
  %3794 = vmatpush2.bf16.msra.mxu0 0
  %3795 = vmatprep.subr.bf16.mxu0 0
  %3796 = vmatpush2.bf16.msra.mxu0 0
  %3797 = vmatprep.mubr.bf16.mxu0 0
  %3798 = vmatmul.mubr.bf16.gmra.mxu0 %v3757
  %v3799 = vpop.f32.mrf.mxu0
  %v3800 = vadd.f32 %v3743, %v3799
  %v3801 = vpop.f32.mrf.mxu0
  %v3802 = vpop.f32.mrf.mxu0
  %v3803 = vadd.f32 %v3743, %v3802
  %v3804 = vpop.f32.mrf.mxu0
  %3805 = vmatprep.mubr.bf16.mxu0 0
  %3806 = vmatmul.mubr.bf16.gmra.mxu0 %v3760
  %v3807 = vpop.f32.mrf.mxu0
  %v3808 = vadd.f32 %v3743, %v3807
  %v3809 = vpop.f32.mrf.mxu0
  %v3810 = vpop.f32.mrf.mxu0
  %v3811 = vadd.f32 %v3743, %v3810
  %v3812 = vpop.f32.mrf.mxu0
  %3813 = vmatprep.mubr.bf16.mxu0 0
  %3814 = vmatmul.mubr.bf16.gmra.mxu0 %v3763
  %v3815 = vpop.f32.mrf.mxu0
  %v3816 = vadd.f32 %v3743, %v3815
  %v3817 = vpop.f32.mrf.mxu0
  %v3818 = vpop.f32.mrf.mxu0
  %v3819 = vadd.f32 %v3743, %v3818
  %v3820 = vpop.f32.mrf.mxu0
  %3821 = vdwg.mxu0
  %s3822 = scalar_lea.vmem %s6, 16
  %v3823 = vld [vmem:[%s3822] sm:$0xf]
  %v3824 = vld [vmem:[%s3822 + $0x4] sm:$0xf]
  %v3825 = vld [vmem:[%s3822 + $0x8] sm:$0xf]
  %v3826 = vld [vmem:[%s3822 + $0xc] sm:$0xf]
  %v3827 = vld [vmem:[%s3738 + $0x1] sm:$0x1]
  %v3828 = vlaneseq
  %v3829 = vshrl.u32 %v3828, 7
  %v3830 = vsub.s32 0, %v3829
  %v3831 = vrot.slane %v3827, %v3830
  %v3836 = vunpack.c.l.b16 %v3823
  %v3837 = vunpack.c.l.b16 %v3824
  %v3838 = vunpack.c.l.b16 %v3825
  %v3839 = vunpack.c.l.b16 %v3826
  %v3840 = vpack.c.b16 %v3837, %v3836
  %v3841 = vpack.c.b16 %v3839, %v3838
  %3844 = vmatprep.subr.bf16.mxu0 0
  %3845 = vmatpush1.bf16.msra.mxu0 0
  %3846 = vmatprep.subr.bf16.mxu0 0
  %3847 = vmatpush1.bf16.msra.mxu0 0
  %3848 = vmatprep.subr.bf16.mxu0 0
  %3849 = vmatpush1.bf16.msra.mxu0 0
  %3850 = vmatprep.subr.bf16.mxu0 0
  %3851 = vmatpush1.bf16.msra.mxu0 0
  %3852 = vmatprep.subr.bf16.mxu0 0
  %3853 = vmatpush1.bf16.msra.mxu0 0
  %3854 = vmatprep.subr.bf16.mxu0 0
  %3855 = vmatpush1.bf16.msra.mxu0 0
  %3856 = vmatprep.subr.bf16.mxu0 0
  %3857 = vmatpush1.bf16.msra.mxu0 %v3841
  %3858 = vmatprep.subr.bf16.mxu0 0
  %3859 = vmatpush1.bf16.msra.mxu0 %v3840
  %3860 = vmatprep.subr.bf16.mxu0 0
  %3861 = vmatpush2.bf16.msra.mxu0 0
  %3862 = vmatprep.subr.bf16.mxu0 0
  %3863 = vmatpush2.bf16.msra.mxu0 0
  %3864 = vmatprep.subr.bf16.mxu0 0
  %3865 = vmatpush2.bf16.msra.mxu0 0
  %3866 = vmatprep.subr.bf16.mxu0 0
  %3867 = vmatpush2.bf16.msra.mxu0 0
  %3868 = vmatprep.subr.bf16.mxu0 0
  %3869 = vmatpush2.bf16.msra.mxu0 0
  %3870 = vmatprep.subr.bf16.mxu0 0
  %3871 = vmatpush2.bf16.msra.mxu0 0
  %3872 = vmatprep.subr.bf16.mxu0 0
  %3873 = vmatpush2.bf16.msra.mxu0 0
  %3874 = vmatprep.subr.bf16.mxu0 0
  %3875 = vmatpush2.bf16.msra.mxu0 0
  %3876 = vmatprep.mubr.bf16.mxu0 0
  %3877 = vmatmul.mubr.bf16.gmra.mxu0 %v3757
  %v3878 = vpop.f32.mrf.mxu0
  %v3879 = vadd.f32 %v3831, %v3878
  %v3880 = vpop.f32.mrf.mxu0
  %v3881 = vpop.f32.mrf.mxu0
  %v3882 = vadd.f32 %v3831, %v3881
  %v3883 = vpop.f32.mrf.mxu0
  %3884 = vmatprep.mubr.bf16.mxu0 0
  %3885 = vmatmul.mubr.bf16.gmra.mxu0 %v3760
  %v3886 = vpop.f32.mrf.mxu0
  %v3887 = vadd.f32 %v3831, %v3886
  %v3888 = vpop.f32.mrf.mxu0
  %v3889 = vpop.f32.mrf.mxu0
  %v3890 = vadd.f32 %v3831, %v3889
  %v3891 = vpop.f32.mrf.mxu0
  %3892 = vmatprep.mubr.bf16.mxu0 0
  %3893 = vmatmul.mubr.bf16.gmra.mxu0 %v3763
  %v3894 = vpop.f32.mrf.mxu0
  %v3895 = vadd.f32 %v3831, %v3894
  %v3896 = vpop.f32.mrf.mxu0
  %v3897 = vpop.f32.mrf.mxu0
  %v3898 = vadd.f32 %v3831, %v3897
  %v3899 = vpop.f32.mrf.mxu0
  %3900 = vdwg.mxu0
  %s3901 = scalar_lea.vmem %s7, 16
  %v3902 = vld [vmem:[%s3901] sm:$0xf]
  %v3903 = vld [vmem:[%s3901 + $0x4] sm:$0xf]
  %v3904 = vld [vmem:[%s3901 + $0x8] sm:$0xf]
  %v3905 = vld [vmem:[%s3901 + $0xc] sm:$0xf]
  %v3906 = vld [vmem:[%s3738 + $0x2] sm:$0x1]
  %v3907 = vlaneseq
  %v3908 = vshrl.u32 %v3907, 7
  %v3909 = vsub.s32 0, %v3908
  %v3910 = vrot.slane %v3906, %v3909
  %v3915 = vunpack.c.l.b16 %v3902
  %v3916 = vunpack.c.l.b16 %v3903
  %v3917 = vunpack.c.l.b16 %v3904
  %v3918 = vunpack.c.l.b16 %v3905
  %v3919 = vpack.c.b16 %v3916, %v3915
  %v3920 = vpack.c.b16 %v3918, %v3917
  %3923 = vmatprep.subr.bf16.mxu0 0
  %3924 = vmatpush1.bf16.msra.mxu0 0
  %3925 = vmatprep.subr.bf16.mxu0 0
  %3926 = vmatpush1.bf16.msra.mxu0 0
  %3927 = vmatprep.subr.bf16.mxu0 0
  %3928 = vmatpush1.bf16.msra.mxu0 0
  %3929 = vmatprep.subr.bf16.mxu0 0
  %3930 = vmatpush1.bf16.msra.mxu0 0
  %3931 = vmatprep.subr.bf16.mxu0 0
  %3932 = vmatpush1.bf16.msra.mxu0 0
  %3933 = vmatprep.subr.bf16.mxu0 0
  %3934 = vmatpush1.bf16.msra.mxu0 0
  %3935 = vmatprep.subr.bf16.mxu0 0
  %3936 = vmatpush1.bf16.msra.mxu0 %v3920
  %3937 = vmatprep.subr.bf16.mxu0 0
  %3938 = vmatpush1.bf16.msra.mxu0 %v3919
  %3939 = vmatprep.subr.bf16.mxu0 0
  %3940 = vmatpush2.bf16.msra.mxu0 0
  %3941 = vmatprep.subr.bf16.mxu0 0
  %3942 = vmatpush2.bf16.msra.mxu0 0
  %3943 = vmatprep.subr.bf16.mxu0 0
  %3944 = vmatpush2.bf16.msra.mxu0 0
  %3945 = vmatprep.subr.bf16.mxu0 0
  %3946 = vmatpush2.bf16.msra.mxu0 0
  %3947 = vmatprep.subr.bf16.mxu0 0
  %3948 = vmatpush2.bf16.msra.mxu0 0
  %3949 = vmatprep.subr.bf16.mxu0 0
  %3950 = vmatpush2.bf16.msra.mxu0 0
  %3951 = vmatprep.subr.bf16.mxu0 0
  %3952 = vmatpush2.bf16.msra.mxu0 0
  %3953 = vmatprep.subr.bf16.mxu0 0
  %3954 = vmatpush2.bf16.msra.mxu0 0
  %3955 = vmatprep.mubr.bf16.mxu0 0
  %3956 = vmatmul.mubr.bf16.gmra.mxu0 %v3757
  %v3957 = vpop.f32.mrf.mxu0
  %v3958 = vadd.f32 %v3910, %v3957
  %v3959 = vpop.f32.mrf.mxu0
  %v3960 = vpop.f32.mrf.mxu0
  %v3961 = vadd.f32 %v3910, %v3960
  %v3962 = vpop.f32.mrf.mxu0
  %3963 = vmatprep.mubr.bf16.mxu0 0
  %3964 = vmatmul.mubr.bf16.gmra.mxu0 %v3760
  %v3965 = vpop.f32.mrf.mxu0
  %v3966 = vadd.f32 %v3910, %v3965
  %v3967 = vpop.f32.mrf.mxu0
  %v3968 = vpop.f32.mrf.mxu0
  %v3969 = vadd.f32 %v3910, %v3968
  %v3970 = vpop.f32.mrf.mxu0
  %3971 = vmatprep.mubr.bf16.mxu0 0
  %3972 = vmatmul.mubr.bf16.gmra.mxu0 %v3763
  %v3973 = vpop.f32.mrf.mxu0
  %v3974 = vadd.f32 %v3910, %v3973
  %v3975 = vpop.f32.mrf.mxu0
  %v3976 = vpop.f32.mrf.mxu0
  %v3977 = vadd.f32 %v3910, %v3976
  %v3978 = vpop.f32.mrf.mxu0
  %3979 = vdwg.mxu0
  %v3980 = vmul.f32 %v3800, %v3879
  %v3981 = vmul.f32 %v3803, %v3882
  %v3982 = vmul.f32 %v3808, %v3887
  %v3983 = vmul.f32 %v3811, %v3890
  %v3984 = vmul.f32 %v3816, %v3895
  %v3985 = vmul.f32 %v3819, %v3898
  %v3987 = vsel %vm206, %v3980, 0
  %v3990 = vsel %vm206, %v3981, 0
  %v3993 = vsel %vm206, %v3982, 0
  %v3996 = vsel %vm206, %v3983, 0
  %v3999 = vsel %vm206, %v3984, 0
  %v4002 = vsel %vm206, %v3985, 0
  %4004 = vmatprep.subr.mxu0 0.0
  %4005 = vmatpush1.msra.mxu0 0.0
  %4006 = vmatprep.subr.mxu0 0.0
  %4007 = vmatpush1.msra.mxu0 0.0
  %4008 = vmatprep.subr.mxu0 0.0
  %4009 = vmatpush1.msra.mxu0 0.0
  %4010 = vmatprep.subr.mxu0 0.0
  %4011 = vmatpush1.msra.mxu0 0.0
  %4012 = vmatprep.subr.mxu0 0.0
  %4013 = vmatpush1.msra.mxu0 0.0
  %4014 = vmatprep.subr.mxu0 0.0
  %4015 = vmatpush1.msra.mxu0 0.0
  %4016 = vmatprep.subr.mxu0 0.0
  %4017 = vmatpush1.msra.mxu0 0.0
  %4018 = vmatprep.subr.mxu0 0.0
  %4019 = vmatpush1.msra.mxu0 0.0
  %4020 = vmatprep.subr.mxu0 0.0
  %4021 = vmatpush1.msra.mxu0 0.0
  %4022 = vmatprep.subr.mxu0 0.0
  %4023 = vmatpush1.msra.mxu0 0.0
  %4024 = vmatprep.subr.mxu0 0.0
  %4025 = vmatpush1.msra.mxu0 0.0
  %4026 = vmatprep.subr.mxu0 0.0
  %4027 = vmatpush1.msra.mxu0 0.0
  %4028 = vmatprep.subr.mxu0 0.0
  %4029 = vmatpush1.msra.mxu0 %v180
  %4030 = vmatprep.subr.mxu0 0.0
  %4031 = vmatpush1.msra.mxu0 %v179
  %4032 = vmatprep.subr.mxu0 0.0
  %4033 = vmatpush1.msra.mxu0 %v178
  %4034 = vmatprep.subr.mxu0 0.0
  %4035 = vmatpush1.msra.mxu0 %v177
  %4036 = vmatprep.subr.mxu0 0.0
  %4037 = vmatpush2.msra.mxu0 0.0
  %4038 = vmatprep.subr.mxu0 0.0
  %4039 = vmatpush2.msra.mxu0 0.0
  %4040 = vmatprep.subr.mxu0 0.0
  %4041 = vmatpush2.msra.mxu0 0.0
  %4042 = vmatprep.subr.mxu0 0.0
  %4043 = vmatpush2.msra.mxu0 0.0
  %4044 = vmatprep.subr.mxu0 0.0
  %4045 = vmatpush2.msra.mxu0 0.0
  %4046 = vmatprep.subr.mxu0 0.0
  %4047 = vmatpush2.msra.mxu0 0.0
  %4048 = vmatprep.subr.mxu0 0.0
  %4049 = vmatpush2.msra.mxu0 0.0
  %4050 = vmatprep.subr.mxu0 0.0
  %4051 = vmatpush2.msra.mxu0 0.0
  %4052 = vmatprep.subr.mxu0 0.0
  %4053 = vmatpush2.msra.mxu0 0.0
  %4054 = vmatprep.subr.mxu0 0.0
  %4055 = vmatpush2.msra.mxu0 0.0
  %4056 = vmatprep.subr.mxu0 0.0
  %4057 = vmatpush2.msra.mxu0 0.0
  %4058 = vmatprep.subr.mxu0 0.0
  %4059 = vmatpush2.msra.mxu0 0.0
  %4060 = vmatprep.subr.mxu0 0.0
  %4061 = vmatpush2.msra.mxu0 0.0
  %4062 = vmatprep.subr.mxu0 0.0
  %4063 = vmatpush2.msra.mxu0 0.0
  %4064 = vmatprep.subr.mxu0 0.0
  %4065 = vmatpush2.msra.mxu0 0.0
  %4066 = vmatprep.subr.mxu0 0.0
  %4067 = vmatpush2.msra.mxu0 0.0
  %4068 = vmatprep.mubr.f32.mxu0 0.0
  %4069 = vmatmul.mubr.f32.gmra.mxu0 %v3987
  %v4070 = vpop.f32.mrf.mxu0
  %v4071 = vadd.f32 0.0, %v4070
  %v4072 = vpop.f32.mrf.mxu0
  %4073 = vmatprep.mubr.f32.mxu0 0.0
  %4074 = vmatmul.mubr.f32.gmra.mxu0 %v3990
  %v4075 = vpop.f32.mrf.mxu0
  %v4076 = vadd.f32 0.0, %v4075
  %v4077 = vpop.f32.mrf.mxu0
  %4078 = vmatprep.mubr.f32.mxu0 0.0
  %4079 = vmatmul.mubr.f32.gmra.mxu0 %v3993
  %v4080 = vpop.f32.mrf.mxu0
  %v4081 = vadd.f32 0.0, %v4080
  %v4082 = vpop.f32.mrf.mxu0
  %4083 = vmatprep.mubr.f32.mxu0 0.0
  %4084 = vmatmul.mubr.f32.gmra.mxu0 %v3996
  %v4085 = vpop.f32.mrf.mxu0
  %v4086 = vadd.f32 0.0, %v4085
  %v4087 = vpop.f32.mrf.mxu0
  %4088 = vmatprep.mubr.f32.mxu0 0.0
  %4089 = vmatmul.mubr.f32.gmra.mxu0 %v3999
  %v4090 = vpop.f32.mrf.mxu0
  %v4091 = vadd.f32 0.0, %v4090
  %v4092 = vpop.f32.mrf.mxu0
  %4093 = vmatprep.mubr.f32.mxu0 0.0
  %4094 = vmatmul.mubr.f32.gmra.mxu0 %v4002
  %v4095 = vpop.f32.mrf.mxu0
  %v4096 = vadd.f32 0.0, %v4095
  %v4097 = vpop.f32.mrf.mxu0
  %4098 = vdwg.mxu0
  %v4099 = vmul.f32 %v3800, %v3890
  %v4100 = vmul.f32 %v3803, %v3895
  %v4101 = vmul.f32 %v3808, %v3898
  %v4102 = vmul.f32 %v3811, %v3879
  %v4103 = vmul.f32 %v3816, %v3882
  %v4104 = vmul.f32 %v3819, %v3887
  %v4106 = vsel %vm206, %v4099, 0
  %v4109 = vsel %vm206, %v4100, 0
  %v4112 = vsel %vm206, %v4101, 0
  %v4115 = vsel %vm206, %v4102, 0
  %v4118 = vsel %vm206, %v4103, 0
  %v4121 = vsel %vm206, %v4104, 0
  %4123 = vmatprep.subr.mxu0 0.0
  %4124 = vmatpush1.msra.mxu0 0.0
  %4125 = vmatprep.subr.mxu0 0.0
  %4126 = vmatpush1.msra.mxu0 0.0
  %4127 = vmatprep.subr.mxu0 0.0
  %4128 = vmatpush1.msra.mxu0 0.0
  %4129 = vmatprep.subr.mxu0 0.0
  %4130 = vmatpush1.msra.mxu0 0.0
  %4131 = vmatprep.subr.mxu0 0.0
  %4132 = vmatpush1.msra.mxu0 0.0
  %4133 = vmatprep.subr.mxu0 0.0
  %4134 = vmatpush1.msra.mxu0 0.0
  %4135 = vmatprep.subr.mxu0 0.0
  %4136 = vmatpush1.msra.mxu0 0.0
  %4137 = vmatprep.subr.mxu0 0.0
  %4138 = vmatpush1.msra.mxu0 0.0
  %4139 = vmatprep.subr.mxu0 0.0
  %4140 = vmatpush1.msra.mxu0 0.0
  %4141 = vmatprep.subr.mxu0 0.0
  %4142 = vmatpush1.msra.mxu0 0.0
  %4143 = vmatprep.subr.mxu0 0.0
  %4144 = vmatpush1.msra.mxu0 0.0
  %4145 = vmatprep.subr.mxu0 0.0
  %4146 = vmatpush1.msra.mxu0 0.0
  %4147 = vmatprep.subr.mxu0 0.0
  %4148 = vmatpush1.msra.mxu0 %v180
  %4149 = vmatprep.subr.mxu0 0.0
  %4150 = vmatpush1.msra.mxu0 %v179
  %4151 = vmatprep.subr.mxu0 0.0
  %4152 = vmatpush1.msra.mxu0 %v178
  %4153 = vmatprep.subr.mxu0 0.0
  %4154 = vmatpush1.msra.mxu0 %v177
  %4155 = vmatprep.subr.mxu0 0.0
  %4156 = vmatpush2.msra.mxu0 0.0
  %4157 = vmatprep.subr.mxu0 0.0
  %4158 = vmatpush2.msra.mxu0 0.0
  %4159 = vmatprep.subr.mxu0 0.0
  %4160 = vmatpush2.msra.mxu0 0.0
  %4161 = vmatprep.subr.mxu0 0.0
  %4162 = vmatpush2.msra.mxu0 0.0
  %4163 = vmatprep.subr.mxu0 0.0
  %4164 = vmatpush2.msra.mxu0 0.0
  %4165 = vmatprep.subr.mxu0 0.0
  %4166 = vmatpush2.msra.mxu0 0.0
  %4167 = vmatprep.subr.mxu0 0.0
  %4168 = vmatpush2.msra.mxu0 0.0
  %4169 = vmatprep.subr.mxu0 0.0
  %4170 = vmatpush2.msra.mxu0 0.0
  %4171 = vmatprep.subr.mxu0 0.0
  %4172 = vmatpush2.msra.mxu0 0.0
  %4173 = vmatprep.subr.mxu0 0.0
  %4174 = vmatpush2.msra.mxu0 0.0
  %4175 = vmatprep.subr.mxu0 0.0
  %4176 = vmatpush2.msra.mxu0 0.0
  %4177 = vmatprep.subr.mxu0 0.0
  %4178 = vmatpush2.msra.mxu0 0.0
  %4179 = vmatprep.subr.mxu0 0.0
  %4180 = vmatpush2.msra.mxu0 0.0
  %4181 = vmatprep.subr.mxu0 0.0
  %4182 = vmatpush2.msra.mxu0 0.0
  %4183 = vmatprep.subr.mxu0 0.0
  %4184 = vmatpush2.msra.mxu0 0.0
  %4185 = vmatprep.subr.mxu0 0.0
  %4186 = vmatpush2.msra.mxu0 0.0
  %4187 = vmatprep.mubr.f32.mxu0 0.0
  %4188 = vmatmul.mubr.f32.gmra.mxu0 %v4106
  %v4189 = vpop.f32.mrf.mxu0
  %v4190 = vadd.f32 0.0, %v4189
  %v4191 = vpop.f32.mrf.mxu0
  %4192 = vmatprep.mubr.f32.mxu0 0.0
  %4193 = vmatmul.mubr.f32.gmra.mxu0 %v4109
  %v4194 = vpop.f32.mrf.mxu0
  %v4195 = vadd.f32 0.0, %v4194
  %v4196 = vpop.f32.mrf.mxu0
  %4197 = vmatprep.mubr.f32.mxu0 0.0
  %4198 = vmatmul.mubr.f32.gmra.mxu0 %v4112
  %v4199 = vpop.f32.mrf.mxu0
  %v4200 = vadd.f32 0.0, %v4199
  %v4201 = vpop.f32.mrf.mxu0
  %4202 = vmatprep.mubr.f32.mxu0 0.0
  %4203 = vmatmul.mubr.f32.gmra.mxu0 %v4115
  %v4204 = vpop.f32.mrf.mxu0
  %v4205 = vadd.f32 0.0, %v4204
  %v4206 = vpop.f32.mrf.mxu0
  %4207 = vmatprep.mubr.f32.mxu0 0.0
  %4208 = vmatmul.mubr.f32.gmra.mxu0 %v4118
  %v4209 = vpop.f32.mrf.mxu0
  %v4210 = vadd.f32 0.0, %v4209
  %v4211 = vpop.f32.mrf.mxu0
  %4212 = vmatprep.mubr.f32.mxu0 0.0
  %4213 = vmatmul.mubr.f32.gmra.mxu0 %v4121
  %v4214 = vpop.f32.mrf.mxu0
  %v4215 = vadd.f32 0.0, %v4214
  %v4216 = vpop.f32.mrf.mxu0
  %4217 = vdwg.mxu0
  %v4218 = vmax.f32 %v4071, %v4190
  %v4219 = vmax.f32 %v4076, %v4195
  %v4220 = vmax.f32 %v4081, %v4200
  %v4221 = vmax.f32 %v4086, %v4205
  %v4222 = vmax.f32 %v4091, %v4210
  %v4223 = vmax.f32 %v4096, %v4215
  %v4224 = vsub.f32 %v4071, %v4218
  %v4225 = vsub.f32 %v4076, %v4219
  %v4226 = vsub.f32 %v4081, %v4220
  %v4227 = vsub.f32 %v4086, %v4221
  %v4228 = vsub.f32 %v4091, %v4222
  %v4229 = vsub.f32 %v4096, %v4223
  %v4230 = vmul.f32 %v4224, 1.442695
  %v4231 = vpow.pop %v4230
  %v4232 = vmul.f32 %v4225, 1.442695
  %v4233 = vpow.pop %v4232
  %v4234 = vmul.f32 %v4226, 1.442695
  %v4235 = vpow.pop %v4234
  %v4236 = vmul.f32 %v4227, 1.442695
  %v4237 = vpow.pop %v4236
  %v4238 = vmul.f32 %v4228, 1.442695
  %v4239 = vpow.pop %v4238
  %v4240 = vmul.f32 %v4229, 1.442695
  %v4241 = vpow.pop %v4240
  %v4242 = vsub.f32 %v4190, %v4218
  %v4243 = vsub.f32 %v4195, %v4219
  %v4244 = vsub.f32 %v4200, %v4220
  %v4245 = vsub.f32 %v4205, %v4221
  %v4246 = vsub.f32 %v4210, %v4222
  %v4247 = vsub.f32 %v4215, %v4223
  %v4248 = vmul.f32 %v4242, 1.442695
  %v4249 = vpow.pop %v4248
  %v4250 = vmul.f32 %v4243, 1.442695
  %v4251 = vpow.pop %v4250
  %v4252 = vmul.f32 %v4244, 1.442695
  %v4253 = vpow.pop %v4252
  %v4254 = vmul.f32 %v4245, 1.442695
  %v4255 = vpow.pop %v4254
  %v4256 = vmul.f32 %v4246, 1.442695
  %v4257 = vpow.pop %v4256
  %v4258 = vmul.f32 %v4247, 1.442695
  %v4259 = vpow.pop %v4258
  %v4260 = vadd.f32 %v4231, %v4249
  %v4261 = vadd.f32 %v4233, %v4251
  %v4262 = vadd.f32 %v4235, %v4253
  %v4263 = vadd.f32 %v4237, %v4255
  %v4264 = vadd.f32 %v4239, %v4257
  %v4265 = vadd.f32 %v4241, %v4259
  %v4266 = vrcp.pop %v4260
  %v4267 = vmul.f32 1.0, %v4266
  %v4268 = vrcp.pop %v4261
  %v4269 = vmul.f32 1.0, %v4268
  %v4270 = vrcp.pop %v4262
  %v4271 = vmul.f32 1.0, %v4270
  %v4272 = vrcp.pop %v4263
  %v4273 = vmul.f32 1.0, %v4272
  %v4274 = vrcp.pop %v4264
  %v4275 = vmul.f32 1.0, %v4274
  %v4276 = vrcp.pop %v4265
  %v4277 = vmul.f32 1.0, %v4276
  %v4278 = vmul.f32 %v4231, %v4267
  %v4279 = vmul.f32 %v4233, %v4269
  %v4280 = vmul.f32 %v4235, %v4271
  %v4281 = vmul.f32 %v4237, %v4273
  %v4282 = vmul.f32 %v4239, %v4275
  %v4283 = vmul.f32 %v4241, %v4277
  %v4285 = vsel %vm733, %v4278, 0
  %v4288 = vsel %vm733, %v4279, 0
  %v4291 = vsel %vm733, %v4280, 0
  %v4294 = vsel %vm733, %v4281, 0
  %v4297 = vsel %vm733, %v4282, 0
  %v4300 = vsel %vm733, %v4283, 0
  %4302 = vmatprep.subr.mxu0 0.0
  %4303 = vmatpush1.msra.mxu0 0.0
  %4304 = vmatprep.subr.mxu0 0.0
  %4305 = vmatpush1.msra.mxu0 0.0
  %4306 = vmatprep.subr.mxu0 0.0
  %4307 = vmatpush1.msra.mxu0 0.0
  %4308 = vmatprep.subr.mxu0 0.0
  %4309 = vmatpush1.msra.mxu0 0.0
  %4310 = vmatprep.subr.mxu0 0.0
  %4311 = vmatpush1.msra.mxu0 0.0
  %4312 = vmatprep.subr.mxu0 0.0
  %4313 = vmatpush1.msra.mxu0 0.0
  %4314 = vmatprep.subr.mxu0 0.0
  %4315 = vmatpush1.msra.mxu0 0.0
  %4316 = vmatprep.subr.mxu0 0.0
  %4317 = vmatpush1.msra.mxu0 0.0
  %4318 = vmatprep.subr.mxu0 0.0
  %4319 = vmatpush1.msra.mxu0 0.0
  %4320 = vmatprep.subr.mxu0 0.0
  %4321 = vmatpush1.msra.mxu0 0.0
  %4322 = vmatprep.subr.mxu0 0.0
  %4323 = vmatpush1.msra.mxu0 0.0
  %4324 = vmatprep.subr.mxu0 0.0
  %4325 = vmatpush1.msra.mxu0 0.0
  %4326 = vmatprep.subr.mxu0 0.0
  %4327 = vmatpush1.msra.mxu0 0.0
  %4328 = vmatprep.subr.mxu0 0.0
  %4329 = vmatpush1.msra.mxu0 0.0
  %4330 = vmatprep.subr.mxu0 0.0
  %4331 = vmatpush1.msra.mxu0 0.0
  %4332 = vmatprep.subr.mxu0 0.0
  %4333 = vmatpush1.msra.mxu0 %v181
  %4334 = vmatprep.subr.mxu0 0.0
  %4335 = vmatpush2.msra.mxu0 0.0
  %4336 = vmatprep.subr.mxu0 0.0
  %4337 = vmatpush2.msra.mxu0 0.0
  %4338 = vmatprep.subr.mxu0 0.0
  %4339 = vmatpush2.msra.mxu0 0.0
  %4340 = vmatprep.subr.mxu0 0.0
  %4341 = vmatpush2.msra.mxu0 0.0
  %4342 = vmatprep.subr.mxu0 0.0
  %4343 = vmatpush2.msra.mxu0 0.0
  %4344 = vmatprep.subr.mxu0 0.0
  %4345 = vmatpush2.msra.mxu0 0.0
  %4346 = vmatprep.subr.mxu0 0.0
  %4347 = vmatpush2.msra.mxu0 0.0
  %4348 = vmatprep.subr.mxu0 0.0
  %4349 = vmatpush2.msra.mxu0 0.0
  %4350 = vmatprep.subr.mxu0 0.0
  %4351 = vmatpush2.msra.mxu0 0.0
  %4352 = vmatprep.subr.mxu0 0.0
  %4353 = vmatpush2.msra.mxu0 0.0
  %4354 = vmatprep.subr.mxu0 0.0
  %4355 = vmatpush2.msra.mxu0 0.0
  %4356 = vmatprep.subr.mxu0 0.0
  %4357 = vmatpush2.msra.mxu0 0.0
  %4358 = vmatprep.subr.mxu0 0.0
  %4359 = vmatpush2.msra.mxu0 0.0
  %4360 = vmatprep.subr.mxu0 0.0
  %4361 = vmatpush2.msra.mxu0 0.0
  %4362 = vmatprep.subr.mxu0 0.0
  %4363 = vmatpush2.msra.mxu0 0.0
  %4364 = vmatprep.subr.mxu0 0.0
  %4365 = vmatpush2.msra.mxu0 0.0
  %4366 = vmatprep.mubr.f32.mxu0 0.0
  %4367 = vmatmul.mubr.f32.gmra.mxu0 %v4285
  %v4368 = vpop.f32.mrf.mxu0
  %v4369 = vadd.f32 0.0, %v4368
  %v4370 = vpop.f32.mrf.mxu0
  %4371 = vmatprep.mubr.f32.mxu0 0.0
  %4372 = vmatmul.mubr.f32.gmra.mxu0 %v4288
  %v4373 = vpop.f32.mrf.mxu0
  %v4374 = vadd.f32 0.0, %v4373
  %v4375 = vpop.f32.mrf.mxu0
  %4376 = vmatprep.mubr.f32.mxu0 0.0
  %4377 = vmatmul.mubr.f32.gmra.mxu0 %v4291
  %v4378 = vpop.f32.mrf.mxu0
  %v4379 = vadd.f32 0.0, %v4378
  %v4380 = vpop.f32.mrf.mxu0
  %4381 = vmatprep.mubr.f32.mxu0 0.0
  %4382 = vmatmul.mubr.f32.gmra.mxu0 %v4294
  %v4383 = vpop.f32.mrf.mxu0
  %v4384 = vadd.f32 0.0, %v4383
  %v4385 = vpop.f32.mrf.mxu0
  %4386 = vmatprep.mubr.f32.mxu0 0.0
  %4387 = vmatmul.mubr.f32.gmra.mxu0 %v4297
  %v4388 = vpop.f32.mrf.mxu0
  %v4389 = vadd.f32 0.0, %v4388
  %v4390 = vpop.f32.mrf.mxu0
  %4391 = vmatprep.mubr.f32.mxu0 0.0
  %4392 = vmatmul.mubr.f32.gmra.mxu0 %v4300
  %v4393 = vpop.f32.mrf.mxu0
  %v4394 = vadd.f32 0.0, %v4393
  %v4395 = vpop.f32.mrf.mxu0
  %4396 = vdwg.mxu0
  %v4397 = vmul.f32 %v4369, %v3958
  %v4398 = vmul.f32 %v4374, %v3961
  %v4399 = vmul.f32 %v4379, %v3966
  %v4400 = vmul.f32 %v4384, %v3969
  %v4401 = vmul.f32 %v4389, %v3974
  %v4402 = vmul.f32 %v4394, %v3977
  %v4403 = vmul.f32 %v4249, %v4267
  %v4404 = vmul.f32 %v4251, %v4269
  %v4405 = vmul.f32 %v4253, %v4271
  %v4406 = vmul.f32 %v4255, %v4273
  %v4407 = vmul.f32 %v4257, %v4275
  %v4408 = vmul.f32 %v4259, %v4277
  %v4410 = vsel %vm733, %v4403, 0
  %v4413 = vsel %vm733, %v4404, 0
  %v4416 = vsel %vm733, %v4405, 0
  %v4419 = vsel %vm733, %v4406, 0
  %v4422 = vsel %vm733, %v4407, 0
  %v4425 = vsel %vm733, %v4408, 0
  %4427 = vmatprep.subr.mxu0 0.0
  %4428 = vmatpush1.msra.mxu0 0.0
  %4429 = vmatprep.subr.mxu0 0.0
  %4430 = vmatpush1.msra.mxu0 0.0
  %4431 = vmatprep.subr.mxu0 0.0
  %4432 = vmatpush1.msra.mxu0 0.0
  %4433 = vmatprep.subr.mxu0 0.0
  %4434 = vmatpush1.msra.mxu0 0.0
  %4435 = vmatprep.subr.mxu0 0.0
  %4436 = vmatpush1.msra.mxu0 0.0
  %4437 = vmatprep.subr.mxu0 0.0
  %4438 = vmatpush1.msra.mxu0 0.0
  %4439 = vmatprep.subr.mxu0 0.0
  %4440 = vmatpush1.msra.mxu0 0.0
  %4441 = vmatprep.subr.mxu0 0.0
  %4442 = vmatpush1.msra.mxu0 0.0
  %4443 = vmatprep.subr.mxu0 0.0
  %4444 = vmatpush1.msra.mxu0 0.0
  %4445 = vmatprep.subr.mxu0 0.0
  %4446 = vmatpush1.msra.mxu0 0.0
  %4447 = vmatprep.subr.mxu0 0.0
  %4448 = vmatpush1.msra.mxu0 0.0
  %4449 = vmatprep.subr.mxu0 0.0
  %4450 = vmatpush1.msra.mxu0 0.0
  %4451 = vmatprep.subr.mxu0 0.0
  %4452 = vmatpush1.msra.mxu0 0.0
  %4453 = vmatprep.subr.mxu0 0.0
  %4454 = vmatpush1.msra.mxu0 0.0
  %4455 = vmatprep.subr.mxu0 0.0
  %4456 = vmatpush1.msra.mxu0 0.0
  %4457 = vmatprep.subr.mxu0 0.0
  %4458 = vmatpush1.msra.mxu0 %v181
  %4459 = vmatprep.subr.mxu0 0.0
  %4460 = vmatpush2.msra.mxu0 0.0
  %4461 = vmatprep.subr.mxu0 0.0
  %4462 = vmatpush2.msra.mxu0 0.0
  %4463 = vmatprep.subr.mxu0 0.0
  %4464 = vmatpush2.msra.mxu0 0.0
  %4465 = vmatprep.subr.mxu0 0.0
  %4466 = vmatpush2.msra.mxu0 0.0
  %4467 = vmatprep.subr.mxu0 0.0
  %4468 = vmatpush2.msra.mxu0 0.0
  %4469 = vmatprep.subr.mxu0 0.0
  %4470 = vmatpush2.msra.mxu0 0.0
  %4471 = vmatprep.subr.mxu0 0.0
  %4472 = vmatpush2.msra.mxu0 0.0
  %4473 = vmatprep.subr.mxu0 0.0
  %4474 = vmatpush2.msra.mxu0 0.0
  %4475 = vmatprep.subr.mxu0 0.0
  %4476 = vmatpush2.msra.mxu0 0.0
  %4477 = vmatprep.subr.mxu0 0.0
  %4478 = vmatpush2.msra.mxu0 0.0
  %4479 = vmatprep.subr.mxu0 0.0
  %4480 = vmatpush2.msra.mxu0 0.0
  %4481 = vmatprep.subr.mxu0 0.0
  %4482 = vmatpush2.msra.mxu0 0.0
  %4483 = vmatprep.subr.mxu0 0.0
  %4484 = vmatpush2.msra.mxu0 0.0
  %4485 = vmatprep.subr.mxu0 0.0
  %4486 = vmatpush2.msra.mxu0 0.0
  %4487 = vmatprep.subr.mxu0 0.0
  %4488 = vmatpush2.msra.mxu0 0.0
  %4489 = vmatprep.subr.mxu0 0.0
  %4490 = vmatpush2.msra.mxu0 0.0
  %4491 = vmatprep.mubr.f32.mxu0 0.0
  %4492 = vmatmul.mubr.f32.gmra.mxu0 %v4410
  %v4493 = vpop.f32.mrf.mxu0
  %v4494 = vadd.f32 0.0, %v4493
  %v4495 = vpop.f32.mrf.mxu0
  %4496 = vmatprep.mubr.f32.mxu0 0.0
  %4497 = vmatmul.mubr.f32.gmra.mxu0 %v4413
  %v4498 = vpop.f32.mrf.mxu0
  %v4499 = vadd.f32 0.0, %v4498
  %v4500 = vpop.f32.mrf.mxu0
  %4501 = vmatprep.mubr.f32.mxu0 0.0
  %4502 = vmatmul.mubr.f32.gmra.mxu0 %v4416
  %v4503 = vpop.f32.mrf.mxu0
  %v4504 = vadd.f32 0.0, %v4503
  %v4505 = vpop.f32.mrf.mxu0
  %4506 = vmatprep.mubr.f32.mxu0 0.0
  %4507 = vmatmul.mubr.f32.gmra.mxu0 %v4419
  %v4508 = vpop.f32.mrf.mxu0
  %v4509 = vadd.f32 0.0, %v4508
  %v4510 = vpop.f32.mrf.mxu0
  %4511 = vmatprep.mubr.f32.mxu0 0.0
  %4512 = vmatmul.mubr.f32.gmra.mxu0 %v4422
  %v4513 = vpop.f32.mrf.mxu0
  %v4514 = vadd.f32 0.0, %v4513
  %v4515 = vpop.f32.mrf.mxu0
  %4516 = vmatprep.mubr.f32.mxu0 0.0
  %4517 = vmatmul.mubr.f32.gmra.mxu0 %v4425
  %v4518 = vpop.f32.mrf.mxu0
  %v4519 = vadd.f32 0.0, %v4518
  %v4520 = vpop.f32.mrf.mxu0
  %4521 = vdwg.mxu0
  %v4522 = vmul.f32 %v4494, %v3969
  %v4523 = vmul.f32 %v4499, %v3974
  %v4524 = vmul.f32 %v4504, %v3977
  %v4525 = vmul.f32 %v4509, %v3958
  %v4526 = vmul.f32 %v4514, %v3961
  %v4527 = vmul.f32 %v4519, %v3966
  %v4528 = vadd.f32 %v4397, %v4522
  %v4529 = vadd.f32 %v4398, %v4523
  %v4530 = vadd.f32 %v4399, %v4524
  %v4531 = vadd.f32 %v4400, %v4525
  %v4532 = vadd.f32 %v4401, %v4526
  %v4533 = vadd.f32 %v4402, %v4527
  %v4534 = vpack.c.bf16 %v4529, %v4528
  %v4535 = vpack.c.bf16 %v4531, %v4530
  %v4536 = vpack.c.bf16 %v4533, %v4532
  %s4537 = scalar_lea.vmem %s8, 16
  %v4538 = vld [vmem:[%s4537] sm:$0xf]
  %v4539 = vld [vmem:[%s4537 + $0x4] sm:$0xf]
  %v4540 = vld [vmem:[%s4537 + $0x8] sm:$0xf]
  %v4541 = vld [vmem:[%s4537 + $0xc] sm:$0xf]
  %v4542 = vld [vmem:[%s3738 + $0x3] sm:$0x1]
  %v4543 = vlaneseq
  %v4544 = vshrl.u32 %v4543, 7
  %v4545 = vsub.s32 0, %v4544
  %v4546 = vrot.slane %v4542, %v4545
  %v4551 = vunpack.c.l.b16 %v4538
  %v4552 = vunpack.c.l.b16 %v4539
  %v4553 = vunpack.c.l.b16 %v4540
  %v4554 = vunpack.c.l.b16 %v4541
  %v4555 = vpack.c.b16 %v4552, %v4551
  %v4556 = vpack.c.b16 %v4554, %v4553
  %v4560 = vsel %vm206, %v4534, 0
  %v4563 = vsel %vm206, %v4535, 0
  %v4566 = vsel %vm206, %v4536, 0
  %4568 = vmatprep.subr.bf16.mxu0 0
  %4569 = vmatpush1.bf16.msra.mxu0 0
  %4570 = vmatprep.subr.bf16.mxu0 0
  %4571 = vmatpush1.bf16.msra.mxu0 0
  %4572 = vmatprep.subr.bf16.mxu0 0
  %4573 = vmatpush1.bf16.msra.mxu0 0
  %4574 = vmatprep.subr.bf16.mxu0 0
  %4575 = vmatpush1.bf16.msra.mxu0 0
  %4576 = vmatprep.subr.bf16.mxu0 0
  %4577 = vmatpush1.bf16.msra.mxu0 0
  %4578 = vmatprep.subr.bf16.mxu0 0
  %4579 = vmatpush1.bf16.msra.mxu0 0
  %4580 = vmatprep.subr.bf16.mxu0 0
  %4581 = vmatpush1.bf16.msra.mxu0 %v4556
  %4582 = vmatprep.subr.bf16.mxu0 0
  %4583 = vmatpush1.bf16.msra.mxu0 %v4555
  %4584 = vmatprep.subr.bf16.mxu0 0
  %4585 = vmatpush2.bf16.msra.mxu0 0
  %4586 = vmatprep.subr.bf16.mxu0 0
  %4587 = vmatpush2.bf16.msra.mxu0 0
  %4588 = vmatprep.subr.bf16.mxu0 0
  %4589 = vmatpush2.bf16.msra.mxu0 0
  %4590 = vmatprep.subr.bf16.mxu0 0
  %4591 = vmatpush2.bf16.msra.mxu0 0
  %4592 = vmatprep.subr.bf16.mxu0 0
  %4593 = vmatpush2.bf16.msra.mxu0 0
  %4594 = vmatprep.subr.bf16.mxu0 0
  %4595 = vmatpush2.bf16.msra.mxu0 0
  %4596 = vmatprep.subr.bf16.mxu0 0
  %4597 = vmatpush2.bf16.msra.mxu0 0
  %4598 = vmatprep.subr.bf16.mxu0 0
  %4599 = vmatpush2.bf16.msra.mxu0 0
  %4600 = vmatprep.mubr.bf16.mxu0 0
  %4601 = vmatmul.mubr.bf16.gmra.mxu0 %v4560
  %v4602 = vpop.f32.mrf.mxu0
  %v4603 = vadd.f32 %v4546, %v4602
  %v4604 = vpop.f32.mrf.mxu0
  %v4605 = vpop.f32.mrf.mxu0
  %v4606 = vadd.f32 %v4546, %v4605
  %v4607 = vpop.f32.mrf.mxu0
  %4608 = vmatprep.mubr.bf16.mxu0 0
  %4609 = vmatmul.mubr.bf16.gmra.mxu0 %v4563
  %v4610 = vpop.f32.mrf.mxu0
  %v4611 = vadd.f32 %v4546, %v4610
  %v4612 = vpop.f32.mrf.mxu0
  %v4613 = vpop.f32.mrf.mxu0
  %v4614 = vadd.f32 %v4546, %v4613
  %v4615 = vpop.f32.mrf.mxu0
  %4616 = vmatprep.mubr.bf16.mxu0 0
  %4617 = vmatmul.mubr.bf16.gmra.mxu0 %v4566
  %v4618 = vpop.f32.mrf.mxu0
  %v4619 = vadd.f32 %v4546, %v4618
  %v4620 = vpop.f32.mrf.mxu0
  %v4621 = vpop.f32.mrf.mxu0
  %v4622 = vadd.f32 %v4546, %v4621
  %v4623 = vpop.f32.mrf.mxu0
  %4624 = vdwg.mxu0
  %v4625 = vadd.f32 %v3724, %v4603
  %v4626 = vadd.f32 %v3725, %v4606
  %v4627 = vadd.f32 %v3726, %v4611
  %v4628 = vadd.f32 %v3727, %v4614
  %v4629 = vadd.f32 %v3728, %v4619
  %v4630 = vadd.f32 %v3729, %v4622
  %v4631 = vld [vmem:[%s3738 + $0x5] sm:$0x1]
  %v4632 = vld [vmem:[%s3738 + $0x6] sm:$0x1]
  %v4633 = vsel %vm206, %v4625, 0.0
  %4634 = vadd.xlane.f32.xlu0 %v4633
  %v4635 = vpop.xlane.xlu0 %4634
  %v4636 = vsel %vm206, %v4626, 0.0
  %4637 = vadd.xlane.f32.xlu0 %v4636
  %v4638 = vpop.xlane.xlu0 %4637
  %v4639 = vsel %vm206, %v4627, 0.0
  %4640 = vadd.xlane.f32.xlu0 %v4639
  %v4641 = vpop.xlane.xlu0 %4640
  %v4642 = vsel %vm206, %v4628, 0.0
  %4643 = vadd.xlane.f32.xlu0 %v4642
  %v4644 = vpop.xlane.xlu0 %4643
  %v4645 = vsel %vm206, %v4629, 0.0
  %4646 = vadd.xlane.f32.xlu0 %v4645
  %v4647 = vpop.xlane.xlu0 %4646
  %v4648 = vsel %vm206, %v4630, 0.0
  %4649 = vadd.xlane.f32.xlu0 %v4648
  %v4650 = vpop.xlane.xlu0 %4649
  %v4651 = vmul.f32 %v4635, %v1100
  %v4652 = vmul.f32 %v4638, %v1100
  %v4653 = vmul.f32 %v4641, %v1100
  %v4654 = vmul.f32 %v4644, %v1100
  %v4655 = vmul.f32 %v4647, %v1100
  %v4656 = vmul.f32 %v4650, %v1100
  %v4657 = vsub.f32 %v4625, %v4651
  %v4658 = vsub.f32 %v4626, %v4652
  %v4659 = vsub.f32 %v4627, %v4653
  %v4660 = vsub.f32 %v4628, %v4654
  %v4661 = vsub.f32 %v4629, %v4655
  %v4662 = vsub.f32 %v4630, %v4656
  %v4663 = vmul.f32 %v4657, %v4657
  %v4664 = vmul.f32 %v4658, %v4658
  %v4665 = vmul.f32 %v4659, %v4659
  %v4666 = vmul.f32 %v4660, %v4660
  %v4667 = vmul.f32 %v4661, %v4661
  %v4668 = vmul.f32 %v4662, %v4662
  %v4669 = vsel %vm206, %v4663, 0.0
  %4670 = vadd.xlane.f32.xlu0 %v4669
  %v4671 = vpop.xlane.xlu0 %4670
  %v4672 = vsel %vm206, %v4664, 0.0
  %4673 = vadd.xlane.f32.xlu0 %v4672
  %v4674 = vpop.xlane.xlu0 %4673
  %v4675 = vsel %vm206, %v4665, 0.0
  %4676 = vadd.xlane.f32.xlu0 %v4675
  %v4677 = vpop.xlane.xlu0 %4676
  %v4678 = vsel %vm206, %v4666, 0.0
  %4679 = vadd.xlane.f32.xlu0 %v4678
  %v4680 = vpop.xlane.xlu0 %4679
  %v4681 = vsel %vm206, %v4667, 0.0
  %4682 = vadd.xlane.f32.xlu0 %v4681
  %v4683 = vpop.xlane.xlu0 %4682
  %v4684 = vsel %vm206, %v4668, 0.0
  %4685 = vadd.xlane.f32.xlu0 %v4684
  %v4686 = vpop.xlane.xlu0 %4685
  %v4687 = vmul.f32 %v4671, %v1100
  %v4688 = vmul.f32 %v4674, %v1100
  %v4689 = vmul.f32 %v4677, %v1100
  %v4690 = vmul.f32 %v4680, %v1100
  %v4691 = vmul.f32 %v4683, %v1100
  %v4692 = vmul.f32 %v4686, %v1100
  %v4693 = vadd.f32 %v4687, 1e-05
  %v4694 = vadd.f32 %v4688, 1e-05
  %v4695 = vadd.f32 %v4689, 1e-05
  %v4696 = vadd.f32 %v4690, 1e-05
  %v4697 = vadd.f32 %v4691, 1e-05
  %v4698 = vadd.f32 %v4692, 1e-05
  %v4699 = vrsqrt.pop %v4693
  %v4700 = vrsqrt.pop %v4694
  %v4701 = vrsqrt.pop %v4695
  %v4702 = vrsqrt.pop %v4696
  %v4703 = vrsqrt.pop %v4697
  %v4704 = vrsqrt.pop %v4698
  %v4705 = vmul.f32 %v4657, %v4699
  %v4706 = vmul.f32 %v4658, %v4700
  %v4707 = vmul.f32 %v4659, %v4701
  %v4708 = vmul.f32 %v4660, %v4702
  %v4709 = vmul.f32 %v4661, %v4703
  %v4710 = vmul.f32 %v4662, %v4704
  %v4711 = vlaneseq
  %v4712 = vshrl.u32 %v4711, 7
  %v4713 = vsub.s32 0, %v4712
  %v4714 = vrot.slane %v4631, %v4713
  %v4715 = vmul.f32 %v4705, %v4714
  %v4716 = vmul.f32 %v4706, %v4714
  %v4717 = vmul.f32 %v4707, %v4714
  %v4718 = vmul.f32 %v4708, %v4714
  %v4719 = vmul.f32 %v4709, %v4714
  %v4720 = vmul.f32 %v4710, %v4714
  %v4721 = vlaneseq
  %v4722 = vshrl.u32 %v4721, 7
  %v4723 = vsub.s32 0, %v4722
  %v4724 = vrot.slane %v4632, %v4723
  %v4725 = vadd.f32 %v4715, %v4724
  %v4726 = vadd.f32 %v4716, %v4724
  %v4727 = vadd.f32 %v4717, %v4724
  %v4728 = vadd.f32 %v4718, %v4724
  %v4729 = vadd.f32 %v4719, %v4724
  %v4730 = vadd.f32 %v4720, %v4724
  %v4731 = vpack.c.bf16 %v4726, %v4725
  %v4732 = vpack.c.bf16 %v4728, %v4727
  %v4733 = vpack.c.bf16 %v4730, %v4729
  %s4734 = scalar_lea.vmem %s9, 256
  %v4735 = vld [vmem:[%s4734] sm:$0xff]
  %v4736 = vld [vmem:[%s4734 + $0x8] sm:$0xff]
  %v4737 = vld [vmem:[%s4734 + $0x40] sm:$0xff]
  %v4738 = vld [vmem:[%s4734 + $0x48] sm:$0xff]
  %v4739 = vld [vmem:[%s4734 + $0x80] sm:$0xff]
  %v4740 = vld [vmem:[%s4734 + $0x88] sm:$0xff]
  %v4741 = vld [vmem:[%s4734 + $0xc0] sm:$0xff]
  %v4742 = vld [vmem:[%s4734 + $0xc8] sm:$0xff]
  %s4743 = scalar_lea.vmem %s10, 16
  %v4744 = vld [vmem:[%s4743] sm:$0xf]
  %v4746 = vlaneseq
  %v4747 = vshrl.u32 %v4746, 7
  %v4748 = vsub.s32 0, %v4747
  %v4749 = vrot.slane %v4744, %v4748
  %v4750 = vlaneseq
  %v4751 = vshrl.u32 %v4750, 7
  %v4752 = vsub.s32 1, %v4751
  %v4753 = vrot.slane %v4744, %v4752
  %v4754 = vlaneseq
  %v4755 = vshrl.u32 %v4754, 7
  %v4756 = vsub.s32 2, %v4755
  %v4757 = vrot.slane %v4744, %v4756
  %v4758 = vlaneseq
  %v4759 = vshrl.u32 %v4758, 7
  %v4760 = vsub.s32 3, %v4759
  %v4761 = vrot.slane %v4744, %v4760
  %v4774 = vunpack.c.l.b16 %v4735
  %v4775 = vunpack.c.h.b16 %v4735
  %v4776 = vunpack.c.l.b16 %v4736
  %v4777 = vunpack.c.h.b16 %v4736
  %v4778 = vunpack.c.l.b16 %v4737
  %v4779 = vunpack.c.h.b16 %v4737
  %v4780 = vunpack.c.l.b16 %v4738
  %v4781 = vunpack.c.h.b16 %v4738
  %v4782 = vunpack.c.l.b16 %v4739
  %v4783 = vunpack.c.h.b16 %v4739
  %v4784 = vunpack.c.l.b16 %v4740
  %v4785 = vunpack.c.h.b16 %v4740
  %v4786 = vunpack.c.l.b16 %v4741
  %v4787 = vunpack.c.h.b16 %v4741
  %v4788 = vunpack.c.l.b16 %v4742
  %v4789 = vunpack.c.h.b16 %v4742
  %v4790 = vpack.c.b16 %v4778, %v4774
  %v4791 = vpack.c.b16 %v4779, %v4775
  %v4792 = vpack.c.b16 %v4780, %v4776
  %v4793 = vpack.c.b16 %v4781, %v4777
  %v4794 = vpack.c.b16 %v4786, %v4782
  %v4795 = vpack.c.b16 %v4787, %v4783
  %v4796 = vpack.c.b16 %v4788, %v4784
  %v4797 = vpack.c.b16 %v4789, %v4785
  %v4807 = vsel %vm206, %v4731, 0
  %v4810 = vsel %vm206, %v4732, 0
  %v4813 = vsel %vm206, %v4733, 0
  %4815 = vmatprep.subr.bf16.mxu0 0
  %4816 = vmatpush1.bf16.msra.mxu0 0
  %4817 = vmatprep.subr.bf16.mxu0 0
  %4818 = vmatpush1.bf16.msra.mxu0 0
  %4819 = vmatprep.subr.bf16.mxu0 0
  %4820 = vmatpush1.bf16.msra.mxu0 0
  %4821 = vmatprep.subr.bf16.mxu0 0
  %4822 = vmatpush1.bf16.msra.mxu0 0
  %4823 = vmatprep.subr.bf16.mxu0 0
  %4824 = vmatpush1.bf16.msra.mxu0 0
  %4825 = vmatprep.subr.bf16.mxu0 0
  %4826 = vmatpush1.bf16.msra.mxu0 0
  %4827 = vmatprep.subr.bf16.mxu0 %v4795
  %4828 = vmatpush1.bf16.msra.mxu0 %v4794
  %4829 = vmatprep.subr.bf16.mxu0 %v4791
  %4830 = vmatpush1.bf16.msra.mxu0 %v4790
  %4831 = vmatprep.subr.bf16.mxu0 0
  %4832 = vmatpush2.bf16.msra.mxu0 0
  %4833 = vmatprep.subr.bf16.mxu0 0
  %4834 = vmatpush2.bf16.msra.mxu0 0
  %4835 = vmatprep.subr.bf16.mxu0 0
  %4836 = vmatpush2.bf16.msra.mxu0 0
  %4837 = vmatprep.subr.bf16.mxu0 0
  %4838 = vmatpush2.bf16.msra.mxu0 0
  %4839 = vmatprep.subr.bf16.mxu0 0
  %4840 = vmatpush2.bf16.msra.mxu0 0
  %4841 = vmatprep.subr.bf16.mxu0 0
  %4842 = vmatpush2.bf16.msra.mxu0 0
  %4843 = vmatprep.subr.bf16.mxu0 0
  %4844 = vmatpush2.bf16.msra.mxu0 0
  %4845 = vmatprep.subr.bf16.mxu0 0
  %4846 = vmatpush2.bf16.msra.mxu0 0
  %4847 = vmatprep.mubr.bf16.mxu0 0
  %4848 = vmatmul.mubr.bf16.gmra.mxu0 %v4807
  %v4849 = vpop.f32.mrf.mxu0
  %v4850 = vadd.f32 %v4749, %v4849
  %v4851 = vpop.f32.mrf.mxu0
  %v4852 = vadd.f32 %v4753, %v4851
  %v4853 = vpop.f32.mrf.mxu0
  %v4854 = vadd.f32 %v4749, %v4853
  %v4855 = vpop.f32.mrf.mxu0
  %v4856 = vadd.f32 %v4753, %v4855
  %4857 = vmatprep.mubr.bf16.mxu0 0
  %4858 = vmatmul.mubr.bf16.gmra.mxu0 %v4810
  %v4859 = vpop.f32.mrf.mxu0
  %v4860 = vadd.f32 %v4749, %v4859
  %v4861 = vpop.f32.mrf.mxu0
  %v4862 = vadd.f32 %v4753, %v4861
  %v4863 = vpop.f32.mrf.mxu0
  %v4864 = vadd.f32 %v4749, %v4863
  %v4865 = vpop.f32.mrf.mxu0
  %v4866 = vadd.f32 %v4753, %v4865
  %4867 = vmatprep.mubr.bf16.mxu0 0
  %4868 = vmatmul.mubr.bf16.gmra.mxu0 %v4813
  %v4869 = vpop.f32.mrf.mxu0
  %v4870 = vadd.f32 %v4749, %v4869
  %v4871 = vpop.f32.mrf.mxu0
  %v4872 = vadd.f32 %v4753, %v4871
  %v4873 = vpop.f32.mrf.mxu0
  %v4874 = vadd.f32 %v4749, %v4873
  %v4875 = vpop.f32.mrf.mxu0
  %v4876 = vadd.f32 %v4753, %v4875
  %4877 = vdwg.mxu0
  %4878 = vmatprep.subr.bf16.mxu0 0
  %4879 = vmatpush1.bf16.msra.mxu0 0
  %4880 = vmatprep.subr.bf16.mxu0 0
  %4881 = vmatpush1.bf16.msra.mxu0 0
  %4882 = vmatprep.subr.bf16.mxu0 0
  %4883 = vmatpush1.bf16.msra.mxu0 0
  %4884 = vmatprep.subr.bf16.mxu0 0
  %4885 = vmatpush1.bf16.msra.mxu0 0
  %4886 = vmatprep.subr.bf16.mxu0 0
  %4887 = vmatpush1.bf16.msra.mxu0 0
  %4888 = vmatprep.subr.bf16.mxu0 0
  %4889 = vmatpush1.bf16.msra.mxu0 0
  %4890 = vmatprep.subr.bf16.mxu0 %v4797
  %4891 = vmatpush1.bf16.msra.mxu0 %v4796
  %4892 = vmatprep.subr.bf16.mxu0 %v4793
  %4893 = vmatpush1.bf16.msra.mxu0 %v4792
  %4894 = vmatprep.subr.bf16.mxu0 0
  %4895 = vmatpush2.bf16.msra.mxu0 0
  %4896 = vmatprep.subr.bf16.mxu0 0
  %4897 = vmatpush2.bf16.msra.mxu0 0
  %4898 = vmatprep.subr.bf16.mxu0 0
  %4899 = vmatpush2.bf16.msra.mxu0 0
  %4900 = vmatprep.subr.bf16.mxu0 0
  %4901 = vmatpush2.bf16.msra.mxu0 0
  %4902 = vmatprep.subr.bf16.mxu0 0
  %4903 = vmatpush2.bf16.msra.mxu0 0
  %4904 = vmatprep.subr.bf16.mxu0 0
  %4905 = vmatpush2.bf16.msra.mxu0 0
  %4906 = vmatprep.subr.bf16.mxu0 0
  %4907 = vmatpush2.bf16.msra.mxu0 0
  %4908 = vmatprep.subr.bf16.mxu0 0
  %4909 = vmatpush2.bf16.msra.mxu0 0
  %4910 = vmatprep.mubr.bf16.mxu0 0
  %4911 = vmatmul.mubr.bf16.gmra.mxu0 %v4807
  %v4912 = vpop.f32.mrf.mxu0
  %v4913 = vadd.f32 %v4757, %v4912
  %v4914 = vpop.f32.mrf.mxu0
  %v4915 = vadd.f32 %v4761, %v4914
  %v4916 = vpop.f32.mrf.mxu0
  %v4917 = vadd.f32 %v4757, %v4916
  %v4918 = vpop.f32.mrf.mxu0
  %v4919 = vadd.f32 %v4761, %v4918
  %4920 = vmatprep.mubr.bf16.mxu0 0
  %4921 = vmatmul.mubr.bf16.gmra.mxu0 %v4810
  %v4922 = vpop.f32.mrf.mxu0
  %v4923 = vadd.f32 %v4757, %v4922
  %v4924 = vpop.f32.mrf.mxu0
  %v4925 = vadd.f32 %v4761, %v4924
  %v4926 = vpop.f32.mrf.mxu0
  %v4927 = vadd.f32 %v4757, %v4926
  %v4928 = vpop.f32.mrf.mxu0
  %v4929 = vadd.f32 %v4761, %v4928
  %4930 = vmatprep.mubr.bf16.mxu0 0
  %4931 = vmatmul.mubr.bf16.gmra.mxu0 %v4813
  %v4932 = vpop.f32.mrf.mxu0
  %v4933 = vadd.f32 %v4757, %v4932
  %v4934 = vpop.f32.mrf.mxu0
  %v4935 = vadd.f32 %v4761, %v4934
  %v4936 = vpop.f32.mrf.mxu0
  %v4937 = vadd.f32 %v4757, %v4936
  %v4938 = vpop.f32.mrf.mxu0
  %v4939 = vadd.f32 %v4761, %v4938
  %4940 = vdwg.mxu0
  %v4941 = vmax.f32 %v4850, 0.0
  %v4942 = vmax.f32 %v4852, 0.0
  %v4943 = vmax.f32 %v4913, 0.0
  %v4944 = vmax.f32 %v4915, 0.0
  %v4945 = vmax.f32 %v4854, 0.0
  %v4946 = vmax.f32 %v4856, 0.0
  %v4947 = vmax.f32 %v4917, 0.0
  %v4948 = vmax.f32 %v4919, 0.0
  %v4949 = vmax.f32 %v4860, 0.0
  %v4950 = vmax.f32 %v4862, 0.0
  %v4951 = vmax.f32 %v4923, 0.0
  %v4952 = vmax.f32 %v4925, 0.0
  %v4953 = vmax.f32 %v4864, 0.0
  %v4954 = vmax.f32 %v4866, 0.0
  %v4955 = vmax.f32 %v4927, 0.0
  %v4956 = vmax.f32 %v4929, 0.0
  %v4957 = vmax.f32 %v4870, 0.0
  %v4958 = vmax.f32 %v4872, 0.0
  %v4959 = vmax.f32 %v4933, 0.0
  %v4960 = vmax.f32 %v4935, 0.0
  %v4961 = vmax.f32 %v4874, 0.0
  %v4962 = vmax.f32 %v4876, 0.0
  %v4963 = vmax.f32 %v4937, 0.0
  %v4964 = vmax.f32 %v4939, 0.0
  %v4965 = vpack.c.bf16 %v4945, %v4941
  %v4966 = vpack.c.bf16 %v4946, %v4942
  %v4967 = vpack.c.bf16 %v4947, %v4943
  %v4968 = vpack.c.bf16 %v4948, %v4944
  %v4969 = vpack.c.bf16 %v4953, %v4949
  %v4970 = vpack.c.bf16 %v4954, %v4950
  %v4971 = vpack.c.bf16 %v4955, %v4951
  %v4972 = vpack.c.bf16 %v4956, %v4952
  %v4973 = vpack.c.bf16 %v4961, %v4957
  %v4974 = vpack.c.bf16 %v4962, %v4958
  %v4975 = vpack.c.bf16 %v4963, %v4959
  %v4976 = vpack.c.bf16 %v4964, %v4960
  %s4977 = scalar_lea.vmem %s11, 1024
  %v4978 = vld [vmem:[%s4977] sm:$0xf]
  %v4979 = vld [vmem:[%s4977 + $0x4] sm:$0xf]
  %v4980 = vld [vmem:[%s4977 + $0x8] sm:$0xf]
  %v4981 = vld [vmem:[%s4977 + $0xc] sm:$0xf]
  %v4982 = vld [vmem:[%s4977 + $0x10] sm:$0xf]
  %v4983 = vld [vmem:[%s4977 + $0x14] sm:$0xf]
  %v4984 = vld [vmem:[%s4977 + $0x18] sm:$0xf]
  %v4985 = vld [vmem:[%s4977 + $0x1c] sm:$0xf]
  %v4986 = vld [vmem:[%s4977 + $0x20] sm:$0xf]
  %v4987 = vld [vmem:[%s4977 + $0x24] sm:$0xf]
  %v4988 = vld [vmem:[%s4977 + $0x28] sm:$0xf]
  %v4989 = vld [vmem:[%s4977 + $0x2c] sm:$0xf]
  %v4990 = vld [vmem:[%s4977 + $0x30] sm:$0xf]
  %v4991 = vld [vmem:[%s4977 + $0x34] sm:$0xf]
  %v4992 = vld [vmem:[%s4977 + $0x38] sm:$0xf]
  %v4993 = vld [vmem:[%s4977 + $0x3c] sm:$0xf]
  %v4994 = vld [vmem:[%s4977 + $0x40] sm:$0xf]
  %v4995 = vld [vmem:[%s4977 + $0x44] sm:$0xf]
  %v4996 = vld [vmem:[%s4977 + $0x48] sm:$0xf]
  %v4997 = vld [vmem:[%s4977 + $0x4c] sm:$0xf]
  %v4998 = vld [vmem:[%s4977 + $0x50] sm:$0xf]
  %v4999 = vld [vmem:[%s4977 + $0x54] sm:$0xf]
  %v5000 = vld [vmem:[%s4977 + $0x58] sm:$0xf]
  %v5001 = vld [vmem:[%s4977 + $0x5c] sm:$0xf]
  %v5002 = vld [vmem:[%s4977 + $0x60] sm:$0xf]
  %v5003 = vld [vmem:[%s4977 + $0x64] sm:$0xf]
  %v5004 = vld [vmem:[%s4977 + $0x68] sm:$0xf]
  %v5005 = vld [vmem:[%s4977 + $0x6c] sm:$0xf]
  %v5006 = vld [vmem:[%s4977 + $0x70] sm:$0xf]
  %v5007 = vld [vmem:[%s4977 + $0x74] sm:$0xf]
  %v5008 = vld [vmem:[%s4977 + $0x78] sm:$0xf]
  %v5009 = vld [vmem:[%s4977 + $0x7c] sm:$0xf]
  %v5010 = vld [vmem:[%s4977 + $0x80] sm:$0xf]
  %v5011 = vld [vmem:[%s4977 + $0x84] sm:$0xf]
  %v5012 = vld [vmem:[%s4977 + $0x88] sm:$0xf]
  %v5013 = vld [vmem:[%s4977 + $0x8c] sm:$0xf]
  %v5014 = vld [vmem:[%s4977 + $0x90] sm:$0xf]
  %v5015 = vld [vmem:[%s4977 + $0x94] sm:$0xf]
  %v5016 = vld [vmem:[%s4977 + $0x98] sm:$0xf]
  %v5017 = vld [vmem:[%s4977 + $0x9c] sm:$0xf]
  %v5018 = vld [vmem:[%s4977 + $0xa0] sm:$0xf]
  %v5019 = vld [vmem:[%s4977 + $0xa4] sm:$0xf]
  %v5020 = vld [vmem:[%s4977 + $0xa8] sm:$0xf]
  %v5021 = vld [vmem:[%s4977 + $0xac] sm:$0xf]
  %v5022 = vld [vmem:[%s4977 + $0xb0] sm:$0xf]
  %v5023 = vld [vmem:[%s4977 + $0xb4] sm:$0xf]
  %v5024 = vld [vmem:[%s4977 + $0xb8] sm:$0xf]
  %v5025 = vld [vmem:[%s4977 + $0xbc] sm:$0xf]
  %v5026 = vld [vmem:[%s4977 + $0xc0] sm:$0xf]
  %v5027 = vld [vmem:[%s4977 + $0xc4] sm:$0xf]
  %v5028 = vld [vmem:[%s4977 + $0xc8] sm:$0xf]
  %v5029 = vld [vmem:[%s4977 + $0xcc] sm:$0xf]
  %v5030 = vld [vmem:[%s4977 + $0xd0] sm:$0xf]
  %v5031 = vld [vmem:[%s4977 + $0xd4] sm:$0xf]
  %v5032 = vld [vmem:[%s4977 + $0xd8] sm:$0xf]
  %v5033 = vld [vmem:[%s4977 + $0xdc] sm:$0xf]
  %v5034 = vld [vmem:[%s4977 + $0xe0] sm:$0xf]
  %v5035 = vld [vmem:[%s4977 + $0xe4] sm:$0xf]
  %v5036 = vld [vmem:[%s4977 + $0xe8] sm:$0xf]
  %v5037 = vld [vmem:[%s4977 + $0xec] sm:$0xf]
  %v5038 = vld [vmem:[%s4977 + $0xf0] sm:$0xf]
  %v5039 = vld [vmem:[%s4977 + $0xf4] sm:$0xf]
  %v5040 = vld [vmem:[%s4977 + $0xf8] sm:$0xf]
  %v5041 = vld [vmem:[%s4977 + $0xfc] sm:$0xf]
  %v5042 = vld [vmem:[%s4734 + $0x10] sm:$0xff]
  %v5043 = vld [vmem:[%s4734 + $0x18] sm:$0xff]
  %v5044 = vld [vmem:[%s4734 + $0x50] sm:$0xff]
  %v5045 = vld [vmem:[%s4734 + $0x58] sm:$0xff]
  %v5046 = vld [vmem:[%s4734 + $0x90] sm:$0xff]
  %v5047 = vld [vmem:[%s4734 + $0x98] sm:$0xff]
  %v5048 = vld [vmem:[%s4734 + $0xd0] sm:$0xff]
  %v5049 = vld [vmem:[%s4734 + $0xd8] sm:$0xff]
  %v5050 = vld [vmem:[%s4743 + $0x4] sm:$0xf]
  %v5052 = vlaneseq
  %v5053 = vshrl.u32 %v5052, 7
  %v5054 = vsub.s32 0, %v5053
  %v5055 = vrot.slane %v5050, %v5054
  %v5056 = vlaneseq
  %v5057 = vshrl.u32 %v5056, 7
  %v5058 = vsub.s32 1, %v5057
  %v5059 = vrot.slane %v5050, %v5058
  %v5060 = vlaneseq
  %v5061 = vshrl.u32 %v5060, 7
  %v5062 = vsub.s32 2, %v5061
  %v5063 = vrot.slane %v5050, %v5062
  %v5064 = vlaneseq
  %v5065 = vshrl.u32 %v5064, 7
  %v5066 = vsub.s32 3, %v5065
  %v5067 = vrot.slane %v5050, %v5066
  %v5080 = vunpack.c.l.b16 %v5042
  %v5081 = vunpack.c.h.b16 %v5042
  %v5082 = vunpack.c.l.b16 %v5043
  %v5083 = vunpack.c.h.b16 %v5043
  %v5084 = vunpack.c.l.b16 %v5044
  %v5085 = vunpack.c.h.b16 %v5044
  %v5086 = vunpack.c.l.b16 %v5045
  %v5087 = vunpack.c.h.b16 %v5045
  %v5088 = vunpack.c.l.b16 %v5046
  %v5089 = vunpack.c.h.b16 %v5046
  %v5090 = vunpack.c.l.b16 %v5047
  %v5091 = vunpack.c.h.b16 %v5047
  %v5092 = vunpack.c.l.b16 %v5048
  %v5093 = vunpack.c.h.b16 %v5048
  %v5094 = vunpack.c.l.b16 %v5049
  %v5095 = vunpack.c.h.b16 %v5049
  %v5096 = vpack.c.b16 %v5084, %v5080
  %v5097 = vpack.c.b16 %v5085, %v5081
  %v5098 = vpack.c.b16 %v5086, %v5082
  %v5099 = vpack.c.b16 %v5087, %v5083
  %v5100 = vpack.c.b16 %v5092, %v5088
  %v5101 = vpack.c.b16 %v5093, %v5089
  %v5102 = vpack.c.b16 %v5094, %v5090
  %v5103 = vpack.c.b16 %v5095, %v5091
  %5112 = vmatprep.subr.bf16.mxu0 0
  %5113 = vmatpush1.bf16.msra.mxu0 0
  %5114 = vmatprep.subr.bf16.mxu0 0
  %5115 = vmatpush1.bf16.msra.mxu0 0
  %5116 = vmatprep.subr.bf16.mxu0 0
  %5117 = vmatpush1.bf16.msra.mxu0 0
  %5118 = vmatprep.subr.bf16.mxu0 0
  %5119 = vmatpush1.bf16.msra.mxu0 0
  %5120 = vmatprep.subr.bf16.mxu0 0
  %5121 = vmatpush1.bf16.msra.mxu0 0
  %5122 = vmatprep.subr.bf16.mxu0 0
  %5123 = vmatpush1.bf16.msra.mxu0 0
  %5124 = vmatprep.subr.bf16.mxu0 %v5101
  %5125 = vmatpush1.bf16.msra.mxu0 %v5100
  %5126 = vmatprep.subr.bf16.mxu0 %v5097
  %5127 = vmatpush1.bf16.msra.mxu0 %v5096
  %5128 = vmatprep.subr.bf16.mxu0 0
  %5129 = vmatpush2.bf16.msra.mxu0 0
  %5130 = vmatprep.subr.bf16.mxu0 0
  %5131 = vmatpush2.bf16.msra.mxu0 0
  %5132 = vmatprep.subr.bf16.mxu0 0
  %5133 = vmatpush2.bf16.msra.mxu0 0
  %5134 = vmatprep.subr.bf16.mxu0 0
  %5135 = vmatpush2.bf16.msra.mxu0 0
  %5136 = vmatprep.subr.bf16.mxu0 0
  %5137 = vmatpush2.bf16.msra.mxu0 0
  %5138 = vmatprep.subr.bf16.mxu0 0
  %5139 = vmatpush2.bf16.msra.mxu0 0
  %5140 = vmatprep.subr.bf16.mxu0 0
  %5141 = vmatpush2.bf16.msra.mxu0 0
  %5142 = vmatprep.subr.bf16.mxu0 0
  %5143 = vmatpush2.bf16.msra.mxu0 0
  %5144 = vmatprep.mubr.bf16.mxu0 0
  %5145 = vmatmul.mubr.bf16.gmra.mxu0 %v4807
  %v5146 = vpop.f32.mrf.mxu0
  %v5147 = vadd.f32 %v5055, %v5146
  %v5148 = vpop.f32.mrf.mxu0
  %v5149 = vadd.f32 %v5059, %v5148
  %v5150 = vpop.f32.mrf.mxu0
  %v5151 = vadd.f32 %v5055, %v5150
  %v5152 = vpop.f32.mrf.mxu0
  %v5153 = vadd.f32 %v5059, %v5152
  %5154 = vmatprep.mubr.bf16.mxu0 0
  %5155 = vmatmul.mubr.bf16.gmra.mxu0 %v4810
  %v5156 = vpop.f32.mrf.mxu0
  %v5157 = vadd.f32 %v5055, %v5156
  %v5158 = vpop.f32.mrf.mxu0
  %v5159 = vadd.f32 %v5059, %v5158
  %v5160 = vpop.f32.mrf.mxu0
  %v5161 = vadd.f32 %v5055, %v5160
  %v5162 = vpop.f32.mrf.mxu0
  %v5163 = vadd.f32 %v5059, %v5162
  %5164 = vmatprep.mubr.bf16.mxu0 0
  %5165 = vmatmul.mubr.bf16.gmra.mxu0 %v4813
  %v5166 = vpop.f32.mrf.mxu0
  %v5167 = vadd.f32 %v5055, %v5166
  %v5168 = vpop.f32.mrf.mxu0
  %v5169 = vadd.f32 %v5059, %v5168
  %v5170 = vpop.f32.mrf.mxu0
  %v5171 = vadd.f32 %v5055, %v5170
  %v5172 = vpop.f32.mrf.mxu0
  %v5173 = vadd.f32 %v5059, %v5172
  %5174 = vdwg.mxu0
  %5175 = vmatprep.subr.bf16.mxu0 0
  %5176 = vmatpush1.bf16.msra.mxu0 0
  %5177 = vmatprep.subr.bf16.mxu0 0
  %5178 = vmatpush1.bf16.msra.mxu0 0
  %5179 = vmatprep.subr.bf16.mxu0 0
  %5180 = vmatpush1.bf16.msra.mxu0 0
  %5181 = vmatprep.subr.bf16.mxu0 0
  %5182 = vmatpush1.bf16.msra.mxu0 0
  %5183 = vmatprep.subr.bf16.mxu0 0
  %5184 = vmatpush1.bf16.msra.mxu0 0
  %5185 = vmatprep.subr.bf16.mxu0 0
  %5186 = vmatpush1.bf16.msra.mxu0 0
  %5187 = vmatprep.subr.bf16.mxu0 %v5103
  %5188 = vmatpush1.bf16.msra.mxu0 %v5102
  %5189 = vmatprep.subr.bf16.mxu0 %v5099
  %5190 = vmatpush1.bf16.msra.mxu0 %v5098
  %5191 = vmatprep.subr.bf16.mxu0 0
  %5192 = vmatpush2.bf16.msra.mxu0 0
  %5193 = vmatprep.subr.bf16.mxu0 0
  %5194 = vmatpush2.bf16.msra.mxu0 0
  %5195 = vmatprep.subr.bf16.mxu0 0
  %5196 = vmatpush2.bf16.msra.mxu0 0
  %5197 = vmatprep.subr.bf16.mxu0 0
  %5198 = vmatpush2.bf16.msra.mxu0 0
  %5199 = vmatprep.subr.bf16.mxu0 0
  %5200 = vmatpush2.bf16.msra.mxu0 0
  %5201 = vmatprep.subr.bf16.mxu0 0
  %5202 = vmatpush2.bf16.msra.mxu0 0
  %5203 = vmatprep.subr.bf16.mxu0 0
  %5204 = vmatpush2.bf16.msra.mxu0 0
  %5205 = vmatprep.subr.bf16.mxu0 0
  %5206 = vmatpush2.bf16.msra.mxu0 0
  %5207 = vmatprep.mubr.bf16.mxu0 0
  %5208 = vmatmul.mubr.bf16.gmra.mxu0 %v4807
  %v5209 = vpop.f32.mrf.mxu0
  %v5210 = vadd.f32 %v5063, %v5209
  %v5211 = vpop.f32.mrf.mxu0
  %v5212 = vadd.f32 %v5067, %v5211
  %v5213 = vpop.f32.mrf.mxu0
  %v5214 = vadd.f32 %v5063, %v5213
  %v5215 = vpop.f32.mrf.mxu0
  %v5216 = vadd.f32 %v5067, %v5215
  %5217 = vmatprep.mubr.bf16.mxu0 0
  %5218 = vmatmul.mubr.bf16.gmra.mxu0 %v4810
  %v5219 = vpop.f32.mrf.mxu0
  %v5220 = vadd.f32 %v5063, %v5219
  %v5221 = vpop.f32.mrf.mxu0
  %v5222 = vadd.f32 %v5067, %v5221
  %v5223 = vpop.f32.mrf.mxu0
  %v5224 = vadd.f32 %v5063, %v5223
  %v5225 = vpop.f32.mrf.mxu0
  %v5226 = vadd.f32 %v5067, %v5225
  %5227 = vmatprep.mubr.bf16.mxu0 0
  %5228 = vmatmul.mubr.bf16.gmra.mxu0 %v4813
  %v5229 = vpop.f32.mrf.mxu0
  %v5230 = vadd.f32 %v5063, %v5229
  %v5231 = vpop.f32.mrf.mxu0
  %v5232 = vadd.f32 %v5067, %v5231
  %v5233 = vpop.f32.mrf.mxu0
  %v5234 = vadd.f32 %v5063, %v5233
  %v5235 = vpop.f32.mrf.mxu0
  %v5236 = vadd.f32 %v5067, %v5235
  %5237 = vdwg.mxu0
  %v5238 = vmax.f32 %v5147, 0.0
  %v5239 = vmax.f32 %v5149, 0.0
  %v5240 = vmax.f32 %v5210, 0.0
  %v5241 = vmax.f32 %v5212, 0.0
  %v5242 = vmax.f32 %v5151, 0.0
  %v5243 = vmax.f32 %v5153, 0.0
  %v5244 = vmax.f32 %v5214, 0.0
  %v5245 = vmax.f32 %v5216, 0.0
  %v5246 = vmax.f32 %v5157, 0.0
  %v5247 = vmax.f32 %v5159, 0.0
  %v5248 = vmax.f32 %v5220, 0.0
  %v5249 = vmax.f32 %v5222, 0.0
  %v5250 = vmax.f32 %v5161, 0.0
  %v5251 = vmax.f32 %v5163, 0.0
  %v5252 = vmax.f32 %v5224, 0.0
  %v5253 = vmax.f32 %v5226, 0.0
  %v5254 = vmax.f32 %v5167, 0.0
  %v5255 = vmax.f32 %v5169, 0.0
  %v5256 = vmax.f32 %v5230, 0.0
  %v5257 = vmax.f32 %v5232, 0.0
  %v5258 = vmax.f32 %v5171, 0.0
  %v5259 = vmax.f32 %v5173, 0.0
  %v5260 = vmax.f32 %v5234, 0.0
  %v5261 = vmax.f32 %v5236, 0.0
  %v5262 = vpack.c.bf16 %v5242, %v5238
  %v5263 = vpack.c.bf16 %v5243, %v5239
  %v5264 = vpack.c.bf16 %v5244, %v5240
  %v5265 = vpack.c.bf16 %v5245, %v5241
  %v5266 = vpack.c.bf16 %v5250, %v5246
  %v5267 = vpack.c.bf16 %v5251, %v5247
  %v5268 = vpack.c.bf16 %v5252, %v5248
  %v5269 = vpack.c.bf16 %v5253, %v5249
  %v5270 = vpack.c.bf16 %v5258, %v5254
  %v5271 = vpack.c.bf16 %v5259, %v5255
  %v5272 = vpack.c.bf16 %v5260, %v5256
  %v5273 = vpack.c.bf16 %v5261, %v5257
  %v5274 = vld [vmem:[%s4977 + $0x100] sm:$0xf]
  %v5275 = vld [vmem:[%s4977 + $0x104] sm:$0xf]
  %v5276 = vld [vmem:[%s4977 + $0x108] sm:$0xf]
  %v5277 = vld [vmem:[%s4977 + $0x10c] sm:$0xf]
  %v5278 = vld [vmem:[%s4977 + $0x110] sm:$0xf]
  %v5279 = vld [vmem:[%s4977 + $0x114] sm:$0xf]
  %v5280 = vld [vmem:[%s4977 + $0x118] sm:$0xf]
  %v5281 = vld [vmem:[%s4977 + $0x11c] sm:$0xf]
  %v5282 = vld [vmem:[%s4977 + $0x120] sm:$0xf]
  %v5283 = vld [vmem:[%s4977 + $0x124] sm:$0xf]
  %v5284 = vld [vmem:[%s4977 + $0x128] sm:$0xf]
  %v5285 = vld [vmem:[%s4977 + $0x12c] sm:$0xf]
  %v5286 = vld [vmem:[%s4977 + $0x130] sm:$0xf]
  %v5287 = vld [vmem:[%s4977 + $0x134] sm:$0xf]
  %v5288 = vld [vmem:[%s4977 + $0x138] sm:$0xf]
  %v5289 = vld [vmem:[%s4977 + $0x13c] sm:$0xf]
  %v5290 = vld [vmem:[%s4977 + $0x140] sm:$0xf]
  %v5291 = vld [vmem:[%s4977 + $0x144] sm:$0xf]
  %v5292 = vld [vmem:[%s4977 + $0x148] sm:$0xf]
  %v5293 = vld [vmem:[%s4977 + $0x14c] sm:$0xf]
  %v5294 = vld [vmem:[%s4977 + $0x150] sm:$0xf]
  %v5295 = vld [vmem:[%s4977 + $0x154] sm:$0xf]
  %v5296 = vld [vmem:[%s4977 + $0x158] sm:$0xf]
  %v5297 = vld [vmem:[%s4977 + $0x15c] sm:$0xf]
  %v5298 = vld [vmem:[%s4977 + $0x160] sm:$0xf]
  %v5299 = vld [vmem:[%s4977 + $0x164] sm:$0xf]
  %v5300 = vld [vmem:[%s4977 + $0x168] sm:$0xf]
  %v5301 = vld [vmem:[%s4977 + $0x16c] sm:$0xf]
  %v5302 = vld [vmem:[%s4977 + $0x170] sm:$0xf]
  %v5303 = vld [vmem:[%s4977 + $0x174] sm:$0xf]
  %v5304 = vld [vmem:[%s4977 + $0x178] sm:$0xf]
  %v5305 = vld [vmem:[%s4977 + $0x17c] sm:$0xf]
  %v5306 = vld [vmem:[%s4977 + $0x180] sm:$0xf]
  %v5307 = vld [vmem:[%s4977 + $0x184] sm:$0xf]
  %v5308 = vld [vmem:[%s4977 + $0x188] sm:$0xf]
  %v5309 = vld [vmem:[%s4977 + $0x18c] sm:$0xf]
  %v5310 = vld [vmem:[%s4977 + $0x190] sm:$0xf]
  %v5311 = vld [vmem:[%s4977 + $0x194] sm:$0xf]
  %v5312 = vld [vmem:[%s4977 + $0x198] sm:$0xf]
  %v5313 = vld [vmem:[%s4977 + $0x19c] sm:$0xf]
  %v5314 = vld [vmem:[%s4977 + $0x1a0] sm:$0xf]
  %v5315 = vld [vmem:[%s4977 + $0x1a4] sm:$0xf]
  %v5316 = vld [vmem:[%s4977 + $0x1a8] sm:$0xf]
  %v5317 = vld [vmem:[%s4977 + $0x1ac] sm:$0xf]
  %v5318 = vld [vmem:[%s4977 + $0x1b0] sm:$0xf]
  %v5319 = vld [vmem:[%s4977 + $0x1b4] sm:$0xf]
  %v5320 = vld [vmem:[%s4977 + $0x1b8] sm:$0xf]
  %v5321 = vld [vmem:[%s4977 + $0x1bc] sm:$0xf]
  %v5322 = vld [vmem:[%s4977 + $0x1c0] sm:$0xf]
  %v5323 = vld [vmem:[%s4977 + $0x1c4] sm:$0xf]
  %v5324 = vld [vmem:[%s4977 + $0x1c8] sm:$0xf]
  %v5325 = vld [vmem:[%s4977 + $0x1cc] sm:$0xf]
  %v5326 = vld [vmem:[%s4977 + $0x1d0] sm:$0xf]
  %v5327 = vld [vmem:[%s4977 + $0x1d4] sm:$0xf]
  %v5328 = vld [vmem:[%s4977 + $0x1d8] sm:$0xf]
  %v5329 = vld [vmem:[%s4977 + $0x1dc] sm:$0xf]
  %v5330 = vld [vmem:[%s4977 + $0x1e0] sm:$0xf]
  %v5331 = vld [vmem:[%s4977 + $0x1e4] sm:$0xf]
  %v5332 = vld [vmem:[%s4977 + $0x1e8] sm:$0xf]
  %v5333 = vld [vmem:[%s4977 + $0x1ec] sm:$0xf]
  %v5334 = vld [vmem:[%s4977 + $0x1f0] sm:$0xf]
  %v5335 = vld [vmem:[%s4977 + $0x1f4] sm:$0xf]
  %v5336 = vld [vmem:[%s4977 + $0x1f8] sm:$0xf]
  %v5337 = vld [vmem:[%s4977 + $0x1fc] sm:$0xf]
  %v5402 = vunpack.c.l.b16 %v5274
  %v5403 = vunpack.c.l.b16 %v5275
  %v5404 = vunpack.c.l.b16 %v5276
  %v5405 = vunpack.c.l.b16 %v5277
  %v5406 = vunpack.c.l.b16 %v5278
  %v5407 = vunpack.c.l.b16 %v5279
  %v5408 = vunpack.c.l.b16 %v5280
  %v5409 = vunpack.c.l.b16 %v5281
  %v5410 = vunpack.c.l.b16 %v5282
  %v5411 = vunpack.c.l.b16 %v5283
  %v5412 = vunpack.c.l.b16 %v5284
  %v5413 = vunpack.c.l.b16 %v5285
  %v5414 = vunpack.c.l.b16 %v5286
  %v5415 = vunpack.c.l.b16 %v5287
  %v5416 = vunpack.c.l.b16 %v5288
  %v5417 = vunpack.c.l.b16 %v5289
  %v5418 = vunpack.c.l.b16 %v5290
  %v5419 = vunpack.c.l.b16 %v5291
  %v5420 = vunpack.c.l.b16 %v5292
  %v5421 = vunpack.c.l.b16 %v5293
  %v5422 = vunpack.c.l.b16 %v5294
  %v5423 = vunpack.c.l.b16 %v5295
  %v5424 = vunpack.c.l.b16 %v5296
  %v5425 = vunpack.c.l.b16 %v5297
  %v5426 = vunpack.c.l.b16 %v5298
  %v5427 = vunpack.c.l.b16 %v5299
  %v5428 = vunpack.c.l.b16 %v5300
  %v5429 = vunpack.c.l.b16 %v5301
  %v5430 = vunpack.c.l.b16 %v5302
  %v5431 = vunpack.c.l.b16 %v5303
  %v5432 = vunpack.c.l.b16 %v5304
  %v5433 = vunpack.c.l.b16 %v5305
  %v5434 = vunpack.c.l.b16 %v5306
  %v5435 = vunpack.c.l.b16 %v5307
  %v5436 = vunpack.c.l.b16 %v5308
  %v5437 = vunpack.c.l.b16 %v5309
  %v5438 = vunpack.c.l.b16 %v5310
  %v5439 = vunpack.c.l.b16 %v5311
  %v5440 = vunpack.c.l.b16 %v5312
  %v5441 = vunpack.c.l.b16 %v5313
  %v5442 = vunpack.c.l.b16 %v5314
  %v5443 = vunpack.c.l.b16 %v5315
  %v5444 = vunpack.c.l.b16 %v5316
  %v5445 = vunpack.c.l.b16 %v5317
  %v5446 = vunpack.c.l.b16 %v5318
  %v5447 = vunpack.c.l.b16 %v5319
  %v5448 = vunpack.c.l.b16 %v5320
  %v5449 = vunpack.c.l.b16 %v5321
  %v5450 = vunpack.c.l.b16 %v5322
  %v5451 = vunpack.c.l.b16 %v5323
  %v5452 = vunpack.c.l.b16 %v5324
  %v5453 = vunpack.c.l.b16 %v5325
  %v5454 = vunpack.c.l.b16 %v5326
  %v5455 = vunpack.c.l.b16 %v5327
  %v5456 = vunpack.c.l.b16 %v5328
  %v5457 = vunpack.c.l.b16 %v5329
  %v5458 = vunpack.c.l.b16 %v5330
  %v5459 = vunpack.c.l.b16 %v5331
  %v5460 = vunpack.c.l.b16 %v5332
  %v5461 = vunpack.c.l.b16 %v5333
  %v5462 = vunpack.c.l.b16 %v5334
  %v5463 = vunpack.c.l.b16 %v5335
  %v5464 = vunpack.c.l.b16 %v5336
  %v5465 = vunpack.c.l.b16 %v5337
  %v5466 = vpack.c.b16 %v5403, %v5402
  %v5467 = vpack.c.b16 %v5405, %v5404
  %v5468 = vpack.c.b16 %v5407, %v5406
  %v5469 = vpack.c.b16 %v5409, %v5408
  %v5470 = vpack.c.b16 %v5411, %v5410
  %v5471 = vpack.c.b16 %v5413, %v5412
  %v5472 = vpack.c.b16 %v5415, %v5414
  %v5473 = vpack.c.b16 %v5417, %v5416
  %v5474 = vpack.c.b16 %v5419, %v5418
  %v5475 = vpack.c.b16 %v5421, %v5420
  %v5476 = vpack.c.b16 %v5423, %v5422
  %v5477 = vpack.c.b16 %v5425, %v5424
  %v5478 = vpack.c.b16 %v5427, %v5426
  %v5479 = vpack.c.b16 %v5429, %v5428
  %v5480 = vpack.c.b16 %v5431, %v5430
  %v5481 = vpack.c.b16 %v5433, %v5432
  %v5482 = vpack.c.b16 %v5435, %v5434
  %v5483 = vpack.c.b16 %v5437, %v5436
  %v5484 = vpack.c.b16 %v5439, %v5438
  %v5485 = vpack.c.b16 %v5441, %v5440
  %v5486 = vpack.c.b16 %v5443, %v5442
  %v5487 = vpack.c.b16 %v5445, %v5444
  %v5488 = vpack.c.b16 %v5447, %v5446
  %v5489 = vpack.c.b16 %v5449, %v5448
  %v5490 = vpack.c.b16 %v5451, %v5450
  %v5491 = vpack.c.b16 %v5453, %v5452
  %v5492 = vpack.c.b16 %v5455, %v5454
  %v5493 = vpack.c.b16 %v5457, %v5456
  %v5494 = vpack.c.b16 %v5459, %v5458
  %v5495 = vpack.c.b16 %v5461, %v5460
  %v5496 = vpack.c.b16 %v5463, %v5462
  %v5497 = vpack.c.b16 %v5465, %v5464
  %5530 = vmatprep.subr.bf16.mxu0 0
  %5531 = vmatpush1.bf16.msra.mxu0 %v5473
  %5532 = vmatprep.subr.bf16.mxu0 0
  %5533 = vmatpush1.bf16.msra.mxu0 %v5472
  %5534 = vmatprep.subr.bf16.mxu0 0
  %5535 = vmatpush1.bf16.msra.mxu0 %v5471
  %5536 = vmatprep.subr.bf16.mxu0 0
  %5537 = vmatpush1.bf16.msra.mxu0 %v5470
  %5538 = vmatprep.subr.bf16.mxu0 0
  %5539 = vmatpush1.bf16.msra.mxu0 %v5469
  %5540 = vmatprep.subr.bf16.mxu0 0
  %5541 = vmatpush1.bf16.msra.mxu0 %v5468
  %5542 = vmatprep.subr.bf16.mxu0 0
  %5543 = vmatpush1.bf16.msra.mxu0 %v5467
  %5544 = vmatprep.subr.bf16.mxu0 0
  %5545 = vmatpush1.bf16.msra.mxu0 %v5466
  %5546 = vmatprep.subr.bf16.mxu0 0
  %5547 = vmatpush2.bf16.msra.mxu0 %v5481
  %5548 = vmatprep.subr.bf16.mxu0 0
  %5549 = vmatpush2.bf16.msra.mxu0 %v5480
  %5550 = vmatprep.subr.bf16.mxu0 0
  %5551 = vmatpush2.bf16.msra.mxu0 %v5479
  %5552 = vmatprep.subr.bf16.mxu0 0
  %5553 = vmatpush2.bf16.msra.mxu0 %v5478
  %5554 = vmatprep.subr.bf16.mxu0 0
  %5555 = vmatpush2.bf16.msra.mxu0 %v5477
  %5556 = vmatprep.subr.bf16.mxu0 0
  %5557 = vmatpush2.bf16.msra.mxu0 %v5476
  %5558 = vmatprep.subr.bf16.mxu0 0
  %5559 = vmatpush2.bf16.msra.mxu0 %v5475
  %5560 = vmatprep.subr.bf16.mxu0 0
  %5561 = vmatpush2.bf16.msra.mxu0 %v5474
  %5562 = vmatprep.mubr.bf16.mxu0 %v5263
  %5563 = vmatmul.mubr.bf16.gmra.mxu0 %v5262
  %v5564 = vpop.f32.mrf.mxu0
  %v5565 = vadd.f32 0.0, %v5564
  %v5566 = vpop.f32.mrf.mxu0
  %v5567 = vpop.f32.mrf.mxu0
  %v5568 = vadd.f32 0.0, %v5567
  %v5569 = vpop.f32.mrf.mxu0
  %5570 = vmatprep.mubr.bf16.mxu0 %v5267
  %5571 = vmatmul.mubr.bf16.gmra.mxu0 %v5266
  %v5572 = vpop.f32.mrf.mxu0
  %v5573 = vadd.f32 0.0, %v5572
  %v5574 = vpop.f32.mrf.mxu0
  %v5575 = vpop.f32.mrf.mxu0
  %v5576 = vadd.f32 0.0, %v5575
  %v5577 = vpop.f32.mrf.mxu0
  %5578 = vmatprep.mubr.bf16.mxu0 %v5271
  %5579 = vmatmul.mubr.bf16.gmra.mxu0 %v5270
  %v5580 = vpop.f32.mrf.mxu0
  %v5581 = vadd.f32 0.0, %v5580
  %v5582 = vpop.f32.mrf.mxu0
  %v5583 = vpop.f32.mrf.mxu0
  %v5584 = vadd.f32 0.0, %v5583
  %v5585 = vpop.f32.mrf.mxu0
  %5586 = vdwg.mxu0
  %5587 = vmatprep.subr.bf16.mxu0 0
  %5588 = vmatpush1.bf16.msra.mxu0 %v5489
  %5589 = vmatprep.subr.bf16.mxu0 0
  %5590 = vmatpush1.bf16.msra.mxu0 %v5488
  %5591 = vmatprep.subr.bf16.mxu0 0
  %5592 = vmatpush1.bf16.msra.mxu0 %v5487
  %5593 = vmatprep.subr.bf16.mxu0 0
  %5594 = vmatpush1.bf16.msra.mxu0 %v5486
  %5595 = vmatprep.subr.bf16.mxu0 0
  %5596 = vmatpush1.bf16.msra.mxu0 %v5485
  %5597 = vmatprep.subr.bf16.mxu0 0
  %5598 = vmatpush1.bf16.msra.mxu0 %v5484
  %5599 = vmatprep.subr.bf16.mxu0 0
  %5600 = vmatpush1.bf16.msra.mxu0 %v5483
  %5601 = vmatprep.subr.bf16.mxu0 0
  %5602 = vmatpush1.bf16.msra.mxu0 %v5482
  %5603 = vmatprep.subr.bf16.mxu0 0
  %5604 = vmatpush2.bf16.msra.mxu0 %v5497
  %5605 = vmatprep.subr.bf16.mxu0 0
  %5606 = vmatpush2.bf16.msra.mxu0 %v5496
  %5607 = vmatprep.subr.bf16.mxu0 0
  %5608 = vmatpush2.bf16.msra.mxu0 %v5495
  %5609 = vmatprep.subr.bf16.mxu0 0
  %5610 = vmatpush2.bf16.msra.mxu0 %v5494
  %5611 = vmatprep.subr.bf16.mxu0 0
  %5612 = vmatpush2.bf16.msra.mxu0 %v5493
  %5613 = vmatprep.subr.bf16.mxu0 0
  %5614 = vmatpush2.bf16.msra.mxu0 %v5492
  %5615 = vmatprep.subr.bf16.mxu0 0
  %5616 = vmatpush2.bf16.msra.mxu0 %v5491
  %5617 = vmatprep.subr.bf16.mxu0 0
  %5618 = vmatpush2.bf16.msra.mxu0 %v5490
  %5619 = vmatprep.mubr.bf16.mxu0 %v5265
  %5620 = vmatmul.mubr.bf16.gmra.mxu0 %v5264
  %v5621 = vpop.f32.mrf.mxu0
  %v5622 = vadd.f32 %v5565, %v5621
  %v5623 = vpop.f32.mrf.mxu0
  %v5624 = vpop.f32.mrf.mxu0
  %v5625 = vadd.f32 %v5568, %v5624
  %v5626 = vpop.f32.mrf.mxu0
  %5627 = vmatprep.mubr.bf16.mxu0 %v5269
  %5628 = vmatmul.mubr.bf16.gmra.mxu0 %v5268
  %v5629 = vpop.f32.mrf.mxu0
  %v5630 = vadd.f32 %v5573, %v5629
  %v5631 = vpop.f32.mrf.mxu0
  %v5632 = vpop.f32.mrf.mxu0
  %v5633 = vadd.f32 %v5576, %v5632
  %v5634 = vpop.f32.mrf.mxu0
  %5635 = vmatprep.mubr.bf16.mxu0 %v5273
  %5636 = vmatmul.mubr.bf16.gmra.mxu0 %v5272
  %v5637 = vpop.f32.mrf.mxu0
  %v5638 = vadd.f32 %v5581, %v5637
  %v5639 = vpop.f32.mrf.mxu0
  %v5640 = vpop.f32.mrf.mxu0
  %v5641 = vadd.f32 %v5584, %v5640
  %v5642 = vpop.f32.mrf.mxu0
  %5643 = vdwg.mxu0
  %v5708 = vunpack.c.l.b16 %v4978
  %v5709 = vunpack.c.l.b16 %v4979
  %v5710 = vunpack.c.l.b16 %v4980
  %v5711 = vunpack.c.l.b16 %v4981
  %v5712 = vunpack.c.l.b16 %v4982
  %v5713 = vunpack.c.l.b16 %v4983
  %v5714 = vunpack.c.l.b16 %v4984
  %v5715 = vunpack.c.l.b16 %v4985
  %v5716 = vunpack.c.l.b16 %v4986
  %v5717 = vunpack.c.l.b16 %v4987
  %v5718 = vunpack.c.l.b16 %v4988
  %v5719 = vunpack.c.l.b16 %v4989
  %v5720 = vunpack.c.l.b16 %v4990
  %v5721 = vunpack.c.l.b16 %v4991
  %v5722 = vunpack.c.l.b16 %v4992
  %v5723 = vunpack.c.l.b16 %v4993
  %v5724 = vunpack.c.l.b16 %v4994
  %v5725 = vunpack.c.l.b16 %v4995
  %v5726 = vunpack.c.l.b16 %v4996
  %v5727 = vunpack.c.l.b16 %v4997
  %v5728 = vunpack.c.l.b16 %v4998
  %v5729 = vunpack.c.l.b16 %v4999
  %v5730 = vunpack.c.l.b16 %v5000
  %v5731 = vunpack.c.l.b16 %v5001
  %v5732 = vunpack.c.l.b16 %v5002
  %v5733 = vunpack.c.l.b16 %v5003
  %v5734 = vunpack.c.l.b16 %v5004
  %v5735 = vunpack.c.l.b16 %v5005
  %v5736 = vunpack.c.l.b16 %v5006
  %v5737 = vunpack.c.l.b16 %v5007
  %v5738 = vunpack.c.l.b16 %v5008
  %v5739 = vunpack.c.l.b16 %v5009
  %v5740 = vunpack.c.l.b16 %v5010
  %v5741 = vunpack.c.l.b16 %v5011
  %v5742 = vunpack.c.l.b16 %v5012
  %v5743 = vunpack.c.l.b16 %v5013
  %v5744 = vunpack.c.l.b16 %v5014
  %v5745 = vunpack.c.l.b16 %v5015
  %v5746 = vunpack.c.l.b16 %v5016
  %v5747 = vunpack.c.l.b16 %v5017
  %v5748 = vunpack.c.l.b16 %v5018
  %v5749 = vunpack.c.l.b16 %v5019
  %v5750 = vunpack.c.l.b16 %v5020
  %v5751 = vunpack.c.l.b16 %v5021
  %v5752 = vunpack.c.l.b16 %v5022
  %v5753 = vunpack.c.l.b16 %v5023
  %v5754 = vunpack.c.l.b16 %v5024
  %v5755 = vunpack.c.l.b16 %v5025
  %v5756 = vunpack.c.l.b16 %v5026
  %v5757 = vunpack.c.l.b16 %v5027
  %v5758 = vunpack.c.l.b16 %v5028
  %v5759 = vunpack.c.l.b16 %v5029
  %v5760 = vunpack.c.l.b16 %v5030
  %v5761 = vunpack.c.l.b16 %v5031
  %v5762 = vunpack.c.l.b16 %v5032
  %v5763 = vunpack.c.l.b16 %v5033
  %v5764 = vunpack.c.l.b16 %v5034
  %v5765 = vunpack.c.l.b16 %v5035
  %v5766 = vunpack.c.l.b16 %v5036
  %v5767 = vunpack.c.l.b16 %v5037
  %v5768 = vunpack.c.l.b16 %v5038
  %v5769 = vunpack.c.l.b16 %v5039
  %v5770 = vunpack.c.l.b16 %v5040
  %v5771 = vunpack.c.l.b16 %v5041
  %v5772 = vpack.c.b16 %v5709, %v5708
  %v5773 = vpack.c.b16 %v5711, %v5710
  %v5774 = vpack.c.b16 %v5713, %v5712
  %v5775 = vpack.c.b16 %v5715, %v5714
  %v5776 = vpack.c.b16 %v5717, %v5716
  %v5777 = vpack.c.b16 %v5719, %v5718
  %v5778 = vpack.c.b16 %v5721, %v5720
  %v5779 = vpack.c.b16 %v5723, %v5722
  %v5780 = vpack.c.b16 %v5725, %v5724
  %v5781 = vpack.c.b16 %v5727, %v5726
  %v5782 = vpack.c.b16 %v5729, %v5728
  %v5783 = vpack.c.b16 %v5731, %v5730
  %v5784 = vpack.c.b16 %v5733, %v5732
  %v5785 = vpack.c.b16 %v5735, %v5734
  %v5786 = vpack.c.b16 %v5737, %v5736
  %v5787 = vpack.c.b16 %v5739, %v5738
  %v5788 = vpack.c.b16 %v5741, %v5740
  %v5789 = vpack.c.b16 %v5743, %v5742
  %v5790 = vpack.c.b16 %v5745, %v5744
  %v5791 = vpack.c.b16 %v5747, %v5746
  %v5792 = vpack.c.b16 %v5749, %v5748
  %v5793 = vpack.c.b16 %v5751, %v5750
  %v5794 = vpack.c.b16 %v5753, %v5752
  %v5795 = vpack.c.b16 %v5755, %v5754
  %v5796 = vpack.c.b16 %v5757, %v5756
  %v5797 = vpack.c.b16 %v5759, %v5758
  %v5798 = vpack.c.b16 %v5761, %v5760
  %v5799 = vpack.c.b16 %v5763, %v5762
  %v5800 = vpack.c.b16 %v5765, %v5764
  %v5801 = vpack.c.b16 %v5767, %v5766
  %v5802 = vpack.c.b16 %v5769, %v5768
  %v5803 = vpack.c.b16 %v5771, %v5770
  %5836 = vmatprep.subr.bf16.mxu0 0
  %5837 = vmatpush1.bf16.msra.mxu0 %v5779
  %5838 = vmatprep.subr.bf16.mxu0 0
  %5839 = vmatpush1.bf16.msra.mxu0 %v5778
  %5840 = vmatprep.subr.bf16.mxu0 0
  %5841 = vmatpush1.bf16.msra.mxu0 %v5777
  %5842 = vmatprep.subr.bf16.mxu0 0
  %5843 = vmatpush1.bf16.msra.mxu0 %v5776
  %5844 = vmatprep.subr.bf16.mxu0 0
  %5845 = vmatpush1.bf16.msra.mxu0 %v5775
  %5846 = vmatprep.subr.bf16.mxu0 0
  %5847 = vmatpush1.bf16.msra.mxu0 %v5774
  %5848 = vmatprep.subr.bf16.mxu0 0
  %5849 = vmatpush1.bf16.msra.mxu0 %v5773
  %5850 = vmatprep.subr.bf16.mxu0 0
  %5851 = vmatpush1.bf16.msra.mxu0 %v5772
  %5852 = vmatprep.subr.bf16.mxu0 0
  %5853 = vmatpush2.bf16.msra.mxu0 %v5787
  %5854 = vmatprep.subr.bf16.mxu0 0
  %5855 = vmatpush2.bf16.msra.mxu0 %v5786
  %5856 = vmatprep.subr.bf16.mxu0 0
  %5857 = vmatpush2.bf16.msra.mxu0 %v5785
  %5858 = vmatprep.subr.bf16.mxu0 0
  %5859 = vmatpush2.bf16.msra.mxu0 %v5784
  %5860 = vmatprep.subr.bf16.mxu0 0
  %5861 = vmatpush2.bf16.msra.mxu0 %v5783
  %5862 = vmatprep.subr.bf16.mxu0 0
  %5863 = vmatpush2.bf16.msra.mxu0 %v5782
  %5864 = vmatprep.subr.bf16.mxu0 0
  %5865 = vmatpush2.bf16.msra.mxu0 %v5781
  %5866 = vmatprep.subr.bf16.mxu0 0
  %5867 = vmatpush2.bf16.msra.mxu0 %v5780
  %5868 = vmatprep.mubr.bf16.mxu0 %v4966
  %5869 = vmatmul.mubr.bf16.gmra.mxu0 %v4965
  %v5870 = vpop.f32.mrf.mxu0
  %v5871 = vadd.f32 %v5622, %v5870
  %v5872 = vpop.f32.mrf.mxu0
  %v5873 = vpop.f32.mrf.mxu0
  %v5874 = vadd.f32 %v5625, %v5873
  %v5875 = vpop.f32.mrf.mxu0
  %5876 = vmatprep.mubr.bf16.mxu0 %v4970
  %5877 = vmatmul.mubr.bf16.gmra.mxu0 %v4969
  %v5878 = vpop.f32.mrf.mxu0
  %v5879 = vadd.f32 %v5630, %v5878
  %v5880 = vpop.f32.mrf.mxu0
  %v5881 = vpop.f32.mrf.mxu0
  %v5882 = vadd.f32 %v5633, %v5881
  %v5883 = vpop.f32.mrf.mxu0
  %5884 = vmatprep.mubr.bf16.mxu0 %v4974
  %5885 = vmatmul.mubr.bf16.gmra.mxu0 %v4973
  %v5886 = vpop.f32.mrf.mxu0
  %v5887 = vadd.f32 %v5638, %v5886
  %v5888 = vpop.f32.mrf.mxu0
  %v5889 = vpop.f32.mrf.mxu0
  %v5890 = vadd.f32 %v5641, %v5889
  %v5891 = vpop.f32.mrf.mxu0
  %5892 = vdwg.mxu0
  %5893 = vmatprep.subr.bf16.mxu0 0
  %5894 = vmatpush1.bf16.msra.mxu0 %v5795
  %5895 = vmatprep.subr.bf16.mxu0 0
  %5896 = vmatpush1.bf16.msra.mxu0 %v5794
  %5897 = vmatprep.subr.bf16.mxu0 0
  %5898 = vmatpush1.bf16.msra.mxu0 %v5793
  %5899 = vmatprep.subr.bf16.mxu0 0
  %5900 = vmatpush1.bf16.msra.mxu0 %v5792
  %5901 = vmatprep.subr.bf16.mxu0 0
  %5902 = vmatpush1.bf16.msra.mxu0 %v5791
  %5903 = vmatprep.subr.bf16.mxu0 0
  %5904 = vmatpush1.bf16.msra.mxu0 %v5790
  %5905 = vmatprep.subr.bf16.mxu0 0
  %5906 = vmatpush1.bf16.msra.mxu0 %v5789
  %5907 = vmatprep.subr.bf16.mxu0 0
  %5908 = vmatpush1.bf16.msra.mxu0 %v5788
  %5909 = vmatprep.subr.bf16.mxu0 0
  %5910 = vmatpush2.bf16.msra.mxu0 %v5803
  %5911 = vmatprep.subr.bf16.mxu0 0
  %5912 = vmatpush2.bf16.msra.mxu0 %v5802
  %5913 = vmatprep.subr.bf16.mxu0 0
  %5914 = vmatpush2.bf16.msra.mxu0 %v5801
  %5915 = vmatprep.subr.bf16.mxu0 0
  %5916 = vmatpush2.bf16.msra.mxu0 %v5800
  %5917 = vmatprep.subr.bf16.mxu0 0
  %5918 = vmatpush2.bf16.msra.mxu0 %v5799
  %5919 = vmatprep.subr.bf16.mxu0 0
  %5920 = vmatpush2.bf16.msra.mxu0 %v5798
  %5921 = vmatprep.subr.bf16.mxu0 0
  %5922 = vmatpush2.bf16.msra.mxu0 %v5797
  %5923 = vmatprep.subr.bf16.mxu0 0
  %5924 = vmatpush2.bf16.msra.mxu0 %v5796
  %5925 = vmatprep.mubr.bf16.mxu0 %v4968
  %5926 = vmatmul.mubr.bf16.gmra.mxu0 %v4967
  %v5927 = vpop.f32.mrf.mxu0
  %v5928 = vadd.f32 %v5871, %v5927
  %v5929 = vpop.f32.mrf.mxu0
  %v5930 = vpop.f32.mrf.mxu0
  %v5931 = vadd.f32 %v5874, %v5930
  %v5932 = vpop.f32.mrf.mxu0
  %5933 = vmatprep.mubr.bf16.mxu0 %v4972
  %5934 = vmatmul.mubr.bf16.gmra.mxu0 %v4971
  %v5935 = vpop.f32.mrf.mxu0
  %v5936 = vadd.f32 %v5879, %v5935
  %v5937 = vpop.f32.mrf.mxu0
  %v5938 = vpop.f32.mrf.mxu0
  %v5939 = vadd.f32 %v5882, %v5938
  %v5940 = vpop.f32.mrf.mxu0
  %5941 = vmatprep.mubr.bf16.mxu0 %v4976
  %5942 = vmatmul.mubr.bf16.gmra.mxu0 %v4975
  %v5943 = vpop.f32.mrf.mxu0
  %v5944 = vadd.f32 %v5887, %v5943
  %v5945 = vpop.f32.mrf.mxu0
  %v5946 = vpop.f32.mrf.mxu0
  %v5947 = vadd.f32 %v5890, %v5946
  %v5948 = vpop.f32.mrf.mxu0
  %5949 = vdwg.mxu0
  %v5950 = vld [vmem:[%s4734 + $0x20] sm:$0xff]
  %v5951 = vld [vmem:[%s4734 + $0x28] sm:$0xff]
  %v5952 = vld [vmem:[%s4734 + $0x60] sm:$0xff]
  %v5953 = vld [vmem:[%s4734 + $0x68] sm:$0xff]
  %v5954 = vld [vmem:[%s4734 + $0xa0] sm:$0xff]
  %v5955 = vld [vmem:[%s4734 + $0xa8] sm:$0xff]
  %v5956 = vld [vmem:[%s4734 + $0xe0] sm:$0xff]
  %v5957 = vld [vmem:[%s4734 + $0xe8] sm:$0xff]
  %v5958 = vld [vmem:[%s4743 + $0x8] sm:$0xf]
  %v5960 = vlaneseq
  %v5961 = vshrl.u32 %v5960, 7
  %v5962 = vsub.s32 0, %v5961
  %v5963 = vrot.slane %v5958, %v5962
  %v5964 = vlaneseq
  %v5965 = vshrl.u32 %v5964, 7
  %v5966 = vsub.s32 1, %v5965
  %v5967 = vrot.slane %v5958, %v5966
  %v5968 = vlaneseq
  %v5969 = vshrl.u32 %v5968, 7
  %v5970 = vsub.s32 2, %v5969
  %v5971 = vrot.slane %v5958, %v5970
  %v5972 = vlaneseq
  %v5973 = vshrl.u32 %v5972, 7
  %v5974 = vsub.s32 3, %v5973
  %v5975 = vrot.slane %v5958, %v5974
  %v5988 = vunpack.c.l.b16 %v5950
  %v5989 = vunpack.c.h.b16 %v5950
  %v5990 = vunpack.c.l.b16 %v5951
  %v5991 = vunpack.c.h.b16 %v5951
  %v5992 = vunpack.c.l.b16 %v5952
  %v5993 = vunpack.c.h.b16 %v5952
  %v5994 = vunpack.c.l.b16 %v5953
  %v5995 = vunpack.c.h.b16 %v5953
  %v5996 = vunpack.c.l.b16 %v5954
  %v5997 = vunpack.c.h.b16 %v5954
  %v5998 = vunpack.c.l.b16 %v5955
  %v5999 = vunpack.c.h.b16 %v5955
  %v6000 = vunpack.c.l.b16 %v5956
  %v6001 = vunpack.c.h.b16 %v5956
  %v6002 = vunpack.c.l.b16 %v5957
  %v6003 = vunpack.c.h.b16 %v5957
  %v6004 = vpack.c.b16 %v5992, %v5988
  %v6005 = vpack.c.b16 %v5993, %v5989
  %v6006 = vpack.c.b16 %v5994, %v5990
  %v6007 = vpack.c.b16 %v5995, %v5991
  %v6008 = vpack.c.b16 %v6000, %v5996
  %v6009 = vpack.c.b16 %v6001, %v5997
  %v6010 = vpack.c.b16 %v6002, %v5998
  %v6011 = vpack.c.b16 %v6003, %v5999
  %6020 = vmatprep.subr.bf16.mxu0 0
  %6021 = vmatpush1.bf16.msra.mxu0 0
  %6022 = vmatprep.subr.bf16.mxu0 0
  %6023 = vmatpush1.bf16.msra.mxu0 0
  %6024 = vmatprep.subr.bf16.mxu0 0
  %6025 = vmatpush1.bf16.msra.mxu0 0
  %6026 = vmatprep.subr.bf16.mxu0 0
  %6027 = vmatpush1.bf16.msra.mxu0 0
  %6028 = vmatprep.subr.bf16.mxu0 0
  %6029 = vmatpush1.bf16.msra.mxu0 0
  %6030 = vmatprep.subr.bf16.mxu0 0
  %6031 = vmatpush1.bf16.msra.mxu0 0
  %6032 = vmatprep.subr.bf16.mxu0 %v6009
  %6033 = vmatpush1.bf16.msra.mxu0 %v6008
  %6034 = vmatprep.subr.bf16.mxu0 %v6005
  %6035 = vmatpush1.bf16.msra.mxu0 %v6004
  %6036 = vmatprep.subr.bf16.mxu0 0
  %6037 = vmatpush2.bf16.msra.mxu0 0
  %6038 = vmatprep.subr.bf16.mxu0 0
  %6039 = vmatpush2.bf16.msra.mxu0 0
  %6040 = vmatprep.subr.bf16.mxu0 0
  %6041 = vmatpush2.bf16.msra.mxu0 0
  %6042 = vmatprep.subr.bf16.mxu0 0
  %6043 = vmatpush2.bf16.msra.mxu0 0
  %6044 = vmatprep.subr.bf16.mxu0 0
  %6045 = vmatpush2.bf16.msra.mxu0 0
  %6046 = vmatprep.subr.bf16.mxu0 0
  %6047 = vmatpush2.bf16.msra.mxu0 0
  %6048 = vmatprep.subr.bf16.mxu0 0
  %6049 = vmatpush2.bf16.msra.mxu0 0
  %6050 = vmatprep.subr.bf16.mxu0 0
  %6051 = vmatpush2.bf16.msra.mxu0 0
  %6052 = vmatprep.mubr.bf16.mxu0 0
  %6053 = vmatmul.mubr.bf16.gmra.mxu0 %v4807
  %v6054 = vpop.f32.mrf.mxu0
  %v6055 = vadd.f32 %v5963, %v6054
  %v6056 = vpop.f32.mrf.mxu0
  %v6057 = vadd.f32 %v5967, %v6056
  %v6058 = vpop.f32.mrf.mxu0
  %v6059 = vadd.f32 %v5963, %v6058
  %v6060 = vpop.f32.mrf.mxu0
  %v6061 = vadd.f32 %v5967, %v6060
  %6062 = vmatprep.mubr.bf16.mxu0 0
  %6063 = vmatmul.mubr.bf16.gmra.mxu0 %v4810
  %v6064 = vpop.f32.mrf.mxu0
  %v6065 = vadd.f32 %v5963, %v6064
  %v6066 = vpop.f32.mrf.mxu0
  %v6067 = vadd.f32 %v5967, %v6066
  %v6068 = vpop.f32.mrf.mxu0
  %v6069 = vadd.f32 %v5963, %v6068
  %v6070 = vpop.f32.mrf.mxu0
  %v6071 = vadd.f32 %v5967, %v6070
  %6072 = vmatprep.mubr.bf16.mxu0 0
  %6073 = vmatmul.mubr.bf16.gmra.mxu0 %v4813
  %v6074 = vpop.f32.mrf.mxu0
  %v6075 = vadd.f32 %v5963, %v6074
  %v6076 = vpop.f32.mrf.mxu0
  %v6077 = vadd.f32 %v5967, %v6076
  %v6078 = vpop.f32.mrf.mxu0
  %v6079 = vadd.f32 %v5963, %v6078
  %v6080 = vpop.f32.mrf.mxu0
  %v6081 = vadd.f32 %v5967, %v6080
  %6082 = vdwg.mxu0
  %6083 = vmatprep.subr.bf16.mxu0 0
  %6084 = vmatpush1.bf16.msra.mxu0 0
  %6085 = vmatprep.subr.bf16.mxu0 0
  %6086 = vmatpush1.bf16.msra.mxu0 0
  %6087 = vmatprep.subr.bf16.mxu0 0
  %6088 = vmatpush1.bf16.msra.mxu0 0
  %6089 = vmatprep.subr.bf16.mxu0 0
  %6090 = vmatpush1.bf16.msra.mxu0 0
  %6091 = vmatprep.subr.bf16.mxu0 0
  %6092 = vmatpush1.bf16.msra.mxu0 0
  %6093 = vmatprep.subr.bf16.mxu0 0
  %6094 = vmatpush1.bf16.msra.mxu0 0
  %6095 = vmatprep.subr.bf16.mxu0 %v6011
  %6096 = vmatpush1.bf16.msra.mxu0 %v6010
  %6097 = vmatprep.subr.bf16.mxu0 %v6007
  %6098 = vmatpush1.bf16.msra.mxu0 %v6006
  %6099 = vmatprep.subr.bf16.mxu0 0
  %6100 = vmatpush2.bf16.msra.mxu0 0
  %6101 = vmatprep.subr.bf16.mxu0 0
  %6102 = vmatpush2.bf16.msra.mxu0 0
  %6103 = vmatprep.subr.bf16.mxu0 0
  %6104 = vmatpush2.bf16.msra.mxu0 0
  %6105 = vmatprep.subr.bf16.mxu0 0
  %6106 = vmatpush2.bf16.msra.mxu0 0
  %6107 = vmatprep.subr.bf16.mxu0 0
  %6108 = vmatpush2.bf16.msra.mxu0 0
  %6109 = vmatprep.subr.bf16.mxu0 0
  %6110 = vmatpush2.bf16.msra.mxu0 0
  %6111 = vmatprep.subr.bf16.mxu0 0
  %6112 = vmatpush2.bf16.msra.mxu0 0
  %6113 = vmatprep.subr.bf16.mxu0 0
  %6114 = vmatpush2.bf16.msra.mxu0 0
  %6115 = vmatprep.mubr.bf16.mxu0 0
  %6116 = vmatmul.mubr.bf16.gmra.mxu0 %v4807
  %v6117 = vpop.f32.mrf.mxu0
  %v6118 = vadd.f32 %v5971, %v6117
  %v6119 = vpop.f32.mrf.mxu0
  %v6120 = vadd.f32 %v5975, %v6119
  %v6121 = vpop.f32.mrf.mxu0
  %v6122 = vadd.f32 %v5971, %v6121
  %v6123 = vpop.f32.mrf.mxu0
  %v6124 = vadd.f32 %v5975, %v6123
  %6125 = vmatprep.mubr.bf16.mxu0 0
  %6126 = vmatmul.mubr.bf16.gmra.mxu0 %v4810
  %v6127 = vpop.f32.mrf.mxu0
  %v6128 = vadd.f32 %v5971, %v6127
  %v6129 = vpop.f32.mrf.mxu0
  %v6130 = vadd.f32 %v5975, %v6129
  %v6131 = vpop.f32.mrf.mxu0
  %v6132 = vadd.f32 %v5971, %v6131
  %v6133 = vpop.f32.mrf.mxu0
  %v6134 = vadd.f32 %v5975, %v6133
  %6135 = vmatprep.mubr.bf16.mxu0 0
  %6136 = vmatmul.mubr.bf16.gmra.mxu0 %v4813
  %v6137 = vpop.f32.mrf.mxu0
  %v6138 = vadd.f32 %v5971, %v6137
  %v6139 = vpop.f32.mrf.mxu0
  %v6140 = vadd.f32 %v5975, %v6139
  %v6141 = vpop.f32.mrf.mxu0
  %v6142 = vadd.f32 %v5971, %v6141
  %v6143 = vpop.f32.mrf.mxu0
  %v6144 = vadd.f32 %v5975, %v6143
  %6145 = vdwg.mxu0
  %v6146 = vmax.f32 %v6055, 0.0
  %v6147 = vmax.f32 %v6057, 0.0
  %v6148 = vmax.f32 %v6118, 0.0
  %v6149 = vmax.f32 %v6120, 0.0
  %v6150 = vmax.f32 %v6059, 0.0
  %v6151 = vmax.f32 %v6061, 0.0
  %v6152 = vmax.f32 %v6122, 0.0
  %v6153 = vmax.f32 %v6124, 0.0
  %v6154 = vmax.f32 %v6065, 0.0
  %v6155 = vmax.f32 %v6067, 0.0
  %v6156 = vmax.f32 %v6128, 0.0
  %v6157 = vmax.f32 %v6130, 0.0
  %v6158 = vmax.f32 %v6069, 0.0
  %v6159 = vmax.f32 %v6071, 0.0
  %v6160 = vmax.f32 %v6132, 0.0
  %v6161 = vmax.f32 %v6134, 0.0
  %v6162 = vmax.f32 %v6075, 0.0
  %v6163 = vmax.f32 %v6077, 0.0
  %v6164 = vmax.f32 %v6138, 0.0
  %v6165 = vmax.f32 %v6140, 0.0
  %v6166 = vmax.f32 %v6079, 0.0
  %v6167 = vmax.f32 %v6081, 0.0
  %v6168 = vmax.f32 %v6142, 0.0
  %v6169 = vmax.f32 %v6144, 0.0
  %v6170 = vpack.c.bf16 %v6150, %v6146
  %v6171 = vpack.c.bf16 %v6151, %v6147
  %v6172 = vpack.c.bf16 %v6152, %v6148
  %v6173 = vpack.c.bf16 %v6153, %v6149
  %v6174 = vpack.c.bf16 %v6158, %v6154
  %v6175 = vpack.c.bf16 %v6159, %v6155
  %v6176 = vpack.c.bf16 %v6160, %v6156
  %v6177 = vpack.c.bf16 %v6161, %v6157
  %v6178 = vpack.c.bf16 %v6166, %v6162
  %v6179 = vpack.c.bf16 %v6167, %v6163
  %v6180 = vpack.c.bf16 %v6168, %v6164
  %v6181 = vpack.c.bf16 %v6169, %v6165
  %v6182 = vld [vmem:[%s4977 + $0x200] sm:$0xf]
  %v6183 = vld [vmem:[%s4977 + $0x204] sm:$0xf]
  %v6184 = vld [vmem:[%s4977 + $0x208] sm:$0xf]
  %v6185 = vld [vmem:[%s4977 + $0x20c] sm:$0xf]
  %v6186 = vld [vmem:[%s4977 + $0x210] sm:$0xf]
  %v6187 = vld [vmem:[%s4977 + $0x214] sm:$0xf]
  %v6188 = vld [vmem:[%s4977 + $0x218] sm:$0xf]
  %v6189 = vld [vmem:[%s4977 + $0x21c] sm:$0xf]
  %v6190 = vld [vmem:[%s4977 + $0x220] sm:$0xf]
  %v6191 = vld [vmem:[%s4977 + $0x224] sm:$0xf]
  %v6192 = vld [vmem:[%s4977 + $0x228] sm:$0xf]
  %v6193 = vld [vmem:[%s4977 + $0x22c] sm:$0xf]
  %v6194 = vld [vmem:[%s4977 + $0x230] sm:$0xf]
  %v6195 = vld [vmem:[%s4977 + $0x234] sm:$0xf]
  %v6196 = vld [vmem:[%s4977 + $0x238] sm:$0xf]
  %v6197 = vld [vmem:[%s4977 + $0x23c] sm:$0xf]
  %v6198 = vld [vmem:[%s4977 + $0x240] sm:$0xf]
  %v6199 = vld [vmem:[%s4977 + $0x244] sm:$0xf]
  %v6200 = vld [vmem:[%s4977 + $0x248] sm:$0xf]
  %v6201 = vld [vmem:[%s4977 + $0x24c] sm:$0xf]
  %v6202 = vld [vmem:[%s4977 + $0x250] sm:$0xf]
  %v6203 = vld [vmem:[%s4977 + $0x254] sm:$0xf]
  %v6204 = vld [vmem:[%s4977 + $0x258] sm:$0xf]
  %v6205 = vld [vmem:[%s4977 + $0x25c] sm:$0xf]
  %v6206 = vld [vmem:[%s4977 + $0x260] sm:$0xf]
  %v6207 = vld [vmem:[%s4977 + $0x264] sm:$0xf]
  %v6208 = vld [vmem:[%s4977 + $0x268] sm:$0xf]
  %v6209 = vld [vmem:[%s4977 + $0x26c] sm:$0xf]
  %v6210 = vld [vmem:[%s4977 + $0x270] sm:$0xf]
  %v6211 = vld [vmem:[%s4977 + $0x274] sm:$0xf]
  %v6212 = vld [vmem:[%s4977 + $0x278] sm:$0xf]
  %v6213 = vld [vmem:[%s4977 + $0x27c] sm:$0xf]
  %v6214 = vld [vmem:[%s4977 + $0x280] sm:$0xf]
  %v6215 = vld [vmem:[%s4977 + $0x284] sm:$0xf]
  %v6216 = vld [vmem:[%s4977 + $0x288] sm:$0xf]
  %v6217 = vld [vmem:[%s4977 + $0x28c] sm:$0xf]
  %v6218 = vld [vmem:[%s4977 + $0x290] sm:$0xf]
  %v6219 = vld [vmem:[%s4977 + $0x294] sm:$0xf]
  %v6220 = vld [vmem:[%s4977 + $0x298] sm:$0xf]
  %v6221 = vld [vmem:[%s4977 + $0x29c] sm:$0xf]
  %v6222 = vld [vmem:[%s4977 + $0x2a0] sm:$0xf]
  %v6223 = vld [vmem:[%s4977 + $0x2a4] sm:$0xf]
  %v6224 = vld [vmem:[%s4977 + $0x2a8] sm:$0xf]
  %v6225 = vld [vmem:[%s4977 + $0x2ac] sm:$0xf]
  %v6226 = vld [vmem:[%s4977 + $0x2b0] sm:$0xf]
  %v6227 = vld [vmem:[%s4977 + $0x2b4] sm:$0xf]
  %v6228 = vld [vmem:[%s4977 + $0x2b8] sm:$0xf]
  %v6229 = vld [vmem:[%s4977 + $0x2bc] sm:$0xf]
  %v6230 = vld [vmem:[%s4977 + $0x2c0] sm:$0xf]
  %v6231 = vld [vmem:[%s4977 + $0x2c4] sm:$0xf]
  %v6232 = vld [vmem:[%s4977 + $0x2c8] sm:$0xf]
  %v6233 = vld [vmem:[%s4977 + $0x2cc] sm:$0xf]
  %v6234 = vld [vmem:[%s4977 + $0x2d0] sm:$0xf]
  %v6235 = vld [vmem:[%s4977 + $0x2d4] sm:$0xf]
  %v6236 = vld [vmem:[%s4977 + $0x2d8] sm:$0xf]
  %v6237 = vld [vmem:[%s4977 + $0x2dc] sm:$0xf]
  %v6238 = vld [vmem:[%s4977 + $0x2e0] sm:$0xf]
  %v6239 = vld [vmem:[%s4977 + $0x2e4] sm:$0xf]
  %v6240 = vld [vmem:[%s4977 + $0x2e8] sm:$0xf]
  %v6241 = vld [vmem:[%s4977 + $0x2ec] sm:$0xf]
  %v6242 = vld [vmem:[%s4977 + $0x2f0] sm:$0xf]
  %v6243 = vld [vmem:[%s4977 + $0x2f4] sm:$0xf]
  %v6244 = vld [vmem:[%s4977 + $0x2f8] sm:$0xf]
  %v6245 = vld [vmem:[%s4977 + $0x2fc] sm:$0xf]
  %v6310 = vunpack.c.l.b16 %v6182
  %v6311 = vunpack.c.l.b16 %v6183
  %v6312 = vunpack.c.l.b16 %v6184
  %v6313 = vunpack.c.l.b16 %v6185
  %v6314 = vunpack.c.l.b16 %v6186
  %v6315 = vunpack.c.l.b16 %v6187
  %v6316 = vunpack.c.l.b16 %v6188
  %v6317 = vunpack.c.l.b16 %v6189
  %v6318 = vunpack.c.l.b16 %v6190
  %v6319 = vunpack.c.l.b16 %v6191
  %v6320 = vunpack.c.l.b16 %v6192
  %v6321 = vunpack.c.l.b16 %v6193
  %v6322 = vunpack.c.l.b16 %v6194
  %v6323 = vunpack.c.l.b16 %v6195
  %v6324 = vunpack.c.l.b16 %v6196
  %v6325 = vunpack.c.l.b16 %v6197
  %v6326 = vunpack.c.l.b16 %v6198
  %v6327 = vunpack.c.l.b16 %v6199
  %v6328 = vunpack.c.l.b16 %v6200
  %v6329 = vunpack.c.l.b16 %v6201
  %v6330 = vunpack.c.l.b16 %v6202
  %v6331 = vunpack.c.l.b16 %v6203
  %v6332 = vunpack.c.l.b16 %v6204
  %v6333 = vunpack.c.l.b16 %v6205
  %v6334 = vunpack.c.l.b16 %v6206
  %v6335 = vunpack.c.l.b16 %v6207
  %v6336 = vunpack.c.l.b16 %v6208
  %v6337 = vunpack.c.l.b16 %v6209
  %v6338 = vunpack.c.l.b16 %v6210
  %v6339 = vunpack.c.l.b16 %v6211
  %v6340 = vunpack.c.l.b16 %v6212
  %v6341 = vunpack.c.l.b16 %v6213
  %v6342 = vunpack.c.l.b16 %v6214
  %v6343 = vunpack.c.l.b16 %v6215
  %v6344 = vunpack.c.l.b16 %v6216
  %v6345 = vunpack.c.l.b16 %v6217
  %v6346 = vunpack.c.l.b16 %v6218
  %v6347 = vunpack.c.l.b16 %v6219
  %v6348 = vunpack.c.l.b16 %v6220
  %v6349 = vunpack.c.l.b16 %v6221
  %v6350 = vunpack.c.l.b16 %v6222
  %v6351 = vunpack.c.l.b16 %v6223
  %v6352 = vunpack.c.l.b16 %v6224
  %v6353 = vunpack.c.l.b16 %v6225
  %v6354 = vunpack.c.l.b16 %v6226
  %v6355 = vunpack.c.l.b16 %v6227
  %v6356 = vunpack.c.l.b16 %v6228
  %v6357 = vunpack.c.l.b16 %v6229
  %v6358 = vunpack.c.l.b16 %v6230
  %v6359 = vunpack.c.l.b16 %v6231
  %v6360 = vunpack.c.l.b16 %v6232
  %v6361 = vunpack.c.l.b16 %v6233
  %v6362 = vunpack.c.l.b16 %v6234
  %v6363 = vunpack.c.l.b16 %v6235
  %v6364 = vunpack.c.l.b16 %v6236
  %v6365 = vunpack.c.l.b16 %v6237
  %v6366 = vunpack.c.l.b16 %v6238
  %v6367 = vunpack.c.l.b16 %v6239
  %v6368 = vunpack.c.l.b16 %v6240
  %v6369 = vunpack.c.l.b16 %v6241
  %v6370 = vunpack.c.l.b16 %v6242
  %v6371 = vunpack.c.l.b16 %v6243
  %v6372 = vunpack.c.l.b16 %v6244
  %v6373 = vunpack.c.l.b16 %v6245
  %v6374 = vpack.c.b16 %v6311, %v6310
  %v6375 = vpack.c.b16 %v6313, %v6312
  %v6376 = vpack.c.b16 %v6315, %v6314
  %v6377 = vpack.c.b16 %v6317, %v6316
  %v6378 = vpack.c.b16 %v6319, %v6318
  %v6379 = vpack.c.b16 %v6321, %v6320
  %v6380 = vpack.c.b16 %v6323, %v6322
  %v6381 = vpack.c.b16 %v6325, %v6324
  %v6382 = vpack.c.b16 %v6327, %v6326
  %v6383 = vpack.c.b16 %v6329, %v6328
  %v6384 = vpack.c.b16 %v6331, %v6330
  %v6385 = vpack.c.b16 %v6333, %v6332
  %v6386 = vpack.c.b16 %v6335, %v6334
  %v6387 = vpack.c.b16 %v6337, %v6336
  %v6388 = vpack.c.b16 %v6339, %v6338
  %v6389 = vpack.c.b16 %v6341, %v6340
  %v6390 = vpack.c.b16 %v6343, %v6342
  %v6391 = vpack.c.b16 %v6345, %v6344
  %v6392 = vpack.c.b16 %v6347, %v6346
  %v6393 = vpack.c.b16 %v6349, %v6348
  %v6394 = vpack.c.b16 %v6351, %v6350
  %v6395 = vpack.c.b16 %v6353, %v6352
  %v6396 = vpack.c.b16 %v6355, %v6354
  %v6397 = vpack.c.b16 %v6357, %v6356
  %v6398 = vpack.c.b16 %v6359, %v6358
  %v6399 = vpack.c.b16 %v6361, %v6360
  %v6400 = vpack.c.b16 %v6363, %v6362
  %v6401 = vpack.c.b16 %v6365, %v6364
  %v6402 = vpack.c.b16 %v6367, %v6366
  %v6403 = vpack.c.b16 %v6369, %v6368
  %v6404 = vpack.c.b16 %v6371, %v6370
  %v6405 = vpack.c.b16 %v6373, %v6372
  %6438 = vmatprep.subr.bf16.mxu0 0
  %6439 = vmatpush1.bf16.msra.mxu0 %v6381
  %6440 = vmatprep.subr.bf16.mxu0 0
  %6441 = vmatpush1.bf16.msra.mxu0 %v6380
  %6442 = vmatprep.subr.bf16.mxu0 0
  %6443 = vmatpush1.bf16.msra.mxu0 %v6379
  %6444 = vmatprep.subr.bf16.mxu0 0
  %6445 = vmatpush1.bf16.msra.mxu0 %v6378
  %6446 = vmatprep.subr.bf16.mxu0 0
  %6447 = vmatpush1.bf16.msra.mxu0 %v6377
  %6448 = vmatprep.subr.bf16.mxu0 0
  %6449 = vmatpush1.bf16.msra.mxu0 %v6376
  %6450 = vmatprep.subr.bf16.mxu0 0
  %6451 = vmatpush1.bf16.msra.mxu0 %v6375
  %6452 = vmatprep.subr.bf16.mxu0 0
  %6453 = vmatpush1.bf16.msra.mxu0 %v6374
  %6454 = vmatprep.subr.bf16.mxu0 0
  %6455 = vmatpush2.bf16.msra.mxu0 %v6389
  %6456 = vmatprep.subr.bf16.mxu0 0
  %6457 = vmatpush2.bf16.msra.mxu0 %v6388
  %6458 = vmatprep.subr.bf16.mxu0 0
  %6459 = vmatpush2.bf16.msra.mxu0 %v6387
  %6460 = vmatprep.subr.bf16.mxu0 0
  %6461 = vmatpush2.bf16.msra.mxu0 %v6386
  %6462 = vmatprep.subr.bf16.mxu0 0
  %6463 = vmatpush2.bf16.msra.mxu0 %v6385
  %6464 = vmatprep.subr.bf16.mxu0 0
  %6465 = vmatpush2.bf16.msra.mxu0 %v6384
  %6466 = vmatprep.subr.bf16.mxu0 0
  %6467 = vmatpush2.bf16.msra.mxu0 %v6383
  %6468 = vmatprep.subr.bf16.mxu0 0
  %6469 = vmatpush2.bf16.msra.mxu0 %v6382
  %6470 = vmatprep.mubr.bf16.mxu0 %v6171
  %6471 = vmatmul.mubr.bf16.gmra.mxu0 %v6170
  %v6472 = vpop.f32.mrf.mxu0
  %v6473 = vadd.f32 0.0, %v6472
  %v6474 = vpop.f32.mrf.mxu0
  %v6475 = vpop.f32.mrf.mxu0
  %v6476 = vadd.f32 0.0, %v6475
  %v6477 = vpop.f32.mrf.mxu0
  %6478 = vmatprep.mubr.bf16.mxu0 %v6175
  %6479 = vmatmul.mubr.bf16.gmra.mxu0 %v6174
  %v6480 = vpop.f32.mrf.mxu0
  %v6481 = vadd.f32 0.0, %v6480
  %v6482 = vpop.f32.mrf.mxu0
  %v6483 = vpop.f32.mrf.mxu0
  %v6484 = vadd.f32 0.0, %v6483
  %v6485 = vpop.f32.mrf.mxu0
  %6486 = vmatprep.mubr.bf16.mxu0 %v6179
  %6487 = vmatmul.mubr.bf16.gmra.mxu0 %v6178
  %v6488 = vpop.f32.mrf.mxu0
  %v6489 = vadd.f32 0.0, %v6488
  %v6490 = vpop.f32.mrf.mxu0
  %v6491 = vpop.f32.mrf.mxu0
  %v6492 = vadd.f32 0.0, %v6491
  %v6493 = vpop.f32.mrf.mxu0
  %6494 = vdwg.mxu0
  %6495 = vmatprep.subr.bf16.mxu0 0
  %6496 = vmatpush1.bf16.msra.mxu0 %v6397
  %6497 = vmatprep.subr.bf16.mxu0 0
  %6498 = vmatpush1.bf16.msra.mxu0 %v6396
  %6499 = vmatprep.subr.bf16.mxu0 0
  %6500 = vmatpush1.bf16.msra.mxu0 %v6395
  %6501 = vmatprep.subr.bf16.mxu0 0
  %6502 = vmatpush1.bf16.msra.mxu0 %v6394
  %6503 = vmatprep.subr.bf16.mxu0 0
  %6504 = vmatpush1.bf16.msra.mxu0 %v6393
  %6505 = vmatprep.subr.bf16.mxu0 0
  %6506 = vmatpush1.bf16.msra.mxu0 %v6392
  %6507 = vmatprep.subr.bf16.mxu0 0
  %6508 = vmatpush1.bf16.msra.mxu0 %v6391
  %6509 = vmatprep.subr.bf16.mxu0 0
  %6510 = vmatpush1.bf16.msra.mxu0 %v6390
  %6511 = vmatprep.subr.bf16.mxu0 0
  %6512 = vmatpush2.bf16.msra.mxu0 %v6405
  %6513 = vmatprep.subr.bf16.mxu0 0
  %6514 = vmatpush2.bf16.msra.mxu0 %v6404
  %6515 = vmatprep.subr.bf16.mxu0 0
  %6516 = vmatpush2.bf16.msra.mxu0 %v6403
  %6517 = vmatprep.subr.bf16.mxu0 0
  %6518 = vmatpush2.bf16.msra.mxu0 %v6402
  %6519 = vmatprep.subr.bf16.mxu0 0
  %6520 = vmatpush2.bf16.msra.mxu0 %v6401
  %6521 = vmatprep.subr.bf16.mxu0 0
  %6522 = vmatpush2.bf16.msra.mxu0 %v6400
  %6523 = vmatprep.subr.bf16.mxu0 0
  %6524 = vmatpush2.bf16.msra.mxu0 %v6399
  %6525 = vmatprep.subr.bf16.mxu0 0
  %6526 = vmatpush2.bf16.msra.mxu0 %v6398
  %6527 = vmatprep.mubr.bf16.mxu0 %v6173
  %6528 = vmatmul.mubr.bf16.gmra.mxu0 %v6172
  %v6529 = vpop.f32.mrf.mxu0
  %v6530 = vadd.f32 %v6473, %v6529
  %v6531 = vpop.f32.mrf.mxu0
  %v6532 = vpop.f32.mrf.mxu0
  %v6533 = vadd.f32 %v6476, %v6532
  %v6534 = vpop.f32.mrf.mxu0
  %6535 = vmatprep.mubr.bf16.mxu0 %v6177
  %6536 = vmatmul.mubr.bf16.gmra.mxu0 %v6176
  %v6537 = vpop.f32.mrf.mxu0
  %v6538 = vadd.f32 %v6481, %v6537
  %v6539 = vpop.f32.mrf.mxu0
  %v6540 = vpop.f32.mrf.mxu0
  %v6541 = vadd.f32 %v6484, %v6540
  %v6542 = vpop.f32.mrf.mxu0
  %6543 = vmatprep.mubr.bf16.mxu0 %v6181
  %6544 = vmatmul.mubr.bf16.gmra.mxu0 %v6180
  %v6545 = vpop.f32.mrf.mxu0
  %v6546 = vadd.f32 %v6489, %v6545
  %v6547 = vpop.f32.mrf.mxu0
  %v6548 = vpop.f32.mrf.mxu0
  %v6549 = vadd.f32 %v6492, %v6548
  %v6550 = vpop.f32.mrf.mxu0
  %6551 = vdwg.mxu0
  %v6552 = vadd.f32 %v5928, %v6530
  %v6553 = vadd.f32 %v5931, %v6533
  %v6554 = vadd.f32 %v5936, %v6538
  %v6555 = vadd.f32 %v5939, %v6541
  %v6556 = vadd.f32 %v5944, %v6546
  %v6557 = vadd.f32 %v5947, %v6549
  %v6558 = vld [vmem:[%s4734 + $0x30] sm:$0xff]
  %v6559 = vld [vmem:[%s4734 + $0x38] sm:$0xff]
  %v6560 = vld [vmem:[%s4734 + $0x70] sm:$0xff]
  %v6561 = vld [vmem:[%s4734 + $0x78] sm:$0xff]
  %v6562 = vld [vmem:[%s4734 + $0xb0] sm:$0xff]
  %v6563 = vld [vmem:[%s4734 + $0xb8] sm:$0xff]
  %v6564 = vld [vmem:[%s4734 + $0xf0] sm:$0xff]
  %v6565 = vld [vmem:[%s4734 + $0xf8] sm:$0xff]
  %v6566 = vld [vmem:[%s4743 + $0xc] sm:$0xf]
  %v6568 = vlaneseq
  %v6569 = vshrl.u32 %v6568, 7
  %v6570 = vsub.s32 0, %v6569
  %v6571 = vrot.slane %v6566, %v6570
  %v6572 = vlaneseq
  %v6573 = vshrl.u32 %v6572, 7
  %v6574 = vsub.s32 1, %v6573
  %v6575 = vrot.slane %v6566, %v6574
  %v6576 = vlaneseq
  %v6577 = vshrl.u32 %v6576, 7
  %v6578 = vsub.s32 2, %v6577
  %v6579 = vrot.slane %v6566, %v6578
  %v6580 = vlaneseq
  %v6581 = vshrl.u32 %v6580, 7
  %v6582 = vsub.s32 3, %v6581
  %v6583 = vrot.slane %v6566, %v6582
  %v6596 = vunpack.c.l.b16 %v6558
  %v6597 = vunpack.c.h.b16 %v6558
  %v6598 = vunpack.c.l.b16 %v6559
  %v6599 = vunpack.c.h.b16 %v6559
  %v6600 = vunpack.c.l.b16 %v6560
  %v6601 = vunpack.c.h.b16 %v6560
  %v6602 = vunpack.c.l.b16 %v6561
  %v6603 = vunpack.c.h.b16 %v6561
  %v6604 = vunpack.c.l.b16 %v6562
  %v6605 = vunpack.c.h.b16 %v6562
  %v6606 = vunpack.c.l.b16 %v6563
  %v6607 = vunpack.c.h.b16 %v6563
  %v6608 = vunpack.c.l.b16 %v6564
  %v6609 = vunpack.c.h.b16 %v6564
  %v6610 = vunpack.c.l.b16 %v6565
  %v6611 = vunpack.c.h.b16 %v6565
  %v6612 = vpack.c.b16 %v6600, %v6596
  %v6613 = vpack.c.b16 %v6601, %v6597
  %v6614 = vpack.c.b16 %v6602, %v6598
  %v6615 = vpack.c.b16 %v6603, %v6599
  %v6616 = vpack.c.b16 %v6608, %v6604
  %v6617 = vpack.c.b16 %v6609, %v6605
  %v6618 = vpack.c.b16 %v6610, %v6606
  %v6619 = vpack.c.b16 %v6611, %v6607
  %6628 = vmatprep.subr.bf16.mxu0 0
  %6629 = vmatpush1.bf16.msra.mxu0 0
  %6630 = vmatprep.subr.bf16.mxu0 0
  %6631 = vmatpush1.bf16.msra.mxu0 0
  %6632 = vmatprep.subr.bf16.mxu0 0
  %6633 = vmatpush1.bf16.msra.mxu0 0
  %6634 = vmatprep.subr.bf16.mxu0 0
  %6635 = vmatpush1.bf16.msra.mxu0 0
  %6636 = vmatprep.subr.bf16.mxu0 0
  %6637 = vmatpush1.bf16.msra.mxu0 0
  %6638 = vmatprep.subr.bf16.mxu0 0
  %6639 = vmatpush1.bf16.msra.mxu0 0
  %6640 = vmatprep.subr.bf16.mxu0 %v6617
  %6641 = vmatpush1.bf16.msra.mxu0 %v6616
  %6642 = vmatprep.subr.bf16.mxu0 %v6613
  %6643 = vmatpush1.bf16.msra.mxu0 %v6612
  %6644 = vmatprep.subr.bf16.mxu0 0
  %6645 = vmatpush2.bf16.msra.mxu0 0
  %6646 = vmatprep.subr.bf16.mxu0 0
  %6647 = vmatpush2.bf16.msra.mxu0 0
  %6648 = vmatprep.subr.bf16.mxu0 0
  %6649 = vmatpush2.bf16.msra.mxu0 0
  %6650 = vmatprep.subr.bf16.mxu0 0
  %6651 = vmatpush2.bf16.msra.mxu0 0
  %6652 = vmatprep.subr.bf16.mxu0 0
  %6653 = vmatpush2.bf16.msra.mxu0 0
  %6654 = vmatprep.subr.bf16.mxu0 0
  %6655 = vmatpush2.bf16.msra.mxu0 0
  %6656 = vmatprep.subr.bf16.mxu0 0
  %6657 = vmatpush2.bf16.msra.mxu0 0
  %6658 = vmatprep.subr.bf16.mxu0 0
  %6659 = vmatpush2.bf16.msra.mxu0 0
  %6660 = vmatprep.mubr.bf16.mxu0 0
  %6661 = vmatmul.mubr.bf16.gmra.mxu0 %v4807
  %v6662 = vpop.f32.mrf.mxu0
  %v6663 = vadd.f32 %v6571, %v6662
  %v6664 = vpop.f32.mrf.mxu0
  %v6665 = vadd.f32 %v6575, %v6664
  %v6666 = vpop.f32.mrf.mxu0
  %v6667 = vadd.f32 %v6571, %v6666
  %v6668 = vpop.f32.mrf.mxu0
  %v6669 = vadd.f32 %v6575, %v6668
  %6670 = vmatprep.mubr.bf16.mxu0 0
  %6671 = vmatmul.mubr.bf16.gmra.mxu0 %v4810
  %v6672 = vpop.f32.mrf.mxu0
  %v6673 = vadd.f32 %v6571, %v6672
  %v6674 = vpop.f32.mrf.mxu0
  %v6675 = vadd.f32 %v6575, %v6674
  %v6676 = vpop.f32.mrf.mxu0
  %v6677 = vadd.f32 %v6571, %v6676
  %v6678 = vpop.f32.mrf.mxu0
  %v6679 = vadd.f32 %v6575, %v6678
  %6680 = vmatprep.mubr.bf16.mxu0 0
  %6681 = vmatmul.mubr.bf16.gmra.mxu0 %v4813
  %v6682 = vpop.f32.mrf.mxu0
  %v6683 = vadd.f32 %v6571, %v6682
  %v6684 = vpop.f32.mrf.mxu0
  %v6685 = vadd.f32 %v6575, %v6684
  %v6686 = vpop.f32.mrf.mxu0
  %v6687 = vadd.f32 %v6571, %v6686
  %v6688 = vpop.f32.mrf.mxu0
  %v6689 = vadd.f32 %v6575, %v6688
  %6690 = vdwg.mxu0
  %6691 = vmatprep.subr.bf16.mxu0 0
  %6692 = vmatpush1.bf16.msra.mxu0 0
  %6693 = vmatprep.subr.bf16.mxu0 0
  %6694 = vmatpush1.bf16.msra.mxu0 0
  %6695 = vmatprep.subr.bf16.mxu0 0
  %6696 = vmatpush1.bf16.msra.mxu0 0
  %6697 = vmatprep.subr.bf16.mxu0 0
  %6698 = vmatpush1.bf16.msra.mxu0 0
  %6699 = vmatprep.subr.bf16.mxu0 0
  %6700 = vmatpush1.bf16.msra.mxu0 0
  %6701 = vmatprep.subr.bf16.mxu0 0
  %6702 = vmatpush1.bf16.msra.mxu0 0
  %6703 = vmatprep.subr.bf16.mxu0 %v6619
  %6704 = vmatpush1.bf16.msra.mxu0 %v6618
  %6705 = vmatprep.subr.bf16.mxu0 %v6615
  %6706 = vmatpush1.bf16.msra.mxu0 %v6614
  %6707 = vmatprep.subr.bf16.mxu0 0
  %6708 = vmatpush2.bf16.msra.mxu0 0
  %6709 = vmatprep.subr.bf16.mxu0 0
  %6710 = vmatpush2.bf16.msra.mxu0 0
  %6711 = vmatprep.subr.bf16.mxu0 0
  %6712 = vmatpush2.bf16.msra.mxu0 0
  %6713 = vmatprep.subr.bf16.mxu0 0
  %6714 = vmatpush2.bf16.msra.mxu0 0
  %6715 = vmatprep.subr.bf16.mxu0 0
  %6716 = vmatpush2.bf16.msra.mxu0 0
  %6717 = vmatprep.subr.bf16.mxu0 0
  %6718 = vmatpush2.bf16.msra.mxu0 0
  %6719 = vmatprep.subr.bf16.mxu0 0
  %6720 = vmatpush2.bf16.msra.mxu0 0
  %6721 = vmatprep.subr.bf16.mxu0 0
  %6722 = vmatpush2.bf16.msra.mxu0 0
  %6723 = vmatprep.mubr.bf16.mxu0 0
  %6724 = vmatmul.mubr.bf16.gmra.mxu0 %v4807
  %v6725 = vpop.f32.mrf.mxu0
  %v6726 = vadd.f32 %v6579, %v6725
  %v6727 = vpop.f32.mrf.mxu0
  %v6728 = vadd.f32 %v6583, %v6727
  %v6729 = vpop.f32.mrf.mxu0
  %v6730 = vadd.f32 %v6579, %v6729
  %v6731 = vpop.f32.mrf.mxu0
  %v6732 = vadd.f32 %v6583, %v6731
  %6733 = vmatprep.mubr.bf16.mxu0 0
  %6734 = vmatmul.mubr.bf16.gmra.mxu0 %v4810
  %v6735 = vpop.f32.mrf.mxu0
  %v6736 = vadd.f32 %v6579, %v6735
  %v6737 = vpop.f32.mrf.mxu0
  %v6738 = vadd.f32 %v6583, %v6737
  %v6739 = vpop.f32.mrf.mxu0
  %v6740 = vadd.f32 %v6579, %v6739
  %v6741 = vpop.f32.mrf.mxu0
  %v6742 = vadd.f32 %v6583, %v6741
  %6743 = vmatprep.mubr.bf16.mxu0 0
  %6744 = vmatmul.mubr.bf16.gmra.mxu0 %v4813
  %v6745 = vpop.f32.mrf.mxu0
  %v6746 = vadd.f32 %v6579, %v6745
  %v6747 = vpop.f32.mrf.mxu0
  %v6748 = vadd.f32 %v6583, %v6747
  %v6749 = vpop.f32.mrf.mxu0
  %v6750 = vadd.f32 %v6579, %v6749
  %v6751 = vpop.f32.mrf.mxu0
  %v6752 = vadd.f32 %v6583, %v6751
  %6753 = vdwg.mxu0
  %v6754 = vmax.f32 %v6663, 0.0
  %v6755 = vmax.f32 %v6665, 0.0
  %v6756 = vmax.f32 %v6726, 0.0
  %v6757 = vmax.f32 %v6728, 0.0
  %v6758 = vmax.f32 %v6667, 0.0
  %v6759 = vmax.f32 %v6669, 0.0
  %v6760 = vmax.f32 %v6730, 0.0
  %v6761 = vmax.f32 %v6732, 0.0
  %v6762 = vmax.f32 %v6673, 0.0
  %v6763 = vmax.f32 %v6675, 0.0
  %v6764 = vmax.f32 %v6736, 0.0
  %v6765 = vmax.f32 %v6738, 0.0
  %v6766 = vmax.f32 %v6677, 0.0
  %v6767 = vmax.f32 %v6679, 0.0
  %v6768 = vmax.f32 %v6740, 0.0
  %v6769 = vmax.f32 %v6742, 0.0
  %v6770 = vmax.f32 %v6683, 0.0
  %v6771 = vmax.f32 %v6685, 0.0
  %v6772 = vmax.f32 %v6746, 0.0
  %v6773 = vmax.f32 %v6748, 0.0
  %v6774 = vmax.f32 %v6687, 0.0
  %v6775 = vmax.f32 %v6689, 0.0
  %v6776 = vmax.f32 %v6750, 0.0
  %v6777 = vmax.f32 %v6752, 0.0
  %v6778 = vpack.c.bf16 %v6758, %v6754
  %v6779 = vpack.c.bf16 %v6759, %v6755
  %v6780 = vpack.c.bf16 %v6760, %v6756
  %v6781 = vpack.c.bf16 %v6761, %v6757
  %v6782 = vpack.c.bf16 %v6766, %v6762
  %v6783 = vpack.c.bf16 %v6767, %v6763
  %v6784 = vpack.c.bf16 %v6768, %v6764
  %v6785 = vpack.c.bf16 %v6769, %v6765
  %v6786 = vpack.c.bf16 %v6774, %v6770
  %v6787 = vpack.c.bf16 %v6775, %v6771
  %v6788 = vpack.c.bf16 %v6776, %v6772
  %v6789 = vpack.c.bf16 %v6777, %v6773
  %v6790 = vld [vmem:[%s4977 + $0x300] sm:$0xf]
  %v6791 = vld [vmem:[%s4977 + $0x304] sm:$0xf]
  %v6792 = vld [vmem:[%s4977 + $0x308] sm:$0xf]
  %v6793 = vld [vmem:[%s4977 + $0x30c] sm:$0xf]
  %v6794 = vld [vmem:[%s4977 + $0x310] sm:$0xf]
  %v6795 = vld [vmem:[%s4977 + $0x314] sm:$0xf]
  %v6796 = vld [vmem:[%s4977 + $0x318] sm:$0xf]
  %v6797 = vld [vmem:[%s4977 + $0x31c] sm:$0xf]
  %v6798 = vld [vmem:[%s4977 + $0x320] sm:$0xf]
  %v6799 = vld [vmem:[%s4977 + $0x324] sm:$0xf]
  %v6800 = vld [vmem:[%s4977 + $0x328] sm:$0xf]
  %v6801 = vld [vmem:[%s4977 + $0x32c] sm:$0xf]
  %v6802 = vld [vmem:[%s4977 + $0x330] sm:$0xf]
  %v6803 = vld [vmem:[%s4977 + $0x334] sm:$0xf]
  %v6804 = vld [vmem:[%s4977 + $0x338] sm:$0xf]
  %v6805 = vld [vmem:[%s4977 + $0x33c] sm:$0xf]
  %v6806 = vld [vmem:[%s4977 + $0x340] sm:$0xf]
  %v6807 = vld [vmem:[%s4977 + $0x344] sm:$0xf]
  %v6808 = vld [vmem:[%s4977 + $0x348] sm:$0xf]
  %v6809 = vld [vmem:[%s4977 + $0x34c] sm:$0xf]
  %v6810 = vld [vmem:[%s4977 + $0x350] sm:$0xf]
  %v6811 = vld [vmem:[%s4977 + $0x354] sm:$0xf]
  %v6812 = vld [vmem:[%s4977 + $0x358] sm:$0xf]
  %v6813 = vld [vmem:[%s4977 + $0x35c] sm:$0xf]
  %v6814 = vld [vmem:[%s4977 + $0x360] sm:$0xf]
  %v6815 = vld [vmem:[%s4977 + $0x364] sm:$0xf]
  %v6816 = vld [vmem:[%s4977 + $0x368] sm:$0xf]
  %v6817 = vld [vmem:[%s4977 + $0x36c] sm:$0xf]
  %v6818 = vld [vmem:[%s4977 + $0x370] sm:$0xf]
  %v6819 = vld [vmem:[%s4977 + $0x374] sm:$0xf]
  %v6820 = vld [vmem:[%s4977 + $0x378] sm:$0xf]
  %v6821 = vld [vmem:[%s4977 + $0x37c] sm:$0xf]
  %v6822 = vld [vmem:[%s4977 + $0x380] sm:$0xf]
  %v6823 = vld [vmem:[%s4977 + $0x384] sm:$0xf]
  %v6824 = vld [vmem:[%s4977 + $0x388] sm:$0xf]
  %v6825 = vld [vmem:[%s4977 + $0x38c] sm:$0xf]
  %v6826 = vld [vmem:[%s4977 + $0x390] sm:$0xf]
  %v6827 = vld [vmem:[%s4977 + $0x394] sm:$0xf]
  %v6828 = vld [vmem:[%s4977 + $0x398] sm:$0xf]
  %v6829 = vld [vmem:[%s4977 + $0x39c] sm:$0xf]
  %v6830 = vld [vmem:[%s4977 + $0x3a0] sm:$0xf]
  %v6831 = vld [vmem:[%s4977 + $0x3a4] sm:$0xf]
  %v6832 = vld [vmem:[%s4977 + $0x3a8] sm:$0xf]
  %v6833 = vld [vmem:[%s4977 + $0x3ac] sm:$0xf]
  %v6834 = vld [vmem:[%s4977 + $0x3b0] sm:$0xf]
  %v6835 = vld [vmem:[%s4977 + $0x3b4] sm:$0xf]
  %v6836 = vld [vmem:[%s4977 + $0x3b8] sm:$0xf]
  %v6837 = vld [vmem:[%s4977 + $0x3bc] sm:$0xf]
  %v6838 = vld [vmem:[%s4977 + $0x3c0] sm:$0xf]
  %v6839 = vld [vmem:[%s4977 + $0x3c4] sm:$0xf]
  %v6840 = vld [vmem:[%s4977 + $0x3c8] sm:$0xf]
  %v6841 = vld [vmem:[%s4977 + $0x3cc] sm:$0xf]
  %v6842 = vld [vmem:[%s4977 + $0x3d0] sm:$0xf]
  %v6843 = vld [vmem:[%s4977 + $0x3d4] sm:$0xf]
  %v6844 = vld [vmem:[%s4977 + $0x3d8] sm:$0xf]
  %v6845 = vld [vmem:[%s4977 + $0x3dc] sm:$0xf]
  %v6846 = vld [vmem:[%s4977 + $0x3e0] sm:$0xf]
  %v6847 = vld [vmem:[%s4977 + $0x3e4] sm:$0xf]
  %v6848 = vld [vmem:[%s4977 + $0x3e8] sm:$0xf]
  %v6849 = vld [vmem:[%s4977 + $0x3ec] sm:$0xf]
  %v6850 = vld [vmem:[%s4977 + $0x3f0] sm:$0xf]
  %v6851 = vld [vmem:[%s4977 + $0x3f4] sm:$0xf]
  %v6852 = vld [vmem:[%s4977 + $0x3f8] sm:$0xf]
  %v6853 = vld [vmem:[%s4977 + $0x3fc] sm:$0xf]
  %v6918 = vunpack.c.l.b16 %v6790
  %v6919 = vunpack.c.l.b16 %v6791
  %v6920 = vunpack.c.l.b16 %v6792
  %v6921 = vunpack.c.l.b16 %v6793
  %v6922 = vunpack.c.l.b16 %v6794
  %v6923 = vunpack.c.l.b16 %v6795
  %v6924 = vunpack.c.l.b16 %v6796
  %v6925 = vunpack.c.l.b16 %v6797
  %v6926 = vunpack.c.l.b16 %v6798
  %v6927 = vunpack.c.l.b16 %v6799
  %v6928 = vunpack.c.l.b16 %v6800
  %v6929 = vunpack.c.l.b16 %v6801
  %v6930 = vunpack.c.l.b16 %v6802
  %v6931 = vunpack.c.l.b16 %v6803
  %v6932 = vunpack.c.l.b16 %v6804
  %v6933 = vunpack.c.l.b16 %v6805
  %v6934 = vunpack.c.l.b16 %v6806
  %v6935 = vunpack.c.l.b16 %v6807
  %v6936 = vunpack.c.l.b16 %v6808
  %v6937 = vunpack.c.l.b16 %v6809
  %v6938 = vunpack.c.l.b16 %v6810
  %v6939 = vunpack.c.l.b16 %v6811
  %v6940 = vunpack.c.l.b16 %v6812
  %v6941 = vunpack.c.l.b16 %v6813
  %v6942 = vunpack.c.l.b16 %v6814
  %v6943 = vunpack.c.l.b16 %v6815
  %v6944 = vunpack.c.l.b16 %v6816
  %v6945 = vunpack.c.l.b16 %v6817
  %v6946 = vunpack.c.l.b16 %v6818
  %v6947 = vunpack.c.l.b16 %v6819
  %v6948 = vunpack.c.l.b16 %v6820
  %v6949 = vunpack.c.l.b16 %v6821
  %v6950 = vunpack.c.l.b16 %v6822
  %v6951 = vunpack.c.l.b16 %v6823
  %v6952 = vunpack.c.l.b16 %v6824
  %v6953 = vunpack.c.l.b16 %v6825
  %v6954 = vunpack.c.l.b16 %v6826
  %v6955 = vunpack.c.l.b16 %v6827
  %v6956 = vunpack.c.l.b16 %v6828
  %v6957 = vunpack.c.l.b16 %v6829
  %v6958 = vunpack.c.l.b16 %v6830
  %v6959 = vunpack.c.l.b16 %v6831
  %v6960 = vunpack.c.l.b16 %v6832
  %v6961 = vunpack.c.l.b16 %v6833
  %v6962 = vunpack.c.l.b16 %v6834
  %v6963 = vunpack.c.l.b16 %v6835
  %v6964 = vunpack.c.l.b16 %v6836
  %v6965 = vunpack.c.l.b16 %v6837
  %v6966 = vunpack.c.l.b16 %v6838
  %v6967 = vunpack.c.l.b16 %v6839
  %v6968 = vunpack.c.l.b16 %v6840
  %v6969 = vunpack.c.l.b16 %v6841
  %v6970 = vunpack.c.l.b16 %v6842
  %v6971 = vunpack.c.l.b16 %v6843
  %v6972 = vunpack.c.l.b16 %v6844
  %v6973 = vunpack.c.l.b16 %v6845
  %v6974 = vunpack.c.l.b16 %v6846
  %v6975 = vunpack.c.l.b16 %v6847
  %v6976 = vunpack.c.l.b16 %v6848
  %v6977 = vunpack.c.l.b16 %v6849
  %v6978 = vunpack.c.l.b16 %v6850
  %v6979 = vunpack.c.l.b16 %v6851
  %v6980 = vunpack.c.l.b16 %v6852
  %v6981 = vunpack.c.l.b16 %v6853
  %v6982 = vpack.c.b16 %v6919, %v6918
  %v6983 = vpack.c.b16 %v6921, %v6920
  %v6984 = vpack.c.b16 %v6923, %v6922
  %v6985 = vpack.c.b16 %v6925, %v6924
  %v6986 = vpack.c.b16 %v6927, %v6926
  %v6987 = vpack.c.b16 %v6929, %v6928
  %v6988 = vpack.c.b16 %v6931, %v6930
  %v6989 = vpack.c.b16 %v6933, %v6932
  %v6990 = vpack.c.b16 %v6935, %v6934
  %v6991 = vpack.c.b16 %v6937, %v6936
  %v6992 = vpack.c.b16 %v6939, %v6938
  %v6993 = vpack.c.b16 %v6941, %v6940
  %v6994 = vpack.c.b16 %v6943, %v6942
  %v6995 = vpack.c.b16 %v6945, %v6944
  %v6996 = vpack.c.b16 %v6947, %v6946
  %v6997 = vpack.c.b16 %v6949, %v6948
  %v6998 = vpack.c.b16 %v6951, %v6950
  %v6999 = vpack.c.b16 %v6953, %v6952
  %v7000 = vpack.c.b16 %v6955, %v6954
  %v7001 = vpack.c.b16 %v6957, %v6956
  %v7002 = vpack.c.b16 %v6959, %v6958
  %v7003 = vpack.c.b16 %v6961, %v6960
  %v7004 = vpack.c.b16 %v6963, %v6962
  %v7005 = vpack.c.b16 %v6965, %v6964
  %v7006 = vpack.c.b16 %v6967, %v6966
  %v7007 = vpack.c.b16 %v6969, %v6968
  %v7008 = vpack.c.b16 %v6971, %v6970
  %v7009 = vpack.c.b16 %v6973, %v6972
  %v7010 = vpack.c.b16 %v6975, %v6974
  %v7011 = vpack.c.b16 %v6977, %v6976
  %v7012 = vpack.c.b16 %v6979, %v6978
  %v7013 = vpack.c.b16 %v6981, %v6980
  %7046 = vmatprep.subr.bf16.mxu0 0
  %7047 = vmatpush1.bf16.msra.mxu0 %v6989
  %7048 = vmatprep.subr.bf16.mxu0 0
  %7049 = vmatpush1.bf16.msra.mxu0 %v6988
  %7050 = vmatprep.subr.bf16.mxu0 0
  %7051 = vmatpush1.bf16.msra.mxu0 %v6987
  %7052 = vmatprep.subr.bf16.mxu0 0
  %7053 = vmatpush1.bf16.msra.mxu0 %v6986
  %7054 = vmatprep.subr.bf16.mxu0 0
  %7055 = vmatpush1.bf16.msra.mxu0 %v6985
  %7056 = vmatprep.subr.bf16.mxu0 0
  %7057 = vmatpush1.bf16.msra.mxu0 %v6984
  %7058 = vmatprep.subr.bf16.mxu0 0
  %7059 = vmatpush1.bf16.msra.mxu0 %v6983
  %7060 = vmatprep.subr.bf16.mxu0 0
  %7061 = vmatpush1.bf16.msra.mxu0 %v6982
  %7062 = vmatprep.subr.bf16.mxu0 0
  %7063 = vmatpush2.bf16.msra.mxu0 %v6997
  %7064 = vmatprep.subr.bf16.mxu0 0
  %7065 = vmatpush2.bf16.msra.mxu0 %v6996
  %7066 = vmatprep.subr.bf16.mxu0 0
  %7067 = vmatpush2.bf16.msra.mxu0 %v6995
  %7068 = vmatprep.subr.bf16.mxu0 0
  %7069 = vmatpush2.bf16.msra.mxu0 %v6994
  %7070 = vmatprep.subr.bf16.mxu0 0
  %7071 = vmatpush2.bf16.msra.mxu0 %v6993
  %7072 = vmatprep.subr.bf16.mxu0 0
  %7073 = vmatpush2.bf16.msra.mxu0 %v6992
  %7074 = vmatprep.subr.bf16.mxu0 0
  %7075 = vmatpush2.bf16.msra.mxu0 %v6991
  %7076 = vmatprep.subr.bf16.mxu0 0
  %7077 = vmatpush2.bf16.msra.mxu0 %v6990
  %7078 = vmatprep.mubr.bf16.mxu0 %v6779
  %7079 = vmatmul.mubr.bf16.gmra.mxu0 %v6778
  %v7080 = vpop.f32.mrf.mxu0
  %v7081 = vadd.f32 0.0, %v7080
  %v7082 = vpop.f32.mrf.mxu0
  %v7083 = vpop.f32.mrf.mxu0
  %v7084 = vadd.f32 0.0, %v7083
  %v7085 = vpop.f32.mrf.mxu0
  %7086 = vmatprep.mubr.bf16.mxu0 %v6783
  %7087 = vmatmul.mubr.bf16.gmra.mxu0 %v6782
  %v7088 = vpop.f32.mrf.mxu0
  %v7089 = vadd.f32 0.0, %v7088
  %v7090 = vpop.f32.mrf.mxu0
  %v7091 = vpop.f32.mrf.mxu0
  %v7092 = vadd.f32 0.0, %v7091
  %v7093 = vpop.f32.mrf.mxu0
  %7094 = vmatprep.mubr.bf16.mxu0 %v6787
  %7095 = vmatmul.mubr.bf16.gmra.mxu0 %v6786
  %v7096 = vpop.f32.mrf.mxu0
  %v7097 = vadd.f32 0.0, %v7096
  %v7098 = vpop.f32.mrf.mxu0
  %v7099 = vpop.f32.mrf.mxu0
  %v7100 = vadd.f32 0.0, %v7099
  %v7101 = vpop.f32.mrf.mxu0
  %7102 = vdwg.mxu0
  %7103 = vmatprep.subr.bf16.mxu0 0
  %7104 = vmatpush1.bf16.msra.mxu0 %v7005
  %7105 = vmatprep.subr.bf16.mxu0 0
  %7106 = vmatpush1.bf16.msra.mxu0 %v7004
  %7107 = vmatprep.subr.bf16.mxu0 0
  %7108 = vmatpush1.bf16.msra.mxu0 %v7003
  %7109 = vmatprep.subr.bf16.mxu0 0
  %7110 = vmatpush1.bf16.msra.mxu0 %v7002
  %7111 = vmatprep.subr.bf16.mxu0 0
  %7112 = vmatpush1.bf16.msra.mxu0 %v7001
  %7113 = vmatprep.subr.bf16.mxu0 0
  %7114 = vmatpush1.bf16.msra.mxu0 %v7000
  %7115 = vmatprep.subr.bf16.mxu0 0
  %7116 = vmatpush1.bf16.msra.mxu0 %v6999
  %7117 = vmatprep.subr.bf16.mxu0 0
  %7118 = vmatpush1.bf16.msra.mxu0 %v6998
  %7119 = vmatprep.subr.bf16.mxu0 0
  %7120 = vmatpush2.bf16.msra.mxu0 %v7013
  %7121 = vmatprep.subr.bf16.mxu0 0
  %7122 = vmatpush2.bf16.msra.mxu0 %v7012
  %7123 = vmatprep.subr.bf16.mxu0 0
  %7124 = vmatpush2.bf16.msra.mxu0 %v7011
  %7125 = vmatprep.subr.bf16.mxu0 0
  %7126 = vmatpush2.bf16.msra.mxu0 %v7010
  %7127 = vmatprep.subr.bf16.mxu0 0
  %7128 = vmatpush2.bf16.msra.mxu0 %v7009
  %7129 = vmatprep.subr.bf16.mxu0 0
  %7130 = vmatpush2.bf16.msra.mxu0 %v7008
  %7131 = vmatprep.subr.bf16.mxu0 0
  %7132 = vmatpush2.bf16.msra.mxu0 %v7007
  %7133 = vmatprep.subr.bf16.mxu0 0
  %7134 = vmatpush2.bf16.msra.mxu0 %v7006
  %7135 = vmatprep.mubr.bf16.mxu0 %v6781
  %7136 = vmatmul.mubr.bf16.gmra.mxu0 %v6780
  %v7137 = vpop.f32.mrf.mxu0
  %v7138 = vadd.f32 %v7081, %v7137
  %v7139 = vpop.f32.mrf.mxu0
  %v7140 = vpop.f32.mrf.mxu0
  %v7141 = vadd.f32 %v7084, %v7140
  %v7142 = vpop.f32.mrf.mxu0
  %7143 = vmatprep.mubr.bf16.mxu0 %v6785
  %7144 = vmatmul.mubr.bf16.gmra.mxu0 %v6784
  %v7145 = vpop.f32.mrf.mxu0
  %v7146 = vadd.f32 %v7089, %v7145
  %v7147 = vpop.f32.mrf.mxu0
  %v7148 = vpop.f32.mrf.mxu0
  %v7149 = vadd.f32 %v7092, %v7148
  %v7150 = vpop.f32.mrf.mxu0
  %7151 = vmatprep.mubr.bf16.mxu0 %v6789
  %7152 = vmatmul.mubr.bf16.gmra.mxu0 %v6788
  %v7153 = vpop.f32.mrf.mxu0
  %v7154 = vadd.f32 %v7097, %v7153
  %v7155 = vpop.f32.mrf.mxu0
  %v7156 = vpop.f32.mrf.mxu0
  %v7157 = vadd.f32 %v7100, %v7156
  %v7158 = vpop.f32.mrf.mxu0
  %7159 = vdwg.mxu0
  %v7160 = vadd.f32 %v6552, %v7138
  %v7161 = vadd.f32 %v6553, %v7141
  %v7162 = vadd.f32 %v6554, %v7146
  %v7163 = vadd.f32 %v6555, %v7149
  %v7164 = vadd.f32 %v6556, %v7154
  %v7165 = vadd.f32 %v6557, %v7157
  %v7166 = vld [vmem:[%s3738 + $0x4] sm:$0x1]
  %v7167 = vlaneseq
  %v7168 = vshrl.u32 %v7167, 7
  %v7169 = vsub.s32 0, %v7168
  %v7170 = vrot.slane %v7166, %v7169
  %v7171 = vadd.f32 %v7160, %v7170
  %v7172 = vadd.f32 %v7161, %v7170
  %v7173 = vadd.f32 %v7162, %v7170
  %v7174 = vadd.f32 %v7163, %v7170
  %v7175 = vadd.f32 %v7164, %v7170
  %v7176 = vadd.f32 %v7165, %v7170
  %v7177 = vadd.f32 %v4725, %v7171
  %v7178 = vadd.f32 %v4726, %v7172
  %v7179 = vadd.f32 %v4727, %v7173
  %v7180 = vadd.f32 %v4728, %v7174
  %v7181 = vadd.f32 %v4729, %v7175
  %v7182 = vadd.f32 %v4730, %v7176
  %v7183 = vld [vmem:[%s3738 + $0x7] sm:$0x1]
  %v7184 = vld [vmem:[%s3738 + $0x8] sm:$0x1]
  %v7185 = vsel %vm206, %v7177, 0.0
  %7186 = vadd.xlane.f32.xlu0 %v7185
  %v7187 = vpop.xlane.xlu0 %7186
  %v7188 = vsel %vm206, %v7178, 0.0
  %7189 = vadd.xlane.f32.xlu0 %v7188
  %v7190 = vpop.xlane.xlu0 %7189
  %v7191 = vsel %vm206, %v7179, 0.0
  %7192 = vadd.xlane.f32.xlu0 %v7191
  %v7193 = vpop.xlane.xlu0 %7192
  %v7194 = vsel %vm206, %v7180, 0.0
  %7195 = vadd.xlane.f32.xlu0 %v7194
  %v7196 = vpop.xlane.xlu0 %7195
  %v7197 = vsel %vm206, %v7181, 0.0
  %7198 = vadd.xlane.f32.xlu0 %v7197
  %v7199 = vpop.xlane.xlu0 %7198
  %v7200 = vsel %vm206, %v7182, 0.0
  %7201 = vadd.xlane.f32.xlu0 %v7200
  %v7202 = vpop.xlane.xlu0 %7201
  %v7203 = vmul.f32 %v7187, %v1100
  %v7204 = vmul.f32 %v7190, %v1100
  %v7205 = vmul.f32 %v7193, %v1100
  %v7206 = vmul.f32 %v7196, %v1100
  %v7207 = vmul.f32 %v7199, %v1100
  %v7208 = vmul.f32 %v7202, %v1100
  %v7209 = vsub.f32 %v7177, %v7203
  %v7210 = vsub.f32 %v7178, %v7204
  %v7211 = vsub.f32 %v7179, %v7205
  %v7212 = vsub.f32 %v7180, %v7206
  %v7213 = vsub.f32 %v7181, %v7207
  %v7214 = vsub.f32 %v7182, %v7208
  %v7215 = vmul.f32 %v7209, %v7209
  %v7216 = vmul.f32 %v7210, %v7210
  %v7217 = vmul.f32 %v7211, %v7211
  %v7218 = vmul.f32 %v7212, %v7212
  %v7219 = vmul.f32 %v7213, %v7213
  %v7220 = vmul.f32 %v7214, %v7214
  %v7221 = vsel %vm206, %v7215, 0.0
  %7222 = vadd.xlane.f32.xlu0 %v7221
  %v7223 = vpop.xlane.xlu0 %7222
  %v7224 = vsel %vm206, %v7216, 0.0
  %7225 = vadd.xlane.f32.xlu0 %v7224
  %v7226 = vpop.xlane.xlu0 %7225
  %v7227 = vsel %vm206, %v7217, 0.0
  %7228 = vadd.xlane.f32.xlu0 %v7227
  %v7229 = vpop.xlane.xlu0 %7228
  %v7230 = vsel %vm206, %v7218, 0.0
  %7231 = vadd.xlane.f32.xlu0 %v7230
  %v7232 = vpop.xlane.xlu0 %7231
  %v7233 = vsel %vm206, %v7219, 0.0
  %7234 = vadd.xlane.f32.xlu0 %v7233
  %v7235 = vpop.xlane.xlu0 %7234
  %v7236 = vsel %vm206, %v7220, 0.0
  %7237 = vadd.xlane.f32.xlu0 %v7236
  %v7238 = vpop.xlane.xlu0 %7237
  %v7239 = vmul.f32 %v7223, %v1100
  %v7240 = vmul.f32 %v7226, %v1100
  %v7241 = vmul.f32 %v7229, %v1100
  %v7242 = vmul.f32 %v7232, %v1100
  %v7243 = vmul.f32 %v7235, %v1100
  %v7244 = vmul.f32 %v7238, %v1100
  %v7245 = vadd.f32 %v7239, 1e-05
  %v7246 = vadd.f32 %v7240, 1e-05
  %v7247 = vadd.f32 %v7241, 1e-05
  %v7248 = vadd.f32 %v7242, 1e-05
  %v7249 = vadd.f32 %v7243, 1e-05
  %v7250 = vadd.f32 %v7244, 1e-05
  %v7251 = vrsqrt.pop %v7245
  %v7252 = vrsqrt.pop %v7246
  %v7253 = vrsqrt.pop %v7247
  %v7254 = vrsqrt.pop %v7248
  %v7255 = vrsqrt.pop %v7249
  %v7256 = vrsqrt.pop %v7250
  %v7257 = vmul.f32 %v7209, %v7251
  %v7258 = vmul.f32 %v7210, %v7252
  %v7259 = vmul.f32 %v7211, %v7253
  %v7260 = vmul.f32 %v7212, %v7254
  %v7261 = vmul.f32 %v7213, %v7255
  %v7262 = vmul.f32 %v7214, %v7256
  %v7263 = vlaneseq
  %v7264 = vshrl.u32 %v7263, 7
  %v7265 = vsub.s32 0, %v7264
  %v7266 = vrot.slane %v7183, %v7265
  %v7267 = vmul.f32 %v7257, %v7266
  %v7268 = vmul.f32 %v7258, %v7266
  %v7269 = vmul.f32 %v7259, %v7266
  %v7270 = vmul.f32 %v7260, %v7266
  %v7271 = vmul.f32 %v7261, %v7266
  %v7272 = vmul.f32 %v7262, %v7266
  %v7273 = vlaneseq
  %v7274 = vshrl.u32 %v7273, 7
  %v7275 = vsub.s32 0, %v7274
  %v7276 = vrot.slane %v7184, %v7275
  %v7277 = vadd.f32 %v7267, %v7276
  %v7278 = vadd.f32 %v7268, %v7276
  %v7279 = vadd.f32 %v7269, %v7276
  %v7280 = vadd.f32 %v7270, %v7276
  %v7281 = vadd.f32 %v7271, %v7276
  %v7282 = vadd.f32 %v7272, %v7276
  %v7283 = vpack.c.bf16 %v7278, %v7277
  %v7284 = vpack.c.bf16 %v7280, %v7279
  %v7285 = vpack.c.bf16 %v7282, %v7281
  %v7286 = vld [vmem:[%s13] sm:$0xf]
  %v7287 = vld [vmem:[%s13 + $0x4] sm:$0xf]
  %v7288 = vld [vmem:[%s13 + $0x8] sm:$0xf]
  %v7289 = vld [vmem:[%s13 + $0xc] sm:$0xf]
  %v7290 = vld [vmem:[%s14] sm:$0x1]
  %v7292 = vlaneseq
  %v7293 = vshrl.u32 %v7292, 7
  %v7294 = vsub.s32 0, %v7293
  %v7295 = vrot.slane %v7290, %v7294
  %v7301 = vunpack.c.l.b16 %v7286
  %v7302 = vunpack.c.l.b16 %v7287
  %v7303 = vunpack.c.l.b16 %v7288
  %v7304 = vunpack.c.l.b16 %v7289
  %v7305 = vpack.c.b16 %v7302, %v7301
  %v7306 = vpack.c.b16 %v7304, %v7303
  %v7310 = vsel %vm206, %v7283, 0
  %v7313 = vsel %vm206, %v7284, 0
  %v7316 = vsel %vm206, %v7285, 0
  %7318 = vmatprep.subr.bf16.mxu0 0
  %7319 = vmatpush1.bf16.msra.mxu0 0
  %7320 = vmatprep.subr.bf16.mxu0 0
  %7321 = vmatpush1.bf16.msra.mxu0 0
  %7322 = vmatprep.subr.bf16.mxu0 0
  %7323 = vmatpush1.bf16.msra.mxu0 0
  %7324 = vmatprep.subr.bf16.mxu0 0
  %7325 = vmatpush1.bf16.msra.mxu0 0
  %7326 = vmatprep.subr.bf16.mxu0 0
  %7327 = vmatpush1.bf16.msra.mxu0 0
  %7328 = vmatprep.subr.bf16.mxu0 0
  %7329 = vmatpush1.bf16.msra.mxu0 0
  %7330 = vmatprep.subr.bf16.mxu0 0
  %7331 = vmatpush1.bf16.msra.mxu0 %v7306
  %7332 = vmatprep.subr.bf16.mxu0 0
  %7333 = vmatpush1.bf16.msra.mxu0 %v7305
  %7334 = vmatprep.subr.bf16.mxu0 0
  %7335 = vmatpush2.bf16.msra.mxu0 0
  %7336 = vmatprep.subr.bf16.mxu0 0
  %7337 = vmatpush2.bf16.msra.mxu0 0
  %7338 = vmatprep.subr.bf16.mxu0 0
  %7339 = vmatpush2.bf16.msra.mxu0 0
  %7340 = vmatprep.subr.bf16.mxu0 0
  %7341 = vmatpush2.bf16.msra.mxu0 0
  %7342 = vmatprep.subr.bf16.mxu0 0
  %7343 = vmatpush2.bf16.msra.mxu0 0
  %7344 = vmatprep.subr.bf16.mxu0 0
  %7345 = vmatpush2.bf16.msra.mxu0 0
  %7346 = vmatprep.subr.bf16.mxu0 0
  %7347 = vmatpush2.bf16.msra.mxu0 0
  %7348 = vmatprep.subr.bf16.mxu0 0
  %7349 = vmatpush2.bf16.msra.mxu0 0
  %7350 = vmatprep.mubr.bf16.mxu0 0
  %7351 = vmatmul.mubr.bf16.gmra.mxu0 %v7310
  %v7352 = vpop.f32.mrf.mxu0
  %v7353 = vadd.f32 %v7295, %v7352
  %v7354 = vpop.f32.mrf.mxu0
  %v7355 = vpop.f32.mrf.mxu0
  %v7356 = vadd.f32 %v7295, %v7355
  %v7357 = vpop.f32.mrf.mxu0
  %7358 = vmatprep.mubr.bf16.mxu0 0
  %7359 = vmatmul.mubr.bf16.gmra.mxu0 %v7313
  %v7360 = vpop.f32.mrf.mxu0
  %v7361 = vadd.f32 %v7295, %v7360
  %v7362 = vpop.f32.mrf.mxu0
  %v7363 = vpop.f32.mrf.mxu0
  %v7364 = vadd.f32 %v7295, %v7363
  %v7365 = vpop.f32.mrf.mxu0
  %7366 = vmatprep.mubr.bf16.mxu0 0
  %7367 = vmatmul.mubr.bf16.gmra.mxu0 %v7316
  %v7368 = vpop.f32.mrf.mxu0
  %v7369 = vadd.f32 %v7295, %v7368
  %v7370 = vpop.f32.mrf.mxu0
  %v7371 = vpop.f32.mrf.mxu0
  %v7372 = vadd.f32 %v7295, %v7371
  %v7373 = vpop.f32.mrf.mxu0
  %7374 = vdwg.mxu0
  %7375 = vst [vmem:[%s15] sm:$0xff] %v7353
  %7376 = vst [vmem:[%s15 + $0x8] sm:$0xff] %v7356
  %7377 = vst [vmem:[%s15 + $0x10] sm:$0xff] %v7361
  %7378 = vst [vmem:[%s15 + $0x18] sm:$0xff] %v7364
  %7379 = vst [vmem:[%s15 + $0x20] sm:$0xff] %v7369
  %7380 = vst [vmem:[%s15 + $0x28] sm:$0xff] %v7372
  // Predicated region
  $region62: #{vit_forward.1} parent=0 // pred_check
    _
  $region63: #{vit_forward.1} parent=0 // pred_check_branch
    %7382 = sbr.rel (0) target = $region65
  $region64: #{vit_forward.1} parent=0 // pred_region
    _
  $region65: #{vit_forward.1} parent=0 // pred_fallthru
    _
  // Predicated region
  $region66: #{vit_forward.1} parent=0 // pred_check
    _
  $region67: #{vit_forward.1} parent=0 // pred_check_branch
    %7384 = sbr.rel (0) target = $region69
  $region68: #{vit_forward.1} parent=0 // pred_region
    _
  $region69: #{vit_forward.1} parent=0 // pred_fallthru
    _

</llo_original>
